<compile_context>
chip_gen: v7x
topology: tpu7x:2x2x1
jax: 0.10.0
libtpu: 0.0.40
codegen_flags: <defaults>
</compile_context>

<pallas_src>
import jax
import jax.numpy as jnp
from jax.experimental import pallas as pl
from jax.experimental.pallas import tpu as pltpu


# ---------------------------------------------------------------------------
# Tiled GEMM (bf16 operands, f32 MXU accumulation)
# ---------------------------------------------------------------------------
_VMEM_BUDGET = 26 * 1024 * 1024   # per-kernel working-set target (v7x-safe)


def _matmul_kernel_single_k(a_ref, b_ref, o_ref):
    o_ref[...] = jnp.dot(a_ref[...], b_ref[...],
                         preferred_element_type=jnp.float32).astype(o_ref.dtype)


def _matmul_kernel_multi_k(a_ref, b_ref, o_ref, acc_ref):
    @pl.when(pl.program_id(2) == 0)
    def _():
        acc_ref[...] = jnp.zeros_like(acc_ref)
    acc_ref[...] += jnp.dot(a_ref[...], b_ref[...],
                            preferred_element_type=jnp.float32)

    @pl.when(pl.program_id(2) == pl.num_programs(2) - 1)
    def _():
        o_ref[...] = acc_ref[...].astype(o_ref.dtype)


def _gemm_tiles(M, K, N, out_bytes):
    """Pick (tm, tn, tk) maximizing operand reuse under the VMEM budget."""
    tm = M if M <= 1024 else 512
    tn = N if N <= 1024 else 1024
    if K <= 2048:
        tk = K
    else:
        tk = next((t for t in (2048, 1024, 512, 256, 128) if K % t == 0), K)

    def fp(tm_, tn_, tk_):
        acc = 0 if tk_ >= K else tm_ * tn_ * 4
        return 2 * (tm_ * tk_ + tk_ * tn_) * 2 + 2 * tm_ * tn_ * out_bytes + acc

    while (fp(tm, tn, tk) > _VMEM_BUDGET and tk > 256 and tk % 2 == 0
           and K % (tk // 2) == 0):
        tk //= 2
    while fp(tm, tn, tk) > _VMEM_BUDGET and tm > 128:
        tm = max(128, tm // 2)
    return tm, tn, tk, fp(tm, tn, tk)


def _vmem_limit(footprint):
    # derive the scoped-VMEM request from the footprint; cap for v7x (64 MiB/TC)
    return min(48 * 1024 * 1024, max(32 * 1024 * 1024, 2 * footprint))


def pallas_matmul(a, b, out_dtype=jnp.bfloat16):
    """(M, K) @ (K, N) -> (M, N); bf16 operands on the MXU, f32 accumulation."""
    M, K = a.shape
    K2, N = b.shape
    assert K == K2
    a = a.astype(jnp.bfloat16)
    b = b.astype(jnp.bfloat16)
    out_bytes = jnp.dtype(out_dtype).itemsize
    tm, tn, tk, footprint = _gemm_tiles(M, K, N, out_bytes)
    params = pltpu.CompilerParams(
        dimension_semantics=("parallel", "parallel") if tk >= K
        else ("parallel", "parallel", "arbitrary"),
        vmem_limit_bytes=_vmem_limit(footprint))

    if tk >= K:   # single K step: no accumulator, direct writeback
        return pl.pallas_call(
            _matmul_kernel_single_k,
            out_shape=jax.ShapeDtypeStruct((M, N), out_dtype),
            grid=(pl.cdiv(M, tm), pl.cdiv(N, tn)),
            in_specs=[pl.BlockSpec((tm, K), lambda i, j: (i, 0)),
                      pl.BlockSpec((K, tn), lambda i, j: (0, j))],
            out_specs=pl.BlockSpec((tm, tn), lambda i, j: (i, j)),
            compiler_params=params,
        )(a, b)

    return pl.pallas_call(
        _matmul_kernel_multi_k,
        out_shape=jax.ShapeDtypeStruct((M, N), out_dtype),
        grid=(pl.cdiv(M, tm), pl.cdiv(N, tn), K // tk),
        in_specs=[pl.BlockSpec((tm, tk), lambda i, j, k: (i, k)),
                  pl.BlockSpec((tk, tn), lambda i, j, k: (k, j))],
        out_specs=pl.BlockSpec((tm, tn), lambda i, j, k: (i, j)),
        scratch_shapes=[pltpu.VMEM((tm, tn), jnp.float32)],
        compiler_params=params,
    )(a, b)


# ---------------------------------------------------------------------------
# Final-layer transposed GEMM with fused bias + tanh (lane-dense output)
# ---------------------------------------------------------------------------
def _final_gemm_kernel(b_ref, a_ref, bias_ref, o_ref):
    y = jnp.dot(b_ref[...], a_ref[...], preferred_element_type=jnp.float32)
    o_ref[...] = jnp.tanh(y + bias_ref[...]).astype(o_ref.dtype)


def pallas_matmul_t_bias_tanh(bt, at, bias_col, out_dtype=jnp.float32):
    """tanh((R, K) @ (K, M) + bias_col) with the large M dimension in lanes."""
    R, K = bt.shape
    K2, M = at.shape
    assert K == K2
    bt = bt.astype(jnp.bfloat16)
    at = at.astype(jnp.bfloat16)
    tn = M if M <= 4096 else 2048
    return pl.pallas_call(
        _final_gemm_kernel,
        out_shape=jax.ShapeDtypeStruct((R, M), out_dtype),
        grid=(pl.cdiv(M, tn),),
        in_specs=[pl.BlockSpec((R, K), lambda j: (0, 0)),
                  pl.BlockSpec((K, tn), lambda j: (0, j)),
                  pl.BlockSpec((R, 1), lambda j: (0, 0))],
        out_specs=pl.BlockSpec((R, tn), lambda j: (0, j)),
        compiler_params=pltpu.CompilerParams(
            dimension_semantics=("parallel",),
            vmem_limit_bytes=32 * 1024 * 1024),
    )(bt, at, bias_col.astype(jnp.float32))


# ---------------------------------------------------------------------------
# BatchNorm (training-mode batch stats, biased variance) + ReLU, bf16 in/out
# ---------------------------------------------------------------------------
def _bn_sums_kernel(x_ref, o_ref):
    x = x_ref[...].astype(jnp.float32)
    s = jnp.sum(x, axis=0)
    q = jnp.sum(x * x, axis=0)
    o_ref[...] = jnp.stack([s, q]).reshape(1, 2, -1)


def _bn_affine_relu_kernel(x_ref, scale_ref, shift_ref, o_ref):
    x = x_ref[...].astype(jnp.float32)
    y = x * scale_ref[...] + shift_ref[...]
    o_ref[...] = jnp.maximum(y, 0.0).astype(o_ref.dtype)


def _pick_row_tile(M):
    for t in (1024, 512, 256, 128, 64, 32, 16, 8):
        if M % t == 0:
            return t
    return M


def pallas_batchnorm_relu(x_nhwc, gamma, beta, eps=1e-5, out_dtype=jnp.bfloat16):
    """nn.BatchNorm2d (training forward: batch stats, biased var) + ReLU."""
    N, H, W, C = x_nhwc.shape
    M = N * H * W
    x2 = x_nhwc.reshape(M, C)                 # stays bf16 -- no f32 copy
    tm = _pick_row_tile(M)
    nb = M // tm

    # per-block partial sums on a "parallel" grid (both TCs on v7x); tiny
    # cross-block reduction in plain JAX.
    partial = pl.pallas_call(
        _bn_sums_kernel,
        out_shape=jax.ShapeDtypeStruct((nb, 2, C), jnp.float32),
        grid=(nb,),
        in_specs=[pl.BlockSpec((tm, C), lambda i: (i, 0))],
        out_specs=pl.BlockSpec((1, 2, C), lambda i: (i, 0, 0)),
        compiler_params=pltpu.CompilerParams(dimension_semantics=("parallel",)),
    )(x2)
    s = jnp.sum(partial[:, 0, :], axis=0)
    q = jnp.sum(partial[:, 1, :], axis=0)
    mean = s / M
    var = jnp.maximum(q / M - mean * mean, 0.0)   # clamp E[x^2]-mean^2 cancellation
    inv_std = jax.lax.rsqrt(var + eps)
    scale = (gamma * inv_std).reshape(1, C).astype(jnp.float32)
    shift = (beta - mean * gamma * inv_std).reshape(1, C).astype(jnp.float32)

    out = pl.pallas_call(
        _bn_affine_relu_kernel,
        out_shape=jax.ShapeDtypeStruct((M, C), out_dtype),
        grid=(nb,),
        in_specs=[pl.BlockSpec((tm, C), lambda i: (i, 0)),
                  pl.BlockSpec((1, C), lambda i: (0, 0)),
                  pl.BlockSpec((1, C), lambda i: (0, 0))],
        out_specs=pl.BlockSpec((tm, C), lambda i: (i, 0)),
        compiler_params=pltpu.CompilerParams(dimension_semantics=("parallel",)),
    )(x2, scale, shift)
    return out.reshape(N, H, W, C)


# ---------------------------------------------------------------------------
# ConvTranspose2d layers (sub-pixel / phase decomposition for stride 2)
# ---------------------------------------------------------------------------
def _subpixel_weight(w_pt):
    """B[(dy,dx,ci), (r,c,co)] = w_pt[ci, co, 3-r-2*dy, 3-c-2*dx]."""
    Cin, Cout = w_pt.shape[:2]
    wf = w_pt[:, :, ::-1, ::-1].reshape(Cin, Cout, 2, 2, 2, 2)  # (ci,co,dy,r,dx,c)
    return jnp.transpose(wf, (2, 4, 0, 3, 5, 1)).reshape(4 * Cin, 4 * Cout)


def _subpixel_weight_t(w_pt):
    """B^T[(r,c,co), (dy,dx,ci)] — transposed form for the lane-dense final GEMM."""
    Cin, Cout = w_pt.shape[:2]
    wf = w_pt[:, :, ::-1, ::-1].reshape(Cin, Cout, 2, 2, 2, 2)
    return jnp.transpose(wf, (3, 5, 1, 2, 4, 0)).reshape(4 * Cout, 4 * Cin)


def conv_transpose_1x1_to_4x4(x_nc, B0):
    """ConvTranspose2d(k=4, s=1, p=0) on a 1x1 spatial input == one GEMM."""
    N = x_nc.shape[0]
    Cout = B0.shape[1] // 16
    Y = pallas_matmul(x_nc, B0, out_dtype=jnp.bfloat16)
    return Y.reshape(N, 4, 4, Cout)


def conv_transpose_s2(x_nhwc, B):
    """ConvTranspose2d(k=4, s=2, p=1): one GEMM with K=4*Cin, N=4*Cout.

    y[n, 2m+r, 2w+c, co] = sum_{dy,dx,ci} xpad[n, m+r+dy, w+c+dx, ci]
                                          * W[ci, co, 3-r-2*dy, 3-c-2*dx]
    """
    N, H, W, Cin = x_nhwc.shape
    Cout = B.shape[1] // 4
    xp = jnp.pad(x_nhwc, ((0, 0), (1, 1), (1, 1), (0, 0)))
    taps = [xp[:, dy:dy + H + 1, dx:dx + W + 1, :]
            for dy in (0, 1) for dx in (0, 1)]
    A = jnp.stack(taps, axis=3).reshape(N * (H + 1) * (W + 1), 4 * Cin)
    Y = pallas_matmul(A, B, out_dtype=jnp.bfloat16)

    Yf = Y.reshape(N, H + 1, W + 1, 2, 2, Cout)
    rows = []
    for r in (0, 1):
        cols = [Yf[:, r:r + H, c:c + W, r, c, :] for c in (0, 1)]
        rows.append(jnp.stack(cols, axis=3))        # (N, H, W, 2(c), Cout)
    S = jnp.stack(rows, axis=3)                     # (N, H, W, 2(r), 2(c), Cout)
    return jnp.transpose(S, (0, 1, 3, 2, 4, 5)).reshape(N, 2 * H, 2 * W, Cout)


def conv_transpose_s2_final(x_nhwc, Bt, bias_col):
    """Final ConvTranspose2d(k=4,s=2,p=1) + bias + tanh as a transposed GEMM.

    Output of the GEMM is (4*Cout, M): M = N*(H+1)*(W+1) sits in lanes, so the
    12-row output gets lane-dense, unmasked stores.  Returns NCHW f32.
    """
    N, H, W, Cin = x_nhwc.shape
    Cout = Bt.shape[0] // 4
    x_t = jnp.transpose(x_nhwc, (3, 0, 1, 2))                    # (Cin, N, H, W)
    xp = jnp.pad(x_t, ((0, 0), (0, 0), (1, 1), (1, 1)))
    taps = [xp[:, :, dy:dy + H + 1, dx:dx + W + 1]
            for dy in (0, 1) for dx in (0, 1)]
    At = jnp.stack(taps, axis=0).reshape(4 * Cin, N * (H + 1) * (W + 1))

    Yt = pallas_matmul_t_bias_tanh(Bt, At, bias_col)             # (4*Cout, M) f32
    Yt6 = Yt.reshape(2, 2, Cout, N, H + 1, W + 1)
    rows = []
    for r in (0, 1):
        cols = [Yt6[r, c, :, :, r:r + H, c:c + W] for c in (0, 1)]  # (Cout,N,H,W)
        rows.append(jnp.stack(cols, axis=-1))                       # (Cout,N,H,W,2c)
    T = jnp.stack(rows, axis=3)                                     # (Cout,N,H,2r,W,2c)
    return jnp.transpose(T, (1, 0, 2, 3, 4, 5)).reshape(N, Cout, 2 * H, 2 * W)


# ---------------------------------------------------------------------------
# Parameters
# ---------------------------------------------------------------------------
def init_generator_params(key, z_dim, channels, features):
    """PyTorch-layout parameters: w_i (Cin, Cout, 4, 4), BN gamma/beta, bias."""
    f = features
    dims = [
        (z_dim, f * 16),    # block 1: k=4, s=1, p=0
        (f * 16, f * 8),    # block 2: k=4, s=2, p=1
        (f * 8, f * 4),     # block 3
        (f * 4, f * 2),     # block 4
        (f * 2, channels),  # final conv-transpose (with bias)
    ]
    params = {}
    keys = jax.random.split(key, len(dims) + 1)
    for i, (cin, cout) in enumerate(dims):
        params[f"w{i}"] = 0.05 * jax.random.normal(
            keys[i], (cin, cout, 4, 4), jnp.float32)
        if i < 4:
            params[f"gamma{i}"] = jnp.ones((cout,), jnp.float32)
            params[f"beta{i}"] = jnp.zeros((cout,), jnp.float32)
    params["bias4"] = 0.05 * jax.random.normal(keys[-1], (channels,), jnp.float32)
    return params


def prepare_params(params):
    """One-time conversion to GEMM-ready bf16 weight matrices (done outside jit)."""
    prep = {}
    w0 = params["w0"]
    prep["B0"] = jnp.transpose(w0, (0, 2, 3, 1)).reshape(
        w0.shape[0], -1).astype(jnp.bfloat16)
    for i in (1, 2, 3):
        prep[f"B{i}"] = _subpixel_weight(params[f"w{i}"]).astype(jnp.bfloat16)
    prep["Bt4"] = _subpixel_weight_t(params["w4"]).astype(jnp.bfloat16)
    prep["bias4"] = jnp.tile(params["bias4"], 4).reshape(-1, 1).astype(jnp.float32)
    for i in range(4):
        prep[f"gamma{i}"] = params[f"gamma{i}"].astype(jnp.float32)
        prep[f"beta{i}"] = params[f"beta{i}"].astype(jnp.float32)
    return prep


# ---------------------------------------------------------------------------
# Generator forward (Pallas) and pure-JAX reference
# ---------------------------------------------------------------------------
def generator_forward(prep, x_nchw):
    """x_nchw: (N, z_dim, 1, 1) -> (N, channels, 64, 64), matching PyTorch."""
    N = x_nchw.shape[0]
    x = x_nchw.reshape(N, -1).astype(jnp.bfloat16)                 # (N, z_dim)

    x = conv_transpose_1x1_to_4x4(x, prep["B0"])                   # 4x4
    x = pallas_batchnorm_relu(x, prep["gamma0"], prep["beta0"])
    for i in (1, 2, 3):                                            # 8, 16, 32
        x = conv_transpose_s2(x, prep[f"B{i}"])
        x = pallas_batchnorm_relu(x, prep[f"gamma{i}"], prep[f"beta{i}"])
    return conv_transpose_s2_final(x, prep["Bt4"], prep["bias4"])  # 64x64, NCHW f32


def _conv_transpose_ref(x, w_pt, stride, padding, bias=None):
    Cin, Cout, k, _ = w_pt.shape
    w_conv = jnp.transpose(w_pt[:, :, ::-1, ::-1], (1, 0, 2, 3))   # (Cout,Cin,k,k)
    pad = k - 1 - padding
    y = jax.lax.conv_general_dilated(
        x, w_conv, window_strides=(1, 1), padding=[(pad, pad), (pad, pad)],
        lhs_dilation=(stride, stride),
        dimension_numbers=("NCHW", "OIHW", "NCHW"),
        precision=jax.lax.Precision.HIGHEST)
    if bias is not None:
        y = y + bias.reshape(1, -1, 1, 1)
    return y


def _bn_relu_ref(x, gamma, beta, eps=1e-5):
    mean = jnp.mean(x, axis=(0, 2, 3), keepdims=True)
    var = jnp.mean((x - mean) ** 2, axis=(0, 2, 3), keepdims=True)
    y = (x - mean) * jax.lax.rsqrt(var + eps)
    y = y * gamma.reshape(1, -1, 1, 1) + beta.reshape(1, -1, 1, 1)
    return jnp.maximum(y, 0.0)


def generator_reference(params, x):
    x = _conv_transpose_ref(x, params["w0"], 1, 0)
    x = _bn_relu_ref(x, params["gamma0"], params["beta0"])
    for i in (1, 2, 3):
        x = _conv_transpose_ref(x, params[f"w{i}"], 2, 1)
        x = _bn_relu_ref(x, params[f"gamma{i}"], params[f"beta{i}"])
    x = _conv_transpose_ref(x, params["w4"], 2, 1, bias=params["bias4"])
    return jnp.tanh(x)


if __name__ == "__main__":
    batch, z_dim, channels, features = 2, 8, 3, 4

    key = jax.random.PRNGKey(0)
    k_param, k_in = jax.random.split(key)
    params = init_generator_params(k_param, z_dim, channels, features)
    prep = prepare_params(params)
    z = jax.random.normal(k_in, (batch, z_dim, 1, 1), jnp.float32)

    fwd = jax.jit(generator_forward)
    out = jax.block_until_ready(fwd(prep, z))

    assert out.shape == (batch, channels, 64, 64), out.shape
    assert bool(jnp.all(jnp.isfinite(out)))

    # numerical validation against a pure-JAX f32 reference (bf16 activations
    # inside the Pallas path -> loose tolerance)
    ref = generator_reference(params, z)
    err = float(jnp.max(jnp.abs(out - ref)))
    assert err < 6e-2, f"max abs error vs reference: {err}"

    print("KERNEL_OK")
</pallas_src>

<mosaic_0001>
module attributes {stable_mosaic.version = 11 : i64} {
  func.func @_matmul_kernel_single_k(%arg0: i32, %arg1: i32, %arg2: memref<2x8xbf16, #tpu.memory_space<vmem>>, %arg3: memref<8x1024xbf16, #tpu.memory_space<vmem>>, %arg4: memref<2x1024xbf16, #tpu.memory_space<vmem>>) attributes {dimension_semantics = [#tpu.dimension_semantics<parallel>, #tpu.dimension_semantics<parallel>], iteration_bounds = array<i64: 1, 1>, scalar_prefetch = 0 : i64, scratch_operands = 0 : i64, tpu.core_type = #tpu.core_type<tc>, window_params = [{transform_indices = @transform_0, window_bounds = array<i64: 2, 8>}, {transform_indices = @transform_1, window_bounds = array<i64: 8, 1024>}, {transform_indices = @transform_2, window_bounds = array<i64: 2, 1024>}]} {
    %c0 = arith.constant 0 : index
    %c0_0 = arith.constant 0 : index
    %0 = vector.load %arg2[%c0, %c0_0] : memref<2x8xbf16, #tpu.memory_space<vmem>>, vector<2x8xbf16>
    %c0_1 = arith.constant 0 : index
    %c0_2 = arith.constant 0 : index
    %1 = vector.load %arg3[%c0_1, %c0_2] : memref<8x1024xbf16, #tpu.memory_space<vmem>>, vector<8x1024xbf16>
    %cst = arith.constant dense<0.000000e+00> : vector<2x1024xf32>
    %2 = tpu.matmul %0, %1, %cst {dimension_numbers = #tpu.dot_dimension_numbers<[1], [0], [0], [1], [0, 0, 1, 1], [], []>} : vector<2x8xbf16>, vector<8x1024xbf16>, vector<2x1024xf32> -> vector<2x1024xf32>
    %3 = arith.truncf %2 : vector<2x1024xf32> to vector<2x1024xbf16>
    %c0_3 = arith.constant 0 : index
    %c0_4 = arith.constant 0 : index
    %4 = vector.load %arg4[%c0_3, %c0_4] : memref<2x1024xbf16, #tpu.memory_space<vmem>>, vector<2x1024xbf16>
    tpu.vector_store %arg4[%c0_3, %c0_4], %3 {strides = array<i32>} : memref<2x1024xbf16, #tpu.memory_space<vmem>>, vector<2x1024xbf16>,
    return
  }
  func.func @transform_0(%arg0: i32, %arg1: i32) -> (i32, i32) {
    %c0_i32 = arith.constant 0 : i32
    %c0_i32_0 = arith.constant 0 : i32
    return %arg0, %c0_i32 : i32, i32
  }
  func.func @transform_1(%arg0: i32, %arg1: i32) -> (i32, i32) {
    %c0_i32 = arith.constant 0 : i32
    %c0_i32_0 = arith.constant 0 : i32
    return %c0_i32, %arg1 : i32, i32
  }
  func.func @transform_2(%arg0: i32, %arg1: i32) -> (i32, i32) {
    %c0_i32 = arith.constant 0 : i32
    return %arg0, %arg1 : i32, i32
  }
}

module attributes {stable_mosaic.version = 11 : i64} {
  func.func @_bn_sums_kernel(%arg0: i32, %arg1: memref<32x64xbf16, #tpu.memory_space<vmem>>, %arg2: memref<1x2x64xf32, #tpu.memory_space<vmem>>) attributes {dimension_semantics = [#tpu.dimension_semantics<parallel>], iteration_bounds = array<i64: 1>, scalar_prefetch = 0 : i64, scratch_operands = 0 : i64, tpu.core_type = #tpu.core_type<tc>, window_params = [{transform_indices = @transform_0, window_bounds = array<i64: 32, 64>}, {transform_indices = @transform_1, window_bounds = array<i64: 1, 2, 64>}]} {
    %c0 = arith.constant 0 : index
    %c0_0 = arith.constant 0 : index
    %0 = vector.load %arg1[%c0, %c0_0] : memref<32x64xbf16, #tpu.memory_space<vmem>>, vector<32x64xbf16>
    %1 = arith.extf %0 : vector<32x64xbf16> to vector<32x64xf32>
    %cst = arith.constant dense<0.000000e+00> : vector<64xf32>
    %2 = vector.multi_reduction <add>, %1, %cst [0] : vector<32x64xf32> to vector<64xf32>
    %3 = arith.mulf %1, %1 : vector<32x64xf32>
    %cst_1 = arith.constant dense<0.000000e+00> : vector<64xf32>
    %4 = vector.multi_reduction <add>, %3, %cst_1 [0] : vector<32x64xf32> to vector<64xf32>
    %5 = vector.shape_cast %2 : vector<64xf32> to vector<1x64xf32>
    %6 = vector.shape_cast %4 : vector<64xf32> to vector<1x64xf32>
    %7 = tpu.concatenate %5, %6 in 0 : vector<1x64xf32>, vector<1x64xf32> -> vector<2x64xf32>
    %8 = vector.shape_cast %7 : vector<2x64xf32> to vector<1x2x64xf32>
    %c0_2 = arith.constant 0 : index
    %c0_3 = arith.constant 0 : index
    %c0_4 = arith.constant 0 : index
    %9 = vector.load %arg2[%c0_2, %c0_3, %c0_4] : memref<1x2x64xf32, #tpu.memory_space<vmem>>, vector<1x2x64xf32>
    tpu.vector_store %arg2[%c0_2, %c0_3, %c0_4], %8 {strides = array<i32>} : memref<1x2x64xf32, #tpu.memory_space<vmem>>, vector<1x2x64xf32>,
    return
  }
  func.func @transform_0(%arg0: i32) -> (i32, i32) {
    %c0_i32 = arith.constant 0 : i32
    %c0_i32_0 = arith.constant 0 : i32
    return %arg0, %c0_i32 : i32, i32
  }
  func.func @transform_1(%arg0: i32) -> (i32, i32, i32) {
    %c0_i32 = arith.constant 0 : i32
    %c0_i32_0 = arith.constant 0 : i32
    %c0_i32_1 = arith.constant 0 : i32
    return %arg0, %c0_i32, %c0_i32_0 : i32, i32, i32
  }
}

module attributes {stable_mosaic.version = 11 : i64} {
  func.func @_bn_affine_relu_kernel(%arg0: i32, %arg1: memref<32x64xbf16, #tpu.memory_space<vmem>>, %arg2: memref<1x64xf32, #tpu.memory_space<vmem>>, %arg3: memref<1x64xf32, #tpu.memory_space<vmem>>, %arg4: memref<32x64xbf16, #tpu.memory_space<vmem>>) attributes {dimension_semantics = [#tpu.dimension_semantics<parallel>], iteration_bounds = array<i64: 1>, scalar_prefetch = 0 : i64, scratch_operands = 0 : i64, tpu.core_type = #tpu.core_type<tc>, window_params = [{transform_indices = @transform_0, window_bounds = array<i64: 32, 64>}, {pipeline_mode = #tpu.pipeline_mode<synchronous>, transform_indices = @transform_1, window_bounds = array<i64: 1, 64>}, {pipeline_mode = #tpu.pipeline_mode<synchronous>, transform_indices = @transform_2, window_bounds = array<i64: 1, 64>}, {transform_indices = @transform_3, window_bounds = array<i64: 32, 64>}]} {
    %c0 = arith.constant 0 : index
    %c0_0 = arith.constant 0 : index
    %0 = vector.load %arg1[%c0, %c0_0] : memref<32x64xbf16, #tpu.memory_space<vmem>>, vector<32x64xbf16>
    %1 = arith.extf %0 : vector<32x64xbf16> to vector<32x64xf32>
    %c0_1 = arith.constant 0 : index
    %c0_2 = arith.constant 0 : index
    %2 = vector.load %arg2[%c0_1, %c0_2] : memref<1x64xf32, #tpu.memory_space<vmem>>, vector<1x64xf32>
    %3 = vector.broadcast %2 : vector<1x64xf32> to vector<32x64xf32>
    %4 = arith.mulf %1, %3 : vector<32x64xf32>
    %c0_3 = arith.constant 0 : index
    %c0_4 = arith.constant 0 : index
    %5 = vector.load %arg3[%c0_3, %c0_4] : memref<1x64xf32, #tpu.memory_space<vmem>>, vector<1x64xf32>
    %6 = vector.broadcast %5 : vector<1x64xf32> to vector<32x64xf32>
    %7 = arith.addf %4, %6 : vector<32x64xf32>
    %cst = arith.constant 0.000000e+00 : f32
    %8 = vector.broadcast %cst : f32 to vector<32x64xf32>
    %9 = arith.maximumf %7, %8 : vector<32x64xf32>
    %10 = arith.truncf %9 : vector<32x64xf32> to vector<32x64xbf16>
    %c0_5 = arith.constant 0 : index
    %c0_6 = arith.constant 0 : index
    %11 = vector.load %arg4[%c0_5, %c0_6] : memref<32x64xbf16, #tpu.memory_space<vmem>>, vector<32x64xbf16>
    tpu.vector_store %arg4[%c0_5, %c0_6], %10 {strides = array<i32>} : memref<32x64xbf16, #tpu.memory_space<vmem>>, vector<32x64xbf16>,
    return
  }
  func.func @transform_0(%arg0: i32) -> (i32, i32) {
    %c0_i32 = arith.constant 0 : i32
    %c0_i32_0 = arith.constant 0 : i32
    return %arg0, %c0_i32 : i32, i32
  }
  func.func @transform_1(%arg0: i32) -> (i32, i32) {
    %c0_i32 = arith.constant 0 : i32
    %c0_i32_0 = arith.constant 0 : i32
    %c0_i32_1 = arith.constant 0 : i32
    return %c0_i32, %c0_i32_0 : i32, i32
  }
  func.func @transform_2(%arg0: i32) -> (i32, i32) {
    %c0_i32 = arith.constant 0 : i32
    %c0_i32_0 = arith.constant 0 : i32
    %c0_i32_1 = arith.constant 0 : i32
    return %c0_i32, %c0_i32_0 : i32, i32
  }
  func.func @transform_3(%arg0: i32) -> (i32, i32) {
    %c0_i32 = arith.constant 0 : i32
    %c0_i32_0 = arith.constant 0 : i32
    return %arg0, %c0_i32 : i32, i32
  }
}

module attributes {stable_mosaic.version = 11 : i64} {
  func.func @_matmul_kernel_single_k(%arg0: i32, %arg1: i32, %arg2: memref<50x256xbf16, #tpu.memory_space<vmem>>, %arg3: memref<256x128xbf16, #tpu.memory_space<vmem>>, %arg4: memref<50x128xbf16, #tpu.memory_space<vmem>>) attributes {dimension_semantics = [#tpu.dimension_semantics<parallel>, #tpu.dimension_semantics<parallel>], iteration_bounds = array<i64: 1, 1>, scalar_prefetch = 0 : i64, scratch_operands = 0 : i64, tpu.core_type = #tpu.core_type<tc>, window_params = [{transform_indices = @transform_0, window_bounds = array<i64: 50, 256>}, {transform_indices = @transform_1, window_bounds = array<i64: 256, 128>}, {transform_indices = @transform_2, window_bounds = array<i64: 50, 128>}]} {
    %c0 = arith.constant 0 : index
    %c0_0 = arith.constant 0 : index
    %0 = vector.load %arg2[%c0, %c0_0] : memref<50x256xbf16, #tpu.memory_space<vmem>>, vector<50x256xbf16>
    %c0_1 = arith.constant 0 : index
    %c0_2 = arith.constant 0 : index
    %1 = vector.load %arg3[%c0_1, %c0_2] : memref<256x128xbf16, #tpu.memory_space<vmem>>, vector<256x128xbf16>
    %cst = arith.constant dense<0.000000e+00> : vector<50x128xf32>
    %2 = tpu.matmul %0, %1, %cst {dimension_numbers = #tpu.dot_dimension_numbers<[1], [0], [0], [1], [0, 0, 1, 1], [], []>} : vector<50x256xbf16>, vector<256x128xbf16>, vector<50x128xf32> -> vector<50x128xf32>
    %3 = arith.truncf %2 : vector<50x128xf32> to vector<50x128xbf16>
    %c0_3 = arith.constant 0 : index
    %c0_4 = arith.constant 0 : index
    %4 = vector.load %arg4[%c0_3, %c0_4] : memref<50x128xbf16, #tpu.memory_space<vmem>>, vector<50x128xbf16>
    tpu.vector_store %arg4[%c0_3, %c0_4], %3 {strides = array<i32>} : memref<50x128xbf16, #tpu.memory_space<vmem>>, vector<50x128xbf16>,
    return
  }
  func.func @transform_0(%arg0: i32, %arg1: i32) -> (i32, i32) {
    %c0_i32 = arith.constant 0 : i32
    %c0_i32_0 = arith.constant 0 : i32
    return %arg0, %c0_i32 : i32, i32
  }
  func.func @transform_1(%arg0: i32, %arg1: i32) -> (i32, i32) {
    %c0_i32 = arith.constant 0 : i32
    %c0_i32_0 = arith.constant 0 : i32
    return %c0_i32, %arg1 : i32, i32
  }
  func.func @transform_2(%arg0: i32, %arg1: i32) -> (i32, i32) {
    %c0_i32 = arith.constant 0 : i32
    return %arg0, %arg1 : i32, i32
  }
}

module attributes {stable_mosaic.version = 11 : i64} {
  func.func @_bn_sums_kernel(%arg0: i32, %arg1: memref<128x32xbf16, #tpu.memory_space<vmem>>, %arg2: memref<1x2x32xf32, #tpu.memory_space<vmem>>) attributes {dimension_semantics = [#tpu.dimension_semantics<parallel>], iteration_bounds = array<i64: 1>, scalar_prefetch = 0 : i64, scratch_operands = 0 : i64, tpu.core_type = #tpu.core_type<tc>, window_params = [{transform_indices = @transform_0, window_bounds = array<i64: 128, 32>}, {transform_indices = @transform_1, window_bounds = array<i64: 1, 2, 32>}]} {
    %c0 = arith.constant 0 : index
    %c0_0 = arith.constant 0 : index
    %0 = vector.load %arg1[%c0, %c0_0] : memref<128x32xbf16, #tpu.memory_space<vmem>>, vector<128x32xbf16>
    %1 = arith.extf %0 : vector<128x32xbf16> to vector<128x32xf32>
    %cst = arith.constant dense<0.000000e+00> : vector<32xf32>
    %2 = vector.multi_reduction <add>, %1, %cst [0] : vector<128x32xf32> to vector<32xf32>
    %3 = arith.mulf %1, %1 : vector<128x32xf32>
    %cst_1 = arith.constant dense<0.000000e+00> : vector<32xf32>
    %4 = vector.multi_reduction <add>, %3, %cst_1 [0] : vector<128x32xf32> to vector<32xf32>
    %5 = vector.shape_cast %2 : vector<32xf32> to vector<1x32xf32>
    %6 = vector.shape_cast %4 : vector<32xf32> to vector<1x32xf32>
    %7 = tpu.concatenate %5, %6 in 0 : vector<1x32xf32>, vector<1x32xf32> -> vector<2x32xf32>
    %8 = vector.shape_cast %7 : vector<2x32xf32> to vector<1x2x32xf32>
    %c0_2 = arith.constant 0 : index
    %c0_3 = arith.constant 0 : index
    %c0_4 = arith.constant 0 : index
    %9 = vector.load %arg2[%c0_2, %c0_3, %c0_4] : memref<1x2x32xf32, #tpu.memory_space<vmem>>, vector<1x2x32xf32>
    tpu.vector_store %arg2[%c0_2, %c0_3, %c0_4], %8 {strides = array<i32>} : memref<1x2x32xf32, #tpu.memory_space<vmem>>, vector<1x2x32xf32>,
    return
  }
  func.func @transform_0(%arg0: i32) -> (i32, i32) {
    %c0_i32 = arith.constant 0 : i32
    %c0_i32_0 = arith.constant 0 : i32
    return %arg0, %c0_i32 : i32, i32
  }
  func.func @transform_1(%arg0: i32) -> (i32, i32, i32) {
    %c0_i32 = arith.constant 0 : i32
    %c0_i32_0 = arith.constant 0 : i32
    %c0_i32_1 = arith.constant 0 : i32
    return %arg0, %c0_i32, %c0_i32_0 : i32, i32, i32
  }
}

module attributes {stable_mosaic.version = 11 : i64} {
  func.func @_bn_affine_relu_kernel(%arg0: i32, %arg1: memref<128x32xbf16, #tpu.memory_space<vmem>>, %arg2: memref<1x32xf32, #tpu.memory_space<vmem>>, %arg3: memref<1x32xf32, #tpu.memory_space<vmem>>, %arg4: memref<128x32xbf16, #tpu.memory_space<vmem>>) attributes {dimension_semantics = [#tpu.dimension_semantics<parallel>], iteration_bounds = array<i64: 1>, scalar_prefetch = 0 : i64, scratch_operands = 0 : i64, tpu.core_type = #tpu.core_type<tc>, window_params = [{transform_indices = @transform_0, window_bounds = array<i64: 128, 32>}, {pipeline_mode = #tpu.pipeline_mode<synchronous>, transform_indices = @transform_1, window_bounds = array<i64: 1, 32>}, {pipeline_mode = #tpu.pipeline_mode<synchronous>, transform_indices = @transform_2, window_bounds = array<i64: 1, 32>}, {transform_indices = @transform_3, window_bounds = array<i64: 128, 32>}]} {
    %c0 = arith.constant 0 : index
    %c0_0 = arith.constant 0 : index
    %0 = vector.load %arg1[%c0, %c0_0] : memref<128x32xbf16, #tpu.memory_space<vmem>>, vector<128x32xbf16>
    %1 = arith.extf %0 : vector<128x32xbf16> to vector<128x32xf32>
    %c0_1 = arith.constant 0 : index
    %c0_2 = arith.constant 0 : index
    %2 = vector.load %arg2[%c0_1, %c0_2] : memref<1x32xf32, #tpu.memory_space<vmem>>, vector<1x32xf32>
    %3 = vector.broadcast %2 : vector<1x32xf32> to vector<128x32xf32>
    %4 = arith.mulf %1, %3 : vector<128x32xf32>
    %c0_3 = arith.constant 0 : index
    %c0_4 = arith.constant 0 : index
    %5 = vector.load %arg3[%c0_3, %c0_4] : memref<1x32xf32, #tpu.memory_space<vmem>>, vector<1x32xf32>
    %6 = vector.broadcast %5 : vector<1x32xf32> to vector<128x32xf32>
    %7 = arith.addf %4, %6 : vector<128x32xf32>
    %cst = arith.constant 0.000000e+00 : f32
    %8 = vector.broadcast %cst : f32 to vector<128x32xf32>
    %9 = arith.maximumf %7, %8 : vector<128x32xf32>
    %10 = arith.truncf %9 : vector<128x32xf32> to vector<128x32xbf16>
    %c0_5 = arith.constant 0 : index
    %c0_6 = arith.constant 0 : index
    %11 = vector.load %arg4[%c0_5, %c0_6] : memref<128x32xbf16, #tpu.memory_space<vmem>>, vector<128x32xbf16>
    tpu.vector_store %arg4[%c0_5, %c0_6], %10 {strides = array<i32>} : memref<128x32xbf16, #tpu.memory_space<vmem>>, vector<128x32xbf16>,
    return
  }
  func.func @transform_0(%arg0: i32) -> (i32, i32) {
    %c0_i32 = arith.constant 0 : i32
    %c0_i32_0 = arith.constant 0 : i32
    return %arg0, %c0_i32 : i32, i32
  }
  func.func @transform_1(%arg0: i32) -> (i32, i32) {
    %c0_i32 = arith.constant 0 : i32
    %c0_i32_0 = arith.constant 0 : i32
    %c0_i32_1 = arith.constant 0 : i32
    return %c0_i32, %c0_i32_0 : i32, i32
  }
  func.func @transform_2(%arg0: i32) -> (i32, i32) {
    %c0_i32 = arith.constant 0 : i32
    %c0_i32_0 = arith.constant 0 : i32
    %c0_i32_1 = arith.constant 0 : i32
    return %c0_i32, %c0_i32_0 : i32, i32
  }
  func.func @transform_3(%arg0: i32) -> (i32, i32) {
    %c0_i32 = arith.constant 0 : i32
    %c0_i32_0 = arith.constant 0 : i32
    return %arg0, %c0_i32 : i32, i32
  }
}

module attributes {stable_mosaic.version = 11 : i64} {
  func.func @_matmul_kernel_single_k(%arg0: i32, %arg1: i32, %arg2: memref<162x128xbf16, #tpu.memory_space<vmem>>, %arg3: memref<128x64xbf16, #tpu.memory_space<vmem>>, %arg4: memref<162x64xbf16, #tpu.memory_space<vmem>>) attributes {dimension_semantics = [#tpu.dimension_semantics<parallel>, #tpu.dimension_semantics<parallel>], iteration_bounds = array<i64: 1, 1>, scalar_prefetch = 0 : i64, scratch_operands = 0 : i64, tpu.core_type = #tpu.core_type<tc>, window_params = [{transform_indices = @transform_0, window_bounds = array<i64: 162, 128>}, {transform_indices = @transform_1, window_bounds = array<i64: 128, 64>}, {transform_indices = @transform_2, window_bounds = array<i64: 162, 64>}]} {
    %c0 = arith.constant 0 : index
    %c0_0 = arith.constant 0 : index
    %0 = vector.load %arg2[%c0, %c0_0] : memref<162x128xbf16, #tpu.memory_space<vmem>>, vector<162x128xbf16>
    %c0_1 = arith.constant 0 : index
    %c0_2 = arith.constant 0 : index
    %1 = vector.load %arg3[%c0_1, %c0_2] : memref<128x64xbf16, #tpu.memory_space<vmem>>, vector<128x64xbf16>
    %cst = arith.constant dense<0.000000e+00> : vector<162x64xf32>
    %2 = tpu.matmul %0, %1, %cst {dimension_numbers = #tpu.dot_dimension_numbers<[1], [0], [0], [1], [0, 0, 1, 1], [], []>} : vector<162x128xbf16>, vector<128x64xbf16>, vector<162x64xf32> -> vector<162x64xf32>
    %3 = arith.truncf %2 : vector<162x64xf32> to vector<162x64xbf16>
    %c0_3 = arith.constant 0 : index
    %c0_4 = arith.constant 0 : index
    %4 = vector.load %arg4[%c0_3, %c0_4] : memref<162x64xbf16, #tpu.memory_space<vmem>>, vector<162x64xbf16>
    tpu.vector_store %arg4[%c0_3, %c0_4], %3 {strides = array<i32>} : memref<162x64xbf16, #tpu.memory_space<vmem>>, vector<162x64xbf16>,
    return
  }
  func.func @transform_0(%arg0: i32, %arg1: i32) -> (i32, i32) {
    %c0_i32 = arith.constant 0 : i32
    %c0_i32_0 = arith.constant 0 : i32
    return %arg0, %c0_i32 : i32, i32
  }
  func.func @transform_1(%arg0: i32, %arg1: i32) -> (i32, i32) {
    %c0_i32 = arith.constant 0 : i32
    %c0_i32_0 = arith.constant 0 : i32
    return %c0_i32, %arg1 : i32, i32
  }
  func.func @transform_2(%arg0: i32, %arg1: i32) -> (i32, i32) {
    %c0_i32 = arith.constant 0 : i32
    return %arg0, %arg1 : i32, i32
  }
}

module attributes {stable_mosaic.version = 11 : i64} {
  func.func @_bn_sums_kernel(%arg0: i32, %arg1: memref<512x16xbf16, #tpu.memory_space<vmem>>, %arg2: memref<1x2x16xf32, #tpu.memory_space<vmem>>) attributes {dimension_semantics = [#tpu.dimension_semantics<parallel>], iteration_bounds = array<i64: 1>, scalar_prefetch = 0 : i64, scratch_operands = 0 : i64, tpu.core_type = #tpu.core_type<tc>, window_params = [{transform_indices = @transform_0, window_bounds = array<i64: 512, 16>}, {transform_indices = @transform_1, window_bounds = array<i64: 1, 2, 16>}]} {
    %c0 = arith.constant 0 : index
    %c0_0 = arith.constant 0 : index
    %0 = vector.load %arg1[%c0, %c0_0] : memref<512x16xbf16, #tpu.memory_space<vmem>>, vector<512x16xbf16>
    %1 = arith.extf %0 : vector<512x16xbf16> to vector<512x16xf32>
    %cst = arith.constant dense<0.000000e+00> : vector<16xf32>
    %2 = vector.multi_reduction <add>, %1, %cst [0] : vector<512x16xf32> to vector<16xf32>
    %3 = arith.mulf %1, %1 : vector<512x16xf32>
    %cst_1 = arith.constant dense<0.000000e+00> : vector<16xf32>
    %4 = vector.multi_reduction <add>, %3, %cst_1 [0] : vector<512x16xf32> to vector<16xf32>
    %5 = vector.shape_cast %2 : vector<16xf32> to vector<1x16xf32>
    %6 = vector.shape_cast %4 : vector<16xf32> to vector<1x16xf32>
    %7 = tpu.concatenate %5, %6 in 0 : vector<1x16xf32>, vector<1x16xf32> -> vector<2x16xf32>
    %8 = vector.shape_cast %7 : vector<2x16xf32> to vector<1x2x16xf32>
    %c0_2 = arith.constant 0 : index
    %c0_3 = arith.constant 0 : index
    %c0_4 = arith.constant 0 : index
    %9 = vector.load %arg2[%c0_2, %c0_3, %c0_4] : memref<1x2x16xf32, #tpu.memory_space<vmem>>, vector<1x2x16xf32>
    tpu.vector_store %arg2[%c0_2, %c0_3, %c0_4], %8 {strides = array<i32>} : memref<1x2x16xf32, #tpu.memory_space<vmem>>, vector<1x2x16xf32>,
    return
  }
  func.func @transform_0(%arg0: i32) -> (i32, i32) {
    %c0_i32 = arith.constant 0 : i32
    %c0_i32_0 = arith.constant 0 : i32
    return %arg0, %c0_i32 : i32, i32
  }
  func.func @transform_1(%arg0: i32) -> (i32, i32, i32) {
    %c0_i32 = arith.constant 0 : i32
    %c0_i32_0 = arith.constant 0 : i32
    %c0_i32_1 = arith.constant 0 : i32
    return %arg0, %c0_i32, %c0_i32_0 : i32, i32, i32
  }
}

module attributes {stable_mosaic.version = 11 : i64} {
  func.func @_bn_affine_relu_kernel(%arg0: i32, %arg1: memref<512x16xbf16, #tpu.memory_space<vmem>>, %arg2: memref<1x16xf32, #tpu.memory_space<vmem>>, %arg3: memref<1x16xf32, #tpu.memory_space<vmem>>, %arg4: memref<512x16xbf16, #tpu.memory_space<vmem>>) attributes {dimension_semantics = [#tpu.dimension_semantics<parallel>], iteration_bounds = array<i64: 1>, scalar_prefetch = 0 : i64, scratch_operands = 0 : i64, tpu.core_type = #tpu.core_type<tc>, window_params = [{transform_indices = @transform_0, window_bounds = array<i64: 512, 16>}, {pipeline_mode = #tpu.pipeline_mode<synchronous>, transform_indices = @transform_1, window_bounds = array<i64: 1, 16>}, {pipeline_mode = #tpu.pipeline_mode<synchronous>, transform_indices = @transform_2, window_bounds = array<i64: 1, 16>}, {transform_indices = @transform_3, window_bounds = array<i64: 512, 16>}]} {
    %c0 = arith.constant 0 : index
    %c0_0 = arith.constant 0 : index
    %0 = vector.load %arg1[%c0, %c0_0] : memref<512x16xbf16, #tpu.memory_space<vmem>>, vector<512x16xbf16>
    %1 = arith.extf %0 : vector<512x16xbf16> to vector<512x16xf32>
    %c0_1 = arith.constant 0 : index
    %c0_2 = arith.constant 0 : index
    %2 = vector.load %arg2[%c0_1, %c0_2] : memref<1x16xf32, #tpu.memory_space<vmem>>, vector<1x16xf32>
    %3 = vector.broadcast %2 : vector<1x16xf32> to vector<512x16xf32>
    %4 = arith.mulf %1, %3 : vector<512x16xf32>
    %c0_3 = arith.constant 0 : index
    %c0_4 = arith.constant 0 : index
    %5 = vector.load %arg3[%c0_3, %c0_4] : memref<1x16xf32, #tpu.memory_space<vmem>>, vector<1x16xf32>
    %6 = vector.broadcast %5 : vector<1x16xf32> to vector<512x16xf32>
    %7 = arith.addf %4, %6 : vector<512x16xf32>
    %cst = arith.constant 0.000000e+00 : f32
    %8 = vector.broadcast %cst : f32 to vector<512x16xf32>
    %9 = arith.maximumf %7, %8 : vector<512x16xf32>
    %10 = arith.truncf %9 : vector<512x16xf32> to vector<512x16xbf16>
    %c0_5 = arith.constant 0 : index
    %c0_6 = arith.constant 0 : index
    %11 = vector.load %arg4[%c0_5, %c0_6] : memref<512x16xbf16, #tpu.memory_space<vmem>>, vector<512x16xbf16>
    tpu.vector_store %arg4[%c0_5, %c0_6], %10 {strides = array<i32>} : memref<512x16xbf16, #tpu.memory_space<vmem>>, vector<512x16xbf16>,
    return
  }
  func.func @transform_0(%arg0: i32) -> (i32, i32) {
    %c0_i32 = arith.constant 0 : i32
    %c0_i32_0 = arith.constant 0 : i32
    return %arg0, %c0_i32 : i32, i32
  }
  func.func @transform_1(%arg0: i32) -> (i32, i32) {
    %c0_i32 = arith.constant 0 : i32
    %c0_i32_0 = arith.constant 0 : i32
    %c0_i32_1 = arith.constant 0 : i32
    return %c0_i32, %c0_i32_0 : i32, i32
  }
  func.func @transform_2(%arg0: i32) -> (i32, i32) {
    %c0_i32 = arith.constant 0 : i32
    %c0_i32_0 = arith.constant 0 : i32
    %c0_i32_1 = arith.constant 0 : i32
    return %c0_i32, %c0_i32_0 : i32, i32
  }
  func.func @transform_3(%arg0: i32) -> (i32, i32) {
    %c0_i32 = arith.constant 0 : i32
    %c0_i32_0 = arith.constant 0 : i32
    return %arg0, %c0_i32 : i32, i32
  }
}

module attributes {stable_mosaic.version = 11 : i64} {
  func.func @_matmul_kernel_single_k(%arg0: i32, %arg1: i32, %arg2: memref<578x64xbf16, #tpu.memory_space<vmem>>, %arg3: memref<64x32xbf16, #tpu.memory_space<vmem>>, %arg4: memref<578x32xbf16, #tpu.memory_space<vmem>>) attributes {dimension_semantics = [#tpu.dimension_semantics<parallel>, #tpu.dimension_semantics<parallel>], iteration_bounds = array<i64: 1, 1>, scalar_prefetch = 0 : i64, scratch_operands = 0 : i64, tpu.core_type = #tpu.core_type<tc>, window_params = [{transform_indices = @transform_0, window_bounds = array<i64: 578, 64>}, {transform_indices = @transform_1, window_bounds = array<i64: 64, 32>}, {transform_indices = @transform_2, window_bounds = array<i64: 578, 32>}]} {
    %c0 = arith.constant 0 : index
    %c0_0 = arith.constant 0 : index
    %0 = vector.load %arg2[%c0, %c0_0] : memref<578x64xbf16, #tpu.memory_space<vmem>>, vector<578x64xbf16>
    %c0_1 = arith.constant 0 : index
    %c0_2 = arith.constant 0 : index
    %1 = vector.load %arg3[%c0_1, %c0_2] : memref<64x32xbf16, #tpu.memory_space<vmem>>, vector<64x32xbf16>
    %cst = arith.constant dense<0.000000e+00> : vector<578x32xf32>
    %2 = tpu.matmul %0, %1, %cst {dimension_numbers = #tpu.dot_dimension_numbers<[1], [0], [0], [1], [0, 0, 1, 1], [], []>} : vector<578x64xbf16>, vector<64x32xbf16>, vector<578x32xf32> -> vector<578x32xf32>
    %3 = arith.truncf %2 : vector<578x32xf32> to vector<578x32xbf16>
    %c0_3 = arith.constant 0 : index
    %c0_4 = arith.constant 0 : index
    %4 = vector.load %arg4[%c0_3, %c0_4] : memref<578x32xbf16, #tpu.memory_space<vmem>>, vector<578x32xbf16>
    tpu.vector_store %arg4[%c0_3, %c0_4], %3 {strides = array<i32>} : memref<578x32xbf16, #tpu.memory_space<vmem>>, vector<578x32xbf16>,
    return
  }
  func.func @transform_0(%arg0: i32, %arg1: i32) -> (i32, i32) {
    %c0_i32 = arith.constant 0 : i32
    %c0_i32_0 = arith.constant 0 : i32
    return %arg0, %c0_i32 : i32, i32
  }
  func.func @transform_1(%arg0: i32, %arg1: i32) -> (i32, i32) {
    %c0_i32 = arith.constant 0 : i32
    %c0_i32_0 = arith.constant 0 : i32
    return %c0_i32, %arg1 : i32, i32
  }
  func.func @transform_2(%arg0: i32, %arg1: i32) -> (i32, i32) {
    %c0_i32 = arith.constant 0 : i32
    return %arg0, %arg1 : i32, i32
  }
}

module attributes {stable_mosaic.version = 11 : i64} {
  func.func @_bn_sums_kernel(%arg0: i32, %arg1: memref<1024x8xbf16, #tpu.memory_space<vmem>>, %arg2: memref<1x2x8xf32, #tpu.memory_space<vmem>>) attributes {dimension_semantics = [#tpu.dimension_semantics<parallel>], iteration_bounds = array<i64: 2>, scalar_prefetch = 0 : i64, scratch_operands = 0 : i64, tpu.core_type = #tpu.core_type<tc>, window_params = [{transform_indices = @transform_0, window_bounds = array<i64: 1024, 8>}, {transform_indices = @transform_1, window_bounds = array<i64: 1, 2, 8>}]} {
    %c0 = arith.constant 0 : index
    %c0_0 = arith.constant 0 : index
    %0 = vector.load %arg1[%c0, %c0_0] : memref<1024x8xbf16, #tpu.memory_space<vmem>>, vector<1024x8xbf16>
    %1 = arith.extf %0 : vector<1024x8xbf16> to vector<1024x8xf32>
    %cst = arith.constant dense<0.000000e+00> : vector<8xf32>
    %2 = vector.multi_reduction <add>, %1, %cst [0] : vector<1024x8xf32> to vector<8xf32>
    %3 = arith.mulf %1, %1 : vector<1024x8xf32>
    %cst_1 = arith.constant dense<0.000000e+00> : vector<8xf32>
    %4 = vector.multi_reduction <add>, %3, %cst_1 [0] : vector<1024x8xf32> to vector<8xf32>
    %5 = vector.shape_cast %2 : vector<8xf32> to vector<1x8xf32>
    %6 = vector.shape_cast %4 : vector<8xf32> to vector<1x8xf32>
    %7 = tpu.concatenate %5, %6 in 0 : vector<1x8xf32>, vector<1x8xf32> -> vector<2x8xf32>
    %8 = vector.shape_cast %7 : vector<2x8xf32> to vector<1x2x8xf32>
    %c0_2 = arith.constant 0 : index
    %c0_3 = arith.constant 0 : index
    %c0_4 = arith.constant 0 : index
    %9 = vector.load %arg2[%c0_2, %c0_3, %c0_4] : memref<1x2x8xf32, #tpu.memory_space<vmem>>, vector<1x2x8xf32>
    tpu.vector_store %arg2[%c0_2, %c0_3, %c0_4], %8 {strides = array<i32>} : memref<1x2x8xf32, #tpu.memory_space<vmem>>, vector<1x2x8xf32>,
    return
  }
  func.func @transform_0(%arg0: i32) -> (i32, i32) {
    %c0_i32 = arith.constant 0 : i32
    %c0_i32_0 = arith.constant 0 : i32
    return %arg0, %c0_i32 : i32, i32
  }
  func.func @transform_1(%arg0: i32) -> (i32, i32, i32) {
    %c0_i32 = arith.constant 0 : i32
    %c0_i32_0 = arith.constant 0 : i32
    %c0_i32_1 = arith.constant 0 : i32
    return %arg0, %c0_i32, %c0_i32_0 : i32, i32, i32
  }
}

module attributes {stable_mosaic.version = 11 : i64} {
  func.func @_bn_affine_relu_kernel(%arg0: i32, %arg1: memref<1024x8xbf16, #tpu.memory_space<vmem>>, %arg2: memref<1x8xf32, #tpu.memory_space<vmem>>, %arg3: memref<1x8xf32, #tpu.memory_space<vmem>>, %arg4: memref<1024x8xbf16, #tpu.memory_space<vmem>>) attributes {dimension_semantics = [#tpu.dimension_semantics<parallel>], iteration_bounds = array<i64: 2>, scalar_prefetch = 0 : i64, scratch_operands = 0 : i64, tpu.core_type = #tpu.core_type<tc>, window_params = [{transform_indices = @transform_0, window_bounds = array<i64: 1024, 8>}, {pipeline_mode = #tpu.pipeline_mode<synchronous>, transform_indices = @transform_1, window_bounds = array<i64: 1, 8>}, {pipeline_mode = #tpu.pipeline_mode<synchronous>, transform_indices = @transform_2, window_bounds = array<i64: 1, 8>}, {transform_indices = @transform_3, window_bounds = array<i64: 1024, 8>}]} {
    %c0 = arith.constant 0 : index
    %c0_0 = arith.constant 0 : index
    %0 = vector.load %arg1[%c0, %c0_0] : memref<1024x8xbf16, #tpu.memory_space<vmem>>, vector<1024x8xbf16>
    %1 = arith.extf %0 : vector<1024x8xbf16> to vector<1024x8xf32>
    %c0_1 = arith.constant 0 : index
    %c0_2 = arith.constant 0 : index
    %2 = vector.load %arg2[%c0_1, %c0_2] : memref<1x8xf32, #tpu.memory_space<vmem>>, vector<1x8xf32>
    %3 = vector.broadcast %2 : vector<1x8xf32> to vector<1024x8xf32>
    %4 = arith.mulf %1, %3 : vector<1024x8xf32>
    %c0_3 = arith.constant 0 : index
    %c0_4 = arith.constant 0 : index
    %5 = vector.load %arg3[%c0_3, %c0_4] : memref<1x8xf32, #tpu.memory_space<vmem>>, vector<1x8xf32>
    %6 = vector.broadcast %5 : vector<1x8xf32> to vector<1024x8xf32>
    %7 = arith.addf %4, %6 : vector<1024x8xf32>
    %cst = arith.constant 0.000000e+00 : f32
    %8 = vector.broadcast %cst : f32 to vector<1024x8xf32>
    %9 = arith.maximumf %7, %8 : vector<1024x8xf32>
    %10 = arith.truncf %9 : vector<1024x8xf32> to vector<1024x8xbf16>
    %c0_5 = arith.constant 0 : index
    %c0_6 = arith.constant 0 : index
    %11 = vector.load %arg4[%c0_5, %c0_6] : memref<1024x8xbf16, #tpu.memory_space<vmem>>, vector<1024x8xbf16>
    tpu.vector_store %arg4[%c0_5, %c0_6], %10 {strides = array<i32>} : memref<1024x8xbf16, #tpu.memory_space<vmem>>, vector<1024x8xbf16>,
    return
  }
  func.func @transform_0(%arg0: i32) -> (i32, i32) {
    %c0_i32 = arith.constant 0 : i32
    %c0_i32_0 = arith.constant 0 : i32
    return %arg0, %c0_i32 : i32, i32
  }
  func.func @transform_1(%arg0: i32) -> (i32, i32) {
    %c0_i32 = arith.constant 0 : i32
    %c0_i32_0 = arith.constant 0 : i32
    %c0_i32_1 = arith.constant 0 : i32
    return %c0_i32, %c0_i32_0 : i32, i32
  }
  func.func @transform_2(%arg0: i32) -> (i32, i32) {
    %c0_i32 = arith.constant 0 : i32
    %c0_i32_0 = arith.constant 0 : i32
    %c0_i32_1 = arith.constant 0 : i32
    return %c0_i32, %c0_i32_0 : i32, i32
  }
  func.func @transform_3(%arg0: i32) -> (i32, i32) {
    %c0_i32 = arith.constant 0 : i32
    %c0_i32_0 = arith.constant 0 : i32
    return %arg0, %c0_i32 : i32, i32
  }
}

module attributes {stable_mosaic.version = 11 : i64} {
  func.func @_final_gemm_kernel(%arg0: i32, %arg1: memref<12x32xbf16, #tpu.memory_space<vmem>>, %arg2: memref<32x2178xbf16, #tpu.memory_space<vmem>>, %arg3: memref<12x1xf32, #tpu.memory_space<vmem>>, %arg4: memref<12x2178xf32, #tpu.memory_space<vmem>>) attributes {dimension_semantics = [#tpu.dimension_semantics<parallel>], iteration_bounds = array<i64: 1>, scalar_prefetch = 0 : i64, scratch_operands = 0 : i64, tpu.core_type = #tpu.core_type<tc>, window_params = [{pipeline_mode = #tpu.pipeline_mode<synchronous>, transform_indices = @transform_0, window_bounds = array<i64: 12, 32>}, {transform_indices = @transform_1, window_bounds = array<i64: 32, 2178>}, {pipeline_mode = #tpu.pipeline_mode<synchronous>, transform_indices = @transform_2, window_bounds = array<i64: 12, 1>}, {transform_indices = @transform_3, window_bounds = array<i64: 12, 2178>}]} {
    %c0 = arith.constant 0 : index
    %c0_0 = arith.constant 0 : index
    %0 = vector.load %arg1[%c0, %c0_0] : memref<12x32xbf16, #tpu.memory_space<vmem>>, vector<12x32xbf16>
    %c0_1 = arith.constant 0 : index
    %c0_2 = arith.constant 0 : index
    %1 = vector.load %arg2[%c0_1, %c0_2] : memref<32x2178xbf16, #tpu.memory_space<vmem>>, vector<32x2178xbf16>
    %cst = arith.constant dense<0.000000e+00> : vector<12x2178xf32>
    %2 = tpu.matmul %0, %1, %cst {dimension_numbers = #tpu.dot_dimension_numbers<[1], [0], [0], [1], [0, 0, 1, 1], [], []>} : vector<12x32xbf16>, vector<32x2178xbf16>, vector<12x2178xf32> -> vector<12x2178xf32>
    %c0_3 = arith.constant 0 : index
    %c0_4 = arith.constant 0 : index
    %3 = vector.load %arg3[%c0_3, %c0_4] : memref<12x1xf32, #tpu.memory_space<vmem>>, vector<12x1xf32>
    %4 = vector.broadcast %3 : vector<12x1xf32> to vector<12x2178xf32>
    %5 = arith.addf %2, %4 : vector<12x2178xf32>
    %6 = math.tanh %5 : vector<12x2178xf32>
    %c0_5 = arith.constant 0 : index
    %c0_6 = arith.constant 0 : index
    %7 = vector.load %arg4[%c0_5, %c0_6] : memref<12x2178xf32, #tpu.memory_space<vmem>>, vector<12x2178xf32>
    tpu.vector_store %arg4[%c0_5, %c0_6], %6 {strides = array<i32>} : memref<12x2178xf32, #tpu.memory_space<vmem>>, vector<12x2178xf32>,
    return
  }
  func.func @transform_0(%arg0: i32) -> (i32, i32) {
    %c0_i32 = arith.constant 0 : i32
    %c0_i32_0 = arith.constant 0 : i32
    %c0_i32_1 = arith.constant 0 : i32
    return %c0_i32, %c0_i32_0 : i32, i32
  }
  func.func @transform_1(%arg0: i32) -> (i32, i32) {
    %c0_i32 = arith.constant 0 : i32
    %c0_i32_0 = arith.constant 0 : i32
    return %c0_i32, %arg0 : i32, i32
  }
  func.func @transform_2(%arg0: i32) -> (i32, i32) {
    %c0_i32 = arith.constant 0 : i32
    %c0_i32_0 = arith.constant 0 : i32
    %c0_i32_1 = arith.constant 0 : i32
    return %c0_i32, %c0_i32_0 : i32, i32
  }
  func.func @transform_3(%arg0: i32) -> (i32, i32) {
    %c0_i32 = arith.constant 0 : i32
    %c0_i32_0 = arith.constant 0 : i32
    return %c0_i32, %arg0 : i32, i32
  }
}

</mosaic_0001>

<llo_original>
// kernel: generator_forward.14
$region0: #{generator_forward.14}
  #allocation0 [shape = 'u32[]', space=smem, size = 0x4, offset = 0x4, fixed_abs, tag = 'smem constant byte address 0x4 - core index']
  #allocation1 [shape = 'u32[144,128]{1,0:T(1,128)}', space=vmem, size = 0x12000, scoped, tag = 'internal scratch']
  %s0 = inlined_call_operand.vmem [shape: bf16[32,64], index: 0, kind: input, shape index: {}]
  %s1 = inlined_call_operand.vmem [shape: f32[1,2,64], index: 1, kind: output, shape index: {}]
  %s2 = sld [smem:[#allocation0]]
  $region14: #{generator_forward.14} parent=0
    _
  %s4 = ssub.s32 1, %s2
  %s5 = scalar_select 0, %s4, %s2
  // Predicated region
  $region2: #{generator_forward.14} parent=0 // pred_check
    _
  $region3: #{generator_forward.14} parent=0 // pred_check_branch
    %7 = sbr.rel (0) target = $region5
  $region4: #{generator_forward.14} parent=0 // pred_region
    _
  $region5: #{generator_forward.14} parent=0 // pred_fallthru
    _
  %v8 = vld [vmem:[%s0] sm:$0xf]
  %v9 = vld [vmem:[%s0 + $0x4] sm:$0xf]
  %v10 = vld [vmem:[%s0 + $0x8] sm:$0xf]
  %v11 = vld [vmem:[%s0 + $0xc] sm:$0xf]
  %v12 = vunpack.c.l.bf16 %v8
  %v13 = vunpack.c.l.bf16 %v9
  %v14 = vunpack.c.l.bf16 %v10
  %v15 = vunpack.c.l.bf16 %v11
  %vm16 = vcmask 523264
  %v17 = vsel %vm16, %v12, 0.0
  %v18 = vsel %vm16, %v13, 0.0
  %v19 = vadd.f32 %v17, %v18
  %v20 = vsel %vm16, %v14, 0.0
  %v21 = vadd.f32 %v19, %v20
  %v22 = vsel %vm16, %v15, 0.0
  %v23 = vadd.f32 %v21, %v22
  %v24 = vrot.slane %v23, 4
  %v25 = vadd.f32 %v23, %v24
  %v26 = vrot.slane %v25, 2
  %v27 = vadd.f32 %v25, %v26
  %v28 = vrot.slane %v27, 1
  %v29 = vadd.f32 %v27, %v28
  %v30 = vmul.f32 %v12, %v12
  %v31 = vmul.f32 %v13, %v13
  %v32 = vmul.f32 %v14, %v14
  %v33 = vmul.f32 %v15, %v15
  %v34 = vsel %vm16, %v30, 0.0
  %v35 = vsel %vm16, %v31, 0.0
  %v36 = vadd.f32 %v34, %v35
  %v37 = vsel %vm16, %v32, 0.0
  %v38 = vadd.f32 %v36, %v37
  %v39 = vsel %vm16, %v33, 0.0
  %v40 = vadd.f32 %v38, %v39
  %v41 = vrot.slane %v40, 4
  %v42 = vadd.f32 %v40, %v41
  %v43 = vrot.slane %v42, 2
  %v44 = vadd.f32 %v42, %v43
  %v45 = vrot.slane %v44, 1
  %v46 = vadd.f32 %v44, %v45
  %vm47 = vcmask 1040384
  %v48 = vsel %vm47, %v29, %v46
  %vm49 = vcmask 517120
  %50 = vst.msk [vmem:[%s1] sm:$0x3] %vm49, %v48
  // Predicated region
  $region6: #{generator_forward.14} parent=0 // pred_check
    _
  $region7: #{generator_forward.14} parent=0 // pred_check_branch
    %52 = sbr.rel (0) target = $region9
  $region8: #{generator_forward.14} parent=0 // pred_region
    _
  $region9: #{generator_forward.14} parent=0 // pred_fallthru
    _
  // Predicated region
  $region10: #{generator_forward.14} parent=0 // pred_check
    _
  $region11: #{generator_forward.14} parent=0 // pred_check_branch
    %54 = sbr.rel (0) target = $region13
  $region12: #{generator_forward.14} parent=0 // pred_region
    _
  $region13: #{generator_forward.14} parent=0 // pred_fallthru
    _

// kernel: generator_forward.13
$region0: #{generator_forward.13}
  #allocation0 [shape = 'u32[]', space=smem, size = 0x4, offset = 0x4, fixed_abs, tag = 'smem constant byte address 0x4 - core index']
  #allocation1 [shape = 'u32[144,128]{1,0:T(1,128)}', space=vmem, size = 0x12000, scoped, tag = 'internal scratch']
  %s0 = inlined_call_operand.vmem [shape: bf16[2,8], index: 0, kind: input, shape index: {}]
  %s1 = inlined_call_operand.hbm [shape: bf16[8,1024], index: 1, kind: input, shape index: {}]
  %s2 = inlined_call_operand.vmem [shape: bf16[2,1024], index: 2, kind: output, shape index: {}]
  %s3 = sld [smem:[#allocation0]]
  $region22: #{generator_forward.13} parent=0
    _
  %s5 = ssub.s32 1, %s3
  %s6 = scalar_select 0, %s5, %s3
  $region1: #{generator_forward.13} parent=0
    #allocation2 [shape = 'u8[16384]{0}', space=vmem, size = 0x4000, scoped, tag = 'input window, operand 1, single buffered']
    #allocation3 [shape = 's32[1]{0}', space=sflag, size = 0x4, scoped, tag = 'scoped memory for generator_forward.13']
    %7 = vsyncpa [#allocation3], 0
    // Predicated region
    $region2: #{generator_forward.13} parent=1 // pred_check
      _
    $region3: #{generator_forward.13} parent=1 // pred_check_branch
      %9 = sbr.rel (0) target = $region5
    $region4: #{generator_forward.13} parent=1 // pred_region
      _
    $region5: #{generator_forward.13} parent=1 // pred_fallthru
      _
    // Predicated region
    $region6: #{generator_forward.13} parent=1 // pred_check
      _
    $region7: #{generator_forward.13} parent=1 // pred_check_branch
      %11 = sbr.rel (0) target = $region9
    $region8: #{generator_forward.13} parent=1 // pred_region
      %s13 = ssub.s32 512, 512
      %14 = vsyncadd [#allocation3], %s13
      %s16 = sshll.u32 [#allocation2], 4
      %s17 = int_to_ptr.vmem [resolvable:$true] %s16
      %19 = dma.hbm_to_vmem [thread:$0]  %s1, 512, %s17, [#allocation3]
    $region9: #{generator_forward.13} parent=1 // pred_fallthru
      _
    // Predicated region
    $region10: #{generator_forward.13} parent=1 // pred_check
      _
    $region11: #{generator_forward.13} parent=1 // pred_check_branch
      %21 = sbr.rel (0) target = $region13
    $region12: #{generator_forward.13} parent=1 // pred_region
      %22 = dma.done [#allocation3], 512
    $region13: #{generator_forward.13} parent=1 // pred_fallthru
      _
    %v24 = vld [vmem:[%s0] sm:$0x1]
    %v25 = vld [vmem:[#allocation2] sm:$0xff]
    %v26 = vld [vmem:[#allocation2 + $0x8] sm:$0xff]
    %v27 = vld [vmem:[#allocation2 + $0x10] sm:$0xff]
    %v28 = vld [vmem:[#allocation2 + $0x18] sm:$0xff]
    %v33 = vunpack.c.l.b16 %v25
    %v34 = vunpack.c.h.b16 %v25
    %v35 = vunpack.c.l.b16 %v26
    %v36 = vunpack.c.h.b16 %v26
    %v37 = vunpack.c.l.b16 %v27
    %v38 = vunpack.c.h.b16 %v27
    %v39 = vunpack.c.l.b16 %v28
    %v40 = vunpack.c.h.b16 %v28
    %v41 = vpack.c.b16 %v33, %v33
    %v42 = vpack.c.b16 %v34, %v34
    %v43 = vpack.c.b16 %v35, %v35
    %v44 = vpack.c.b16 %v36, %v36
    %v45 = vpack.c.b16 %v37, %v37
    %v46 = vpack.c.b16 %v38, %v38
    %v47 = vpack.c.b16 %v39, %v39
    %v48 = vpack.c.b16 %v40, %v40
    %vm49 = vcmask 64512
    %v51 = vsel %vm49, %v24, 0
    %vm53 = vcmask 1043456
    %v55 = vsel %vm53, %v41, 0
    %v58 = vsel %vm53, %v42, 0
    %v61 = vsel %vm53, %v43, 0
    %v64 = vsel %vm53, %v44, 0
    %v67 = vsel %vm53, %v45, 0
    %v70 = vsel %vm53, %v46, 0
    %v73 = vsel %vm53, %v47, 0
    %v76 = vsel %vm53, %v48, 0
    %78 = vmatprep.subr.bf16.mxu0 %v58
    %79 = vmatpush1.bf16.msra.mxu0 %v55
    %80 = vmatprep.subr.bf16.mxu0 0
    %81 = vmatpush1.bf16.msra.mxu0 0
    %82 = vmatprep.subr.bf16.mxu0 0
    %83 = vmatpush1.bf16.msra.mxu0 0
    %84 = vmatprep.subr.bf16.mxu0 0
    %85 = vmatpush1.bf16.msra.mxu0 0
    %86 = vmatprep.subr.bf16.mxu0 0
    %87 = vmatpush1.bf16.msra.mxu0 0
    %88 = vmatprep.subr.bf16.mxu0 0
    %89 = vmatpush1.bf16.msra.mxu0 0
    %90 = vmatprep.subr.bf16.mxu0 0
    %91 = vmatpush1.bf16.msra.mxu0 0
    %92 = vmatprep.subr.bf16.mxu0 0
    %93 = vmatpush1.bf16.msra.mxu0 0
    %94 = vmatprep.subr.bf16.mxu0 0
    %95 = vmatpush1.bf16.msra.mxu0 0
    %96 = vmatprep.subr.bf16.mxu0 0
    %97 = vmatpush1.bf16.msra.mxu0 0
    %98 = vmatprep.subr.bf16.mxu0 0
    %99 = vmatpush1.bf16.msra.mxu0 0
    %100 = vmatprep.subr.bf16.mxu0 0
    %101 = vmatpush1.bf16.msra.mxu0 0
    %102 = vmatprep.subr.bf16.mxu0 0
    %103 = vmatpush1.bf16.msra.mxu0 0
    %104 = vmatprep.subr.bf16.mxu0 0
    %105 = vmatpush1.bf16.msra.mxu0 0
    %106 = vmatprep.subr.bf16.mxu0 0
    %107 = vmatpush1.bf16.msra.mxu0 0
    %108 = vmatprep.subr.bf16.mxu0 0
    %109 = vmatpush1.bf16.msra.mxu0 0
    %110 = vmatprep.mubr.bf16.mxu0 0
    %111 = vmatmul.mubr.bf16.gmra.mrb[0].mxu0 %v51
    %v112 = vpop.f32.mrb[0].mxu0
    %v113 = vadd.f32 0.0, %v112
    %v114 = vpop.f32.mrb[0].mxu0
    %v115 = vadd.f32 0.0, %v114
    %v116 = vpop.f32.mrb[0].mxu0
    %v117 = vpop.f32.mrb[0].mxu0
    %118 = vdwg.mxu0
    %119 = vmatprep.subr.bf16.mxu0 %v64
    %120 = vmatpush1.bf16.msra.mxu0 %v61
    %121 = vmatprep.subr.bf16.mxu0 0
    %122 = vmatpush1.bf16.msra.mxu0 0
    %123 = vmatprep.subr.bf16.mxu0 0
    %124 = vmatpush1.bf16.msra.mxu0 0
    %125 = vmatprep.subr.bf16.mxu0 0
    %126 = vmatpush1.bf16.msra.mxu0 0
    %127 = vmatprep.subr.bf16.mxu0 0
    %128 = vmatpush1.bf16.msra.mxu0 0
    %129 = vmatprep.subr.bf16.mxu0 0
    %130 = vmatpush1.bf16.msra.mxu0 0
    %131 = vmatprep.subr.bf16.mxu0 0
    %132 = vmatpush1.bf16.msra.mxu0 0
    %133 = vmatprep.subr.bf16.mxu0 0
    %134 = vmatpush1.bf16.msra.mxu0 0
    %135 = vmatprep.subr.bf16.mxu0 0
    %136 = vmatpush1.bf16.msra.mxu0 0
    %137 = vmatprep.subr.bf16.mxu0 0
    %138 = vmatpush1.bf16.msra.mxu0 0
    %139 = vmatprep.subr.bf16.mxu0 0
    %140 = vmatpush1.bf16.msra.mxu0 0
    %141 = vmatprep.subr.bf16.mxu0 0
    %142 = vmatpush1.bf16.msra.mxu0 0
    %143 = vmatprep.subr.bf16.mxu0 0
    %144 = vmatpush1.bf16.msra.mxu0 0
    %145 = vmatprep.subr.bf16.mxu0 0
    %146 = vmatpush1.bf16.msra.mxu0 0
    %147 = vmatprep.subr.bf16.mxu0 0
    %148 = vmatpush1.bf16.msra.mxu0 0
    %149 = vmatprep.subr.bf16.mxu0 0
    %150 = vmatpush1.bf16.msra.mxu0 0
    %151 = vmatprep.mubr.bf16.mxu0 0
    %152 = vmatmul.mubr.bf16.gmra.mrb[0].mxu0 %v51
    %v153 = vpop.f32.mrb[0].mxu0
    %v154 = vadd.f32 0.0, %v153
    %v155 = vpop.f32.mrb[0].mxu0
    %v156 = vadd.f32 0.0, %v155
    %v157 = vpop.f32.mrb[0].mxu0
    %v158 = vpop.f32.mrb[0].mxu0
    %159 = vdwg.mxu0
    %160 = vmatprep.subr.bf16.mxu0 %v70
    %161 = vmatpush1.bf16.msra.mxu0 %v67
    %162 = vmatprep.subr.bf16.mxu0 0
    %163 = vmatpush1.bf16.msra.mxu0 0
    %164 = vmatprep.subr.bf16.mxu0 0
    %165 = vmatpush1.bf16.msra.mxu0 0
    %166 = vmatprep.subr.bf16.mxu0 0
    %167 = vmatpush1.bf16.msra.mxu0 0
    %168 = vmatprep.subr.bf16.mxu0 0
    %169 = vmatpush1.bf16.msra.mxu0 0
    %170 = vmatprep.subr.bf16.mxu0 0
    %171 = vmatpush1.bf16.msra.mxu0 0
    %172 = vmatprep.subr.bf16.mxu0 0
    %173 = vmatpush1.bf16.msra.mxu0 0
    %174 = vmatprep.subr.bf16.mxu0 0
    %175 = vmatpush1.bf16.msra.mxu0 0
    %176 = vmatprep.subr.bf16.mxu0 0
    %177 = vmatpush1.bf16.msra.mxu0 0
    %178 = vmatprep.subr.bf16.mxu0 0
    %179 = vmatpush1.bf16.msra.mxu0 0
    %180 = vmatprep.subr.bf16.mxu0 0
    %181 = vmatpush1.bf16.msra.mxu0 0
    %182 = vmatprep.subr.bf16.mxu0 0
    %183 = vmatpush1.bf16.msra.mxu0 0
    %184 = vmatprep.subr.bf16.mxu0 0
    %185 = vmatpush1.bf16.msra.mxu0 0
    %186 = vmatprep.subr.bf16.mxu0 0
    %187 = vmatpush1.bf16.msra.mxu0 0
    %188 = vmatprep.subr.bf16.mxu0 0
    %189 = vmatpush1.bf16.msra.mxu0 0
    %190 = vmatprep.subr.bf16.mxu0 0
    %191 = vmatpush1.bf16.msra.mxu0 0
    %192 = vmatprep.mubr.bf16.mxu0 0
    %193 = vmatmul.mubr.bf16.gmra.mrb[0].mxu0 %v51
    %v194 = vpop.f32.mrb[0].mxu0
    %v195 = vadd.f32 0.0, %v194
    %v196 = vpop.f32.mrb[0].mxu0
    %v197 = vadd.f32 0.0, %v196
    %v198 = vpop.f32.mrb[0].mxu0
    %v199 = vpop.f32.mrb[0].mxu0
    %200 = vdwg.mxu0
    %201 = vmatprep.subr.bf16.mxu0 %v76
    %202 = vmatpush1.bf16.msra.mxu0 %v73
    %203 = vmatprep.subr.bf16.mxu0 0
    %204 = vmatpush1.bf16.msra.mxu0 0
    %205 = vmatprep.subr.bf16.mxu0 0
    %206 = vmatpush1.bf16.msra.mxu0 0
    %207 = vmatprep.subr.bf16.mxu0 0
    %208 = vmatpush1.bf16.msra.mxu0 0
    %209 = vmatprep.subr.bf16.mxu0 0
    %210 = vmatpush1.bf16.msra.mxu0 0
    %211 = vmatprep.subr.bf16.mxu0 0
    %212 = vmatpush1.bf16.msra.mxu0 0
    %213 = vmatprep.subr.bf16.mxu0 0
    %214 = vmatpush1.bf16.msra.mxu0 0
    %215 = vmatprep.subr.bf16.mxu0 0
    %216 = vmatpush1.bf16.msra.mxu0 0
    %217 = vmatprep.subr.bf16.mxu0 0
    %218 = vmatpush1.bf16.msra.mxu0 0
    %219 = vmatprep.subr.bf16.mxu0 0
    %220 = vmatpush1.bf16.msra.mxu0 0
    %221 = vmatprep.subr.bf16.mxu0 0
    %222 = vmatpush1.bf16.msra.mxu0 0
    %223 = vmatprep.subr.bf16.mxu0 0
    %224 = vmatpush1.bf16.msra.mxu0 0
    %225 = vmatprep.subr.bf16.mxu0 0
    %226 = vmatpush1.bf16.msra.mxu0 0
    %227 = vmatprep.subr.bf16.mxu0 0
    %228 = vmatpush1.bf16.msra.mxu0 0
    %229 = vmatprep.subr.bf16.mxu0 0
    %230 = vmatpush1.bf16.msra.mxu0 0
    %231 = vmatprep.subr.bf16.mxu0 0
    %232 = vmatpush1.bf16.msra.mxu0 0
    %233 = vmatprep.mubr.bf16.mxu0 0
    %234 = vmatmul.mubr.bf16.gmra.mrb[0].mxu0 %v51
    %v235 = vpop.f32.mrb[0].mxu0
    %v236 = vadd.f32 0.0, %v235
    %v237 = vpop.f32.mrb[0].mxu0
    %v238 = vadd.f32 0.0, %v237
    %v239 = vpop.f32.mrb[0].mxu0
    %v240 = vpop.f32.mrb[0].mxu0
    %241 = vdwg.mxu0
    %v242 = vpack.c.bf16 %v113, %v113
    %v243 = vpack.c.bf16 %v115, %v115
    %v244 = vpack.c.bf16 %v154, %v154
    %v245 = vpack.c.bf16 %v156, %v156
    %v246 = vpack.c.bf16 %v195, %v195
    %v247 = vpack.c.bf16 %v197, %v197
    %v248 = vpack.c.bf16 %v236, %v236
    %v249 = vpack.c.bf16 %v238, %v238
    %v258 = vcombine.low %v242, %v243
    %v259 = vcombine.low %v244, %v245
    %v260 = vcombine.low %v246, %v247
    %v261 = vcombine.low %v248, %v249
    %v263 = vunpack.c.l.s4 1966171168
    %v264 = vunpack.c.0.s8 %v263
    %v265 = vlaneseq
    %v266 = vshrl.u32 %v265, 7
    %v267 = vsub.s32 %v264, %v266
    %v268 = vrot.slane %v258, %v267
    %v270 = vunpack.c.l.s4 1966171168
    %v271 = vunpack.c.0.s8 %v270
    %v272 = vlaneseq
    %v273 = vshrl.u32 %v272, 7
    %v274 = vsub.s32 %v271, %v273
    %v275 = vrot.slane %v259, %v274
    %v277 = vunpack.c.l.s4 1966171168
    %v278 = vunpack.c.0.s8 %v277
    %v279 = vlaneseq
    %v280 = vshrl.u32 %v279, 7
    %v281 = vsub.s32 %v278, %v280
    %v282 = vrot.slane %v260, %v281
    %v284 = vunpack.c.l.s4 1966171168
    %v285 = vunpack.c.0.s8 %v284
    %v286 = vlaneseq
    %v287 = vshrl.u32 %v286, 7
    %v288 = vsub.s32 %v285, %v287
    %v289 = vrot.slane %v261, %v288
    %v290 = vcombine.low %v268, %v275
    %v291 = vcombine.low %v282, %v289
    %v293 = vunpack.c.l.s4 1966171168
    %v294 = vunpack.c.0.s8 %v293
    %v295 = vlaneseq
    %v296 = vshrl.u32 %v295, 7
    %v297 = vsub.s32 %v294, %v296
    %v298 = vrot.slane %v290, %v297
    %v300 = vunpack.c.l.s4 1966171168
    %v301 = vunpack.c.0.s8 %v300
    %v302 = vlaneseq
    %v303 = vshrl.u32 %v302, 7
    %v304 = vsub.s32 %v301, %v303
    %v305 = vrot.slane %v291, %v304
    %v306 = vcombine.low %v298, %v305
    %308 = vst [vmem:[%s2] sm:$0xff] %v306
    // Predicated region
    $region14: #{generator_forward.13} parent=1 // pred_check
      _
    $region15: #{generator_forward.13} parent=1 // pred_check_branch
      %310 = sbr.rel (0) target = $region17
    $region16: #{generator_forward.13} parent=1 // pred_region
      _
    $region17: #{generator_forward.13} parent=1 // pred_fallthru
      _
    // Predicated region
    $region18: #{generator_forward.13} parent=1 // pred_check
      _
    $region19: #{generator_forward.13} parent=1 // pred_check_branch
      %312 = sbr.rel (0) target = $region21
    $region20: #{generator_forward.13} parent=1 // pred_region
      _
    $region21: #{generator_forward.13} parent=1 // pred_fallthru
      _
    %313 = vsyncpa [#allocation3], 1

// kernel: generator_forward.15
$region0: #{generator_forward.15}
  #allocation0 [shape = 'u32[]', space=smem, size = 0x4, offset = 0x4, fixed_abs, tag = 'smem constant byte address 0x4 - core index']
  #allocation1 [shape = 'u32[144,128]{1,0:T(1,128)}', space=vmem, size = 0x12000, scoped, tag = 'internal scratch']
  %s0 = inlined_call_operand.vmem [shape: bf16[32,64], index: 0, kind: input, shape index: {}]
  %s1 = inlined_call_operand.vmem [shape: f32[1,64], index: 1, kind: input, shape index: {}]
  %s2 = inlined_call_operand.vmem [shape: f32[1,64], index: 2, kind: input, shape index: {}]
  %s3 = inlined_call_operand.vmem [shape: bf16[32,64], index: 3, kind: output, shape index: {}]
  %s4 = sld [smem:[#allocation0]]
  $region22: #{generator_forward.15} parent=0
    _
  %s6 = ssub.s32 1, %s4
  %s7 = scalar_select 0, %s6, %s4
  // Predicated region
  $region2: #{generator_forward.15} parent=0 // pred_check
    _
  $region3: #{generator_forward.15} parent=0 // pred_check_branch
    %9 = sbr.rel (0) target = $region5
  $region4: #{generator_forward.15} parent=0 // pred_region
    _
  $region5: #{generator_forward.15} parent=0 // pred_fallthru
    _
  // Predicated region
  $region6: #{generator_forward.15} parent=0 // pred_check
    _
  $region7: #{generator_forward.15} parent=0 // pred_check_branch
    %11 = sbr.rel (0) target = $region9
  $region8: #{generator_forward.15} parent=0 // pred_region
    _
  $region9: #{generator_forward.15} parent=0 // pred_fallthru
    _
  // Predicated region
  $region10: #{generator_forward.15} parent=0 // pred_check
    _
  $region11: #{generator_forward.15} parent=0 // pred_check_branch
    %13 = sbr.rel (0) target = $region13
  $region12: #{generator_forward.15} parent=0 // pred_region
    _
  $region13: #{generator_forward.15} parent=0 // pred_fallthru
    _
  %v14 = vld [vmem:[%s0] sm:$0xf]
  %v15 = vld [vmem:[%s0 + $0x4] sm:$0xf]
  %v16 = vld [vmem:[%s0 + $0x8] sm:$0xf]
  %v17 = vld [vmem:[%s0 + $0xc] sm:$0xf]
  %v18 = vunpack.c.l.bf16 %v14
  %v19 = vunpack.c.l.bf16 %v15
  %v20 = vunpack.c.l.bf16 %v16
  %v21 = vunpack.c.l.bf16 %v17
  %v22 = vld [vmem:[%s1] sm:$0x1]
  %v24 = vlaneseq
  %v25 = vshrl.u32 %v24, 7
  %v26 = vsub.s32 0, %v25
  %v27 = vrot.slane %v22, %v26
  %v29 = vmul.f32 %v18, %v27
  %v30 = vmul.f32 %v19, %v27
  %v31 = vmul.f32 %v20, %v27
  %v32 = vmul.f32 %v21, %v27
  %v33 = vld [vmem:[%s2] sm:$0x1]
  %v35 = vlaneseq
  %v36 = vshrl.u32 %v35, 7
  %v37 = vsub.s32 0, %v36
  %v38 = vrot.slane %v33, %v37
  %v40 = vadd.f32 %v29, %v38
  %v41 = vadd.f32 %v30, %v38
  %v42 = vadd.f32 %v31, %v38
  %v43 = vadd.f32 %v32, %v38
  %v44 = vmax.f32 %v40, 0.0
  %v45 = vmax.f32 %v41, 0.0
  %v46 = vmax.f32 %v42, 0.0
  %v47 = vmax.f32 %v43, 0.0
  %v48 = vpack.c.bf16 %v45, %v44
  %v49 = vpack.c.bf16 %v47, %v46
  %v52 = vunpack.c.l.b16 %v48
  %v53 = vunpack.c.h.b16 %v48
  %v54 = vunpack.c.l.b16 %v49
  %v55 = vunpack.c.h.b16 %v49
  %v56 = vpack.c.b16 %v52, %v52
  %v57 = vpack.c.b16 %v53, %v53
  %v58 = vpack.c.b16 %v54, %v54
  %v59 = vpack.c.b16 %v55, %v55
  %vm64 = vcmask 519168
  %65 = vst.msk [vmem:[%s3] sm:$0xf] %vm64, %v56
  %66 = vst.msk [vmem:[%s3 + $0x4] sm:$0xf] %vm64, %v57
  %67 = vst.msk [vmem:[%s3 + $0x8] sm:$0xf] %vm64, %v58
  %68 = vst.msk [vmem:[%s3 + $0xc] sm:$0xf] %vm64, %v59
  // Predicated region
  $region14: #{generator_forward.15} parent=0 // pred_check
    _
  $region15: #{generator_forward.15} parent=0 // pred_check_branch
    %70 = sbr.rel (0) target = $region17
  $region16: #{generator_forward.15} parent=0 // pred_region
    _
  $region17: #{generator_forward.15} parent=0 // pred_fallthru
    _
  // Predicated region
  $region18: #{generator_forward.15} parent=0 // pred_check
    _
  $region19: #{generator_forward.15} parent=0 // pred_check_branch
    %72 = sbr.rel (0) target = $region21
  $region20: #{generator_forward.15} parent=0 // pred_region
    _
  $region21: #{generator_forward.15} parent=0 // pred_fallthru
    _

// kernel: generator_forward.16
$region0: #{generator_forward.16}
  #allocation0 [shape = 'u32[]', space=smem, size = 0x4, offset = 0x4, fixed_abs, tag = 'smem constant byte address 0x4 - core index']
  #allocation1 [shape = 'u32[144,128]{1,0:T(1,128)}', space=vmem, size = 0x12000, scoped, tag = 'internal scratch']
  %s0 = inlined_call_operand.vmem [shape: bf16[50,256], index: 0, kind: input, shape index: {}]
  %s1 = inlined_call_operand.hbm [shape: bf16[256,128], index: 1, kind: input, shape index: {}]
  %s2 = inlined_call_operand.vmem [shape: bf16[50,128], index: 2, kind: output, shape index: {}]
  %s3 = sld [smem:[#allocation0]]
  $region22: #{generator_forward.16} parent=0
    _
  %s5 = ssub.s32 1, %s3
  %s6 = scalar_select 0, %s5, %s3
  $region1: #{generator_forward.16} parent=0
    #allocation2 [shape = 'u8[65536]{0}', space=vmem, size = 0x10000, scoped, tag = 'input window, operand 1, single buffered']
    #allocation3 [shape = 's32[1]{0}', space=sflag, size = 0x4, scoped, tag = 'scoped memory for generator_forward.16']
    %7 = vsyncpa [#allocation3], 0
    // Predicated region
    $region2: #{generator_forward.16} parent=1 // pred_check
      _
    $region3: #{generator_forward.16} parent=1 // pred_check_branch
      %9 = sbr.rel (0) target = $region5
    $region4: #{generator_forward.16} parent=1 // pred_region
      _
    $region5: #{generator_forward.16} parent=1 // pred_fallthru
      _
    // Predicated region
    $region6: #{generator_forward.16} parent=1 // pred_check
      _
    $region7: #{generator_forward.16} parent=1 // pred_check_branch
      %11 = sbr.rel (0) target = $region9
    $region8: #{generator_forward.16} parent=1 // pred_region
      %s13 = ssub.s32 2048, 2048
      %14 = vsyncadd [#allocation3], %s13
      %s15 = sshll.u32 [#allocation2], 4
      %s16 = int_to_ptr.vmem [resolvable:$true] %s15
      %21 = dma.hbm_to_vmem [thread:$0]  %s1, 2048, %s16, [#allocation3], 64, 64, 4
    $region9: #{generator_forward.16} parent=1 // pred_fallthru
      _
    // Predicated region
    $region10: #{generator_forward.16} parent=1 // pred_check
      _
    $region11: #{generator_forward.16} parent=1 // pred_check_branch
      %23 = sbr.rel (0) target = $region13
    $region12: #{generator_forward.16} parent=1 // pred_region
      %24 = dma.done [#allocation3], 2048
    $region13: #{generator_forward.16} parent=1 // pred_fallthru
      _
    %v26 = vld [vmem:[%s0] sm:$0xff]
    %v27 = vld [vmem:[%s0 + $0x8] sm:$0xff]
    %v28 = vld [vmem:[%s0 + $0x10] sm:$0xff]
    %v29 = vld [vmem:[%s0 + $0x18] sm:$0xff]
    %v30 = vld [vmem:[%s0 + $0x20] sm:$0xff]
    %v31 = vld [vmem:[%s0 + $0x28] sm:$0xff]
    %v32 = vld [vmem:[%s0 + $0x30] sm:$0x11]
    %v33 = vld [vmem:[#allocation2] sm:$0xf]
    %v34 = vld [vmem:[#allocation2 + $0x4] sm:$0xf]
    %v35 = vld [vmem:[#allocation2 + $0x8] sm:$0xf]
    %v36 = vld [vmem:[#allocation2 + $0xc] sm:$0xf]
    %v37 = vld [vmem:[#allocation2 + $0x10] sm:$0xf]
    %v38 = vld [vmem:[#allocation2 + $0x14] sm:$0xf]
    %v39 = vld [vmem:[#allocation2 + $0x18] sm:$0xf]
    %v40 = vld [vmem:[#allocation2 + $0x1c] sm:$0xf]
    %v41 = vld [vmem:[#allocation2 + $0x20] sm:$0xf]
    %v42 = vld [vmem:[#allocation2 + $0x24] sm:$0xf]
    %v43 = vld [vmem:[#allocation2 + $0x28] sm:$0xf]
    %v44 = vld [vmem:[#allocation2 + $0x2c] sm:$0xf]
    %v45 = vld [vmem:[#allocation2 + $0x30] sm:$0xf]
    %v46 = vld [vmem:[#allocation2 + $0x34] sm:$0xf]
    %v47 = vld [vmem:[#allocation2 + $0x38] sm:$0xf]
    %v48 = vld [vmem:[#allocation2 + $0x3c] sm:$0xf]
    %v49 = vld [vmem:[#allocation2 + $0x40] sm:$0xf]
    %v50 = vld [vmem:[#allocation2 + $0x44] sm:$0xf]
    %v51 = vld [vmem:[#allocation2 + $0x48] sm:$0xf]
    %v52 = vld [vmem:[#allocation2 + $0x4c] sm:$0xf]
    %v53 = vld [vmem:[#allocation2 + $0x50] sm:$0xf]
    %v54 = vld [vmem:[#allocation2 + $0x54] sm:$0xf]
    %v55 = vld [vmem:[#allocation2 + $0x58] sm:$0xf]
    %v56 = vld [vmem:[#allocation2 + $0x5c] sm:$0xf]
    %v57 = vld [vmem:[#allocation2 + $0x60] sm:$0xf]
    %v58 = vld [vmem:[#allocation2 + $0x64] sm:$0xf]
    %v59 = vld [vmem:[#allocation2 + $0x68] sm:$0xf]
    %v60 = vld [vmem:[#allocation2 + $0x6c] sm:$0xf]
    %v61 = vld [vmem:[#allocation2 + $0x70] sm:$0xf]
    %v62 = vld [vmem:[#allocation2 + $0x74] sm:$0xf]
    %v63 = vld [vmem:[#allocation2 + $0x78] sm:$0xf]
    %v64 = vld [vmem:[#allocation2 + $0x7c] sm:$0xf]
    %v72 = vunpack.c.l.b16 %v26
    %v73 = vunpack.c.h.b16 %v26
    %v74 = vunpack.c.l.b16 %v27
    %v75 = vunpack.c.h.b16 %v27
    %v76 = vunpack.c.l.b16 %v28
    %v77 = vunpack.c.h.b16 %v28
    %v78 = vunpack.c.l.b16 %v29
    %v79 = vunpack.c.h.b16 %v29
    %v80 = vunpack.c.l.b16 %v30
    %v81 = vunpack.c.h.b16 %v30
    %v82 = vunpack.c.l.b16 %v31
    %v83 = vunpack.c.h.b16 %v31
    %v84 = vunpack.c.l.b16 %v32
    %v85 = vunpack.c.h.b16 %v32
    %v86 = vpack.c.b16 %v74, %v72
    %v87 = vpack.c.b16 %v75, %v73
    %v88 = vpack.c.b16 %v78, %v76
    %v89 = vpack.c.b16 %v79, %v77
    %v90 = vpack.c.b16 %v82, %v80
    %v91 = vpack.c.b16 %v83, %v81
    %v92 = vpack.c.b16 %v84, %v84
    %v93 = vpack.c.b16 %v85, %v85
    %v134 = vunpack.c.l.b16 %v33
    %v135 = vunpack.c.l.b16 %v34
    %v136 = vunpack.c.l.b16 %v35
    %v137 = vunpack.c.l.b16 %v36
    %v138 = vunpack.c.l.b16 %v37
    %v139 = vunpack.c.l.b16 %v38
    %v140 = vunpack.c.l.b16 %v39
    %v141 = vunpack.c.l.b16 %v40
    %v142 = vunpack.c.l.b16 %v41
    %v143 = vunpack.c.l.b16 %v42
    %v144 = vunpack.c.l.b16 %v43
    %v145 = vunpack.c.l.b16 %v44
    %v146 = vunpack.c.l.b16 %v45
    %v147 = vunpack.c.l.b16 %v46
    %v148 = vunpack.c.l.b16 %v47
    %v149 = vunpack.c.l.b16 %v48
    %v150 = vunpack.c.l.b16 %v49
    %v151 = vunpack.c.l.b16 %v50
    %v152 = vunpack.c.l.b16 %v51
    %v153 = vunpack.c.l.b16 %v52
    %v154 = vunpack.c.l.b16 %v53
    %v155 = vunpack.c.l.b16 %v54
    %v156 = vunpack.c.l.b16 %v55
    %v157 = vunpack.c.l.b16 %v56
    %v158 = vunpack.c.l.b16 %v57
    %v159 = vunpack.c.l.b16 %v58
    %v160 = vunpack.c.l.b16 %v59
    %v161 = vunpack.c.l.b16 %v60
    %v162 = vunpack.c.l.b16 %v61
    %v163 = vunpack.c.l.b16 %v62
    %v164 = vunpack.c.l.b16 %v63
    %v165 = vunpack.c.l.b16 %v64
    %v166 = vpack.c.b16 %v135, %v134
    %v167 = vpack.c.b16 %v137, %v136
    %v168 = vpack.c.b16 %v139, %v138
    %v169 = vpack.c.b16 %v141, %v140
    %v170 = vpack.c.b16 %v143, %v142
    %v171 = vpack.c.b16 %v145, %v144
    %v172 = vpack.c.b16 %v147, %v146
    %v173 = vpack.c.b16 %v149, %v148
    %v174 = vpack.c.b16 %v151, %v150
    %v175 = vpack.c.b16 %v153, %v152
    %v176 = vpack.c.b16 %v155, %v154
    %v177 = vpack.c.b16 %v157, %v156
    %v178 = vpack.c.b16 %v159, %v158
    %v179 = vpack.c.b16 %v161, %v160
    %v180 = vpack.c.b16 %v163, %v162
    %v181 = vpack.c.b16 %v165, %v164
    %198 = vmatprep.subr.bf16.mxu0 0
    %199 = vmatpush1.bf16.msra.mxu0 %v166
    %200 = vmatprep.subr.bf16.mxu0 0
    %201 = vmatpush1.bf16.msra.mxu0 %v167
    %202 = vmatprep.subr.bf16.mxu0 0
    %203 = vmatpush1.bf16.msra.mxu0 %v168
    %204 = vmatprep.subr.bf16.mxu0 0
    %205 = vmatpush1.bf16.msra.mxu0 %v169
    %206 = vmatprep.subr.bf16.mxu0 0
    %207 = vmatpush1.bf16.msra.mxu0 %v170
    %208 = vmatprep.subr.bf16.mxu0 0
    %209 = vmatpush1.bf16.msra.mxu0 %v171
    %210 = vmatprep.subr.bf16.mxu0 0
    %211 = vmatpush1.bf16.msra.mxu0 %v172
    %212 = vmatprep.subr.bf16.mxu0 0
    %213 = vmatpush1.bf16.msra.mxu0 %v173
    %214 = vmatprep.subr.bf16.mxu0 0
    %215 = vmatpush1.bf16.msra.mxu0 %v174
    %216 = vmatprep.subr.bf16.mxu0 0
    %217 = vmatpush1.bf16.msra.mxu0 %v175
    %218 = vmatprep.subr.bf16.mxu0 0
    %219 = vmatpush1.bf16.msra.mxu0 %v176
    %220 = vmatprep.subr.bf16.mxu0 0
    %221 = vmatpush1.bf16.msra.mxu0 %v177
    %222 = vmatprep.subr.bf16.mxu0 0
    %223 = vmatpush1.bf16.msra.mxu0 %v178
    %224 = vmatprep.subr.bf16.mxu0 0
    %225 = vmatpush1.bf16.msra.mxu0 %v179
    %226 = vmatprep.subr.bf16.mxu0 0
    %227 = vmatpush1.bf16.msra.mxu0 %v180
    %228 = vmatprep.subr.bf16.mxu0 0
    %229 = vmatpush1.bf16.msra.mxu0 %v181
    %230 = vmatprep.mubr.bf16.mxu0 %v87
    %231 = vmatmul.mubr.bf16.gmra.mrb[0].mxu0 %v86
    %v232 = vpop.f32.mrb[0].mxu0
    %v233 = vadd.f32 0.0, %v232
    %v234 = vpop.f32.mrb[0].mxu0
    %v235 = vpop.f32.mrb[0].mxu0
    %v236 = vadd.f32 0.0, %v235
    %v237 = vpop.f32.mrb[0].mxu0
    %238 = vmatprep.mubr.bf16.mxu0 %v89
    %239 = vmatmul.mubr.bf16.gmra.mrb[0].mxu0 %v88
    %v240 = vpop.f32.mrb[0].mxu0
    %v241 = vadd.f32 0.0, %v240
    %v242 = vpop.f32.mrb[0].mxu0
    %v243 = vpop.f32.mrb[0].mxu0
    %v244 = vadd.f32 0.0, %v243
    %v245 = vpop.f32.mrb[0].mxu0
    %246 = vmatprep.mubr.bf16.mxu0 %v91
    %247 = vmatmul.mubr.bf16.gmra.mrb[0].mxu0 %v90
    %v248 = vpop.f32.mrb[0].mxu0
    %v249 = vadd.f32 0.0, %v248
    %v250 = vpop.f32.mrb[0].mxu0
    %v251 = vpop.f32.mrb[0].mxu0
    %v252 = vadd.f32 0.0, %v251
    %v253 = vpop.f32.mrb[0].mxu0
    %254 = vmatprep.mubr.bf16.mxu0 %v93
    %255 = vmatmul.mubr.bf16.gmra.mrb[0].mxu0 %v92
    %v256 = vpop.f32.mrb[0].mxu0
    %v257 = vadd.f32 0.0, %v256
    %v258 = vpop.f32.mrb[0].mxu0
    %v259 = vpop.f32.mrb[0].mxu0
    %v260 = vpop.f32.mrb[0].mxu0
    %261 = vdwg.mxu0
    %v262 = vpack.c.bf16 %v236, %v233
    %v263 = vpack.c.bf16 %v244, %v241
    %v264 = vpack.c.bf16 %v252, %v249
    %v265 = vpack.c.bf16 %v257, %v257
    %v270 = vunpack.c.l.b16 %v262
    %v271 = vunpack.c.h.b16 %v262
    %v272 = vunpack.c.l.b16 %v263
    %v273 = vunpack.c.h.b16 %v263
    %v274 = vunpack.c.l.b16 %v264
    %v275 = vunpack.c.h.b16 %v264
    %v276 = vunpack.c.l.b16 %v265
    %v277 = vpack.c.b16 %v270, %v270
    %v278 = vpack.c.b16 %v271, %v271
    %v279 = vpack.c.b16 %v272, %v272
    %v280 = vpack.c.b16 %v273, %v273
    %v281 = vpack.c.b16 %v274, %v274
    %v282 = vpack.c.b16 %v275, %v275
    %v283 = vpack.c.b16 %v276, %v276
    %291 = vst [vmem:[%s2] sm:$0xf] %v277
    %292 = vst [vmem:[%s2 + $0x4] sm:$0xf] %v278
    %293 = vst [vmem:[%s2 + $0x8] sm:$0xf] %v279
    %294 = vst [vmem:[%s2 + $0xc] sm:$0xf] %v280
    %295 = vst [vmem:[%s2 + $0x10] sm:$0xf] %v281
    %296 = vst [vmem:[%s2 + $0x14] sm:$0xf] %v282
    %297 = vst [vmem:[%s2 + $0x18] sm:$0x1] %v283
    // Predicated region
    $region14: #{generator_forward.16} parent=1 // pred_check
      _
    $region15: #{generator_forward.16} parent=1 // pred_check_branch
      %299 = sbr.rel (0) target = $region17
    $region16: #{generator_forward.16} parent=1 // pred_region
      _
    $region17: #{generator_forward.16} parent=1 // pred_fallthru
      _
    // Predicated region
    $region18: #{generator_forward.16} parent=1 // pred_check
      _
    $region19: #{generator_forward.16} parent=1 // pred_check_branch
      %301 = sbr.rel (0) target = $region21
    $region20: #{generator_forward.16} parent=1 // pred_region
      _
    $region21: #{generator_forward.16} parent=1 // pred_fallthru
      _
    %302 = vsyncpa [#allocation3], 1

// kernel: generator_forward.17
$region0: #{generator_forward.17}
  #allocation0 [shape = 'u32[]', space=smem, size = 0x4, offset = 0x4, fixed_abs, tag = 'smem constant byte address 0x4 - core index']
  #allocation1 [shape = 'u32[144,128]{1,0:T(1,128)}', space=vmem, size = 0x12000, scoped, tag = 'internal scratch']
  %s0 = inlined_call_operand.vmem [shape: bf16[128,32], index: 0, kind: input, shape index: {}]
  %s1 = inlined_call_operand.vmem [shape: f32[1,2,32], index: 1, kind: output, shape index: {}]
  %s2 = sld [smem:[#allocation0]]
  $region14: #{generator_forward.17} parent=0
    _
  %s4 = ssub.s32 1, %s2
  %s5 = scalar_select 0, %s4, %s2
  // Predicated region
  $region2: #{generator_forward.17} parent=0 // pred_check
    _
  $region3: #{generator_forward.17} parent=0 // pred_check_branch
    %7 = sbr.rel (0) target = $region5
  $region4: #{generator_forward.17} parent=0 // pred_region
    _
  $region5: #{generator_forward.17} parent=0 // pred_fallthru
    _
  %v8 = vld [vmem:[%s0] sm:$0xf]
  %v9 = vld [vmem:[%s0 + $0x4] sm:$0xf]
  %v10 = vld [vmem:[%s0 + $0x8] sm:$0xf]
  %v11 = vld [vmem:[%s0 + $0xc] sm:$0xf]
  %v12 = vld [vmem:[%s0 + $0x10] sm:$0xf]
  %v13 = vld [vmem:[%s0 + $0x14] sm:$0xf]
  %v14 = vld [vmem:[%s0 + $0x18] sm:$0xf]
  %v15 = vld [vmem:[%s0 + $0x1c] sm:$0xf]
  %v16 = vld [vmem:[%s0 + $0x20] sm:$0xf]
  %v17 = vld [vmem:[%s0 + $0x24] sm:$0xf]
  %v18 = vld [vmem:[%s0 + $0x28] sm:$0xf]
  %v19 = vld [vmem:[%s0 + $0x2c] sm:$0xf]
  %v20 = vld [vmem:[%s0 + $0x30] sm:$0xf]
  %v21 = vld [vmem:[%s0 + $0x34] sm:$0xf]
  %v22 = vld [vmem:[%s0 + $0x38] sm:$0xf]
  %v23 = vld [vmem:[%s0 + $0x3c] sm:$0xf]
  %v24 = vunpack.c.l.bf16 %v8
  %v25 = vunpack.c.l.bf16 %v9
  %v26 = vunpack.c.l.bf16 %v10
  %v27 = vunpack.c.l.bf16 %v11
  %v28 = vunpack.c.l.bf16 %v12
  %v29 = vunpack.c.l.bf16 %v13
  %v30 = vunpack.c.l.bf16 %v14
  %v31 = vunpack.c.l.bf16 %v15
  %v32 = vunpack.c.l.bf16 %v16
  %v33 = vunpack.c.l.bf16 %v17
  %v34 = vunpack.c.l.bf16 %v18
  %v35 = vunpack.c.l.bf16 %v19
  %v36 = vunpack.c.l.bf16 %v20
  %v37 = vunpack.c.l.bf16 %v21
  %v38 = vunpack.c.l.bf16 %v22
  %v39 = vunpack.c.l.bf16 %v23
  %vm40 = vcmask 261120
  %v41 = vsel %vm40, %v24, 0.0
  %v42 = vsel %vm40, %v25, 0.0
  %v43 = vadd.f32 %v41, %v42
  %v44 = vsel %vm40, %v26, 0.0
  %v45 = vadd.f32 %v43, %v44
  %v46 = vsel %vm40, %v27, 0.0
  %v47 = vadd.f32 %v45, %v46
  %v48 = vsel %vm40, %v28, 0.0
  %v49 = vadd.f32 %v47, %v48
  %v50 = vsel %vm40, %v29, 0.0
  %v51 = vadd.f32 %v49, %v50
  %v52 = vsel %vm40, %v30, 0.0
  %v53 = vadd.f32 %v51, %v52
  %v54 = vsel %vm40, %v31, 0.0
  %v55 = vadd.f32 %v53, %v54
  %v56 = vsel %vm40, %v32, 0.0
  %v57 = vadd.f32 %v55, %v56
  %v58 = vsel %vm40, %v33, 0.0
  %v59 = vadd.f32 %v57, %v58
  %v60 = vsel %vm40, %v34, 0.0
  %v61 = vadd.f32 %v59, %v60
  %v62 = vsel %vm40, %v35, 0.0
  %v63 = vadd.f32 %v61, %v62
  %v64 = vsel %vm40, %v36, 0.0
  %v65 = vadd.f32 %v63, %v64
  %v66 = vsel %vm40, %v37, 0.0
  %v67 = vadd.f32 %v65, %v66
  %v68 = vsel %vm40, %v38, 0.0
  %v69 = vadd.f32 %v67, %v68
  %v70 = vsel %vm40, %v39, 0.0
  %v71 = vadd.f32 %v69, %v70
  %v72 = vrot.slane %v71, 4
  %v73 = vadd.f32 %v71, %v72
  %v74 = vrot.slane %v73, 2
  %v75 = vadd.f32 %v73, %v74
  %v76 = vrot.slane %v75, 1
  %v77 = vadd.f32 %v75, %v76
  %v78 = vmul.f32 %v24, %v24
  %v79 = vmul.f32 %v25, %v25
  %v80 = vmul.f32 %v26, %v26
  %v81 = vmul.f32 %v27, %v27
  %v82 = vmul.f32 %v28, %v28
  %v83 = vmul.f32 %v29, %v29
  %v84 = vmul.f32 %v30, %v30
  %v85 = vmul.f32 %v31, %v31
  %v86 = vmul.f32 %v32, %v32
  %v87 = vmul.f32 %v33, %v33
  %v88 = vmul.f32 %v34, %v34
  %v89 = vmul.f32 %v35, %v35
  %v90 = vmul.f32 %v36, %v36
  %v91 = vmul.f32 %v37, %v37
  %v92 = vmul.f32 %v38, %v38
  %v93 = vmul.f32 %v39, %v39
  %v94 = vsel %vm40, %v78, 0.0
  %v95 = vsel %vm40, %v79, 0.0
  %v96 = vadd.f32 %v94, %v95
  %v97 = vsel %vm40, %v80, 0.0
  %v98 = vadd.f32 %v96, %v97
  %v99 = vsel %vm40, %v81, 0.0
  %v100 = vadd.f32 %v98, %v99
  %v101 = vsel %vm40, %v82, 0.0
  %v102 = vadd.f32 %v100, %v101
  %v103 = vsel %vm40, %v83, 0.0
  %v104 = vadd.f32 %v102, %v103
  %v105 = vsel %vm40, %v84, 0.0
  %v106 = vadd.f32 %v104, %v105
  %v107 = vsel %vm40, %v85, 0.0
  %v108 = vadd.f32 %v106, %v107
  %v109 = vsel %vm40, %v86, 0.0
  %v110 = vadd.f32 %v108, %v109
  %v111 = vsel %vm40, %v87, 0.0
  %v112 = vadd.f32 %v110, %v111
  %v113 = vsel %vm40, %v88, 0.0
  %v114 = vadd.f32 %v112, %v113
  %v115 = vsel %vm40, %v89, 0.0
  %v116 = vadd.f32 %v114, %v115
  %v117 = vsel %vm40, %v90, 0.0
  %v118 = vadd.f32 %v116, %v117
  %v119 = vsel %vm40, %v91, 0.0
  %v120 = vadd.f32 %v118, %v119
  %v121 = vsel %vm40, %v92, 0.0
  %v122 = vadd.f32 %v120, %v121
  %v123 = vsel %vm40, %v93, 0.0
  %v124 = vadd.f32 %v122, %v123
  %v125 = vrot.slane %v124, 4
  %v126 = vadd.f32 %v124, %v125
  %v127 = vrot.slane %v126, 2
  %v128 = vadd.f32 %v126, %v127
  %v129 = vrot.slane %v128, 1
  %v130 = vadd.f32 %v128, %v129
  %vm131 = vcmask 1040384
  %v132 = vsel %vm131, %v77, %v130
  %vm133 = vcmask 254976
  %134 = vst.msk [vmem:[%s1] sm:$0x3] %vm133, %v132
  // Predicated region
  $region6: #{generator_forward.17} parent=0 // pred_check
    _
  $region7: #{generator_forward.17} parent=0 // pred_check_branch
    %136 = sbr.rel (0) target = $region9
  $region8: #{generator_forward.17} parent=0 // pred_region
    _
  $region9: #{generator_forward.17} parent=0 // pred_fallthru
    _
  // Predicated region
  $region10: #{generator_forward.17} parent=0 // pred_check
    _
  $region11: #{generator_forward.17} parent=0 // pred_check_branch
    %138 = sbr.rel (0) target = $region13
  $region12: #{generator_forward.17} parent=0 // pred_region
    _
  $region13: #{generator_forward.17} parent=0 // pred_fallthru
    _

// kernel: generator_forward.18
$region0: #{generator_forward.18}
  #allocation0 [shape = 'u32[]', space=smem, size = 0x4, offset = 0x4, fixed_abs, tag = 'smem constant byte address 0x4 - core index']
  #allocation1 [shape = 'u32[144,128]{1,0:T(1,128)}', space=vmem, size = 0x12000, scoped, tag = 'internal scratch']
  %s0 = inlined_call_operand.vmem [shape: bf16[128,32], index: 0, kind: input, shape index: {}]
  %s1 = inlined_call_operand.vmem [shape: f32[1,32], index: 1, kind: input, shape index: {}]
  %s2 = inlined_call_operand.vmem [shape: f32[1,32], index: 2, kind: input, shape index: {}]
  %s3 = inlined_call_operand.vmem [shape: bf16[128,32], index: 3, kind: output, shape index: {}]
  %s4 = sld [smem:[#allocation0]]
  $region22: #{generator_forward.18} parent=0
    _
  %s6 = ssub.s32 1, %s4
  %s7 = scalar_select 0, %s6, %s4
  // Predicated region
  $region2: #{generator_forward.18} parent=0 // pred_check
    _
  $region3: #{generator_forward.18} parent=0 // pred_check_branch
    %9 = sbr.rel (0) target = $region5
  $region4: #{generator_forward.18} parent=0 // pred_region
    _
  $region5: #{generator_forward.18} parent=0 // pred_fallthru
    _
  // Predicated region
  $region6: #{generator_forward.18} parent=0 // pred_check
    _
  $region7: #{generator_forward.18} parent=0 // pred_check_branch
    %11 = sbr.rel (0) target = $region9
  $region8: #{generator_forward.18} parent=0 // pred_region
    _
  $region9: #{generator_forward.18} parent=0 // pred_fallthru
    _
  // Predicated region
  $region10: #{generator_forward.18} parent=0 // pred_check
    _
  $region11: #{generator_forward.18} parent=0 // pred_check_branch
    %13 = sbr.rel (0) target = $region13
  $region12: #{generator_forward.18} parent=0 // pred_region
    _
  $region13: #{generator_forward.18} parent=0 // pred_fallthru
    _
  %v14 = vld [vmem:[%s0] sm:$0xf]
  %v15 = vld [vmem:[%s0 + $0x4] sm:$0xf]
  %v16 = vld [vmem:[%s0 + $0x8] sm:$0xf]
  %v17 = vld [vmem:[%s0 + $0xc] sm:$0xf]
  %v18 = vld [vmem:[%s0 + $0x10] sm:$0xf]
  %v19 = vld [vmem:[%s0 + $0x14] sm:$0xf]
  %v20 = vld [vmem:[%s0 + $0x18] sm:$0xf]
  %v21 = vld [vmem:[%s0 + $0x1c] sm:$0xf]
  %v22 = vld [vmem:[%s0 + $0x20] sm:$0xf]
  %v23 = vld [vmem:[%s0 + $0x24] sm:$0xf]
  %v24 = vld [vmem:[%s0 + $0x28] sm:$0xf]
  %v25 = vld [vmem:[%s0 + $0x2c] sm:$0xf]
  %v26 = vld [vmem:[%s0 + $0x30] sm:$0xf]
  %v27 = vld [vmem:[%s0 + $0x34] sm:$0xf]
  %v28 = vld [vmem:[%s0 + $0x38] sm:$0xf]
  %v29 = vld [vmem:[%s0 + $0x3c] sm:$0xf]
  %v30 = vunpack.c.l.bf16 %v14
  %v31 = vunpack.c.l.bf16 %v15
  %v32 = vunpack.c.l.bf16 %v16
  %v33 = vunpack.c.l.bf16 %v17
  %v34 = vunpack.c.l.bf16 %v18
  %v35 = vunpack.c.l.bf16 %v19
  %v36 = vunpack.c.l.bf16 %v20
  %v37 = vunpack.c.l.bf16 %v21
  %v38 = vunpack.c.l.bf16 %v22
  %v39 = vunpack.c.l.bf16 %v23
  %v40 = vunpack.c.l.bf16 %v24
  %v41 = vunpack.c.l.bf16 %v25
  %v42 = vunpack.c.l.bf16 %v26
  %v43 = vunpack.c.l.bf16 %v27
  %v44 = vunpack.c.l.bf16 %v28
  %v45 = vunpack.c.l.bf16 %v29
  %v46 = vld [vmem:[%s1] sm:$0x1]
  %v48 = vlaneseq
  %v49 = vshrl.u32 %v48, 7
  %v50 = vsub.s32 0, %v49
  %v51 = vrot.slane %v46, %v50
  %v53 = vmul.f32 %v30, %v51
  %v54 = vmul.f32 %v31, %v51
  %v55 = vmul.f32 %v32, %v51
  %v56 = vmul.f32 %v33, %v51
  %v57 = vmul.f32 %v34, %v51
  %v58 = vmul.f32 %v35, %v51
  %v59 = vmul.f32 %v36, %v51
  %v60 = vmul.f32 %v37, %v51
  %v61 = vmul.f32 %v38, %v51
  %v62 = vmul.f32 %v39, %v51
  %v63 = vmul.f32 %v40, %v51
  %v64 = vmul.f32 %v41, %v51
  %v65 = vmul.f32 %v42, %v51
  %v66 = vmul.f32 %v43, %v51
  %v67 = vmul.f32 %v44, %v51
  %v68 = vmul.f32 %v45, %v51
  %v69 = vld [vmem:[%s2] sm:$0x1]
  %v71 = vlaneseq
  %v72 = vshrl.u32 %v71, 7
  %v73 = vsub.s32 0, %v72
  %v74 = vrot.slane %v69, %v73
  %v76 = vadd.f32 %v53, %v74
  %v77 = vadd.f32 %v54, %v74
  %v78 = vadd.f32 %v55, %v74
  %v79 = vadd.f32 %v56, %v74
  %v80 = vadd.f32 %v57, %v74
  %v81 = vadd.f32 %v58, %v74
  %v82 = vadd.f32 %v59, %v74
  %v83 = vadd.f32 %v60, %v74
  %v84 = vadd.f32 %v61, %v74
  %v85 = vadd.f32 %v62, %v74
  %v86 = vadd.f32 %v63, %v74
  %v87 = vadd.f32 %v64, %v74
  %v88 = vadd.f32 %v65, %v74
  %v89 = vadd.f32 %v66, %v74
  %v90 = vadd.f32 %v67, %v74
  %v91 = vadd.f32 %v68, %v74
  %v92 = vmax.f32 %v76, 0.0
  %v93 = vmax.f32 %v77, 0.0
  %v94 = vmax.f32 %v78, 0.0
  %v95 = vmax.f32 %v79, 0.0
  %v96 = vmax.f32 %v80, 0.0
  %v97 = vmax.f32 %v81, 0.0
  %v98 = vmax.f32 %v82, 0.0
  %v99 = vmax.f32 %v83, 0.0
  %v100 = vmax.f32 %v84, 0.0
  %v101 = vmax.f32 %v85, 0.0
  %v102 = vmax.f32 %v86, 0.0
  %v103 = vmax.f32 %v87, 0.0
  %v104 = vmax.f32 %v88, 0.0
  %v105 = vmax.f32 %v89, 0.0
  %v106 = vmax.f32 %v90, 0.0
  %v107 = vmax.f32 %v91, 0.0
  %v108 = vpack.c.bf16 %v93, %v92
  %v109 = vpack.c.bf16 %v95, %v94
  %v110 = vpack.c.bf16 %v97, %v96
  %v111 = vpack.c.bf16 %v99, %v98
  %v112 = vpack.c.bf16 %v101, %v100
  %v113 = vpack.c.bf16 %v103, %v102
  %v114 = vpack.c.bf16 %v105, %v104
  %v115 = vpack.c.bf16 %v107, %v106
  %v124 = vunpack.c.l.b16 %v108
  %v125 = vunpack.c.h.b16 %v108
  %v126 = vunpack.c.l.b16 %v109
  %v127 = vunpack.c.h.b16 %v109
  %v128 = vunpack.c.l.b16 %v110
  %v129 = vunpack.c.h.b16 %v110
  %v130 = vunpack.c.l.b16 %v111
  %v131 = vunpack.c.h.b16 %v111
  %v132 = vunpack.c.l.b16 %v112
  %v133 = vunpack.c.h.b16 %v112
  %v134 = vunpack.c.l.b16 %v113
  %v135 = vunpack.c.h.b16 %v113
  %v136 = vunpack.c.l.b16 %v114
  %v137 = vunpack.c.h.b16 %v114
  %v138 = vunpack.c.l.b16 %v115
  %v139 = vunpack.c.h.b16 %v115
  %v140 = vpack.c.b16 %v124, %v124
  %v141 = vpack.c.b16 %v125, %v125
  %v142 = vpack.c.b16 %v126, %v126
  %v143 = vpack.c.b16 %v127, %v127
  %v144 = vpack.c.b16 %v128, %v128
  %v145 = vpack.c.b16 %v129, %v129
  %v146 = vpack.c.b16 %v130, %v130
  %v147 = vpack.c.b16 %v131, %v131
  %v148 = vpack.c.b16 %v132, %v132
  %v149 = vpack.c.b16 %v133, %v133
  %v150 = vpack.c.b16 %v134, %v134
  %v151 = vpack.c.b16 %v135, %v135
  %v152 = vpack.c.b16 %v136, %v136
  %v153 = vpack.c.b16 %v137, %v137
  %v154 = vpack.c.b16 %v138, %v138
  %v155 = vpack.c.b16 %v139, %v139
  %vm172 = vcmask 257024
  %173 = vst.msk [vmem:[%s3] sm:$0xf] %vm172, %v140
  %174 = vst.msk [vmem:[%s3 + $0x4] sm:$0xf] %vm172, %v141
  %175 = vst.msk [vmem:[%s3 + $0x8] sm:$0xf] %vm172, %v142
  %176 = vst.msk [vmem:[%s3 + $0xc] sm:$0xf] %vm172, %v143
  %177 = vst.msk [vmem:[%s3 + $0x10] sm:$0xf] %vm172, %v144
  %178 = vst.msk [vmem:[%s3 + $0x14] sm:$0xf] %vm172, %v145
  %179 = vst.msk [vmem:[%s3 + $0x18] sm:$0xf] %vm172, %v146
  %180 = vst.msk [vmem:[%s3 + $0x1c] sm:$0xf] %vm172, %v147
  %181 = vst.msk [vmem:[%s3 + $0x20] sm:$0xf] %vm172, %v148
  %182 = vst.msk [vmem:[%s3 + $0x24] sm:$0xf] %vm172, %v149
  %183 = vst.msk [vmem:[%s3 + $0x28] sm:$0xf] %vm172, %v150
  %184 = vst.msk [vmem:[%s3 + $0x2c] sm:$0xf] %vm172, %v151
  %185 = vst.msk [vmem:[%s3 + $0x30] sm:$0xf] %vm172, %v152
  %186 = vst.msk [vmem:[%s3 + $0x34] sm:$0xf] %vm172, %v153
  %187 = vst.msk [vmem:[%s3 + $0x38] sm:$0xf] %vm172, %v154
  %188 = vst.msk [vmem:[%s3 + $0x3c] sm:$0xf] %vm172, %v155
  // Predicated region
  $region14: #{generator_forward.18} parent=0 // pred_check
    _
  $region15: #{generator_forward.18} parent=0 // pred_check_branch
    %190 = sbr.rel (0) target = $region17
  $region16: #{generator_forward.18} parent=0 // pred_region
    _
  $region17: #{generator_forward.18} parent=0 // pred_fallthru
    _
  // Predicated region
  $region18: #{generator_forward.18} parent=0 // pred_check
    _
  $region19: #{generator_forward.18} parent=0 // pred_check_branch
    %192 = sbr.rel (0) target = $region21
  $region20: #{generator_forward.18} parent=0 // pred_region
    _
  $region21: #{generator_forward.18} parent=0 // pred_fallthru
    _

// kernel: generator_forward.19
$region0: #{generator_forward.19}
  #allocation0 [shape = 'u32[]', space=smem, size = 0x4, offset = 0x4, fixed_abs, tag = 'smem constant byte address 0x4 - core index']
  #allocation1 [shape = 'u32[144,128]{1,0:T(1,128)}', space=vmem, size = 0x12000, scoped, tag = 'internal scratch']
  %s0 = inlined_call_operand.vmem [shape: bf16[162,128], index: 0, kind: input, shape index: {}]
  %s1 = inlined_call_operand.vmem [shape: bf16[128,64], index: 1, kind: input, shape index: {}]
  %s2 = inlined_call_operand.vmem [shape: bf16[162,64], index: 2, kind: output, shape index: {}]
  %s3 = sld [smem:[#allocation0]]
  $region18: #{generator_forward.19} parent=0
    _
  %s5 = ssub.s32 1, %s3
  %s6 = scalar_select 0, %s5, %s3
  // Predicated region
  $region2: #{generator_forward.19} parent=0 // pred_check
    _
  $region3: #{generator_forward.19} parent=0 // pred_check_branch
    %8 = sbr.rel (0) target = $region5
  $region4: #{generator_forward.19} parent=0 // pred_region
    _
  $region5: #{generator_forward.19} parent=0 // pred_fallthru
    _
  // Predicated region
  $region6: #{generator_forward.19} parent=0 // pred_check
    _
  $region7: #{generator_forward.19} parent=0 // pred_check_branch
    %10 = sbr.rel (0) target = $region9
  $region8: #{generator_forward.19} parent=0 // pred_region
    _
  $region9: #{generator_forward.19} parent=0 // pred_fallthru
    _
  %v12 = vld [vmem:[%s0] sm:$0xf]
  %v13 = vld [vmem:[%s0 + $0x4] sm:$0xf]
  %v14 = vld [vmem:[%s0 + $0x8] sm:$0xf]
  %v15 = vld [vmem:[%s0 + $0xc] sm:$0xf]
  %v16 = vld [vmem:[%s0 + $0x10] sm:$0xf]
  %v17 = vld [vmem:[%s0 + $0x14] sm:$0xf]
  %v18 = vld [vmem:[%s0 + $0x18] sm:$0xf]
  %v19 = vld [vmem:[%s0 + $0x1c] sm:$0xf]
  %v20 = vld [vmem:[%s0 + $0x20] sm:$0xf]
  %v21 = vld [vmem:[%s0 + $0x24] sm:$0xf]
  %v22 = vld [vmem:[%s0 + $0x28] sm:$0xf]
  %v23 = vld [vmem:[%s0 + $0x2c] sm:$0xf]
  %v24 = vld [vmem:[%s0 + $0x30] sm:$0xf]
  %v25 = vld [vmem:[%s0 + $0x34] sm:$0xf]
  %v26 = vld [vmem:[%s0 + $0x38] sm:$0xf]
  %v27 = vld [vmem:[%s0 + $0x3c] sm:$0xf]
  %v28 = vld [vmem:[%s0 + $0x40] sm:$0xf]
  %v29 = vld [vmem:[%s0 + $0x44] sm:$0xf]
  %v30 = vld [vmem:[%s0 + $0x48] sm:$0xf]
  %v31 = vld [vmem:[%s0 + $0x4c] sm:$0xf]
  %v32 = vld [vmem:[%s0 + $0x50] sm:$0x1]
  %v33 = vld [vmem:[%s1] sm:$0xf]
  %v34 = vld [vmem:[%s1 + $0x4] sm:$0xf]
  %v35 = vld [vmem:[%s1 + $0x8] sm:$0xf]
  %v36 = vld [vmem:[%s1 + $0xc] sm:$0xf]
  %v37 = vld [vmem:[%s1 + $0x10] sm:$0xf]
  %v38 = vld [vmem:[%s1 + $0x14] sm:$0xf]
  %v39 = vld [vmem:[%s1 + $0x18] sm:$0xf]
  %v40 = vld [vmem:[%s1 + $0x1c] sm:$0xf]
  %v41 = vld [vmem:[%s1 + $0x20] sm:$0xf]
  %v42 = vld [vmem:[%s1 + $0x24] sm:$0xf]
  %v43 = vld [vmem:[%s1 + $0x28] sm:$0xf]
  %v44 = vld [vmem:[%s1 + $0x2c] sm:$0xf]
  %v45 = vld [vmem:[%s1 + $0x30] sm:$0xf]
  %v46 = vld [vmem:[%s1 + $0x34] sm:$0xf]
  %v47 = vld [vmem:[%s1 + $0x38] sm:$0xf]
  %v48 = vld [vmem:[%s1 + $0x3c] sm:$0xf]
  %v70 = vunpack.c.l.b16 %v12
  %v71 = vunpack.c.l.b16 %v13
  %v72 = vunpack.c.l.b16 %v14
  %v73 = vunpack.c.l.b16 %v15
  %v74 = vunpack.c.l.b16 %v16
  %v75 = vunpack.c.l.b16 %v17
  %v76 = vunpack.c.l.b16 %v18
  %v77 = vunpack.c.l.b16 %v19
  %v78 = vunpack.c.l.b16 %v20
  %v79 = vunpack.c.l.b16 %v21
  %v80 = vunpack.c.l.b16 %v22
  %v81 = vunpack.c.l.b16 %v23
  %v82 = vunpack.c.l.b16 %v24
  %v83 = vunpack.c.l.b16 %v25
  %v84 = vunpack.c.l.b16 %v26
  %v85 = vunpack.c.l.b16 %v27
  %v86 = vunpack.c.l.b16 %v28
  %v87 = vunpack.c.l.b16 %v29
  %v88 = vunpack.c.l.b16 %v30
  %v89 = vunpack.c.l.b16 %v31
  %v90 = vunpack.c.l.b16 %v32
  %v91 = vpack.c.b16 %v71, %v70
  %v92 = vpack.c.b16 %v73, %v72
  %v93 = vpack.c.b16 %v75, %v74
  %v94 = vpack.c.b16 %v77, %v76
  %v95 = vpack.c.b16 %v79, %v78
  %v96 = vpack.c.b16 %v81, %v80
  %v97 = vpack.c.b16 %v83, %v82
  %v98 = vpack.c.b16 %v85, %v84
  %v99 = vpack.c.b16 %v87, %v86
  %v100 = vpack.c.b16 %v89, %v88
  %v101 = vpack.c.b16 %v90, %v90
  %v129 = vunpack.c.l.b16 %v33
  %v130 = vunpack.c.l.b16 %v34
  %v131 = vunpack.c.l.b16 %v35
  %v132 = vunpack.c.l.b16 %v36
  %v133 = vunpack.c.l.b16 %v37
  %v134 = vunpack.c.l.b16 %v38
  %v135 = vunpack.c.l.b16 %v39
  %v136 = vunpack.c.l.b16 %v40
  %v137 = vunpack.c.l.b16 %v41
  %v138 = vunpack.c.l.b16 %v42
  %v139 = vunpack.c.l.b16 %v43
  %v140 = vunpack.c.l.b16 %v44
  %v141 = vunpack.c.l.b16 %v45
  %v142 = vunpack.c.l.b16 %v46
  %v143 = vunpack.c.l.b16 %v47
  %v144 = vunpack.c.l.b16 %v48
  %v145 = vpack.c.b16 %v130, %v129
  %v146 = vpack.c.b16 %v132, %v131
  %v147 = vpack.c.b16 %v134, %v133
  %v148 = vpack.c.b16 %v136, %v135
  %v149 = vpack.c.b16 %v138, %v137
  %v150 = vpack.c.b16 %v140, %v139
  %v151 = vpack.c.b16 %v142, %v141
  %v152 = vpack.c.b16 %v144, %v143
  %161 = vmatprep.subr.bf16.mxu0 0
  %162 = vmatpush1.bf16.msra.mxu0 %v145
  %163 = vmatprep.subr.bf16.mxu0 0
  %164 = vmatpush1.bf16.msra.mxu0 %v146
  %165 = vmatprep.subr.bf16.mxu0 0
  %166 = vmatpush1.bf16.msra.mxu0 %v147
  %167 = vmatprep.subr.bf16.mxu0 0
  %168 = vmatpush1.bf16.msra.mxu0 %v148
  %169 = vmatprep.subr.bf16.mxu0 0
  %170 = vmatpush1.bf16.msra.mxu0 %v149
  %171 = vmatprep.subr.bf16.mxu0 0
  %172 = vmatpush1.bf16.msra.mxu0 %v150
  %173 = vmatprep.subr.bf16.mxu0 0
  %174 = vmatpush1.bf16.msra.mxu0 %v151
  %175 = vmatprep.subr.bf16.mxu0 0
  %176 = vmatpush1.bf16.msra.mxu0 %v152
  %177 = vmatprep.subr.bf16.mxu0 0
  %178 = vmatpush1.bf16.msra.mxu0 0
  %179 = vmatprep.subr.bf16.mxu0 0
  %180 = vmatpush1.bf16.msra.mxu0 0
  %181 = vmatprep.subr.bf16.mxu0 0
  %182 = vmatpush1.bf16.msra.mxu0 0
  %183 = vmatprep.subr.bf16.mxu0 0
  %184 = vmatpush1.bf16.msra.mxu0 0
  %185 = vmatprep.subr.bf16.mxu0 0
  %186 = vmatpush1.bf16.msra.mxu0 0
  %187 = vmatprep.subr.bf16.mxu0 0
  %188 = vmatpush1.bf16.msra.mxu0 0
  %189 = vmatprep.subr.bf16.mxu0 0
  %190 = vmatpush1.bf16.msra.mxu0 0
  %191 = vmatprep.subr.bf16.mxu0 0
  %192 = vmatpush1.bf16.msra.mxu0 0
  %193 = vmatprep.mubr.bf16.mxu0 0
  %194 = vmatmul.mubr.bf16.gmra.mrb[0].mxu0 %v91
  %v195 = vpop.f32.mrb[0].mxu0
  %v196 = vadd.f32 0.0, %v195
  %v197 = vpop.f32.mrb[0].mxu0
  %v198 = vpop.f32.mrb[0].mxu0
  %v199 = vadd.f32 0.0, %v198
  %v200 = vpop.f32.mrb[0].mxu0
  %201 = vmatprep.mubr.bf16.mxu0 0
  %202 = vmatmul.mubr.bf16.gmra.mrb[0].mxu0 %v92
  %v203 = vpop.f32.mrb[0].mxu0
  %v204 = vadd.f32 0.0, %v203
  %v205 = vpop.f32.mrb[0].mxu0
  %v206 = vpop.f32.mrb[0].mxu0
  %v207 = vadd.f32 0.0, %v206
  %v208 = vpop.f32.mrb[0].mxu0
  %209 = vmatprep.mubr.bf16.mxu0 0
  %210 = vmatmul.mubr.bf16.gmra.mrb[0].mxu0 %v93
  %v211 = vpop.f32.mrb[0].mxu0
  %v212 = vadd.f32 0.0, %v211
  %v213 = vpop.f32.mrb[0].mxu0
  %v214 = vpop.f32.mrb[0].mxu0
  %v215 = vadd.f32 0.0, %v214
  %v216 = vpop.f32.mrb[0].mxu0
  %217 = vmatprep.mubr.bf16.mxu0 0
  %218 = vmatmul.mubr.bf16.gmra.mrb[0].mxu0 %v94
  %v219 = vpop.f32.mrb[0].mxu0
  %v220 = vadd.f32 0.0, %v219
  %v221 = vpop.f32.mrb[0].mxu0
  %v222 = vpop.f32.mrb[0].mxu0
  %v223 = vadd.f32 0.0, %v222
  %v224 = vpop.f32.mrb[0].mxu0
  %225 = vmatprep.mubr.bf16.mxu0 0
  %226 = vmatmul.mubr.bf16.gmra.mrb[0].mxu0 %v95
  %v227 = vpop.f32.mrb[0].mxu0
  %v228 = vadd.f32 0.0, %v227
  %v229 = vpop.f32.mrb[0].mxu0
  %v230 = vpop.f32.mrb[0].mxu0
  %v231 = vadd.f32 0.0, %v230
  %v232 = vpop.f32.mrb[0].mxu0
  %233 = vmatprep.mubr.bf16.mxu0 0
  %234 = vmatmul.mubr.bf16.gmra.mrb[0].mxu0 %v96
  %v235 = vpop.f32.mrb[0].mxu0
  %v236 = vadd.f32 0.0, %v235
  %v237 = vpop.f32.mrb[0].mxu0
  %v238 = vpop.f32.mrb[0].mxu0
  %v239 = vadd.f32 0.0, %v238
  %v240 = vpop.f32.mrb[0].mxu0
  %241 = vmatprep.mubr.bf16.mxu0 0
  %242 = vmatmul.mubr.bf16.gmra.mrb[0].mxu0 %v97
  %v243 = vpop.f32.mrb[0].mxu0
  %v244 = vadd.f32 0.0, %v243
  %v245 = vpop.f32.mrb[0].mxu0
  %v246 = vpop.f32.mrb[0].mxu0
  %v247 = vadd.f32 0.0, %v246
  %v248 = vpop.f32.mrb[0].mxu0
  %249 = vmatprep.mubr.bf16.mxu0 0
  %250 = vmatmul.mubr.bf16.gmra.mrb[0].mxu0 %v98
  %v251 = vpop.f32.mrb[0].mxu0
  %v252 = vadd.f32 0.0, %v251
  %v253 = vpop.f32.mrb[0].mxu0
  %v254 = vpop.f32.mrb[0].mxu0
  %v255 = vadd.f32 0.0, %v254
  %v256 = vpop.f32.mrb[0].mxu0
  %257 = vmatprep.mubr.bf16.mxu0 0
  %258 = vmatmul.mubr.bf16.gmra.mrb[0].mxu0 %v99
  %v259 = vpop.f32.mrb[0].mxu0
  %v260 = vadd.f32 0.0, %v259
  %v261 = vpop.f32.mrb[0].mxu0
  %v262 = vpop.f32.mrb[0].mxu0
  %v263 = vadd.f32 0.0, %v262
  %v264 = vpop.f32.mrb[0].mxu0
  %265 = vmatprep.mubr.bf16.mxu0 0
  %266 = vmatmul.mubr.bf16.gmra.mrb[0].mxu0 %v100
  %v267 = vpop.f32.mrb[0].mxu0
  %v268 = vadd.f32 0.0, %v267
  %v269 = vpop.f32.mrb[0].mxu0
  %v270 = vpop.f32.mrb[0].mxu0
  %v271 = vadd.f32 0.0, %v270
  %v272 = vpop.f32.mrb[0].mxu0
  %273 = vmatprep.mubr.bf16.mxu0 0
  %274 = vmatmul.mubr.bf16.gmra.mrb[0].mxu0 %v101
  %v275 = vpop.f32.mrb[0].mxu0
  %v276 = vadd.f32 0.0, %v275
  %v277 = vpop.f32.mrb[0].mxu0
  %v278 = vpop.f32.mrb[0].mxu0
  %v279 = vpop.f32.mrb[0].mxu0
  %280 = vdwg.mxu0
  %v281 = vpack.c.bf16 %v199, %v196
  %v282 = vpack.c.bf16 %v207, %v204
  %v283 = vpack.c.bf16 %v215, %v212
  %v284 = vpack.c.bf16 %v223, %v220
  %v285 = vpack.c.bf16 %v231, %v228
  %v286 = vpack.c.bf16 %v239, %v236
  %v287 = vpack.c.bf16 %v247, %v244
  %v288 = vpack.c.bf16 %v255, %v252
  %v289 = vpack.c.bf16 %v263, %v260
  %v290 = vpack.c.bf16 %v271, %v268
  %v291 = vpack.c.bf16 %v276, %v276
  %v303 = vunpack.c.l.b16 %v281
  %v304 = vunpack.c.h.b16 %v281
  %v305 = vunpack.c.l.b16 %v282
  %v306 = vunpack.c.h.b16 %v282
  %v307 = vunpack.c.l.b16 %v283
  %v308 = vunpack.c.h.b16 %v283
  %v309 = vunpack.c.l.b16 %v284
  %v310 = vunpack.c.h.b16 %v284
  %v311 = vunpack.c.l.b16 %v285
  %v312 = vunpack.c.h.b16 %v285
  %v313 = vunpack.c.l.b16 %v286
  %v314 = vunpack.c.h.b16 %v286
  %v315 = vunpack.c.l.b16 %v287
  %v316 = vunpack.c.h.b16 %v287
  %v317 = vunpack.c.l.b16 %v288
  %v318 = vunpack.c.h.b16 %v288
  %v319 = vunpack.c.l.b16 %v289
  %v320 = vunpack.c.h.b16 %v289
  %v321 = vunpack.c.l.b16 %v290
  %v322 = vunpack.c.h.b16 %v290
  %v323 = vunpack.c.l.b16 %v291
  %v324 = vpack.c.b16 %v303, %v303
  %v325 = vpack.c.b16 %v304, %v304
  %v326 = vpack.c.b16 %v305, %v305
  %v327 = vpack.c.b16 %v306, %v306
  %v328 = vpack.c.b16 %v307, %v307
  %v329 = vpack.c.b16 %v308, %v308
  %v330 = vpack.c.b16 %v309, %v309
  %v331 = vpack.c.b16 %v310, %v310
  %v332 = vpack.c.b16 %v311, %v311
  %v333 = vpack.c.b16 %v312, %v312
  %v334 = vpack.c.b16 %v313, %v313
  %v335 = vpack.c.b16 %v314, %v314
  %v336 = vpack.c.b16 %v315, %v315
  %v337 = vpack.c.b16 %v316, %v316
  %v338 = vpack.c.b16 %v317, %v317
  %v339 = vpack.c.b16 %v318, %v318
  %v340 = vpack.c.b16 %v319, %v319
  %v341 = vpack.c.b16 %v320, %v320
  %v342 = vpack.c.b16 %v321, %v321
  %v343 = vpack.c.b16 %v322, %v322
  %v344 = vpack.c.b16 %v323, %v323
  %vm366 = vcmask 519168
  %367 = vst.msk [vmem:[%s2] sm:$0xf] %vm366, %v324
  %368 = vst.msk [vmem:[%s2 + $0x4] sm:$0xf] %vm366, %v325
  %369 = vst.msk [vmem:[%s2 + $0x8] sm:$0xf] %vm366, %v326
  %370 = vst.msk [vmem:[%s2 + $0xc] sm:$0xf] %vm366, %v327
  %371 = vst.msk [vmem:[%s2 + $0x10] sm:$0xf] %vm366, %v328
  %372 = vst.msk [vmem:[%s2 + $0x14] sm:$0xf] %vm366, %v329
  %373 = vst.msk [vmem:[%s2 + $0x18] sm:$0xf] %vm366, %v330
  %374 = vst.msk [vmem:[%s2 + $0x1c] sm:$0xf] %vm366, %v331
  %375 = vst.msk [vmem:[%s2 + $0x20] sm:$0xf] %vm366, %v332
  %376 = vst.msk [vmem:[%s2 + $0x24] sm:$0xf] %vm366, %v333
  %377 = vst.msk [vmem:[%s2 + $0x28] sm:$0xf] %vm366, %v334
  %378 = vst.msk [vmem:[%s2 + $0x2c] sm:$0xf] %vm366, %v335
  %379 = vst.msk [vmem:[%s2 + $0x30] sm:$0xf] %vm366, %v336
  %380 = vst.msk [vmem:[%s2 + $0x34] sm:$0xf] %vm366, %v337
  %381 = vst.msk [vmem:[%s2 + $0x38] sm:$0xf] %vm366, %v338
  %382 = vst.msk [vmem:[%s2 + $0x3c] sm:$0xf] %vm366, %v339
  %383 = vst.msk [vmem:[%s2 + $0x40] sm:$0xf] %vm366, %v340
  %384 = vst.msk [vmem:[%s2 + $0x44] sm:$0xf] %vm366, %v341
  %385 = vst.msk [vmem:[%s2 + $0x48] sm:$0xf] %vm366, %v342
  %386 = vst.msk [vmem:[%s2 + $0x4c] sm:$0xf] %vm366, %v343
  %vm387 = vcmask 516096
  %388 = vst.msk [vmem:[%s2 + $0x50] sm:$0x1] %vm387, %v344
  // Predicated region
  $region10: #{generator_forward.19} parent=0 // pred_check
    _
  $region11: #{generator_forward.19} parent=0 // pred_check_branch
    %390 = sbr.rel (0) target = $region13
  $region12: #{generator_forward.19} parent=0 // pred_region
    _
  $region13: #{generator_forward.19} parent=0 // pred_fallthru
    _
  // Predicated region
  $region14: #{generator_forward.19} parent=0 // pred_check
    _
  $region15: #{generator_forward.19} parent=0 // pred_check_branch
    %392 = sbr.rel (0) target = $region17
  $region16: #{generator_forward.19} parent=0 // pred_region
    _
  $region17: #{generator_forward.19} parent=0 // pred_fallthru
    _

// kernel: generator_forward.20
$region0: #{generator_forward.20}
  #allocation0 [shape = 'u32[]', space=smem, size = 0x4, offset = 0x4, fixed_abs, tag = 'smem constant byte address 0x4 - core index']
  #allocation1 [shape = 'u32[144,128]{1,0:T(1,128)}', space=vmem, size = 0x12000, scoped, tag = 'internal scratch']
  %s0 = inlined_call_operand.vmem [shape: bf16[512,16], index: 0, kind: input, shape index: {}]
  %s1 = inlined_call_operand.vmem [shape: f32[1,2,16], index: 1, kind: output, shape index: {}]
  %s2 = sld [smem:[#allocation0]]
  $region14: #{generator_forward.20} parent=0
    _
  %s4 = ssub.s32 1, %s2
  %s5 = scalar_select 0, %s4, %s2
  // Predicated region
  $region2: #{generator_forward.20} parent=0 // pred_check
    _
  $region3: #{generator_forward.20} parent=0 // pred_check_branch
    %7 = sbr.rel (0) target = $region5
  $region4: #{generator_forward.20} parent=0 // pred_region
    _
  $region5: #{generator_forward.20} parent=0 // pred_fallthru
    _
  %v8 = vld [vmem:[%s0] sm:$0xf]
  %v9 = vld [vmem:[%s0 + $0x4] sm:$0xf]
  %v10 = vld [vmem:[%s0 + $0x8] sm:$0xf]
  %v11 = vld [vmem:[%s0 + $0xc] sm:$0xf]
  %v12 = vld [vmem:[%s0 + $0x10] sm:$0xf]
  %v13 = vld [vmem:[%s0 + $0x14] sm:$0xf]
  %v14 = vld [vmem:[%s0 + $0x18] sm:$0xf]
  %v15 = vld [vmem:[%s0 + $0x1c] sm:$0xf]
  %v16 = vld [vmem:[%s0 + $0x20] sm:$0xf]
  %v17 = vld [vmem:[%s0 + $0x24] sm:$0xf]
  %v18 = vld [vmem:[%s0 + $0x28] sm:$0xf]
  %v19 = vld [vmem:[%s0 + $0x2c] sm:$0xf]
  %v20 = vld [vmem:[%s0 + $0x30] sm:$0xf]
  %v21 = vld [vmem:[%s0 + $0x34] sm:$0xf]
  %v22 = vld [vmem:[%s0 + $0x38] sm:$0xf]
  %v23 = vld [vmem:[%s0 + $0x3c] sm:$0xf]
  %v24 = vld [vmem:[%s0 + $0x40] sm:$0xf]
  %v25 = vld [vmem:[%s0 + $0x44] sm:$0xf]
  %v26 = vld [vmem:[%s0 + $0x48] sm:$0xf]
  %v27 = vld [vmem:[%s0 + $0x4c] sm:$0xf]
  %v28 = vld [vmem:[%s0 + $0x50] sm:$0xf]
  %v29 = vld [vmem:[%s0 + $0x54] sm:$0xf]
  %v30 = vld [vmem:[%s0 + $0x58] sm:$0xf]
  %v31 = vld [vmem:[%s0 + $0x5c] sm:$0xf]
  %v32 = vld [vmem:[%s0 + $0x60] sm:$0xf]
  %v33 = vld [vmem:[%s0 + $0x64] sm:$0xf]
  %v34 = vld [vmem:[%s0 + $0x68] sm:$0xf]
  %v35 = vld [vmem:[%s0 + $0x6c] sm:$0xf]
  %v36 = vld [vmem:[%s0 + $0x70] sm:$0xf]
  %v37 = vld [vmem:[%s0 + $0x74] sm:$0xf]
  %v38 = vld [vmem:[%s0 + $0x78] sm:$0xf]
  %v39 = vld [vmem:[%s0 + $0x7c] sm:$0xf]
  %v40 = vld [vmem:[%s0 + $0x80] sm:$0xf]
  %v41 = vld [vmem:[%s0 + $0x84] sm:$0xf]
  %v42 = vld [vmem:[%s0 + $0x88] sm:$0xf]
  %v43 = vld [vmem:[%s0 + $0x8c] sm:$0xf]
  %v44 = vld [vmem:[%s0 + $0x90] sm:$0xf]
  %v45 = vld [vmem:[%s0 + $0x94] sm:$0xf]
  %v46 = vld [vmem:[%s0 + $0x98] sm:$0xf]
  %v47 = vld [vmem:[%s0 + $0x9c] sm:$0xf]
  %v48 = vld [vmem:[%s0 + $0xa0] sm:$0xf]
  %v49 = vld [vmem:[%s0 + $0xa4] sm:$0xf]
  %v50 = vld [vmem:[%s0 + $0xa8] sm:$0xf]
  %v51 = vld [vmem:[%s0 + $0xac] sm:$0xf]
  %v52 = vld [vmem:[%s0 + $0xb0] sm:$0xf]
  %v53 = vld [vmem:[%s0 + $0xb4] sm:$0xf]
  %v54 = vld [vmem:[%s0 + $0xb8] sm:$0xf]
  %v55 = vld [vmem:[%s0 + $0xbc] sm:$0xf]
  %v56 = vld [vmem:[%s0 + $0xc0] sm:$0xf]
  %v57 = vld [vmem:[%s0 + $0xc4] sm:$0xf]
  %v58 = vld [vmem:[%s0 + $0xc8] sm:$0xf]
  %v59 = vld [vmem:[%s0 + $0xcc] sm:$0xf]
  %v60 = vld [vmem:[%s0 + $0xd0] sm:$0xf]
  %v61 = vld [vmem:[%s0 + $0xd4] sm:$0xf]
  %v62 = vld [vmem:[%s0 + $0xd8] sm:$0xf]
  %v63 = vld [vmem:[%s0 + $0xdc] sm:$0xf]
  %v64 = vld [vmem:[%s0 + $0xe0] sm:$0xf]
  %v65 = vld [vmem:[%s0 + $0xe4] sm:$0xf]
  %v66 = vld [vmem:[%s0 + $0xe8] sm:$0xf]
  %v67 = vld [vmem:[%s0 + $0xec] sm:$0xf]
  %v68 = vld [vmem:[%s0 + $0xf0] sm:$0xf]
  %v69 = vld [vmem:[%s0 + $0xf4] sm:$0xf]
  %v70 = vld [vmem:[%s0 + $0xf8] sm:$0xf]
  %v71 = vld [vmem:[%s0 + $0xfc] sm:$0xf]
  %v72 = vunpack.c.l.bf16 %v8
  %v73 = vunpack.c.l.bf16 %v9
  %v74 = vunpack.c.l.bf16 %v10
  %v75 = vunpack.c.l.bf16 %v11
  %v76 = vunpack.c.l.bf16 %v12
  %v77 = vunpack.c.l.bf16 %v13
  %v78 = vunpack.c.l.bf16 %v14
  %v79 = vunpack.c.l.bf16 %v15
  %v80 = vunpack.c.l.bf16 %v16
  %v81 = vunpack.c.l.bf16 %v17
  %v82 = vunpack.c.l.bf16 %v18
  %v83 = vunpack.c.l.bf16 %v19
  %v84 = vunpack.c.l.bf16 %v20
  %v85 = vunpack.c.l.bf16 %v21
  %v86 = vunpack.c.l.bf16 %v22
  %v87 = vunpack.c.l.bf16 %v23
  %v88 = vunpack.c.l.bf16 %v24
  %v89 = vunpack.c.l.bf16 %v25
  %v90 = vunpack.c.l.bf16 %v26
  %v91 = vunpack.c.l.bf16 %v27
  %v92 = vunpack.c.l.bf16 %v28
  %v93 = vunpack.c.l.bf16 %v29
  %v94 = vunpack.c.l.bf16 %v30
  %v95 = vunpack.c.l.bf16 %v31
  %v96 = vunpack.c.l.bf16 %v32
  %v97 = vunpack.c.l.bf16 %v33
  %v98 = vunpack.c.l.bf16 %v34
  %v99 = vunpack.c.l.bf16 %v35
  %v100 = vunpack.c.l.bf16 %v36
  %v101 = vunpack.c.l.bf16 %v37
  %v102 = vunpack.c.l.bf16 %v38
  %v103 = vunpack.c.l.bf16 %v39
  %v104 = vunpack.c.l.bf16 %v40
  %v105 = vunpack.c.l.bf16 %v41
  %v106 = vunpack.c.l.bf16 %v42
  %v107 = vunpack.c.l.bf16 %v43
  %v108 = vunpack.c.l.bf16 %v44
  %v109 = vunpack.c.l.bf16 %v45
  %v110 = vunpack.c.l.bf16 %v46
  %v111 = vunpack.c.l.bf16 %v47
  %v112 = vunpack.c.l.bf16 %v48
  %v113 = vunpack.c.l.bf16 %v49
  %v114 = vunpack.c.l.bf16 %v50
  %v115 = vunpack.c.l.bf16 %v51
  %v116 = vunpack.c.l.bf16 %v52
  %v117 = vunpack.c.l.bf16 %v53
  %v118 = vunpack.c.l.bf16 %v54
  %v119 = vunpack.c.l.bf16 %v55
  %v120 = vunpack.c.l.bf16 %v56
  %v121 = vunpack.c.l.bf16 %v57
  %v122 = vunpack.c.l.bf16 %v58
  %v123 = vunpack.c.l.bf16 %v59
  %v124 = vunpack.c.l.bf16 %v60
  %v125 = vunpack.c.l.bf16 %v61
  %v126 = vunpack.c.l.bf16 %v62
  %v127 = vunpack.c.l.bf16 %v63
  %v128 = vunpack.c.l.bf16 %v64
  %v129 = vunpack.c.l.bf16 %v65
  %v130 = vunpack.c.l.bf16 %v66
  %v131 = vunpack.c.l.bf16 %v67
  %v132 = vunpack.c.l.bf16 %v68
  %v133 = vunpack.c.l.bf16 %v69
  %v134 = vunpack.c.l.bf16 %v70
  %v135 = vunpack.c.l.bf16 %v71
  %vm136 = vcmask 130048
  %v137 = vsel %vm136, %v72, 0.0
  %v138 = vsel %vm136, %v73, 0.0
  %v139 = vadd.f32 %v137, %v138
  %v140 = vsel %vm136, %v74, 0.0
  %v141 = vadd.f32 %v139, %v140
  %v142 = vsel %vm136, %v75, 0.0
  %v143 = vadd.f32 %v141, %v142
  %v144 = vsel %vm136, %v76, 0.0
  %v145 = vadd.f32 %v143, %v144
  %v146 = vsel %vm136, %v77, 0.0
  %v147 = vadd.f32 %v145, %v146
  %v148 = vsel %vm136, %v78, 0.0
  %v149 = vadd.f32 %v147, %v148
  %v150 = vsel %vm136, %v79, 0.0
  %v151 = vadd.f32 %v149, %v150
  %v152 = vsel %vm136, %v80, 0.0
  %v153 = vadd.f32 %v151, %v152
  %v154 = vsel %vm136, %v81, 0.0
  %v155 = vadd.f32 %v153, %v154
  %v156 = vsel %vm136, %v82, 0.0
  %v157 = vadd.f32 %v155, %v156
  %v158 = vsel %vm136, %v83, 0.0
  %v159 = vadd.f32 %v157, %v158
  %v160 = vsel %vm136, %v84, 0.0
  %v161 = vadd.f32 %v159, %v160
  %v162 = vsel %vm136, %v85, 0.0
  %v163 = vadd.f32 %v161, %v162
  %v164 = vsel %vm136, %v86, 0.0
  %v165 = vadd.f32 %v163, %v164
  %v166 = vsel %vm136, %v87, 0.0
  %v167 = vadd.f32 %v165, %v166
  %v168 = vsel %vm136, %v88, 0.0
  %v169 = vadd.f32 %v167, %v168
  %v170 = vsel %vm136, %v89, 0.0
  %v171 = vadd.f32 %v169, %v170
  %v172 = vsel %vm136, %v90, 0.0
  %v173 = vadd.f32 %v171, %v172
  %v174 = vsel %vm136, %v91, 0.0
  %v175 = vadd.f32 %v173, %v174
  %v176 = vsel %vm136, %v92, 0.0
  %v177 = vadd.f32 %v175, %v176
  %v178 = vsel %vm136, %v93, 0.0
  %v179 = vadd.f32 %v177, %v178
  %v180 = vsel %vm136, %v94, 0.0
  %v181 = vadd.f32 %v179, %v180
  %v182 = vsel %vm136, %v95, 0.0
  %v183 = vadd.f32 %v181, %v182
  %v184 = vsel %vm136, %v96, 0.0
  %v185 = vadd.f32 %v183, %v184
  %v186 = vsel %vm136, %v97, 0.0
  %v187 = vadd.f32 %v185, %v186
  %v188 = vsel %vm136, %v98, 0.0
  %v189 = vadd.f32 %v187, %v188
  %v190 = vsel %vm136, %v99, 0.0
  %v191 = vadd.f32 %v189, %v190
  %v192 = vsel %vm136, %v100, 0.0
  %v193 = vadd.f32 %v191, %v192
  %v194 = vsel %vm136, %v101, 0.0
  %v195 = vadd.f32 %v193, %v194
  %v196 = vsel %vm136, %v102, 0.0
  %v197 = vadd.f32 %v195, %v196
  %v198 = vsel %vm136, %v103, 0.0
  %v199 = vadd.f32 %v197, %v198
  %v200 = vsel %vm136, %v104, 0.0
  %v201 = vadd.f32 %v199, %v200
  %v202 = vsel %vm136, %v105, 0.0
  %v203 = vadd.f32 %v201, %v202
  %v204 = vsel %vm136, %v106, 0.0
  %v205 = vadd.f32 %v203, %v204
  %v206 = vsel %vm136, %v107, 0.0
  %v207 = vadd.f32 %v205, %v206
  %v208 = vsel %vm136, %v108, 0.0
  %v209 = vadd.f32 %v207, %v208
  %v210 = vsel %vm136, %v109, 0.0
  %v211 = vadd.f32 %v209, %v210
  %v212 = vsel %vm136, %v110, 0.0
  %v213 = vadd.f32 %v211, %v212
  %v214 = vsel %vm136, %v111, 0.0
  %v215 = vadd.f32 %v213, %v214
  %v216 = vsel %vm136, %v112, 0.0
  %v217 = vadd.f32 %v215, %v216
  %v218 = vsel %vm136, %v113, 0.0
  %v219 = vadd.f32 %v217, %v218
  %v220 = vsel %vm136, %v114, 0.0
  %v221 = vadd.f32 %v219, %v220
  %v222 = vsel %vm136, %v115, 0.0
  %v223 = vadd.f32 %v221, %v222
  %v224 = vsel %vm136, %v116, 0.0
  %v225 = vadd.f32 %v223, %v224
  %v226 = vsel %vm136, %v117, 0.0
  %v227 = vadd.f32 %v225, %v226
  %v228 = vsel %vm136, %v118, 0.0
  %v229 = vadd.f32 %v227, %v228
  %v230 = vsel %vm136, %v119, 0.0
  %v231 = vadd.f32 %v229, %v230
  %v232 = vsel %vm136, %v120, 0.0
  %v233 = vadd.f32 %v231, %v232
  %v234 = vsel %vm136, %v121, 0.0
  %v235 = vadd.f32 %v233, %v234
  %v236 = vsel %vm136, %v122, 0.0
  %v237 = vadd.f32 %v235, %v236
  %v238 = vsel %vm136, %v123, 0.0
  %v239 = vadd.f32 %v237, %v238
  %v240 = vsel %vm136, %v124, 0.0
  %v241 = vadd.f32 %v239, %v240
  %v242 = vsel %vm136, %v125, 0.0
  %v243 = vadd.f32 %v241, %v242
  %v244 = vsel %vm136, %v126, 0.0
  %v245 = vadd.f32 %v243, %v244
  %v246 = vsel %vm136, %v127, 0.0
  %v247 = vadd.f32 %v245, %v246
  %v248 = vsel %vm136, %v128, 0.0
  %v249 = vadd.f32 %v247, %v248
  %v250 = vsel %vm136, %v129, 0.0
  %v251 = vadd.f32 %v249, %v250
  %v252 = vsel %vm136, %v130, 0.0
  %v253 = vadd.f32 %v251, %v252
  %v254 = vsel %vm136, %v131, 0.0
  %v255 = vadd.f32 %v253, %v254
  %v256 = vsel %vm136, %v132, 0.0
  %v257 = vadd.f32 %v255, %v256
  %v258 = vsel %vm136, %v133, 0.0
  %v259 = vadd.f32 %v257, %v258
  %v260 = vsel %vm136, %v134, 0.0
  %v261 = vadd.f32 %v259, %v260
  %v262 = vsel %vm136, %v135, 0.0
  %v263 = vadd.f32 %v261, %v262
  %v264 = vrot.slane %v263, 4
  %v265 = vadd.f32 %v263, %v264
  %v266 = vrot.slane %v265, 2
  %v267 = vadd.f32 %v265, %v266
  %v268 = vrot.slane %v267, 1
  %v269 = vadd.f32 %v267, %v268
  %v270 = vmul.f32 %v72, %v72
  %v271 = vmul.f32 %v73, %v73
  %v272 = vmul.f32 %v74, %v74
  %v273 = vmul.f32 %v75, %v75
  %v274 = vmul.f32 %v76, %v76
  %v275 = vmul.f32 %v77, %v77
  %v276 = vmul.f32 %v78, %v78
  %v277 = vmul.f32 %v79, %v79
  %v278 = vmul.f32 %v80, %v80
  %v279 = vmul.f32 %v81, %v81
  %v280 = vmul.f32 %v82, %v82
  %v281 = vmul.f32 %v83, %v83
  %v282 = vmul.f32 %v84, %v84
  %v283 = vmul.f32 %v85, %v85
  %v284 = vmul.f32 %v86, %v86
  %v285 = vmul.f32 %v87, %v87
  %v286 = vmul.f32 %v88, %v88
  %v287 = vmul.f32 %v89, %v89
  %v288 = vmul.f32 %v90, %v90
  %v289 = vmul.f32 %v91, %v91
  %v290 = vmul.f32 %v92, %v92
  %v291 = vmul.f32 %v93, %v93
  %v292 = vmul.f32 %v94, %v94
  %v293 = vmul.f32 %v95, %v95
  %v294 = vmul.f32 %v96, %v96
  %v295 = vmul.f32 %v97, %v97
  %v296 = vmul.f32 %v98, %v98
  %v297 = vmul.f32 %v99, %v99
  %v298 = vmul.f32 %v100, %v100
  %v299 = vmul.f32 %v101, %v101
  %v300 = vmul.f32 %v102, %v102
  %v301 = vmul.f32 %v103, %v103
  %v302 = vmul.f32 %v104, %v104
  %v303 = vmul.f32 %v105, %v105
  %v304 = vmul.f32 %v106, %v106
  %v305 = vmul.f32 %v107, %v107
  %v306 = vmul.f32 %v108, %v108
  %v307 = vmul.f32 %v109, %v109
  %v308 = vmul.f32 %v110, %v110
  %v309 = vmul.f32 %v111, %v111
  %v310 = vmul.f32 %v112, %v112
  %v311 = vmul.f32 %v113, %v113
  %v312 = vmul.f32 %v114, %v114
  %v313 = vmul.f32 %v115, %v115
  %v314 = vmul.f32 %v116, %v116
  %v315 = vmul.f32 %v117, %v117
  %v316 = vmul.f32 %v118, %v118
  %v317 = vmul.f32 %v119, %v119
  %v318 = vmul.f32 %v120, %v120
  %v319 = vmul.f32 %v121, %v121
  %v320 = vmul.f32 %v122, %v122
  %v321 = vmul.f32 %v123, %v123
  %v322 = vmul.f32 %v124, %v124
  %v323 = vmul.f32 %v125, %v125
  %v324 = vmul.f32 %v126, %v126
  %v325 = vmul.f32 %v127, %v127
  %v326 = vmul.f32 %v128, %v128
  %v327 = vmul.f32 %v129, %v129
  %v328 = vmul.f32 %v130, %v130
  %v329 = vmul.f32 %v131, %v131
  %v330 = vmul.f32 %v132, %v132
  %v331 = vmul.f32 %v133, %v133
  %v332 = vmul.f32 %v134, %v134
  %v333 = vmul.f32 %v135, %v135
  %v334 = vsel %vm136, %v270, 0.0
  %v335 = vsel %vm136, %v271, 0.0
  %v336 = vadd.f32 %v334, %v335
  %v337 = vsel %vm136, %v272, 0.0
  %v338 = vadd.f32 %v336, %v337
  %v339 = vsel %vm136, %v273, 0.0
  %v340 = vadd.f32 %v338, %v339
  %v341 = vsel %vm136, %v274, 0.0
  %v342 = vadd.f32 %v340, %v341
  %v343 = vsel %vm136, %v275, 0.0
  %v344 = vadd.f32 %v342, %v343
  %v345 = vsel %vm136, %v276, 0.0
  %v346 = vadd.f32 %v344, %v345
  %v347 = vsel %vm136, %v277, 0.0
  %v348 = vadd.f32 %v346, %v347
  %v349 = vsel %vm136, %v278, 0.0
  %v350 = vadd.f32 %v348, %v349
  %v351 = vsel %vm136, %v279, 0.0
  %v352 = vadd.f32 %v350, %v351
  %v353 = vsel %vm136, %v280, 0.0
  %v354 = vadd.f32 %v352, %v353
  %v355 = vsel %vm136, %v281, 0.0
  %v356 = vadd.f32 %v354, %v355
  %v357 = vsel %vm136, %v282, 0.0
  %v358 = vadd.f32 %v356, %v357
  %v359 = vsel %vm136, %v283, 0.0
  %v360 = vadd.f32 %v358, %v359
  %v361 = vsel %vm136, %v284, 0.0
  %v362 = vadd.f32 %v360, %v361
  %v363 = vsel %vm136, %v285, 0.0
  %v364 = vadd.f32 %v362, %v363
  %v365 = vsel %vm136, %v286, 0.0
  %v366 = vadd.f32 %v364, %v365
  %v367 = vsel %vm136, %v287, 0.0
  %v368 = vadd.f32 %v366, %v367
  %v369 = vsel %vm136, %v288, 0.0
  %v370 = vadd.f32 %v368, %v369
  %v371 = vsel %vm136, %v289, 0.0
  %v372 = vadd.f32 %v370, %v371
  %v373 = vsel %vm136, %v290, 0.0
  %v374 = vadd.f32 %v372, %v373
  %v375 = vsel %vm136, %v291, 0.0
  %v376 = vadd.f32 %v374, %v375
  %v377 = vsel %vm136, %v292, 0.0
  %v378 = vadd.f32 %v376, %v377
  %v379 = vsel %vm136, %v293, 0.0
  %v380 = vadd.f32 %v378, %v379
  %v381 = vsel %vm136, %v294, 0.0
  %v382 = vadd.f32 %v380, %v381
  %v383 = vsel %vm136, %v295, 0.0
  %v384 = vadd.f32 %v382, %v383
  %v385 = vsel %vm136, %v296, 0.0
  %v386 = vadd.f32 %v384, %v385
  %v387 = vsel %vm136, %v297, 0.0
  %v388 = vadd.f32 %v386, %v387
  %v389 = vsel %vm136, %v298, 0.0
  %v390 = vadd.f32 %v388, %v389
  %v391 = vsel %vm136, %v299, 0.0
  %v392 = vadd.f32 %v390, %v391
  %v393 = vsel %vm136, %v300, 0.0
  %v394 = vadd.f32 %v392, %v393
  %v395 = vsel %vm136, %v301, 0.0
  %v396 = vadd.f32 %v394, %v395
  %v397 = vsel %vm136, %v302, 0.0
  %v398 = vadd.f32 %v396, %v397
  %v399 = vsel %vm136, %v303, 0.0
  %v400 = vadd.f32 %v398, %v399
  %v401 = vsel %vm136, %v304, 0.0
  %v402 = vadd.f32 %v400, %v401
  %v403 = vsel %vm136, %v305, 0.0
  %v404 = vadd.f32 %v402, %v403
  %v405 = vsel %vm136, %v306, 0.0
  %v406 = vadd.f32 %v404, %v405
  %v407 = vsel %vm136, %v307, 0.0
  %v408 = vadd.f32 %v406, %v407
  %v409 = vsel %vm136, %v308, 0.0
  %v410 = vadd.f32 %v408, %v409
  %v411 = vsel %vm136, %v309, 0.0
  %v412 = vadd.f32 %v410, %v411
  %v413 = vsel %vm136, %v310, 0.0
  %v414 = vadd.f32 %v412, %v413
  %v415 = vsel %vm136, %v311, 0.0
  %v416 = vadd.f32 %v414, %v415
  %v417 = vsel %vm136, %v312, 0.0
  %v418 = vadd.f32 %v416, %v417
  %v419 = vsel %vm136, %v313, 0.0
  %v420 = vadd.f32 %v418, %v419
  %v421 = vsel %vm136, %v314, 0.0
  %v422 = vadd.f32 %v420, %v421
  %v423 = vsel %vm136, %v315, 0.0
  %v424 = vadd.f32 %v422, %v423
  %v425 = vsel %vm136, %v316, 0.0
  %v426 = vadd.f32 %v424, %v425
  %v427 = vsel %vm136, %v317, 0.0
  %v428 = vadd.f32 %v426, %v427
  %v429 = vsel %vm136, %v318, 0.0
  %v430 = vadd.f32 %v428, %v429
  %v431 = vsel %vm136, %v319, 0.0
  %v432 = vadd.f32 %v430, %v431
  %v433 = vsel %vm136, %v320, 0.0
  %v434 = vadd.f32 %v432, %v433
  %v435 = vsel %vm136, %v321, 0.0
  %v436 = vadd.f32 %v434, %v435
  %v437 = vsel %vm136, %v322, 0.0
  %v438 = vadd.f32 %v436, %v437
  %v439 = vsel %vm136, %v323, 0.0
  %v440 = vadd.f32 %v438, %v439
  %v441 = vsel %vm136, %v324, 0.0
  %v442 = vadd.f32 %v440, %v441
  %v443 = vsel %vm136, %v325, 0.0
  %v444 = vadd.f32 %v442, %v443
  %v445 = vsel %vm136, %v326, 0.0
  %v446 = vadd.f32 %v444, %v445
  %v447 = vsel %vm136, %v327, 0.0
  %v448 = vadd.f32 %v446, %v447
  %v449 = vsel %vm136, %v328, 0.0
  %v450 = vadd.f32 %v448, %v449
  %v451 = vsel %vm136, %v329, 0.0
  %v452 = vadd.f32 %v450, %v451
  %v453 = vsel %vm136, %v330, 0.0
  %v454 = vadd.f32 %v452, %v453
  %v455 = vsel %vm136, %v331, 0.0
  %v456 = vadd.f32 %v454, %v455
  %v457 = vsel %vm136, %v332, 0.0
  %v458 = vadd.f32 %v456, %v457
  %v459 = vsel %vm136, %v333, 0.0
  %v460 = vadd.f32 %v458, %v459
  %v461 = vrot.slane %v460, 4
  %v462 = vadd.f32 %v460, %v461
  %v463 = vrot.slane %v462, 2
  %v464 = vadd.f32 %v462, %v463
  %v465 = vrot.slane %v464, 1
  %v466 = vadd.f32 %v464, %v465
  %vm467 = vcmask 1040384
  %v468 = vsel %vm467, %v269, %v466
  %vm469 = vcmask 123904
  %470 = vst.msk [vmem:[%s1] sm:$0x3] %vm469, %v468
  // Predicated region
  $region6: #{generator_forward.20} parent=0 // pred_check
    _
  $region7: #{generator_forward.20} parent=0 // pred_check_branch
    %472 = sbr.rel (0) target = $region9
  $region8: #{generator_forward.20} parent=0 // pred_region
    _
  $region9: #{generator_forward.20} parent=0 // pred_fallthru
    _
  // Predicated region
  $region10: #{generator_forward.20} parent=0 // pred_check
    _
  $region11: #{generator_forward.20} parent=0 // pred_check_branch
    %474 = sbr.rel (0) target = $region13
  $region12: #{generator_forward.20} parent=0 // pred_region
    _
  $region13: #{generator_forward.20} parent=0 // pred_fallthru
    _

// kernel: generator_forward.21
$region0: #{generator_forward.21}
  #allocation0 [shape = 'u32[]', space=smem, size = 0x4, offset = 0x4, fixed_abs, tag = 'smem constant byte address 0x4 - core index']
  #allocation1 [shape = 'u32[144,128]{1,0:T(1,128)}', space=vmem, size = 0x12000, scoped, tag = 'internal scratch']
  %s0 = inlined_call_operand.vmem [shape: bf16[512,16], index: 0, kind: input, shape index: {}]
  %s1 = inlined_call_operand.vmem [shape: f32[1,16], index: 1, kind: input, shape index: {}]
  %s2 = inlined_call_operand.vmem [shape: f32[1,16], index: 2, kind: input, shape index: {}]
  %s3 = inlined_call_operand.vmem [shape: bf16[512,16], index: 3, kind: output, shape index: {}]
  %s4 = sld [smem:[#allocation0]]
  $region22: #{generator_forward.21} parent=0
    _
  %s6 = ssub.s32 1, %s4
  %s7 = scalar_select 0, %s6, %s4
  // Predicated region
  $region2: #{generator_forward.21} parent=0 // pred_check
    _
  $region3: #{generator_forward.21} parent=0 // pred_check_branch
    %9 = sbr.rel (0) target = $region5
  $region4: #{generator_forward.21} parent=0 // pred_region
    _
  $region5: #{generator_forward.21} parent=0 // pred_fallthru
    _
  // Predicated region
  $region6: #{generator_forward.21} parent=0 // pred_check
    _
  $region7: #{generator_forward.21} parent=0 // pred_check_branch
    %11 = sbr.rel (0) target = $region9
  $region8: #{generator_forward.21} parent=0 // pred_region
    _
  $region9: #{generator_forward.21} parent=0 // pred_fallthru
    _
  // Predicated region
  $region10: #{generator_forward.21} parent=0 // pred_check
    _
  $region11: #{generator_forward.21} parent=0 // pred_check_branch
    %13 = sbr.rel (0) target = $region13
  $region12: #{generator_forward.21} parent=0 // pred_region
    _
  $region13: #{generator_forward.21} parent=0 // pred_fallthru
    _
  %v14 = vld [vmem:[%s0] sm:$0xf]
  %v15 = vld [vmem:[%s0 + $0x4] sm:$0xf]
  %v16 = vld [vmem:[%s0 + $0x8] sm:$0xf]
  %v17 = vld [vmem:[%s0 + $0xc] sm:$0xf]
  %v18 = vld [vmem:[%s0 + $0x10] sm:$0xf]
  %v19 = vld [vmem:[%s0 + $0x14] sm:$0xf]
  %v20 = vld [vmem:[%s0 + $0x18] sm:$0xf]
  %v21 = vld [vmem:[%s0 + $0x1c] sm:$0xf]
  %v22 = vld [vmem:[%s0 + $0x20] sm:$0xf]
  %v23 = vld [vmem:[%s0 + $0x24] sm:$0xf]
  %v24 = vld [vmem:[%s0 + $0x28] sm:$0xf]
  %v25 = vld [vmem:[%s0 + $0x2c] sm:$0xf]
  %v26 = vld [vmem:[%s0 + $0x30] sm:$0xf]
  %v27 = vld [vmem:[%s0 + $0x34] sm:$0xf]
  %v28 = vld [vmem:[%s0 + $0x38] sm:$0xf]
  %v29 = vld [vmem:[%s0 + $0x3c] sm:$0xf]
  %v30 = vld [vmem:[%s0 + $0x40] sm:$0xf]
  %v31 = vld [vmem:[%s0 + $0x44] sm:$0xf]
  %v32 = vld [vmem:[%s0 + $0x48] sm:$0xf]
  %v33 = vld [vmem:[%s0 + $0x4c] sm:$0xf]
  %v34 = vld [vmem:[%s0 + $0x50] sm:$0xf]
  %v35 = vld [vmem:[%s0 + $0x54] sm:$0xf]
  %v36 = vld [vmem:[%s0 + $0x58] sm:$0xf]
  %v37 = vld [vmem:[%s0 + $0x5c] sm:$0xf]
  %v38 = vld [vmem:[%s0 + $0x60] sm:$0xf]
  %v39 = vld [vmem:[%s0 + $0x64] sm:$0xf]
  %v40 = vld [vmem:[%s0 + $0x68] sm:$0xf]
  %v41 = vld [vmem:[%s0 + $0x6c] sm:$0xf]
  %v42 = vld [vmem:[%s0 + $0x70] sm:$0xf]
  %v43 = vld [vmem:[%s0 + $0x74] sm:$0xf]
  %v44 = vld [vmem:[%s0 + $0x78] sm:$0xf]
  %v45 = vld [vmem:[%s0 + $0x7c] sm:$0xf]
  %v46 = vld [vmem:[%s0 + $0x80] sm:$0xf]
  %v47 = vld [vmem:[%s0 + $0x84] sm:$0xf]
  %v48 = vld [vmem:[%s0 + $0x88] sm:$0xf]
  %v49 = vld [vmem:[%s0 + $0x8c] sm:$0xf]
  %v50 = vld [vmem:[%s0 + $0x90] sm:$0xf]
  %v51 = vld [vmem:[%s0 + $0x94] sm:$0xf]
  %v52 = vld [vmem:[%s0 + $0x98] sm:$0xf]
  %v53 = vld [vmem:[%s0 + $0x9c] sm:$0xf]
  %v54 = vld [vmem:[%s0 + $0xa0] sm:$0xf]
  %v55 = vld [vmem:[%s0 + $0xa4] sm:$0xf]
  %v56 = vld [vmem:[%s0 + $0xa8] sm:$0xf]
  %v57 = vld [vmem:[%s0 + $0xac] sm:$0xf]
  %v58 = vld [vmem:[%s0 + $0xb0] sm:$0xf]
  %v59 = vld [vmem:[%s0 + $0xb4] sm:$0xf]
  %v60 = vld [vmem:[%s0 + $0xb8] sm:$0xf]
  %v61 = vld [vmem:[%s0 + $0xbc] sm:$0xf]
  %v62 = vld [vmem:[%s0 + $0xc0] sm:$0xf]
  %v63 = vld [vmem:[%s0 + $0xc4] sm:$0xf]
  %v64 = vld [vmem:[%s0 + $0xc8] sm:$0xf]
  %v65 = vld [vmem:[%s0 + $0xcc] sm:$0xf]
  %v66 = vld [vmem:[%s0 + $0xd0] sm:$0xf]
  %v67 = vld [vmem:[%s0 + $0xd4] sm:$0xf]
  %v68 = vld [vmem:[%s0 + $0xd8] sm:$0xf]
  %v69 = vld [vmem:[%s0 + $0xdc] sm:$0xf]
  %v70 = vld [vmem:[%s0 + $0xe0] sm:$0xf]
  %v71 = vld [vmem:[%s0 + $0xe4] sm:$0xf]
  %v72 = vld [vmem:[%s0 + $0xe8] sm:$0xf]
  %v73 = vld [vmem:[%s0 + $0xec] sm:$0xf]
  %v74 = vld [vmem:[%s0 + $0xf0] sm:$0xf]
  %v75 = vld [vmem:[%s0 + $0xf4] sm:$0xf]
  %v76 = vld [vmem:[%s0 + $0xf8] sm:$0xf]
  %v77 = vld [vmem:[%s0 + $0xfc] sm:$0xf]
  %v78 = vunpack.c.l.bf16 %v14
  %v79 = vunpack.c.l.bf16 %v15
  %v80 = vunpack.c.l.bf16 %v16
  %v81 = vunpack.c.l.bf16 %v17
  %v82 = vunpack.c.l.bf16 %v18
  %v83 = vunpack.c.l.bf16 %v19
  %v84 = vunpack.c.l.bf16 %v20
  %v85 = vunpack.c.l.bf16 %v21
  %v86 = vunpack.c.l.bf16 %v22
  %v87 = vunpack.c.l.bf16 %v23
  %v88 = vunpack.c.l.bf16 %v24
  %v89 = vunpack.c.l.bf16 %v25
  %v90 = vunpack.c.l.bf16 %v26
  %v91 = vunpack.c.l.bf16 %v27
  %v92 = vunpack.c.l.bf16 %v28
  %v93 = vunpack.c.l.bf16 %v29
  %v94 = vunpack.c.l.bf16 %v30
  %v95 = vunpack.c.l.bf16 %v31
  %v96 = vunpack.c.l.bf16 %v32
  %v97 = vunpack.c.l.bf16 %v33
  %v98 = vunpack.c.l.bf16 %v34
  %v99 = vunpack.c.l.bf16 %v35
  %v100 = vunpack.c.l.bf16 %v36
  %v101 = vunpack.c.l.bf16 %v37
  %v102 = vunpack.c.l.bf16 %v38
  %v103 = vunpack.c.l.bf16 %v39
  %v104 = vunpack.c.l.bf16 %v40
  %v105 = vunpack.c.l.bf16 %v41
  %v106 = vunpack.c.l.bf16 %v42
  %v107 = vunpack.c.l.bf16 %v43
  %v108 = vunpack.c.l.bf16 %v44
  %v109 = vunpack.c.l.bf16 %v45
  %v110 = vunpack.c.l.bf16 %v46
  %v111 = vunpack.c.l.bf16 %v47
  %v112 = vunpack.c.l.bf16 %v48
  %v113 = vunpack.c.l.bf16 %v49
  %v114 = vunpack.c.l.bf16 %v50
  %v115 = vunpack.c.l.bf16 %v51
  %v116 = vunpack.c.l.bf16 %v52
  %v117 = vunpack.c.l.bf16 %v53
  %v118 = vunpack.c.l.bf16 %v54
  %v119 = vunpack.c.l.bf16 %v55
  %v120 = vunpack.c.l.bf16 %v56
  %v121 = vunpack.c.l.bf16 %v57
  %v122 = vunpack.c.l.bf16 %v58
  %v123 = vunpack.c.l.bf16 %v59
  %v124 = vunpack.c.l.bf16 %v60
  %v125 = vunpack.c.l.bf16 %v61
  %v126 = vunpack.c.l.bf16 %v62
  %v127 = vunpack.c.l.bf16 %v63
  %v128 = vunpack.c.l.bf16 %v64
  %v129 = vunpack.c.l.bf16 %v65
  %v130 = vunpack.c.l.bf16 %v66
  %v131 = vunpack.c.l.bf16 %v67
  %v132 = vunpack.c.l.bf16 %v68
  %v133 = vunpack.c.l.bf16 %v69
  %v134 = vunpack.c.l.bf16 %v70
  %v135 = vunpack.c.l.bf16 %v71
  %v136 = vunpack.c.l.bf16 %v72
  %v137 = vunpack.c.l.bf16 %v73
  %v138 = vunpack.c.l.bf16 %v74
  %v139 = vunpack.c.l.bf16 %v75
  %v140 = vunpack.c.l.bf16 %v76
  %v141 = vunpack.c.l.bf16 %v77
  %v142 = vld [vmem:[%s1] sm:$0x1]
  %v144 = vlaneseq
  %v145 = vshrl.u32 %v144, 7
  %v146 = vsub.s32 0, %v145
  %v147 = vrot.slane %v142, %v146
  %v149 = vmul.f32 %v78, %v147
  %v150 = vmul.f32 %v79, %v147
  %v151 = vmul.f32 %v80, %v147
  %v152 = vmul.f32 %v81, %v147
  %v153 = vmul.f32 %v82, %v147
  %v154 = vmul.f32 %v83, %v147
  %v155 = vmul.f32 %v84, %v147
  %v156 = vmul.f32 %v85, %v147
  %v157 = vmul.f32 %v86, %v147
  %v158 = vmul.f32 %v87, %v147
  %v159 = vmul.f32 %v88, %v147
  %v160 = vmul.f32 %v89, %v147
  %v161 = vmul.f32 %v90, %v147
  %v162 = vmul.f32 %v91, %v147
  %v163 = vmul.f32 %v92, %v147
  %v164 = vmul.f32 %v93, %v147
  %v165 = vmul.f32 %v94, %v147
  %v166 = vmul.f32 %v95, %v147
  %v167 = vmul.f32 %v96, %v147
  %v168 = vmul.f32 %v97, %v147
  %v169 = vmul.f32 %v98, %v147
  %v170 = vmul.f32 %v99, %v147
  %v171 = vmul.f32 %v100, %v147
  %v172 = vmul.f32 %v101, %v147
  %v173 = vmul.f32 %v102, %v147
  %v174 = vmul.f32 %v103, %v147
  %v175 = vmul.f32 %v104, %v147
  %v176 = vmul.f32 %v105, %v147
  %v177 = vmul.f32 %v106, %v147
  %v178 = vmul.f32 %v107, %v147
  %v179 = vmul.f32 %v108, %v147
  %v180 = vmul.f32 %v109, %v147
  %v181 = vmul.f32 %v110, %v147
  %v182 = vmul.f32 %v111, %v147
  %v183 = vmul.f32 %v112, %v147
  %v184 = vmul.f32 %v113, %v147
  %v185 = vmul.f32 %v114, %v147
  %v186 = vmul.f32 %v115, %v147
  %v187 = vmul.f32 %v116, %v147
  %v188 = vmul.f32 %v117, %v147
  %v189 = vmul.f32 %v118, %v147
  %v190 = vmul.f32 %v119, %v147
  %v191 = vmul.f32 %v120, %v147
  %v192 = vmul.f32 %v121, %v147
  %v193 = vmul.f32 %v122, %v147
  %v194 = vmul.f32 %v123, %v147
  %v195 = vmul.f32 %v124, %v147
  %v196 = vmul.f32 %v125, %v147
  %v197 = vmul.f32 %v126, %v147
  %v198 = vmul.f32 %v127, %v147
  %v199 = vmul.f32 %v128, %v147
  %v200 = vmul.f32 %v129, %v147
  %v201 = vmul.f32 %v130, %v147
  %v202 = vmul.f32 %v131, %v147
  %v203 = vmul.f32 %v132, %v147
  %v204 = vmul.f32 %v133, %v147
  %v205 = vmul.f32 %v134, %v147
  %v206 = vmul.f32 %v135, %v147
  %v207 = vmul.f32 %v136, %v147
  %v208 = vmul.f32 %v137, %v147
  %v209 = vmul.f32 %v138, %v147
  %v210 = vmul.f32 %v139, %v147
  %v211 = vmul.f32 %v140, %v147
  %v212 = vmul.f32 %v141, %v147
  %v213 = vld [vmem:[%s2] sm:$0x1]
  %v215 = vlaneseq
  %v216 = vshrl.u32 %v215, 7
  %v217 = vsub.s32 0, %v216
  %v218 = vrot.slane %v213, %v217
  %v220 = vadd.f32 %v149, %v218
  %v221 = vadd.f32 %v150, %v218
  %v222 = vadd.f32 %v151, %v218
  %v223 = vadd.f32 %v152, %v218
  %v224 = vadd.f32 %v153, %v218
  %v225 = vadd.f32 %v154, %v218
  %v226 = vadd.f32 %v155, %v218
  %v227 = vadd.f32 %v156, %v218
  %v228 = vadd.f32 %v157, %v218
  %v229 = vadd.f32 %v158, %v218
  %v230 = vadd.f32 %v159, %v218
  %v231 = vadd.f32 %v160, %v218
  %v232 = vadd.f32 %v161, %v218
  %v233 = vadd.f32 %v162, %v218
  %v234 = vadd.f32 %v163, %v218
  %v235 = vadd.f32 %v164, %v218
  %v236 = vadd.f32 %v165, %v218
  %v237 = vadd.f32 %v166, %v218
  %v238 = vadd.f32 %v167, %v218
  %v239 = vadd.f32 %v168, %v218
  %v240 = vadd.f32 %v169, %v218
  %v241 = vadd.f32 %v170, %v218
  %v242 = vadd.f32 %v171, %v218
  %v243 = vadd.f32 %v172, %v218
  %v244 = vadd.f32 %v173, %v218
  %v245 = vadd.f32 %v174, %v218
  %v246 = vadd.f32 %v175, %v218
  %v247 = vadd.f32 %v176, %v218
  %v248 = vadd.f32 %v177, %v218
  %v249 = vadd.f32 %v178, %v218
  %v250 = vadd.f32 %v179, %v218
  %v251 = vadd.f32 %v180, %v218
  %v252 = vadd.f32 %v181, %v218
  %v253 = vadd.f32 %v182, %v218
  %v254 = vadd.f32 %v183, %v218
  %v255 = vadd.f32 %v184, %v218
  %v256 = vadd.f32 %v185, %v218
  %v257 = vadd.f32 %v186, %v218
  %v258 = vadd.f32 %v187, %v218
  %v259 = vadd.f32 %v188, %v218
  %v260 = vadd.f32 %v189, %v218
  %v261 = vadd.f32 %v190, %v218
  %v262 = vadd.f32 %v191, %v218
  %v263 = vadd.f32 %v192, %v218
  %v264 = vadd.f32 %v193, %v218
  %v265 = vadd.f32 %v194, %v218
  %v266 = vadd.f32 %v195, %v218
  %v267 = vadd.f32 %v196, %v218
  %v268 = vadd.f32 %v197, %v218
  %v269 = vadd.f32 %v198, %v218
  %v270 = vadd.f32 %v199, %v218
  %v271 = vadd.f32 %v200, %v218
  %v272 = vadd.f32 %v201, %v218
  %v273 = vadd.f32 %v202, %v218
  %v274 = vadd.f32 %v203, %v218
  %v275 = vadd.f32 %v204, %v218
  %v276 = vadd.f32 %v205, %v218
  %v277 = vadd.f32 %v206, %v218
  %v278 = vadd.f32 %v207, %v218
  %v279 = vadd.f32 %v208, %v218
  %v280 = vadd.f32 %v209, %v218
  %v281 = vadd.f32 %v210, %v218
  %v282 = vadd.f32 %v211, %v218
  %v283 = vadd.f32 %v212, %v218
  %v284 = vmax.f32 %v220, 0.0
  %v285 = vmax.f32 %v221, 0.0
  %v286 = vmax.f32 %v222, 0.0
  %v287 = vmax.f32 %v223, 0.0
  %v288 = vmax.f32 %v224, 0.0
  %v289 = vmax.f32 %v225, 0.0
  %v290 = vmax.f32 %v226, 0.0
  %v291 = vmax.f32 %v227, 0.0
  %v292 = vmax.f32 %v228, 0.0
  %v293 = vmax.f32 %v229, 0.0
  %v294 = vmax.f32 %v230, 0.0
  %v295 = vmax.f32 %v231, 0.0
  %v296 = vmax.f32 %v232, 0.0
  %v297 = vmax.f32 %v233, 0.0
  %v298 = vmax.f32 %v234, 0.0
  %v299 = vmax.f32 %v235, 0.0
  %v300 = vmax.f32 %v236, 0.0
  %v301 = vmax.f32 %v237, 0.0
  %v302 = vmax.f32 %v238, 0.0
  %v303 = vmax.f32 %v239, 0.0
  %v304 = vmax.f32 %v240, 0.0
  %v305 = vmax.f32 %v241, 0.0
  %v306 = vmax.f32 %v242, 0.0
  %v307 = vmax.f32 %v243, 0.0
  %v308 = vmax.f32 %v244, 0.0
  %v309 = vmax.f32 %v245, 0.0
  %v310 = vmax.f32 %v246, 0.0
  %v311 = vmax.f32 %v247, 0.0
  %v312 = vmax.f32 %v248, 0.0
  %v313 = vmax.f32 %v249, 0.0
  %v314 = vmax.f32 %v250, 0.0
  %v315 = vmax.f32 %v251, 0.0
  %v316 = vmax.f32 %v252, 0.0
  %v317 = vmax.f32 %v253, 0.0
  %v318 = vmax.f32 %v254, 0.0
  %v319 = vmax.f32 %v255, 0.0
  %v320 = vmax.f32 %v256, 0.0
  %v321 = vmax.f32 %v257, 0.0
  %v322 = vmax.f32 %v258, 0.0
  %v323 = vmax.f32 %v259, 0.0
  %v324 = vmax.f32 %v260, 0.0
  %v325 = vmax.f32 %v261, 0.0
  %v326 = vmax.f32 %v262, 0.0
  %v327 = vmax.f32 %v263, 0.0
  %v328 = vmax.f32 %v264, 0.0
  %v329 = vmax.f32 %v265, 0.0
  %v330 = vmax.f32 %v266, 0.0
  %v331 = vmax.f32 %v267, 0.0
  %v332 = vmax.f32 %v268, 0.0
  %v333 = vmax.f32 %v269, 0.0
  %v334 = vmax.f32 %v270, 0.0
  %v335 = vmax.f32 %v271, 0.0
  %v336 = vmax.f32 %v272, 0.0
  %v337 = vmax.f32 %v273, 0.0
  %v338 = vmax.f32 %v274, 0.0
  %v339 = vmax.f32 %v275, 0.0
  %v340 = vmax.f32 %v276, 0.0
  %v341 = vmax.f32 %v277, 0.0
  %v342 = vmax.f32 %v278, 0.0
  %v343 = vmax.f32 %v279, 0.0
  %v344 = vmax.f32 %v280, 0.0
  %v345 = vmax.f32 %v281, 0.0
  %v346 = vmax.f32 %v282, 0.0
  %v347 = vmax.f32 %v283, 0.0
  %v348 = vpack.c.bf16 %v285, %v284
  %v349 = vpack.c.bf16 %v287, %v286
  %v350 = vpack.c.bf16 %v289, %v288
  %v351 = vpack.c.bf16 %v291, %v290
  %v352 = vpack.c.bf16 %v293, %v292
  %v353 = vpack.c.bf16 %v295, %v294
  %v354 = vpack.c.bf16 %v297, %v296
  %v355 = vpack.c.bf16 %v299, %v298
  %v356 = vpack.c.bf16 %v301, %v300
  %v357 = vpack.c.bf16 %v303, %v302
  %v358 = vpack.c.bf16 %v305, %v304
  %v359 = vpack.c.bf16 %v307, %v306
  %v360 = vpack.c.bf16 %v309, %v308
  %v361 = vpack.c.bf16 %v311, %v310
  %v362 = vpack.c.bf16 %v313, %v312
  %v363 = vpack.c.bf16 %v315, %v314
  %v364 = vpack.c.bf16 %v317, %v316
  %v365 = vpack.c.bf16 %v319, %v318
  %v366 = vpack.c.bf16 %v321, %v320
  %v367 = vpack.c.bf16 %v323, %v322
  %v368 = vpack.c.bf16 %v325, %v324
  %v369 = vpack.c.bf16 %v327, %v326
  %v370 = vpack.c.bf16 %v329, %v328
  %v371 = vpack.c.bf16 %v331, %v330
  %v372 = vpack.c.bf16 %v333, %v332
  %v373 = vpack.c.bf16 %v335, %v334
  %v374 = vpack.c.bf16 %v337, %v336
  %v375 = vpack.c.bf16 %v339, %v338
  %v376 = vpack.c.bf16 %v341, %v340
  %v377 = vpack.c.bf16 %v343, %v342
  %v378 = vpack.c.bf16 %v345, %v344
  %v379 = vpack.c.bf16 %v347, %v346
  %v412 = vunpack.c.l.b16 %v348
  %v413 = vunpack.c.h.b16 %v348
  %v414 = vunpack.c.l.b16 %v349
  %v415 = vunpack.c.h.b16 %v349
  %v416 = vunpack.c.l.b16 %v350
  %v417 = vunpack.c.h.b16 %v350
  %v418 = vunpack.c.l.b16 %v351
  %v419 = vunpack.c.h.b16 %v351
  %v420 = vunpack.c.l.b16 %v352
  %v421 = vunpack.c.h.b16 %v352
  %v422 = vunpack.c.l.b16 %v353
  %v423 = vunpack.c.h.b16 %v353
  %v424 = vunpack.c.l.b16 %v354
  %v425 = vunpack.c.h.b16 %v354
  %v426 = vunpack.c.l.b16 %v355
  %v427 = vunpack.c.h.b16 %v355
  %v428 = vunpack.c.l.b16 %v356
  %v429 = vunpack.c.h.b16 %v356
  %v430 = vunpack.c.l.b16 %v357
  %v431 = vunpack.c.h.b16 %v357
  %v432 = vunpack.c.l.b16 %v358
  %v433 = vunpack.c.h.b16 %v358
  %v434 = vunpack.c.l.b16 %v359
  %v435 = vunpack.c.h.b16 %v359
  %v436 = vunpack.c.l.b16 %v360
  %v437 = vunpack.c.h.b16 %v360
  %v438 = vunpack.c.l.b16 %v361
  %v439 = vunpack.c.h.b16 %v361
  %v440 = vunpack.c.l.b16 %v362
  %v441 = vunpack.c.h.b16 %v362
  %v442 = vunpack.c.l.b16 %v363
  %v443 = vunpack.c.h.b16 %v363
  %v444 = vunpack.c.l.b16 %v364
  %v445 = vunpack.c.h.b16 %v364
  %v446 = vunpack.c.l.b16 %v365
  %v447 = vunpack.c.h.b16 %v365
  %v448 = vunpack.c.l.b16 %v366
  %v449 = vunpack.c.h.b16 %v366
  %v450 = vunpack.c.l.b16 %v367
  %v451 = vunpack.c.h.b16 %v367
  %v452 = vunpack.c.l.b16 %v368
  %v453 = vunpack.c.h.b16 %v368
  %v454 = vunpack.c.l.b16 %v369
  %v455 = vunpack.c.h.b16 %v369
  %v456 = vunpack.c.l.b16 %v370
  %v457 = vunpack.c.h.b16 %v370
  %v458 = vunpack.c.l.b16 %v371
  %v459 = vunpack.c.h.b16 %v371
  %v460 = vunpack.c.l.b16 %v372
  %v461 = vunpack.c.h.b16 %v372
  %v462 = vunpack.c.l.b16 %v373
  %v463 = vunpack.c.h.b16 %v373
  %v464 = vunpack.c.l.b16 %v374
  %v465 = vunpack.c.h.b16 %v374
  %v466 = vunpack.c.l.b16 %v375
  %v467 = vunpack.c.h.b16 %v375
  %v468 = vunpack.c.l.b16 %v376
  %v469 = vunpack.c.h.b16 %v376
  %v470 = vunpack.c.l.b16 %v377
  %v471 = vunpack.c.h.b16 %v377
  %v472 = vunpack.c.l.b16 %v378
  %v473 = vunpack.c.h.b16 %v378
  %v474 = vunpack.c.l.b16 %v379
  %v475 = vunpack.c.h.b16 %v379
  %v476 = vpack.c.b16 %v412, %v412
  %v477 = vpack.c.b16 %v413, %v413
  %v478 = vpack.c.b16 %v414, %v414
  %v479 = vpack.c.b16 %v415, %v415
  %v480 = vpack.c.b16 %v416, %v416
  %v481 = vpack.c.b16 %v417, %v417
  %v482 = vpack.c.b16 %v418, %v418
  %v483 = vpack.c.b16 %v419, %v419
  %v484 = vpack.c.b16 %v420, %v420
  %v485 = vpack.c.b16 %v421, %v421
  %v486 = vpack.c.b16 %v422, %v422
  %v487 = vpack.c.b16 %v423, %v423
  %v488 = vpack.c.b16 %v424, %v424
  %v489 = vpack.c.b16 %v425, %v425
  %v490 = vpack.c.b16 %v426, %v426
  %v491 = vpack.c.b16 %v427, %v427
  %v492 = vpack.c.b16 %v428, %v428
  %v493 = vpack.c.b16 %v429, %v429
  %v494 = vpack.c.b16 %v430, %v430
  %v495 = vpack.c.b16 %v431, %v431
  %v496 = vpack.c.b16 %v432, %v432
  %v497 = vpack.c.b16 %v433, %v433
  %v498 = vpack.c.b16 %v434, %v434
  %v499 = vpack.c.b16 %v435, %v435
  %v500 = vpack.c.b16 %v436, %v436
  %v501 = vpack.c.b16 %v437, %v437
  %v502 = vpack.c.b16 %v438, %v438
  %v503 = vpack.c.b16 %v439, %v439
  %v504 = vpack.c.b16 %v440, %v440
  %v505 = vpack.c.b16 %v441, %v441
  %v506 = vpack.c.b16 %v442, %v442
  %v507 = vpack.c.b16 %v443, %v443
  %v508 = vpack.c.b16 %v444, %v444
  %v509 = vpack.c.b16 %v445, %v445
  %v510 = vpack.c.b16 %v446, %v446
  %v511 = vpack.c.b16 %v447, %v447
  %v512 = vpack.c.b16 %v448, %v448
  %v513 = vpack.c.b16 %v449, %v449
  %v514 = vpack.c.b16 %v450, %v450
  %v515 = vpack.c.b16 %v451, %v451
  %v516 = vpack.c.b16 %v452, %v452
  %v517 = vpack.c.b16 %v453, %v453
  %v518 = vpack.c.b16 %v454, %v454
  %v519 = vpack.c.b16 %v455, %v455
  %v520 = vpack.c.b16 %v456, %v456
  %v521 = vpack.c.b16 %v457, %v457
  %v522 = vpack.c.b16 %v458, %v458
  %v523 = vpack.c.b16 %v459, %v459
  %v524 = vpack.c.b16 %v460, %v460
  %v525 = vpack.c.b16 %v461, %v461
  %v526 = vpack.c.b16 %v462, %v462
  %v527 = vpack.c.b16 %v463, %v463
  %v528 = vpack.c.b16 %v464, %v464
  %v529 = vpack.c.b16 %v465, %v465
  %v530 = vpack.c.b16 %v466, %v466
  %v531 = vpack.c.b16 %v467, %v467
  %v532 = vpack.c.b16 %v468, %v468
  %v533 = vpack.c.b16 %v469, %v469
  %v534 = vpack.c.b16 %v470, %v470
  %v535 = vpack.c.b16 %v471, %v471
  %v536 = vpack.c.b16 %v472, %v472
  %v537 = vpack.c.b16 %v473, %v473
  %v538 = vpack.c.b16 %v474, %v474
  %v539 = vpack.c.b16 %v475, %v475
  %vm604 = vcmask 125952
  %605 = vst.msk [vmem:[%s3] sm:$0xf] %vm604, %v476
  %606 = vst.msk [vmem:[%s3 + $0x4] sm:$0xf] %vm604, %v477
  %607 = vst.msk [vmem:[%s3 + $0x8] sm:$0xf] %vm604, %v478
  %608 = vst.msk [vmem:[%s3 + $0xc] sm:$0xf] %vm604, %v479
  %609 = vst.msk [vmem:[%s3 + $0x10] sm:$0xf] %vm604, %v480
  %610 = vst.msk [vmem:[%s3 + $0x14] sm:$0xf] %vm604, %v481
  %611 = vst.msk [vmem:[%s3 + $0x18] sm:$0xf] %vm604, %v482
  %612 = vst.msk [vmem:[%s3 + $0x1c] sm:$0xf] %vm604, %v483
  %613 = vst.msk [vmem:[%s3 + $0x20] sm:$0xf] %vm604, %v484
  %614 = vst.msk [vmem:[%s3 + $0x24] sm:$0xf] %vm604, %v485
  %615 = vst.msk [vmem:[%s3 + $0x28] sm:$0xf] %vm604, %v486
  %616 = vst.msk [vmem:[%s3 + $0x2c] sm:$0xf] %vm604, %v487
  %617 = vst.msk [vmem:[%s3 + $0x30] sm:$0xf] %vm604, %v488
  %618 = vst.msk [vmem:[%s3 + $0x34] sm:$0xf] %vm604, %v489
  %619 = vst.msk [vmem:[%s3 + $0x38] sm:$0xf] %vm604, %v490
  %620 = vst.msk [vmem:[%s3 + $0x3c] sm:$0xf] %vm604, %v491
  %621 = vst.msk [vmem:[%s3 + $0x40] sm:$0xf] %vm604, %v492
  %622 = vst.msk [vmem:[%s3 + $0x44] sm:$0xf] %vm604, %v493
  %623 = vst.msk [vmem:[%s3 + $0x48] sm:$0xf] %vm604, %v494
  %624 = vst.msk [vmem:[%s3 + $0x4c] sm:$0xf] %vm604, %v495
  %625 = vst.msk [vmem:[%s3 + $0x50] sm:$0xf] %vm604, %v496
  %626 = vst.msk [vmem:[%s3 + $0x54] sm:$0xf] %vm604, %v497
  %627 = vst.msk [vmem:[%s3 + $0x58] sm:$0xf] %vm604, %v498
  %628 = vst.msk [vmem:[%s3 + $0x5c] sm:$0xf] %vm604, %v499
  %629 = vst.msk [vmem:[%s3 + $0x60] sm:$0xf] %vm604, %v500
  %630 = vst.msk [vmem:[%s3 + $0x64] sm:$0xf] %vm604, %v501
  %631 = vst.msk [vmem:[%s3 + $0x68] sm:$0xf] %vm604, %v502
  %632 = vst.msk [vmem:[%s3 + $0x6c] sm:$0xf] %vm604, %v503
  %633 = vst.msk [vmem:[%s3 + $0x70] sm:$0xf] %vm604, %v504
  %634 = vst.msk [vmem:[%s3 + $0x74] sm:$0xf] %vm604, %v505
  %635 = vst.msk [vmem:[%s3 + $0x78] sm:$0xf] %vm604, %v506
  %636 = vst.msk [vmem:[%s3 + $0x7c] sm:$0xf] %vm604, %v507
  %637 = vst.msk [vmem:[%s3 + $0x80] sm:$0xf] %vm604, %v508
  %638 = vst.msk [vmem:[%s3 + $0x84] sm:$0xf] %vm604, %v509
  %639 = vst.msk [vmem:[%s3 + $0x88] sm:$0xf] %vm604, %v510
  %640 = vst.msk [vmem:[%s3 + $0x8c] sm:$0xf] %vm604, %v511
  %641 = vst.msk [vmem:[%s3 + $0x90] sm:$0xf] %vm604, %v512
  %642 = vst.msk [vmem:[%s3 + $0x94] sm:$0xf] %vm604, %v513
  %643 = vst.msk [vmem:[%s3 + $0x98] sm:$0xf] %vm604, %v514
  %644 = vst.msk [vmem:[%s3 + $0x9c] sm:$0xf] %vm604, %v515
  %645 = vst.msk [vmem:[%s3 + $0xa0] sm:$0xf] %vm604, %v516
  %646 = vst.msk [vmem:[%s3 + $0xa4] sm:$0xf] %vm604, %v517
  %647 = vst.msk [vmem:[%s3 + $0xa8] sm:$0xf] %vm604, %v518
  %648 = vst.msk [vmem:[%s3 + $0xac] sm:$0xf] %vm604, %v519
  %649 = vst.msk [vmem:[%s3 + $0xb0] sm:$0xf] %vm604, %v520
  %650 = vst.msk [vmem:[%s3 + $0xb4] sm:$0xf] %vm604, %v521
  %651 = vst.msk [vmem:[%s3 + $0xb8] sm:$0xf] %vm604, %v522
  %652 = vst.msk [vmem:[%s3 + $0xbc] sm:$0xf] %vm604, %v523
  %653 = vst.msk [vmem:[%s3 + $0xc0] sm:$0xf] %vm604, %v524
  %654 = vst.msk [vmem:[%s3 + $0xc4] sm:$0xf] %vm604, %v525
  %655 = vst.msk [vmem:[%s3 + $0xc8] sm:$0xf] %vm604, %v526
  %656 = vst.msk [vmem:[%s3 + $0xcc] sm:$0xf] %vm604, %v527
  %657 = vst.msk [vmem:[%s3 + $0xd0] sm:$0xf] %vm604, %v528
  %658 = vst.msk [vmem:[%s3 + $0xd4] sm:$0xf] %vm604, %v529
  %659 = vst.msk [vmem:[%s3 + $0xd8] sm:$0xf] %vm604, %v530
  %660 = vst.msk [vmem:[%s3 + $0xdc] sm:$0xf] %vm604, %v531
  %661 = vst.msk [vmem:[%s3 + $0xe0] sm:$0xf] %vm604, %v532
  %662 = vst.msk [vmem:[%s3 + $0xe4] sm:$0xf] %vm604, %v533
  %663 = vst.msk [vmem:[%s3 + $0xe8] sm:$0xf] %vm604, %v534
  %664 = vst.msk [vmem:[%s3 + $0xec] sm:$0xf] %vm604, %v535
  %665 = vst.msk [vmem:[%s3 + $0xf0] sm:$0xf] %vm604, %v536
  %666 = vst.msk [vmem:[%s3 + $0xf4] sm:$0xf] %vm604, %v537
  %667 = vst.msk [vmem:[%s3 + $0xf8] sm:$0xf] %vm604, %v538
  %668 = vst.msk [vmem:[%s3 + $0xfc] sm:$0xf] %vm604, %v539
  // Predicated region
  $region14: #{generator_forward.21} parent=0 // pred_check
    _
  $region15: #{generator_forward.21} parent=0 // pred_check_branch
    %670 = sbr.rel (0) target = $region17
  $region16: #{generator_forward.21} parent=0 // pred_region
    _
  $region17: #{generator_forward.21} parent=0 // pred_fallthru
    _
  // Predicated region
  $region18: #{generator_forward.21} parent=0 // pred_check
    _
  $region19: #{generator_forward.21} parent=0 // pred_check_branch
    %672 = sbr.rel (0) target = $region21
  $region20: #{generator_forward.21} parent=0 // pred_region
    _
  $region21: #{generator_forward.21} parent=0 // pred_fallthru
    _

// kernel: generator_forward.22
$region0: #{generator_forward.22}
  #allocation0 [shape = 'u32[]', space=smem, size = 0x4, offset = 0x4, fixed_abs, tag = 'smem constant byte address 0x4 - core index']
  #allocation1 [shape = 'u32[144,128]{1,0:T(1,128)}', space=vmem, size = 0x12000, scoped, tag = 'internal scratch']
  %s0 = inlined_call_operand.vmem [shape: bf16[578,64], index: 0, kind: input, shape index: {}]
  %s1 = inlined_call_operand.vmem [shape: bf16[64,32], index: 1, kind: input, shape index: {}]
  %s2 = inlined_call_operand.vmem [shape: bf16[578,32], index: 2, kind: output, shape index: {}]
  %s3 = sld [smem:[#allocation0]]
  $region18: #{generator_forward.22} parent=0
    _
  %s5 = ssub.s32 1, %s3
  %s6 = scalar_select 0, %s5, %s3
  // Predicated region
  $region2: #{generator_forward.22} parent=0 // pred_check
    _
  $region3: #{generator_forward.22} parent=0 // pred_check_branch
    %8 = sbr.rel (0) target = $region5
  $region4: #{generator_forward.22} parent=0 // pred_region
    _
  $region5: #{generator_forward.22} parent=0 // pred_fallthru
    _
  // Predicated region
  $region6: #{generator_forward.22} parent=0 // pred_check
    _
  $region7: #{generator_forward.22} parent=0 // pred_check_branch
    %10 = sbr.rel (0) target = $region9
  $region8: #{generator_forward.22} parent=0 // pred_region
    _
  $region9: #{generator_forward.22} parent=0 // pred_fallthru
    _
  %v12 = vld [vmem:[%s0] sm:$0xf]
  %v13 = vld [vmem:[%s0 + $0x4] sm:$0xf]
  %v14 = vld [vmem:[%s0 + $0x8] sm:$0xf]
  %v15 = vld [vmem:[%s0 + $0xc] sm:$0xf]
  %v16 = vld [vmem:[%s0 + $0x10] sm:$0xf]
  %v17 = vld [vmem:[%s0 + $0x14] sm:$0xf]
  %v18 = vld [vmem:[%s0 + $0x18] sm:$0xf]
  %v19 = vld [vmem:[%s0 + $0x1c] sm:$0xf]
  %v20 = vld [vmem:[%s0 + $0x20] sm:$0xf]
  %v21 = vld [vmem:[%s0 + $0x24] sm:$0xf]
  %v22 = vld [vmem:[%s0 + $0x28] sm:$0xf]
  %v23 = vld [vmem:[%s0 + $0x2c] sm:$0xf]
  %v24 = vld [vmem:[%s0 + $0x30] sm:$0xf]
  %v25 = vld [vmem:[%s0 + $0x34] sm:$0xf]
  %v26 = vld [vmem:[%s0 + $0x38] sm:$0xf]
  %v27 = vld [vmem:[%s0 + $0x3c] sm:$0xf]
  %v28 = vld [vmem:[%s0 + $0x40] sm:$0xf]
  %v29 = vld [vmem:[%s0 + $0x44] sm:$0xf]
  %v30 = vld [vmem:[%s0 + $0x48] sm:$0xf]
  %v31 = vld [vmem:[%s0 + $0x4c] sm:$0xf]
  %v32 = vld [vmem:[%s0 + $0x50] sm:$0xf]
  %v33 = vld [vmem:[%s0 + $0x54] sm:$0xf]
  %v34 = vld [vmem:[%s0 + $0x58] sm:$0xf]
  %v35 = vld [vmem:[%s0 + $0x5c] sm:$0xf]
  %v36 = vld [vmem:[%s0 + $0x60] sm:$0xf]
  %v37 = vld [vmem:[%s0 + $0x64] sm:$0xf]
  %v38 = vld [vmem:[%s0 + $0x68] sm:$0xf]
  %v39 = vld [vmem:[%s0 + $0x6c] sm:$0xf]
  %v40 = vld [vmem:[%s0 + $0x70] sm:$0xf]
  %v41 = vld [vmem:[%s0 + $0x74] sm:$0xf]
  %v42 = vld [vmem:[%s0 + $0x78] sm:$0xf]
  %v43 = vld [vmem:[%s0 + $0x7c] sm:$0xf]
  %v44 = vld [vmem:[%s0 + $0x80] sm:$0xf]
  %v45 = vld [vmem:[%s0 + $0x84] sm:$0xf]
  %v46 = vld [vmem:[%s0 + $0x88] sm:$0xf]
  %v47 = vld [vmem:[%s0 + $0x8c] sm:$0xf]
  %v48 = vld [vmem:[%s0 + $0x90] sm:$0xf]
  %v49 = vld [vmem:[%s0 + $0x94] sm:$0xf]
  %v50 = vld [vmem:[%s0 + $0x98] sm:$0xf]
  %v51 = vld [vmem:[%s0 + $0x9c] sm:$0xf]
  %v52 = vld [vmem:[%s0 + $0xa0] sm:$0xf]
  %v53 = vld [vmem:[%s0 + $0xa4] sm:$0xf]
  %v54 = vld [vmem:[%s0 + $0xa8] sm:$0xf]
  %v55 = vld [vmem:[%s0 + $0xac] sm:$0xf]
  %v56 = vld [vmem:[%s0 + $0xb0] sm:$0xf]
  %v57 = vld [vmem:[%s0 + $0xb4] sm:$0xf]
  %v58 = vld [vmem:[%s0 + $0xb8] sm:$0xf]
  %v59 = vld [vmem:[%s0 + $0xbc] sm:$0xf]
  %v60 = vld [vmem:[%s0 + $0xc0] sm:$0xf]
  %v61 = vld [vmem:[%s0 + $0xc4] sm:$0xf]
  %v62 = vld [vmem:[%s0 + $0xc8] sm:$0xf]
  %v63 = vld [vmem:[%s0 + $0xcc] sm:$0xf]
  %v64 = vld [vmem:[%s0 + $0xd0] sm:$0xf]
  %v65 = vld [vmem:[%s0 + $0xd4] sm:$0xf]
  %v66 = vld [vmem:[%s0 + $0xd8] sm:$0xf]
  %v67 = vld [vmem:[%s0 + $0xdc] sm:$0xf]
  %v68 = vld [vmem:[%s0 + $0xe0] sm:$0xf]
  %v69 = vld [vmem:[%s0 + $0xe4] sm:$0xf]
  %v70 = vld [vmem:[%s0 + $0xe8] sm:$0xf]
  %v71 = vld [vmem:[%s0 + $0xec] sm:$0xf]
  %v72 = vld [vmem:[%s0 + $0xf0] sm:$0xf]
  %v73 = vld [vmem:[%s0 + $0xf4] sm:$0xf]
  %v74 = vld [vmem:[%s0 + $0xf8] sm:$0xf]
  %v75 = vld [vmem:[%s0 + $0xfc] sm:$0xf]
  %v76 = vld [vmem:[%s0 + $0x100] sm:$0xf]
  %v77 = vld [vmem:[%s0 + $0x104] sm:$0xf]
  %v78 = vld [vmem:[%s0 + $0x108] sm:$0xf]
  %v79 = vld [vmem:[%s0 + $0x10c] sm:$0xf]
  %v80 = vld [vmem:[%s0 + $0x110] sm:$0xf]
  %v81 = vld [vmem:[%s0 + $0x114] sm:$0xf]
  %v82 = vld [vmem:[%s0 + $0x118] sm:$0xf]
  %v83 = vld [vmem:[%s0 + $0x11c] sm:$0xf]
  %v84 = vld [vmem:[%s0 + $0x120] sm:$0x1]
  %v85 = vld [vmem:[%s1] sm:$0xf]
  %v86 = vld [vmem:[%s1 + $0x4] sm:$0xf]
  %v87 = vld [vmem:[%s1 + $0x8] sm:$0xf]
  %v88 = vld [vmem:[%s1 + $0xc] sm:$0xf]
  %v89 = vld [vmem:[%s1 + $0x10] sm:$0xf]
  %v90 = vld [vmem:[%s1 + $0x14] sm:$0xf]
  %v91 = vld [vmem:[%s1 + $0x18] sm:$0xf]
  %v92 = vld [vmem:[%s1 + $0x1c] sm:$0xf]
  %v166 = vunpack.c.l.b16 %v12
  %v167 = vunpack.c.l.b16 %v13
  %v168 = vunpack.c.l.b16 %v14
  %v169 = vunpack.c.l.b16 %v15
  %v170 = vunpack.c.l.b16 %v16
  %v171 = vunpack.c.l.b16 %v17
  %v172 = vunpack.c.l.b16 %v18
  %v173 = vunpack.c.l.b16 %v19
  %v174 = vunpack.c.l.b16 %v20
  %v175 = vunpack.c.l.b16 %v21
  %v176 = vunpack.c.l.b16 %v22
  %v177 = vunpack.c.l.b16 %v23
  %v178 = vunpack.c.l.b16 %v24
  %v179 = vunpack.c.l.b16 %v25
  %v180 = vunpack.c.l.b16 %v26
  %v181 = vunpack.c.l.b16 %v27
  %v182 = vunpack.c.l.b16 %v28
  %v183 = vunpack.c.l.b16 %v29
  %v184 = vunpack.c.l.b16 %v30
  %v185 = vunpack.c.l.b16 %v31
  %v186 = vunpack.c.l.b16 %v32
  %v187 = vunpack.c.l.b16 %v33
  %v188 = vunpack.c.l.b16 %v34
  %v189 = vunpack.c.l.b16 %v35
  %v190 = vunpack.c.l.b16 %v36
  %v191 = vunpack.c.l.b16 %v37
  %v192 = vunpack.c.l.b16 %v38
  %v193 = vunpack.c.l.b16 %v39
  %v194 = vunpack.c.l.b16 %v40
  %v195 = vunpack.c.l.b16 %v41
  %v196 = vunpack.c.l.b16 %v42
  %v197 = vunpack.c.l.b16 %v43
  %v198 = vunpack.c.l.b16 %v44
  %v199 = vunpack.c.l.b16 %v45
  %v200 = vunpack.c.l.b16 %v46
  %v201 = vunpack.c.l.b16 %v47
  %v202 = vunpack.c.l.b16 %v48
  %v203 = vunpack.c.l.b16 %v49
  %v204 = vunpack.c.l.b16 %v50
  %v205 = vunpack.c.l.b16 %v51
  %v206 = vunpack.c.l.b16 %v52
  %v207 = vunpack.c.l.b16 %v53
  %v208 = vunpack.c.l.b16 %v54
  %v209 = vunpack.c.l.b16 %v55
  %v210 = vunpack.c.l.b16 %v56
  %v211 = vunpack.c.l.b16 %v57
  %v212 = vunpack.c.l.b16 %v58
  %v213 = vunpack.c.l.b16 %v59
  %v214 = vunpack.c.l.b16 %v60
  %v215 = vunpack.c.l.b16 %v61
  %v216 = vunpack.c.l.b16 %v62
  %v217 = vunpack.c.l.b16 %v63
  %v218 = vunpack.c.l.b16 %v64
  %v219 = vunpack.c.l.b16 %v65
  %v220 = vunpack.c.l.b16 %v66
  %v221 = vunpack.c.l.b16 %v67
  %v222 = vunpack.c.l.b16 %v68
  %v223 = vunpack.c.l.b16 %v69
  %v224 = vunpack.c.l.b16 %v70
  %v225 = vunpack.c.l.b16 %v71
  %v226 = vunpack.c.l.b16 %v72
  %v227 = vunpack.c.l.b16 %v73
  %v228 = vunpack.c.l.b16 %v74
  %v229 = vunpack.c.l.b16 %v75
  %v230 = vunpack.c.l.b16 %v76
  %v231 = vunpack.c.l.b16 %v77
  %v232 = vunpack.c.l.b16 %v78
  %v233 = vunpack.c.l.b16 %v79
  %v234 = vunpack.c.l.b16 %v80
  %v235 = vunpack.c.l.b16 %v81
  %v236 = vunpack.c.l.b16 %v82
  %v237 = vunpack.c.l.b16 %v83
  %v238 = vunpack.c.l.b16 %v84
  %v239 = vpack.c.b16 %v167, %v166
  %v240 = vpack.c.b16 %v169, %v168
  %v241 = vpack.c.b16 %v171, %v170
  %v242 = vpack.c.b16 %v173, %v172
  %v243 = vpack.c.b16 %v175, %v174
  %v244 = vpack.c.b16 %v177, %v176
  %v245 = vpack.c.b16 %v179, %v178
  %v246 = vpack.c.b16 %v181, %v180
  %v247 = vpack.c.b16 %v183, %v182
  %v248 = vpack.c.b16 %v185, %v184
  %v249 = vpack.c.b16 %v187, %v186
  %v250 = vpack.c.b16 %v189, %v188
  %v251 = vpack.c.b16 %v191, %v190
  %v252 = vpack.c.b16 %v193, %v192
  %v253 = vpack.c.b16 %v195, %v194
  %v254 = vpack.c.b16 %v197, %v196
  %v255 = vpack.c.b16 %v199, %v198
  %v256 = vpack.c.b16 %v201, %v200
  %v257 = vpack.c.b16 %v203, %v202
  %v258 = vpack.c.b16 %v205, %v204
  %v259 = vpack.c.b16 %v207, %v206
  %v260 = vpack.c.b16 %v209, %v208
  %v261 = vpack.c.b16 %v211, %v210
  %v262 = vpack.c.b16 %v213, %v212
  %v263 = vpack.c.b16 %v215, %v214
  %v264 = vpack.c.b16 %v217, %v216
  %v265 = vpack.c.b16 %v219, %v218
  %v266 = vpack.c.b16 %v221, %v220
  %v267 = vpack.c.b16 %v223, %v222
  %v268 = vpack.c.b16 %v225, %v224
  %v269 = vpack.c.b16 %v227, %v226
  %v270 = vpack.c.b16 %v229, %v228
  %v271 = vpack.c.b16 %v231, %v230
  %v272 = vpack.c.b16 %v233, %v232
  %v273 = vpack.c.b16 %v235, %v234
  %v274 = vpack.c.b16 %v237, %v236
  %v275 = vpack.c.b16 %v238, %v238
  %v284 = vunpack.c.l.b16 %v85
  %v285 = vunpack.c.l.b16 %v86
  %v286 = vunpack.c.l.b16 %v87
  %v287 = vunpack.c.l.b16 %v88
  %v288 = vunpack.c.l.b16 %v89
  %v289 = vunpack.c.l.b16 %v90
  %v290 = vunpack.c.l.b16 %v91
  %v291 = vunpack.c.l.b16 %v92
  %v292 = vpack.c.b16 %v285, %v284
  %v293 = vpack.c.b16 %v287, %v286
  %v294 = vpack.c.b16 %v289, %v288
  %v295 = vpack.c.b16 %v291, %v290
  %vm300 = vcmask 523264
  %v302 = vsel %vm300, %v239, 0
  %v305 = vsel %vm300, %v240, 0
  %v308 = vsel %vm300, %v241, 0
  %v311 = vsel %vm300, %v242, 0
  %v314 = vsel %vm300, %v243, 0
  %v317 = vsel %vm300, %v244, 0
  %v320 = vsel %vm300, %v245, 0
  %v323 = vsel %vm300, %v246, 0
  %v326 = vsel %vm300, %v247, 0
  %v329 = vsel %vm300, %v248, 0
  %v332 = vsel %vm300, %v249, 0
  %v335 = vsel %vm300, %v250, 0
  %v338 = vsel %vm300, %v251, 0
  %v341 = vsel %vm300, %v252, 0
  %v344 = vsel %vm300, %v253, 0
  %v347 = vsel %vm300, %v254, 0
  %v350 = vsel %vm300, %v255, 0
  %v353 = vsel %vm300, %v256, 0
  %v356 = vsel %vm300, %v257, 0
  %v359 = vsel %vm300, %v258, 0
  %v362 = vsel %vm300, %v259, 0
  %v365 = vsel %vm300, %v260, 0
  %v368 = vsel %vm300, %v261, 0
  %v371 = vsel %vm300, %v262, 0
  %v374 = vsel %vm300, %v263, 0
  %v377 = vsel %vm300, %v264, 0
  %v380 = vsel %vm300, %v265, 0
  %v383 = vsel %vm300, %v266, 0
  %v386 = vsel %vm300, %v267, 0
  %v389 = vsel %vm300, %v268, 0
  %v392 = vsel %vm300, %v269, 0
  %v395 = vsel %vm300, %v270, 0
  %v398 = vsel %vm300, %v271, 0
  %v401 = vsel %vm300, %v272, 0
  %v404 = vsel %vm300, %v273, 0
  %v407 = vsel %vm300, %v274, 0
  %v410 = vsel %vm300, %v275, 0
  %412 = vmatprep.subr.bf16.mxu0 0
  %413 = vmatpush1.bf16.msra.mxu0 %v292
  %414 = vmatprep.subr.bf16.mxu0 0
  %415 = vmatpush1.bf16.msra.mxu0 %v293
  %416 = vmatprep.subr.bf16.mxu0 0
  %417 = vmatpush1.bf16.msra.mxu0 %v294
  %418 = vmatprep.subr.bf16.mxu0 0
  %419 = vmatpush1.bf16.msra.mxu0 %v295
  %420 = vmatprep.subr.bf16.mxu0 0
  %421 = vmatpush1.bf16.msra.mxu0 0
  %422 = vmatprep.subr.bf16.mxu0 0
  %423 = vmatpush1.bf16.msra.mxu0 0
  %424 = vmatprep.subr.bf16.mxu0 0
  %425 = vmatpush1.bf16.msra.mxu0 0
  %426 = vmatprep.subr.bf16.mxu0 0
  %427 = vmatpush1.bf16.msra.mxu0 0
  %428 = vmatprep.subr.bf16.mxu0 0
  %429 = vmatpush1.bf16.msra.mxu0 0
  %430 = vmatprep.subr.bf16.mxu0 0
  %431 = vmatpush1.bf16.msra.mxu0 0
  %432 = vmatprep.subr.bf16.mxu0 0
  %433 = vmatpush1.bf16.msra.mxu0 0
  %434 = vmatprep.subr.bf16.mxu0 0
  %435 = vmatpush1.bf16.msra.mxu0 0
  %436 = vmatprep.subr.bf16.mxu0 0
  %437 = vmatpush1.bf16.msra.mxu0 0
  %438 = vmatprep.subr.bf16.mxu0 0
  %439 = vmatpush1.bf16.msra.mxu0 0
  %440 = vmatprep.subr.bf16.mxu0 0
  %441 = vmatpush1.bf16.msra.mxu0 0
  %442 = vmatprep.subr.bf16.mxu0 0
  %443 = vmatpush1.bf16.msra.mxu0 0
  %444 = vmatprep.mubr.bf16.mxu0 0
  %445 = vmatmul.mubr.bf16.gmra.mrb[0].mxu0 %v302
  %v446 = vpop.f32.mrb[0].mxu0
  %v447 = vadd.f32 0.0, %v446
  %v448 = vpop.f32.mrb[0].mxu0
  %v449 = vpop.f32.mrb[0].mxu0
  %v450 = vadd.f32 0.0, %v449
  %v451 = vpop.f32.mrb[0].mxu0
  %452 = vmatprep.mubr.bf16.mxu0 0
  %453 = vmatmul.mubr.bf16.gmra.mrb[0].mxu0 %v305
  %v454 = vpop.f32.mrb[0].mxu0
  %v455 = vadd.f32 0.0, %v454
  %v456 = vpop.f32.mrb[0].mxu0
  %v457 = vpop.f32.mrb[0].mxu0
  %v458 = vadd.f32 0.0, %v457
  %v459 = vpop.f32.mrb[0].mxu0
  %460 = vmatprep.mubr.bf16.mxu0 0
  %461 = vmatmul.mubr.bf16.gmra.mrb[0].mxu0 %v308
  %v462 = vpop.f32.mrb[0].mxu0
  %v463 = vadd.f32 0.0, %v462
  %v464 = vpop.f32.mrb[0].mxu0
  %v465 = vpop.f32.mrb[0].mxu0
  %v466 = vadd.f32 0.0, %v465
  %v467 = vpop.f32.mrb[0].mxu0
  %468 = vmatprep.mubr.bf16.mxu0 0
  %469 = vmatmul.mubr.bf16.gmra.mrb[0].mxu0 %v311
  %v470 = vpop.f32.mrb[0].mxu0
  %v471 = vadd.f32 0.0, %v470
  %v472 = vpop.f32.mrb[0].mxu0
  %v473 = vpop.f32.mrb[0].mxu0
  %v474 = vadd.f32 0.0, %v473
  %v475 = vpop.f32.mrb[0].mxu0
  %476 = vmatprep.mubr.bf16.mxu0 0
  %477 = vmatmul.mubr.bf16.gmra.mrb[0].mxu0 %v314
  %v478 = vpop.f32.mrb[0].mxu0
  %v479 = vadd.f32 0.0, %v478
  %v480 = vpop.f32.mrb[0].mxu0
  %v481 = vpop.f32.mrb[0].mxu0
  %v482 = vadd.f32 0.0, %v481
  %v483 = vpop.f32.mrb[0].mxu0
  %484 = vmatprep.mubr.bf16.mxu0 0
  %485 = vmatmul.mubr.bf16.gmra.mrb[0].mxu0 %v317
  %v486 = vpop.f32.mrb[0].mxu0
  %v487 = vadd.f32 0.0, %v486
  %v488 = vpop.f32.mrb[0].mxu0
  %v489 = vpop.f32.mrb[0].mxu0
  %v490 = vadd.f32 0.0, %v489
  %v491 = vpop.f32.mrb[0].mxu0
  %492 = vmatprep.mubr.bf16.mxu0 0
  %493 = vmatmul.mubr.bf16.gmra.mrb[0].mxu0 %v320
  %v494 = vpop.f32.mrb[0].mxu0
  %v495 = vadd.f32 0.0, %v494
  %v496 = vpop.f32.mrb[0].mxu0
  %v497 = vpop.f32.mrb[0].mxu0
  %v498 = vadd.f32 0.0, %v497
  %v499 = vpop.f32.mrb[0].mxu0
  %500 = vmatprep.mubr.bf16.mxu0 0
  %501 = vmatmul.mubr.bf16.gmra.mrb[0].mxu0 %v323
  %v502 = vpop.f32.mrb[0].mxu0
  %v503 = vadd.f32 0.0, %v502
  %v504 = vpop.f32.mrb[0].mxu0
  %v505 = vpop.f32.mrb[0].mxu0
  %v506 = vadd.f32 0.0, %v505
  %v507 = vpop.f32.mrb[0].mxu0
  %508 = vmatprep.mubr.bf16.mxu0 0
  %509 = vmatmul.mubr.bf16.gmra.mrb[0].mxu0 %v326
  %v510 = vpop.f32.mrb[0].mxu0
  %v511 = vadd.f32 0.0, %v510
  %v512 = vpop.f32.mrb[0].mxu0
  %v513 = vpop.f32.mrb[0].mxu0
  %v514 = vadd.f32 0.0, %v513
  %v515 = vpop.f32.mrb[0].mxu0
  %516 = vmatprep.mubr.bf16.mxu0 0
  %517 = vmatmul.mubr.bf16.gmra.mrb[0].mxu0 %v329
  %v518 = vpop.f32.mrb[0].mxu0
  %v519 = vadd.f32 0.0, %v518
  %v520 = vpop.f32.mrb[0].mxu0
  %v521 = vpop.f32.mrb[0].mxu0
  %v522 = vadd.f32 0.0, %v521
  %v523 = vpop.f32.mrb[0].mxu0
  %524 = vmatprep.mubr.bf16.mxu0 0
  %525 = vmatmul.mubr.bf16.gmra.mrb[0].mxu0 %v332
  %v526 = vpop.f32.mrb[0].mxu0
  %v527 = vadd.f32 0.0, %v526
  %v528 = vpop.f32.mrb[0].mxu0
  %v529 = vpop.f32.mrb[0].mxu0
  %v530 = vadd.f32 0.0, %v529
  %v531 = vpop.f32.mrb[0].mxu0
  %532 = vmatprep.mubr.bf16.mxu0 0
  %533 = vmatmul.mubr.bf16.gmra.mrb[0].mxu0 %v335
  %v534 = vpop.f32.mrb[0].mxu0
  %v535 = vadd.f32 0.0, %v534
  %v536 = vpop.f32.mrb[0].mxu0
  %v537 = vpop.f32.mrb[0].mxu0
  %v538 = vadd.f32 0.0, %v537
  %v539 = vpop.f32.mrb[0].mxu0
  %540 = vmatprep.mubr.bf16.mxu0 0
  %541 = vmatmul.mubr.bf16.gmra.mrb[0].mxu0 %v338
  %v542 = vpop.f32.mrb[0].mxu0
  %v543 = vadd.f32 0.0, %v542
  %v544 = vpop.f32.mrb[0].mxu0
  %v545 = vpop.f32.mrb[0].mxu0
  %v546 = vadd.f32 0.0, %v545
  %v547 = vpop.f32.mrb[0].mxu0
  %548 = vmatprep.mubr.bf16.mxu0 0
  %549 = vmatmul.mubr.bf16.gmra.mrb[0].mxu0 %v341
  %v550 = vpop.f32.mrb[0].mxu0
  %v551 = vadd.f32 0.0, %v550
  %v552 = vpop.f32.mrb[0].mxu0
  %v553 = vpop.f32.mrb[0].mxu0
  %v554 = vadd.f32 0.0, %v553
  %v555 = vpop.f32.mrb[0].mxu0
  %556 = vmatprep.mubr.bf16.mxu0 0
  %557 = vmatmul.mubr.bf16.gmra.mrb[0].mxu0 %v344
  %v558 = vpop.f32.mrb[0].mxu0
  %v559 = vadd.f32 0.0, %v558
  %v560 = vpop.f32.mrb[0].mxu0
  %v561 = vpop.f32.mrb[0].mxu0
  %v562 = vadd.f32 0.0, %v561
  %v563 = vpop.f32.mrb[0].mxu0
  %564 = vmatprep.mubr.bf16.mxu0 0
  %565 = vmatmul.mubr.bf16.gmra.mrb[0].mxu0 %v347
  %v566 = vpop.f32.mrb[0].mxu0
  %v567 = vadd.f32 0.0, %v566
  %v568 = vpop.f32.mrb[0].mxu0
  %v569 = vpop.f32.mrb[0].mxu0
  %v570 = vadd.f32 0.0, %v569
  %v571 = vpop.f32.mrb[0].mxu0
  %572 = vmatprep.mubr.bf16.mxu0 0
  %573 = vmatmul.mubr.bf16.gmra.mrb[0].mxu0 %v350
  %v574 = vpop.f32.mrb[0].mxu0
  %v575 = vadd.f32 0.0, %v574
  %v576 = vpop.f32.mrb[0].mxu0
  %v577 = vpop.f32.mrb[0].mxu0
  %v578 = vadd.f32 0.0, %v577
  %v579 = vpop.f32.mrb[0].mxu0
  %580 = vmatprep.mubr.bf16.mxu0 0
  %581 = vmatmul.mubr.bf16.gmra.mrb[0].mxu0 %v353
  %v582 = vpop.f32.mrb[0].mxu0
  %v583 = vadd.f32 0.0, %v582
  %v584 = vpop.f32.mrb[0].mxu0
  %v585 = vpop.f32.mrb[0].mxu0
  %v586 = vadd.f32 0.0, %v585
  %v587 = vpop.f32.mrb[0].mxu0
  %588 = vmatprep.mubr.bf16.mxu0 0
  %589 = vmatmul.mubr.bf16.gmra.mrb[0].mxu0 %v356
  %v590 = vpop.f32.mrb[0].mxu0
  %v591 = vadd.f32 0.0, %v590
  %v592 = vpop.f32.mrb[0].mxu0
  %v593 = vpop.f32.mrb[0].mxu0
  %v594 = vadd.f32 0.0, %v593
  %v595 = vpop.f32.mrb[0].mxu0
  %596 = vmatprep.mubr.bf16.mxu0 0
  %597 = vmatmul.mubr.bf16.gmra.mrb[0].mxu0 %v359
  %v598 = vpop.f32.mrb[0].mxu0
  %v599 = vadd.f32 0.0, %v598
  %v600 = vpop.f32.mrb[0].mxu0
  %v601 = vpop.f32.mrb[0].mxu0
  %v602 = vadd.f32 0.0, %v601
  %v603 = vpop.f32.mrb[0].mxu0
  %604 = vmatprep.mubr.bf16.mxu0 0
  %605 = vmatmul.mubr.bf16.gmra.mrb[0].mxu0 %v362
  %v606 = vpop.f32.mrb[0].mxu0
  %v607 = vadd.f32 0.0, %v606
  %v608 = vpop.f32.mrb[0].mxu0
  %v609 = vpop.f32.mrb[0].mxu0
  %v610 = vadd.f32 0.0, %v609
  %v611 = vpop.f32.mrb[0].mxu0
  %612 = vmatprep.mubr.bf16.mxu0 0
  %613 = vmatmul.mubr.bf16.gmra.mrb[0].mxu0 %v365
  %v614 = vpop.f32.mrb[0].mxu0
  %v615 = vadd.f32 0.0, %v614
  %v616 = vpop.f32.mrb[0].mxu0
  %v617 = vpop.f32.mrb[0].mxu0
  %v618 = vadd.f32 0.0, %v617
  %v619 = vpop.f32.mrb[0].mxu0
  %620 = vmatprep.mubr.bf16.mxu0 0
  %621 = vmatmul.mubr.bf16.gmra.mrb[0].mxu0 %v368
  %v622 = vpop.f32.mrb[0].mxu0
  %v623 = vadd.f32 0.0, %v622
  %v624 = vpop.f32.mrb[0].mxu0
  %v625 = vpop.f32.mrb[0].mxu0
  %v626 = vadd.f32 0.0, %v625
  %v627 = vpop.f32.mrb[0].mxu0
  %628 = vmatprep.mubr.bf16.mxu0 0
  %629 = vmatmul.mubr.bf16.gmra.mrb[0].mxu0 %v371
  %v630 = vpop.f32.mrb[0].mxu0
  %v631 = vadd.f32 0.0, %v630
  %v632 = vpop.f32.mrb[0].mxu0
  %v633 = vpop.f32.mrb[0].mxu0
  %v634 = vadd.f32 0.0, %v633
  %v635 = vpop.f32.mrb[0].mxu0
  %636 = vmatprep.mubr.bf16.mxu0 0
  %637 = vmatmul.mubr.bf16.gmra.mrb[0].mxu0 %v374
  %v638 = vpop.f32.mrb[0].mxu0
  %v639 = vadd.f32 0.0, %v638
  %v640 = vpop.f32.mrb[0].mxu0
  %v641 = vpop.f32.mrb[0].mxu0
  %v642 = vadd.f32 0.0, %v641
  %v643 = vpop.f32.mrb[0].mxu0
  %644 = vmatprep.mubr.bf16.mxu0 0
  %645 = vmatmul.mubr.bf16.gmra.mrb[0].mxu0 %v377
  %v646 = vpop.f32.mrb[0].mxu0
  %v647 = vadd.f32 0.0, %v646
  %v648 = vpop.f32.mrb[0].mxu0
  %v649 = vpop.f32.mrb[0].mxu0
  %v650 = vadd.f32 0.0, %v649
  %v651 = vpop.f32.mrb[0].mxu0
  %652 = vmatprep.mubr.bf16.mxu0 0
  %653 = vmatmul.mubr.bf16.gmra.mrb[0].mxu0 %v380
  %v654 = vpop.f32.mrb[0].mxu0
  %v655 = vadd.f32 0.0, %v654
  %v656 = vpop.f32.mrb[0].mxu0
  %v657 = vpop.f32.mrb[0].mxu0
  %v658 = vadd.f32 0.0, %v657
  %v659 = vpop.f32.mrb[0].mxu0
  %660 = vmatprep.mubr.bf16.mxu0 0
  %661 = vmatmul.mubr.bf16.gmra.mrb[0].mxu0 %v383
  %v662 = vpop.f32.mrb[0].mxu0
  %v663 = vadd.f32 0.0, %v662
  %v664 = vpop.f32.mrb[0].mxu0
  %v665 = vpop.f32.mrb[0].mxu0
  %v666 = vadd.f32 0.0, %v665
  %v667 = vpop.f32.mrb[0].mxu0
  %668 = vmatprep.mubr.bf16.mxu0 0
  %669 = vmatmul.mubr.bf16.gmra.mrb[0].mxu0 %v386
  %v670 = vpop.f32.mrb[0].mxu0
  %v671 = vadd.f32 0.0, %v670
  %v672 = vpop.f32.mrb[0].mxu0
  %v673 = vpop.f32.mrb[0].mxu0
  %v674 = vadd.f32 0.0, %v673
  %v675 = vpop.f32.mrb[0].mxu0
  %676 = vmatprep.mubr.bf16.mxu0 0
  %677 = vmatmul.mubr.bf16.gmra.mrb[0].mxu0 %v389
  %v678 = vpop.f32.mrb[0].mxu0
  %v679 = vadd.f32 0.0, %v678
  %v680 = vpop.f32.mrb[0].mxu0
  %v681 = vpop.f32.mrb[0].mxu0
  %v682 = vadd.f32 0.0, %v681
  %v683 = vpop.f32.mrb[0].mxu0
  %684 = vmatprep.mubr.bf16.mxu0 0
  %685 = vmatmul.mubr.bf16.gmra.mrb[0].mxu0 %v392
  %v686 = vpop.f32.mrb[0].mxu0
  %v687 = vadd.f32 0.0, %v686
  %v688 = vpop.f32.mrb[0].mxu0
  %v689 = vpop.f32.mrb[0].mxu0
  %v690 = vadd.f32 0.0, %v689
  %v691 = vpop.f32.mrb[0].mxu0
  %692 = vmatprep.mubr.bf16.mxu0 0
  %693 = vmatmul.mubr.bf16.gmra.mrb[0].mxu0 %v395
  %v694 = vpop.f32.mrb[0].mxu0
  %v695 = vadd.f32 0.0, %v694
  %v696 = vpop.f32.mrb[0].mxu0
  %v697 = vpop.f32.mrb[0].mxu0
  %v698 = vadd.f32 0.0, %v697
  %v699 = vpop.f32.mrb[0].mxu0
  %700 = vmatprep.mubr.bf16.mxu0 0
  %701 = vmatmul.mubr.bf16.gmra.mrb[0].mxu0 %v398
  %v702 = vpop.f32.mrb[0].mxu0
  %v703 = vadd.f32 0.0, %v702
  %v704 = vpop.f32.mrb[0].mxu0
  %v705 = vpop.f32.mrb[0].mxu0
  %v706 = vadd.f32 0.0, %v705
  %v707 = vpop.f32.mrb[0].mxu0
  %708 = vmatprep.mubr.bf16.mxu0 0
  %709 = vmatmul.mubr.bf16.gmra.mrb[0].mxu0 %v401
  %v710 = vpop.f32.mrb[0].mxu0
  %v711 = vadd.f32 0.0, %v710
  %v712 = vpop.f32.mrb[0].mxu0
  %v713 = vpop.f32.mrb[0].mxu0
  %v714 = vadd.f32 0.0, %v713
  %v715 = vpop.f32.mrb[0].mxu0
  %716 = vmatprep.mubr.bf16.mxu0 0
  %717 = vmatmul.mubr.bf16.gmra.mrb[0].mxu0 %v404
  %v718 = vpop.f32.mrb[0].mxu0
  %v719 = vadd.f32 0.0, %v718
  %v720 = vpop.f32.mrb[0].mxu0
  %v721 = vpop.f32.mrb[0].mxu0
  %v722 = vadd.f32 0.0, %v721
  %v723 = vpop.f32.mrb[0].mxu0
  %724 = vmatprep.mubr.bf16.mxu0 0
  %725 = vmatmul.mubr.bf16.gmra.mrb[0].mxu0 %v407
  %v726 = vpop.f32.mrb[0].mxu0
  %v727 = vadd.f32 0.0, %v726
  %v728 = vpop.f32.mrb[0].mxu0
  %v729 = vpop.f32.mrb[0].mxu0
  %v730 = vadd.f32 0.0, %v729
  %v731 = vpop.f32.mrb[0].mxu0
  %732 = vmatprep.mubr.bf16.mxu0 0
  %733 = vmatmul.mubr.bf16.gmra.mrb[0].mxu0 %v410
  %v734 = vpop.f32.mrb[0].mxu0
  %v735 = vadd.f32 0.0, %v734
  %v736 = vpop.f32.mrb[0].mxu0
  %v737 = vpop.f32.mrb[0].mxu0
  %v738 = vpop.f32.mrb[0].mxu0
  %739 = vdwg.mxu0
  %v740 = vpack.c.bf16 %v450, %v447
  %v741 = vpack.c.bf16 %v458, %v455
  %v742 = vpack.c.bf16 %v466, %v463
  %v743 = vpack.c.bf16 %v474, %v471
  %v744 = vpack.c.bf16 %v482, %v479
  %v745 = vpack.c.bf16 %v490, %v487
  %v746 = vpack.c.bf16 %v498, %v495
  %v747 = vpack.c.bf16 %v506, %v503
  %v748 = vpack.c.bf16 %v514, %v511
  %v749 = vpack.c.bf16 %v522, %v519
  %v750 = vpack.c.bf16 %v530, %v527
  %v751 = vpack.c.bf16 %v538, %v535
  %v752 = vpack.c.bf16 %v546, %v543
  %v753 = vpack.c.bf16 %v554, %v551
  %v754 = vpack.c.bf16 %v562, %v559
  %v755 = vpack.c.bf16 %v570, %v567
  %v756 = vpack.c.bf16 %v578, %v575
  %v757 = vpack.c.bf16 %v586, %v583
  %v758 = vpack.c.bf16 %v594, %v591
  %v759 = vpack.c.bf16 %v602, %v599
  %v760 = vpack.c.bf16 %v610, %v607
  %v761 = vpack.c.bf16 %v618, %v615
  %v762 = vpack.c.bf16 %v626, %v623
  %v763 = vpack.c.bf16 %v634, %v631
  %v764 = vpack.c.bf16 %v642, %v639
  %v765 = vpack.c.bf16 %v650, %v647
  %v766 = vpack.c.bf16 %v658, %v655
  %v767 = vpack.c.bf16 %v666, %v663
  %v768 = vpack.c.bf16 %v674, %v671
  %v769 = vpack.c.bf16 %v682, %v679
  %v770 = vpack.c.bf16 %v690, %v687
  %v771 = vpack.c.bf16 %v698, %v695
  %v772 = vpack.c.bf16 %v706, %v703
  %v773 = vpack.c.bf16 %v714, %v711
  %v774 = vpack.c.bf16 %v722, %v719
  %v775 = vpack.c.bf16 %v730, %v727
  %v776 = vpack.c.bf16 %v735, %v735
  %v814 = vunpack.c.l.b16 %v740
  %v815 = vunpack.c.h.b16 %v740
  %v816 = vunpack.c.l.b16 %v741
  %v817 = vunpack.c.h.b16 %v741
  %v818 = vunpack.c.l.b16 %v742
  %v819 = vunpack.c.h.b16 %v742
  %v820 = vunpack.c.l.b16 %v743
  %v821 = vunpack.c.h.b16 %v743
  %v822 = vunpack.c.l.b16 %v744
  %v823 = vunpack.c.h.b16 %v744
  %v824 = vunpack.c.l.b16 %v745
  %v825 = vunpack.c.h.b16 %v745
  %v826 = vunpack.c.l.b16 %v746
  %v827 = vunpack.c.h.b16 %v746
  %v828 = vunpack.c.l.b16 %v747
  %v829 = vunpack.c.h.b16 %v747
  %v830 = vunpack.c.l.b16 %v748
  %v831 = vunpack.c.h.b16 %v748
  %v832 = vunpack.c.l.b16 %v749
  %v833 = vunpack.c.h.b16 %v749
  %v834 = vunpack.c.l.b16 %v750
  %v835 = vunpack.c.h.b16 %v750
  %v836 = vunpack.c.l.b16 %v751
  %v837 = vunpack.c.h.b16 %v751
  %v838 = vunpack.c.l.b16 %v752
  %v839 = vunpack.c.h.b16 %v752
  %v840 = vunpack.c.l.b16 %v753
  %v841 = vunpack.c.h.b16 %v753
  %v842 = vunpack.c.l.b16 %v754
  %v843 = vunpack.c.h.b16 %v754
  %v844 = vunpack.c.l.b16 %v755
  %v845 = vunpack.c.h.b16 %v755
  %v846 = vunpack.c.l.b16 %v756
  %v847 = vunpack.c.h.b16 %v756
  %v848 = vunpack.c.l.b16 %v757
  %v849 = vunpack.c.h.b16 %v757
  %v850 = vunpack.c.l.b16 %v758
  %v851 = vunpack.c.h.b16 %v758
  %v852 = vunpack.c.l.b16 %v759
  %v853 = vunpack.c.h.b16 %v759
  %v854 = vunpack.c.l.b16 %v760
  %v855 = vunpack.c.h.b16 %v760
  %v856 = vunpack.c.l.b16 %v761
  %v857 = vunpack.c.h.b16 %v761
  %v858 = vunpack.c.l.b16 %v762
  %v859 = vunpack.c.h.b16 %v762
  %v860 = vunpack.c.l.b16 %v763
  %v861 = vunpack.c.h.b16 %v763
  %v862 = vunpack.c.l.b16 %v764
  %v863 = vunpack.c.h.b16 %v764
  %v864 = vunpack.c.l.b16 %v765
  %v865 = vunpack.c.h.b16 %v765
  %v866 = vunpack.c.l.b16 %v766
  %v867 = vunpack.c.h.b16 %v766
  %v868 = vunpack.c.l.b16 %v767
  %v869 = vunpack.c.h.b16 %v767
  %v870 = vunpack.c.l.b16 %v768
  %v871 = vunpack.c.h.b16 %v768
  %v872 = vunpack.c.l.b16 %v769
  %v873 = vunpack.c.h.b16 %v769
  %v874 = vunpack.c.l.b16 %v770
  %v875 = vunpack.c.h.b16 %v770
  %v876 = vunpack.c.l.b16 %v771
  %v877 = vunpack.c.h.b16 %v771
  %v878 = vunpack.c.l.b16 %v772
  %v879 = vunpack.c.h.b16 %v772
  %v880 = vunpack.c.l.b16 %v773
  %v881 = vunpack.c.h.b16 %v773
  %v882 = vunpack.c.l.b16 %v774
  %v883 = vunpack.c.h.b16 %v774
  %v884 = vunpack.c.l.b16 %v775
  %v885 = vunpack.c.h.b16 %v775
  %v886 = vunpack.c.l.b16 %v776
  %v887 = vpack.c.b16 %v814, %v814
  %v888 = vpack.c.b16 %v815, %v815
  %v889 = vpack.c.b16 %v816, %v816
  %v890 = vpack.c.b16 %v817, %v817
  %v891 = vpack.c.b16 %v818, %v818
  %v892 = vpack.c.b16 %v819, %v819
  %v893 = vpack.c.b16 %v820, %v820
  %v894 = vpack.c.b16 %v821, %v821
  %v895 = vpack.c.b16 %v822, %v822
  %v896 = vpack.c.b16 %v823, %v823
  %v897 = vpack.c.b16 %v824, %v824
  %v898 = vpack.c.b16 %v825, %v825
  %v899 = vpack.c.b16 %v826, %v826
  %v900 = vpack.c.b16 %v827, %v827
  %v901 = vpack.c.b16 %v828, %v828
  %v902 = vpack.c.b16 %v829, %v829
  %v903 = vpack.c.b16 %v830, %v830
  %v904 = vpack.c.b16 %v831, %v831
  %v905 = vpack.c.b16 %v832, %v832
  %v906 = vpack.c.b16 %v833, %v833
  %v907 = vpack.c.b16 %v834, %v834
  %v908 = vpack.c.b16 %v835, %v835
  %v909 = vpack.c.b16 %v836, %v836
  %v910 = vpack.c.b16 %v837, %v837
  %v911 = vpack.c.b16 %v838, %v838
  %v912 = vpack.c.b16 %v839, %v839
  %v913 = vpack.c.b16 %v840, %v840
  %v914 = vpack.c.b16 %v841, %v841
  %v915 = vpack.c.b16 %v842, %v842
  %v916 = vpack.c.b16 %v843, %v843
  %v917 = vpack.c.b16 %v844, %v844
  %v918 = vpack.c.b16 %v845, %v845
  %v919 = vpack.c.b16 %v846, %v846
  %v920 = vpack.c.b16 %v847, %v847
  %v921 = vpack.c.b16 %v848, %v848
  %v922 = vpack.c.b16 %v849, %v849
  %v923 = vpack.c.b16 %v850, %v850
  %v924 = vpack.c.b16 %v851, %v851
  %v925 = vpack.c.b16 %v852, %v852
  %v926 = vpack.c.b16 %v853, %v853
  %v927 = vpack.c.b16 %v854, %v854
  %v928 = vpack.c.b16 %v855, %v855
  %v929 = vpack.c.b16 %v856, %v856
  %v930 = vpack.c.b16 %v857, %v857
  %v931 = vpack.c.b16 %v858, %v858
  %v932 = vpack.c.b16 %v859, %v859
  %v933 = vpack.c.b16 %v860, %v860
  %v934 = vpack.c.b16 %v861, %v861
  %v935 = vpack.c.b16 %v862, %v862
  %v936 = vpack.c.b16 %v863, %v863
  %v937 = vpack.c.b16 %v864, %v864
  %v938 = vpack.c.b16 %v865, %v865
  %v939 = vpack.c.b16 %v866, %v866
  %v940 = vpack.c.b16 %v867, %v867
  %v941 = vpack.c.b16 %v868, %v868
  %v942 = vpack.c.b16 %v869, %v869
  %v943 = vpack.c.b16 %v870, %v870
  %v944 = vpack.c.b16 %v871, %v871
  %v945 = vpack.c.b16 %v872, %v872
  %v946 = vpack.c.b16 %v873, %v873
  %v947 = vpack.c.b16 %v874, %v874
  %v948 = vpack.c.b16 %v875, %v875
  %v949 = vpack.c.b16 %v876, %v876
  %v950 = vpack.c.b16 %v877, %v877
  %v951 = vpack.c.b16 %v878, %v878
  %v952 = vpack.c.b16 %v879, %v879
  %v953 = vpack.c.b16 %v880, %v880
  %v954 = vpack.c.b16 %v881, %v881
  %v955 = vpack.c.b16 %v882, %v882
  %v956 = vpack.c.b16 %v883, %v883
  %v957 = vpack.c.b16 %v884, %v884
  %v958 = vpack.c.b16 %v885, %v885
  %v959 = vpack.c.b16 %v886, %v886
  %vm1033 = vcmask 257024
  %1034 = vst.msk [vmem:[%s2] sm:$0xf] %vm1033, %v887
  %1035 = vst.msk [vmem:[%s2 + $0x4] sm:$0xf] %vm1033, %v888
  %1036 = vst.msk [vmem:[%s2 + $0x8] sm:$0xf] %vm1033, %v889
  %1037 = vst.msk [vmem:[%s2 + $0xc] sm:$0xf] %vm1033, %v890
  %1038 = vst.msk [vmem:[%s2 + $0x10] sm:$0xf] %vm1033, %v891
  %1039 = vst.msk [vmem:[%s2 + $0x14] sm:$0xf] %vm1033, %v892
  %1040 = vst.msk [vmem:[%s2 + $0x18] sm:$0xf] %vm1033, %v893
  %1041 = vst.msk [vmem:[%s2 + $0x1c] sm:$0xf] %vm1033, %v894
  %1042 = vst.msk [vmem:[%s2 + $0x20] sm:$0xf] %vm1033, %v895
  %1043 = vst.msk [vmem:[%s2 + $0x24] sm:$0xf] %vm1033, %v896
  %1044 = vst.msk [vmem:[%s2 + $0x28] sm:$0xf] %vm1033, %v897
  %1045 = vst.msk [vmem:[%s2 + $0x2c] sm:$0xf] %vm1033, %v898
  %1046 = vst.msk [vmem:[%s2 + $0x30] sm:$0xf] %vm1033, %v899
  %1047 = vst.msk [vmem:[%s2 + $0x34] sm:$0xf] %vm1033, %v900
  %1048 = vst.msk [vmem:[%s2 + $0x38] sm:$0xf] %vm1033, %v901
  %1049 = vst.msk [vmem:[%s2 + $0x3c] sm:$0xf] %vm1033, %v902
  %1050 = vst.msk [vmem:[%s2 + $0x40] sm:$0xf] %vm1033, %v903
  %1051 = vst.msk [vmem:[%s2 + $0x44] sm:$0xf] %vm1033, %v904
  %1052 = vst.msk [vmem:[%s2 + $0x48] sm:$0xf] %vm1033, %v905
  %1053 = vst.msk [vmem:[%s2 + $0x4c] sm:$0xf] %vm1033, %v906
  %1054 = vst.msk [vmem:[%s2 + $0x50] sm:$0xf] %vm1033, %v907
  %1055 = vst.msk [vmem:[%s2 + $0x54] sm:$0xf] %vm1033, %v908
  %1056 = vst.msk [vmem:[%s2 + $0x58] sm:$0xf] %vm1033, %v909
  %1057 = vst.msk [vmem:[%s2 + $0x5c] sm:$0xf] %vm1033, %v910
  %1058 = vst.msk [vmem:[%s2 + $0x60] sm:$0xf] %vm1033, %v911
  %1059 = vst.msk [vmem:[%s2 + $0x64] sm:$0xf] %vm1033, %v912
  %1060 = vst.msk [vmem:[%s2 + $0x68] sm:$0xf] %vm1033, %v913
  %1061 = vst.msk [vmem:[%s2 + $0x6c] sm:$0xf] %vm1033, %v914
  %1062 = vst.msk [vmem:[%s2 + $0x70] sm:$0xf] %vm1033, %v915
  %1063 = vst.msk [vmem:[%s2 + $0x74] sm:$0xf] %vm1033, %v916
  %1064 = vst.msk [vmem:[%s2 + $0x78] sm:$0xf] %vm1033, %v917
  %1065 = vst.msk [vmem:[%s2 + $0x7c] sm:$0xf] %vm1033, %v918
  %1066 = vst.msk [vmem:[%s2 + $0x80] sm:$0xf] %vm1033, %v919
  %1067 = vst.msk [vmem:[%s2 + $0x84] sm:$0xf] %vm1033, %v920
  %1068 = vst.msk [vmem:[%s2 + $0x88] sm:$0xf] %vm1033, %v921
  %1069 = vst.msk [vmem:[%s2 + $0x8c] sm:$0xf] %vm1033, %v922
  %1070 = vst.msk [vmem:[%s2 + $0x90] sm:$0xf] %vm1033, %v923
  %1071 = vst.msk [vmem:[%s2 + $0x94] sm:$0xf] %vm1033, %v924
  %1072 = vst.msk [vmem:[%s2 + $0x98] sm:$0xf] %vm1033, %v925
  %1073 = vst.msk [vmem:[%s2 + $0x9c] sm:$0xf] %vm1033, %v926
  %1074 = vst.msk [vmem:[%s2 + $0xa0] sm:$0xf] %vm1033, %v927
  %1075 = vst.msk [vmem:[%s2 + $0xa4] sm:$0xf] %vm1033, %v928
  %1076 = vst.msk [vmem:[%s2 + $0xa8] sm:$0xf] %vm1033, %v929
  %1077 = vst.msk [vmem:[%s2 + $0xac] sm:$0xf] %vm1033, %v930
  %1078 = vst.msk [vmem:[%s2 + $0xb0] sm:$0xf] %vm1033, %v931
  %1079 = vst.msk [vmem:[%s2 + $0xb4] sm:$0xf] %vm1033, %v932
  %1080 = vst.msk [vmem:[%s2 + $0xb8] sm:$0xf] %vm1033, %v933
  %1081 = vst.msk [vmem:[%s2 + $0xbc] sm:$0xf] %vm1033, %v934
  %1082 = vst.msk [vmem:[%s2 + $0xc0] sm:$0xf] %vm1033, %v935
  %1083 = vst.msk [vmem:[%s2 + $0xc4] sm:$0xf] %vm1033, %v936
  %1084 = vst.msk [vmem:[%s2 + $0xc8] sm:$0xf] %vm1033, %v937
  %1085 = vst.msk [vmem:[%s2 + $0xcc] sm:$0xf] %vm1033, %v938
  %1086 = vst.msk [vmem:[%s2 + $0xd0] sm:$0xf] %vm1033, %v939
  %1087 = vst.msk [vmem:[%s2 + $0xd4] sm:$0xf] %vm1033, %v940
  %1088 = vst.msk [vmem:[%s2 + $0xd8] sm:$0xf] %vm1033, %v941
  %1089 = vst.msk [vmem:[%s2 + $0xdc] sm:$0xf] %vm1033, %v942
  %1090 = vst.msk [vmem:[%s2 + $0xe0] sm:$0xf] %vm1033, %v943
  %1091 = vst.msk [vmem:[%s2 + $0xe4] sm:$0xf] %vm1033, %v944
  %1092 = vst.msk [vmem:[%s2 + $0xe8] sm:$0xf] %vm1033, %v945
  %1093 = vst.msk [vmem:[%s2 + $0xec] sm:$0xf] %vm1033, %v946
  %1094 = vst.msk [vmem:[%s2 + $0xf0] sm:$0xf] %vm1033, %v947
  %1095 = vst.msk [vmem:[%s2 + $0xf4] sm:$0xf] %vm1033, %v948
  %1096 = vst.msk [vmem:[%s2 + $0xf8] sm:$0xf] %vm1033, %v949
  %1097 = vst.msk [vmem:[%s2 + $0xfc] sm:$0xf] %vm1033, %v950
  %1098 = vst.msk [vmem:[%s2 + $0x100] sm:$0xf] %vm1033, %v951
  %1099 = vst.msk [vmem:[%s2 + $0x104] sm:$0xf] %vm1033, %v952
  %1100 = vst.msk [vmem:[%s2 + $0x108] sm:$0xf] %vm1033, %v953
  %1101 = vst.msk [vmem:[%s2 + $0x10c] sm:$0xf] %vm1033, %v954
  %1102 = vst.msk [vmem:[%s2 + $0x110] sm:$0xf] %vm1033, %v955
  %1103 = vst.msk [vmem:[%s2 + $0x114] sm:$0xf] %vm1033, %v956
  %1104 = vst.msk [vmem:[%s2 + $0x118] sm:$0xf] %vm1033, %v957
  %1105 = vst.msk [vmem:[%s2 + $0x11c] sm:$0xf] %vm1033, %v958
  %vm1106 = vcmask 253952
  %1107 = vst.msk [vmem:[%s2 + $0x120] sm:$0x1] %vm1106, %v959
  // Predicated region
  $region10: #{generator_forward.22} parent=0 // pred_check
    _
  $region11: #{generator_forward.22} parent=0 // pred_check_branch
    %1109 = sbr.rel (0) target = $region13
  $region12: #{generator_forward.22} parent=0 // pred_region
    _
  $region13: #{generator_forward.22} parent=0 // pred_fallthru
    _
  // Predicated region
  $region14: #{generator_forward.22} parent=0 // pred_check
    _
  $region15: #{generator_forward.22} parent=0 // pred_check_branch
    %1111 = sbr.rel (0) target = $region17
  $region16: #{generator_forward.22} parent=0 // pred_region
    _
  $region17: #{generator_forward.22} parent=0 // pred_fallthru
    _

// kernel: generator_forward.23
$region0: #{generator_forward.23}
  #allocation0 [shape = 'u32[]', space=smem, size = 0x4, offset = 0x4, fixed_abs, tag = 'smem constant byte address 0x4 - core index']
  #allocation1 [shape = 'u32[144,128]{1,0:T(1,128)}', space=vmem, size = 0x12000, scoped, tag = 'internal scratch']
  %s0 = inlined_call_operand.vmem [shape: bf16[2048,8], index: 0, kind: input, shape index: {}]
  %s1 = inlined_call_operand.vmem [shape: f32[2,2,8], index: 1, kind: output, shape index: {}]
  %s2 = sld [smem:[#allocation0]]
  $region37: #{generator_forward.23} parent=0
    _
  %s4 = ssub.s32 1, %s2
  %s5 = scalar_select 0, %s4, %s2
  loop: start=0, step=1, limit=4
  $region2: #{generator_forward.23} parent=0 // loop_pre_header
    _
  $region3: #{generator_forward.23} parent=0 // loop_header
    %s7 = sphi 0, %s11
    %p8 = scmp.ge.s32.totalorder %s7, 4
    %s17 = sphi 0, %s19
    %s20 = sphi 0, %s17
    %s21 = sphi 0, %s20
    %s37 = sphi 0, %s21
    %s43 = sphi 0, %s45
    %s46 = sphi 0, %s43
    %s47 = sphi 0, %s46
    %s63 = sphi 0, %s47
  $region4: #{generator_forward.23} parent=0 // loop_header_branch
    %10 = sbr.rel (%p8) target = $region8
  $region5: #{generator_forward.23} parent=0 // loop_body
    %s12 = ssub.s32 %s7, 1
    %s13 = ssub.s32 %s7, 2
    %s14 = sadd.s32 %s7, 1
    %s15 = ssub.s32 %s7, %s14
    %p16 = scmp.eq.s32.totalorder %s15, 0
    %s18 = sadd.s32 %s17, 1
    %s19 = scalar_select %p16, %s17, %s18
    %p22 = pneg %p16
    %p23 = scmp.eq.s32.totalorder %s7, 1
    %p24 = por %p22, %p23
    %p25 = scmp.ne.s32.totalorder %s17, %s20
    %p26 = scmp.eq.s32.totalorder %s7, 0
    %p27 = por %p25, %p26
    %p28 = scmp.ne.s32.totalorder %s17, %s20
    %p29 = scmp.eq.s32.totalorder %s12, 1
    %p30 = por %p28, %p29
    %p31 = scmp.ne.s32.totalorder %s20, %s21
    %p32 = scmp.eq.s32.totalorder %s12, 0
    %p33 = por %p31, %p32
    %p34 = scmp.ne.s32.totalorder %s20, %s21
    %p35 = scmp.eq.s32.totalorder %s13, 1
    %p36 = por %p34, %p35
    %p38 = scmp.ne.s32.totalorder %s21, %s37
    %p39 = scmp.eq.s32.totalorder %s13, 0
    %p40 = por %p38, %p39
    %s41 = ssub.s32 %s7, %s14
    %p42 = scmp.eq.s32.totalorder %s41, 0
    %s44 = sadd.s32 %s43, 1
    %s45 = scalar_select %p42, %s43, %s44
    %p48 = pneg %p42
    %p49 = scmp.eq.s32.totalorder %s7, 1
    %p50 = por %p48, %p49
    %p51 = scmp.ne.s32.totalorder %s43, %s46
    %p52 = scmp.eq.s32.totalorder %s7, 0
    %p53 = por %p51, %p52
    %p54 = scmp.ne.s32.totalorder %s43, %s46
    %p55 = scmp.eq.s32.totalorder %s12, 1
    %p56 = por %p54, %p55
    %p57 = scmp.ne.s32.totalorder %s46, %s47
    %p58 = scmp.eq.s32.totalorder %s12, 0
    %p59 = por %p57, %p58
    %p60 = scmp.ne.s32.totalorder %s46, %s47
    %p61 = scmp.eq.s32.totalorder %s13, 1
    %p62 = por %p60, %p61
    %p64 = scmp.ne.s32.totalorder %s47, %s63
    %p65 = scmp.eq.s32.totalorder %s13, 0
    %p66 = por %p64, %p65
    %p67 = scmp.le.s32.totalorder 1, %s7
    %p68 = scmp.lt.s32.totalorder %s7, 3
    %p69 = pnand %p67, %p68
    %p70 = pneg %p69
    // Predicated region
    $region9: #{generator_forward.23} parent=5 // pred_check
      _
    $region10: #{generator_forward.23} parent=5 // pred_check_branch
      %72 = sbr.rel (%p69) target = $region12
    $region11: #{generator_forward.23} parent=5 // pred_region
      %s73 = ssub.s32 %s7, 1
    $region12: #{generator_forward.23} parent=5 // pred_fallthru
      _
    %p74 = scmp.lt.s32.totalorder %s7, 2
    // Predicated region
    $region13: #{generator_forward.23} parent=5 // pred_check
      %p75 = pneg %p74
    $region14: #{generator_forward.23} parent=5 // pred_check_branch
      %77 = sbr.rel (%p75) target = $region16
    $region15: #{generator_forward.23} parent=5 // pred_region
      // Predicated region
      $region17: #{generator_forward.23} parent=15 // pred_check
        %p78 = pneg %p27
      $region18: #{generator_forward.23} parent=15 // pred_check_branch
        %80 = sbr.rel (%p78) target = $region20
      $region19: #{generator_forward.23} parent=15 // pred_region
        %s81 = smul.u32 128, %s7
        %p82 = scmp.lt.s32.totalorder %s81, 255
        %s83 = scalar_select %p82, %s81, 255
        %s84 = smul.addr %s83, 4
        %s85 = scalar_lea.vmem %s0, %s84
        %s86 = smul.u32 128, %s7
      $region20: #{generator_forward.23} parent=15 // pred_fallthru
        _
    $region16: #{generator_forward.23} parent=5 // pred_fallthru
      _
    %p87 = scmp.le.s32.totalorder 1, %s7
    %p88 = scmp.lt.s32.totalorder %s7, 3
    %p89 = pnand %p87, %p88
    %p90 = pneg %p89
    // Predicated region
    $region21: #{generator_forward.23} parent=5 // pred_check
      _
    $region22: #{generator_forward.23} parent=5 // pred_check_branch
      %92 = sbr.rel (%p89) target = $region24
    $region23: #{generator_forward.23} parent=5 // pred_region
      %s93 = ssub.s32 %s7, 1
      %s94 = smul.u32 128, %s12
      %p95 = scmp.lt.s32.totalorder %s94, 255
      %s96 = scalar_select %p95, %s94, 255
      %s97 = smul.addr %s96, 4
      %s98 = scalar_lea.vmem %s0, %s97
      %p99 = pneg %p33
      %p100 = pneg %p30
      %p101 = pneg %p59
      %p102 = pneg %p56
      %p103 = scmp.lt.s32.totalorder %s12, 1
      %s104 = scalar_select %p103, %s12, 1
      %s105 = smul.addr %s104, 2
      %s106 = scalar_lea.vmem %s1, %s105
      %s107 = smul.u32 128, %s12
      %p108 = scmp.lt.s32.totalorder %s107, 255
      %s109 = scalar_select %p108, %s107, 255
      %s110 = smul.addr %s109, 4
      %s111 = scalar_lea.vmem %s0, %s110
      %s112 = smul.u32 128, %s12
      %p113 = scmp.lt.s32.totalorder %s12, 1
      %s114 = scalar_select %p113, %s12, 1
      %s115 = smul.addr %s114, 2
      %s116 = scalar_lea.vmem %s1, %s115
      %v117 = vld [vmem:[%s111] sm:$0xf]
      %v118 = vld [vmem:[%s111 + $0x4] sm:$0xf]
      %v119 = vld [vmem:[%s111 + $0x8] sm:$0xf]
      %v120 = vld [vmem:[%s111 + $0xc] sm:$0xf]
      %v121 = vld [vmem:[%s111 + $0x10] sm:$0xf]
      %v122 = vld [vmem:[%s111 + $0x14] sm:$0xf]
      %v123 = vld [vmem:[%s111 + $0x18] sm:$0xf]
      %v124 = vld [vmem:[%s111 + $0x1c] sm:$0xf]
      %v125 = vld [vmem:[%s111 + $0x20] sm:$0xf]
      %v126 = vld [vmem:[%s111 + $0x24] sm:$0xf]
      %v127 = vld [vmem:[%s111 + $0x28] sm:$0xf]
      %v128 = vld [vmem:[%s111 + $0x2c] sm:$0xf]
      %v129 = vld [vmem:[%s111 + $0x30] sm:$0xf]
      %v130 = vld [vmem:[%s111 + $0x34] sm:$0xf]
      %v131 = vld [vmem:[%s111 + $0x38] sm:$0xf]
      %v132 = vld [vmem:[%s111 + $0x3c] sm:$0xf]
      %v133 = vld [vmem:[%s111 + $0x40] sm:$0xf]
      %v134 = vld [vmem:[%s111 + $0x44] sm:$0xf]
      %v135 = vld [vmem:[%s111 + $0x48] sm:$0xf]
      %v136 = vld [vmem:[%s111 + $0x4c] sm:$0xf]
      %v137 = vld [vmem:[%s111 + $0x50] sm:$0xf]
      %v138 = vld [vmem:[%s111 + $0x54] sm:$0xf]
      %v139 = vld [vmem:[%s111 + $0x58] sm:$0xf]
      %v140 = vld [vmem:[%s111 + $0x5c] sm:$0xf]
      %v141 = vld [vmem:[%s111 + $0x60] sm:$0xf]
      %v142 = vld [vmem:[%s111 + $0x64] sm:$0xf]
      %v143 = vld [vmem:[%s111 + $0x68] sm:$0xf]
      %v144 = vld [vmem:[%s111 + $0x6c] sm:$0xf]
      %v145 = vld [vmem:[%s111 + $0x70] sm:$0xf]
      %v146 = vld [vmem:[%s111 + $0x74] sm:$0xf]
      %v147 = vld [vmem:[%s111 + $0x78] sm:$0xf]
      %v148 = vld [vmem:[%s111 + $0x7c] sm:$0xf]
      %v149 = vld [vmem:[%s111 + $0x80] sm:$0xf]
      %v150 = vld [vmem:[%s111 + $0x84] sm:$0xf]
      %v151 = vld [vmem:[%s111 + $0x88] sm:$0xf]
      %v152 = vld [vmem:[%s111 + $0x8c] sm:$0xf]
      %v153 = vld [vmem:[%s111 + $0x90] sm:$0xf]
      %v154 = vld [vmem:[%s111 + $0x94] sm:$0xf]
      %v155 = vld [vmem:[%s111 + $0x98] sm:$0xf]
      %v156 = vld [vmem:[%s111 + $0x9c] sm:$0xf]
      %v157 = vld [vmem:[%s111 + $0xa0] sm:$0xf]
      %v158 = vld [vmem:[%s111 + $0xa4] sm:$0xf]
      %v159 = vld [vmem:[%s111 + $0xa8] sm:$0xf]
      %v160 = vld [vmem:[%s111 + $0xac] sm:$0xf]
      %v161 = vld [vmem:[%s111 + $0xb0] sm:$0xf]
      %v162 = vld [vmem:[%s111 + $0xb4] sm:$0xf]
      %v163 = vld [vmem:[%s111 + $0xb8] sm:$0xf]
      %v164 = vld [vmem:[%s111 + $0xbc] sm:$0xf]
      %v165 = vld [vmem:[%s111 + $0xc0] sm:$0xf]
      %v166 = vld [vmem:[%s111 + $0xc4] sm:$0xf]
      %v167 = vld [vmem:[%s111 + $0xc8] sm:$0xf]
      %v168 = vld [vmem:[%s111 + $0xcc] sm:$0xf]
      %v169 = vld [vmem:[%s111 + $0xd0] sm:$0xf]
      %v170 = vld [vmem:[%s111 + $0xd4] sm:$0xf]
      %v171 = vld [vmem:[%s111 + $0xd8] sm:$0xf]
      %v172 = vld [vmem:[%s111 + $0xdc] sm:$0xf]
      %v173 = vld [vmem:[%s111 + $0xe0] sm:$0xf]
      %v174 = vld [vmem:[%s111 + $0xe4] sm:$0xf]
      %v175 = vld [vmem:[%s111 + $0xe8] sm:$0xf]
      %v176 = vld [vmem:[%s111 + $0xec] sm:$0xf]
      %v177 = vld [vmem:[%s111 + $0xf0] sm:$0xf]
      %v178 = vld [vmem:[%s111 + $0xf4] sm:$0xf]
      %v179 = vld [vmem:[%s111 + $0xf8] sm:$0xf]
      %v180 = vld [vmem:[%s111 + $0xfc] sm:$0xf]
      %v181 = vld [vmem:[%s111 + $0x100] sm:$0xf]
      %v182 = vld [vmem:[%s111 + $0x104] sm:$0xf]
      %v183 = vld [vmem:[%s111 + $0x108] sm:$0xf]
      %v184 = vld [vmem:[%s111 + $0x10c] sm:$0xf]
      %v185 = vld [vmem:[%s111 + $0x110] sm:$0xf]
      %v186 = vld [vmem:[%s111 + $0x114] sm:$0xf]
      %v187 = vld [vmem:[%s111 + $0x118] sm:$0xf]
      %v188 = vld [vmem:[%s111 + $0x11c] sm:$0xf]
      %v189 = vld [vmem:[%s111 + $0x120] sm:$0xf]
      %v190 = vld [vmem:[%s111 + $0x124] sm:$0xf]
      %v191 = vld [vmem:[%s111 + $0x128] sm:$0xf]
      %v192 = vld [vmem:[%s111 + $0x12c] sm:$0xf]
      %v193 = vld [vmem:[%s111 + $0x130] sm:$0xf]
      %v194 = vld [vmem:[%s111 + $0x134] sm:$0xf]
      %v195 = vld [vmem:[%s111 + $0x138] sm:$0xf]
      %v196 = vld [vmem:[%s111 + $0x13c] sm:$0xf]
      %v197 = vld [vmem:[%s111 + $0x140] sm:$0xf]
      %v198 = vld [vmem:[%s111 + $0x144] sm:$0xf]
      %v199 = vld [vmem:[%s111 + $0x148] sm:$0xf]
      %v200 = vld [vmem:[%s111 + $0x14c] sm:$0xf]
      %v201 = vld [vmem:[%s111 + $0x150] sm:$0xf]
      %v202 = vld [vmem:[%s111 + $0x154] sm:$0xf]
      %v203 = vld [vmem:[%s111 + $0x158] sm:$0xf]
      %v204 = vld [vmem:[%s111 + $0x15c] sm:$0xf]
      %v205 = vld [vmem:[%s111 + $0x160] sm:$0xf]
      %v206 = vld [vmem:[%s111 + $0x164] sm:$0xf]
      %v207 = vld [vmem:[%s111 + $0x168] sm:$0xf]
      %v208 = vld [vmem:[%s111 + $0x16c] sm:$0xf]
      %v209 = vld [vmem:[%s111 + $0x170] sm:$0xf]
      %v210 = vld [vmem:[%s111 + $0x174] sm:$0xf]
      %v211 = vld [vmem:[%s111 + $0x178] sm:$0xf]
      %v212 = vld [vmem:[%s111 + $0x17c] sm:$0xf]
      %v213 = vld [vmem:[%s111 + $0x180] sm:$0xf]
      %v214 = vld [vmem:[%s111 + $0x184] sm:$0xf]
      %v215 = vld [vmem:[%s111 + $0x188] sm:$0xf]
      %v216 = vld [vmem:[%s111 + $0x18c] sm:$0xf]
      %v217 = vld [vmem:[%s111 + $0x190] sm:$0xf]
      %v218 = vld [vmem:[%s111 + $0x194] sm:$0xf]
      %v219 = vld [vmem:[%s111 + $0x198] sm:$0xf]
      %v220 = vld [vmem:[%s111 + $0x19c] sm:$0xf]
      %v221 = vld [vmem:[%s111 + $0x1a0] sm:$0xf]
      %v222 = vld [vmem:[%s111 + $0x1a4] sm:$0xf]
      %v223 = vld [vmem:[%s111 + $0x1a8] sm:$0xf]
      %v224 = vld [vmem:[%s111 + $0x1ac] sm:$0xf]
      %v225 = vld [vmem:[%s111 + $0x1b0] sm:$0xf]
      %v226 = vld [vmem:[%s111 + $0x1b4] sm:$0xf]
      %v227 = vld [vmem:[%s111 + $0x1b8] sm:$0xf]
      %v228 = vld [vmem:[%s111 + $0x1bc] sm:$0xf]
      %v229 = vld [vmem:[%s111 + $0x1c0] sm:$0xf]
      %v230 = vld [vmem:[%s111 + $0x1c4] sm:$0xf]
      %v231 = vld [vmem:[%s111 + $0x1c8] sm:$0xf]
      %v232 = vld [vmem:[%s111 + $0x1cc] sm:$0xf]
      %v233 = vld [vmem:[%s111 + $0x1d0] sm:$0xf]
      %v234 = vld [vmem:[%s111 + $0x1d4] sm:$0xf]
      %v235 = vld [vmem:[%s111 + $0x1d8] sm:$0xf]
      %v236 = vld [vmem:[%s111 + $0x1dc] sm:$0xf]
      %v237 = vld [vmem:[%s111 + $0x1e0] sm:$0xf]
      %v238 = vld [vmem:[%s111 + $0x1e4] sm:$0xf]
      %v239 = vld [vmem:[%s111 + $0x1e8] sm:$0xf]
      %v240 = vld [vmem:[%s111 + $0x1ec] sm:$0xf]
      %v241 = vld [vmem:[%s111 + $0x1f0] sm:$0xf]
      %v242 = vld [vmem:[%s111 + $0x1f4] sm:$0xf]
      %v243 = vld [vmem:[%s111 + $0x1f8] sm:$0xf]
      %v244 = vld [vmem:[%s111 + $0x1fc] sm:$0xf]
      %v245 = vunpack.c.l.bf16 %v117
      %v246 = vunpack.c.l.bf16 %v118
      %v247 = vunpack.c.l.bf16 %v119
      %v248 = vunpack.c.l.bf16 %v120
      %v249 = vunpack.c.l.bf16 %v121
      %v250 = vunpack.c.l.bf16 %v122
      %v251 = vunpack.c.l.bf16 %v123
      %v252 = vunpack.c.l.bf16 %v124
      %v253 = vunpack.c.l.bf16 %v125
      %v254 = vunpack.c.l.bf16 %v126
      %v255 = vunpack.c.l.bf16 %v127
      %v256 = vunpack.c.l.bf16 %v128
      %v257 = vunpack.c.l.bf16 %v129
      %v258 = vunpack.c.l.bf16 %v130
      %v259 = vunpack.c.l.bf16 %v131
      %v260 = vunpack.c.l.bf16 %v132
      %v261 = vunpack.c.l.bf16 %v133
      %v262 = vunpack.c.l.bf16 %v134
      %v263 = vunpack.c.l.bf16 %v135
      %v264 = vunpack.c.l.bf16 %v136
      %v265 = vunpack.c.l.bf16 %v137
      %v266 = vunpack.c.l.bf16 %v138
      %v267 = vunpack.c.l.bf16 %v139
      %v268 = vunpack.c.l.bf16 %v140
      %v269 = vunpack.c.l.bf16 %v141
      %v270 = vunpack.c.l.bf16 %v142
      %v271 = vunpack.c.l.bf16 %v143
      %v272 = vunpack.c.l.bf16 %v144
      %v273 = vunpack.c.l.bf16 %v145
      %v274 = vunpack.c.l.bf16 %v146
      %v275 = vunpack.c.l.bf16 %v147
      %v276 = vunpack.c.l.bf16 %v148
      %v277 = vunpack.c.l.bf16 %v149
      %v278 = vunpack.c.l.bf16 %v150
      %v279 = vunpack.c.l.bf16 %v151
      %v280 = vunpack.c.l.bf16 %v152
      %v281 = vunpack.c.l.bf16 %v153
      %v282 = vunpack.c.l.bf16 %v154
      %v283 = vunpack.c.l.bf16 %v155
      %v284 = vunpack.c.l.bf16 %v156
      %v285 = vunpack.c.l.bf16 %v157
      %v286 = vunpack.c.l.bf16 %v158
      %v287 = vunpack.c.l.bf16 %v159
      %v288 = vunpack.c.l.bf16 %v160
      %v289 = vunpack.c.l.bf16 %v161
      %v290 = vunpack.c.l.bf16 %v162
      %v291 = vunpack.c.l.bf16 %v163
      %v292 = vunpack.c.l.bf16 %v164
      %v293 = vunpack.c.l.bf16 %v165
      %v294 = vunpack.c.l.bf16 %v166
      %v295 = vunpack.c.l.bf16 %v167
      %v296 = vunpack.c.l.bf16 %v168
      %v297 = vunpack.c.l.bf16 %v169
      %v298 = vunpack.c.l.bf16 %v170
      %v299 = vunpack.c.l.bf16 %v171
      %v300 = vunpack.c.l.bf16 %v172
      %v301 = vunpack.c.l.bf16 %v173
      %v302 = vunpack.c.l.bf16 %v174
      %v303 = vunpack.c.l.bf16 %v175
      %v304 = vunpack.c.l.bf16 %v176
      %v305 = vunpack.c.l.bf16 %v177
      %v306 = vunpack.c.l.bf16 %v178
      %v307 = vunpack.c.l.bf16 %v179
      %v308 = vunpack.c.l.bf16 %v180
      %v309 = vunpack.c.l.bf16 %v181
      %v310 = vunpack.c.l.bf16 %v182
      %v311 = vunpack.c.l.bf16 %v183
      %v312 = vunpack.c.l.bf16 %v184
      %v313 = vunpack.c.l.bf16 %v185
      %v314 = vunpack.c.l.bf16 %v186
      %v315 = vunpack.c.l.bf16 %v187
      %v316 = vunpack.c.l.bf16 %v188
      %v317 = vunpack.c.l.bf16 %v189
      %v318 = vunpack.c.l.bf16 %v190
      %v319 = vunpack.c.l.bf16 %v191
      %v320 = vunpack.c.l.bf16 %v192
      %v321 = vunpack.c.l.bf16 %v193
      %v322 = vunpack.c.l.bf16 %v194
      %v323 = vunpack.c.l.bf16 %v195
      %v324 = vunpack.c.l.bf16 %v196
      %v325 = vunpack.c.l.bf16 %v197
      %v326 = vunpack.c.l.bf16 %v198
      %v327 = vunpack.c.l.bf16 %v199
      %v328 = vunpack.c.l.bf16 %v200
      %v329 = vunpack.c.l.bf16 %v201
      %v330 = vunpack.c.l.bf16 %v202
      %v331 = vunpack.c.l.bf16 %v203
      %v332 = vunpack.c.l.bf16 %v204
      %v333 = vunpack.c.l.bf16 %v205
      %v334 = vunpack.c.l.bf16 %v206
      %v335 = vunpack.c.l.bf16 %v207
      %v336 = vunpack.c.l.bf16 %v208
      %v337 = vunpack.c.l.bf16 %v209
      %v338 = vunpack.c.l.bf16 %v210
      %v339 = vunpack.c.l.bf16 %v211
      %v340 = vunpack.c.l.bf16 %v212
      %v341 = vunpack.c.l.bf16 %v213
      %v342 = vunpack.c.l.bf16 %v214
      %v343 = vunpack.c.l.bf16 %v215
      %v344 = vunpack.c.l.bf16 %v216
      %v345 = vunpack.c.l.bf16 %v217
      %v346 = vunpack.c.l.bf16 %v218
      %v347 = vunpack.c.l.bf16 %v219
      %v348 = vunpack.c.l.bf16 %v220
      %v349 = vunpack.c.l.bf16 %v221
      %v350 = vunpack.c.l.bf16 %v222
      %v351 = vunpack.c.l.bf16 %v223
      %v352 = vunpack.c.l.bf16 %v224
      %v353 = vunpack.c.l.bf16 %v225
      %v354 = vunpack.c.l.bf16 %v226
      %v355 = vunpack.c.l.bf16 %v227
      %v356 = vunpack.c.l.bf16 %v228
      %v357 = vunpack.c.l.bf16 %v229
      %v358 = vunpack.c.l.bf16 %v230
      %v359 = vunpack.c.l.bf16 %v231
      %v360 = vunpack.c.l.bf16 %v232
      %v361 = vunpack.c.l.bf16 %v233
      %v362 = vunpack.c.l.bf16 %v234
      %v363 = vunpack.c.l.bf16 %v235
      %v364 = vunpack.c.l.bf16 %v236
      %v365 = vunpack.c.l.bf16 %v237
      %v366 = vunpack.c.l.bf16 %v238
      %v367 = vunpack.c.l.bf16 %v239
      %v368 = vunpack.c.l.bf16 %v240
      %v369 = vunpack.c.l.bf16 %v241
      %v370 = vunpack.c.l.bf16 %v242
      %v371 = vunpack.c.l.bf16 %v243
      %v372 = vunpack.c.l.bf16 %v244
      %vm373 = vcmask 64512
      %v374 = vsel %vm373, %v245, 0.0
      %v375 = vsel %vm373, %v246, 0.0
      %v376 = vadd.f32 %v374, %v375
      %v377 = vsel %vm373, %v247, 0.0
      %v378 = vadd.f32 %v376, %v377
      %v379 = vsel %vm373, %v248, 0.0
      %v380 = vadd.f32 %v378, %v379
      %v381 = vsel %vm373, %v249, 0.0
      %v382 = vadd.f32 %v380, %v381
      %v383 = vsel %vm373, %v250, 0.0
      %v384 = vadd.f32 %v382, %v383
      %v385 = vsel %vm373, %v251, 0.0
      %v386 = vadd.f32 %v384, %v385
      %v387 = vsel %vm373, %v252, 0.0
      %v388 = vadd.f32 %v386, %v387
      %v389 = vsel %vm373, %v253, 0.0
      %v390 = vadd.f32 %v388, %v389
      %v391 = vsel %vm373, %v254, 0.0
      %v392 = vadd.f32 %v390, %v391
      %v393 = vsel %vm373, %v255, 0.0
      %v394 = vadd.f32 %v392, %v393
      %v395 = vsel %vm373, %v256, 0.0
      %v396 = vadd.f32 %v394, %v395
      %v397 = vsel %vm373, %v257, 0.0
      %v398 = vadd.f32 %v396, %v397
      %v399 = vsel %vm373, %v258, 0.0
      %v400 = vadd.f32 %v398, %v399
      %v401 = vsel %vm373, %v259, 0.0
      %v402 = vadd.f32 %v400, %v401
      %v403 = vsel %vm373, %v260, 0.0
      %v404 = vadd.f32 %v402, %v403
      %v405 = vsel %vm373, %v261, 0.0
      %v406 = vadd.f32 %v404, %v405
      %v407 = vsel %vm373, %v262, 0.0
      %v408 = vadd.f32 %v406, %v407
      %v409 = vsel %vm373, %v263, 0.0
      %v410 = vadd.f32 %v408, %v409
      %v411 = vsel %vm373, %v264, 0.0
      %v412 = vadd.f32 %v410, %v411
      %v413 = vsel %vm373, %v265, 0.0
      %v414 = vadd.f32 %v412, %v413
      %v415 = vsel %vm373, %v266, 0.0
      %v416 = vadd.f32 %v414, %v415
      %v417 = vsel %vm373, %v267, 0.0
      %v418 = vadd.f32 %v416, %v417
      %v419 = vsel %vm373, %v268, 0.0
      %v420 = vadd.f32 %v418, %v419
      %v421 = vsel %vm373, %v269, 0.0
      %v422 = vadd.f32 %v420, %v421
      %v423 = vsel %vm373, %v270, 0.0
      %v424 = vadd.f32 %v422, %v423
      %v425 = vsel %vm373, %v271, 0.0
      %v426 = vadd.f32 %v424, %v425
      %v427 = vsel %vm373, %v272, 0.0
      %v428 = vadd.f32 %v426, %v427
      %v429 = vsel %vm373, %v273, 0.0
      %v430 = vadd.f32 %v428, %v429
      %v431 = vsel %vm373, %v274, 0.0
      %v432 = vadd.f32 %v430, %v431
      %v433 = vsel %vm373, %v275, 0.0
      %v434 = vadd.f32 %v432, %v433
      %v435 = vsel %vm373, %v276, 0.0
      %v436 = vadd.f32 %v434, %v435
      %v437 = vsel %vm373, %v277, 0.0
      %v438 = vadd.f32 %v436, %v437
      %v439 = vsel %vm373, %v278, 0.0
      %v440 = vadd.f32 %v438, %v439
      %v441 = vsel %vm373, %v279, 0.0
      %v442 = vadd.f32 %v440, %v441
      %v443 = vsel %vm373, %v280, 0.0
      %v444 = vadd.f32 %v442, %v443
      %v445 = vsel %vm373, %v281, 0.0
      %v446 = vadd.f32 %v444, %v445
      %v447 = vsel %vm373, %v282, 0.0
      %v448 = vadd.f32 %v446, %v447
      %v449 = vsel %vm373, %v283, 0.0
      %v450 = vadd.f32 %v448, %v449
      %v451 = vsel %vm373, %v284, 0.0
      %v452 = vadd.f32 %v450, %v451
      %v453 = vsel %vm373, %v285, 0.0
      %v454 = vadd.f32 %v452, %v453
      %v455 = vsel %vm373, %v286, 0.0
      %v456 = vadd.f32 %v454, %v455
      %v457 = vsel %vm373, %v287, 0.0
      %v458 = vadd.f32 %v456, %v457
      %v459 = vsel %vm373, %v288, 0.0
      %v460 = vadd.f32 %v458, %v459
      %v461 = vsel %vm373, %v289, 0.0
      %v462 = vadd.f32 %v460, %v461
      %v463 = vsel %vm373, %v290, 0.0
      %v464 = vadd.f32 %v462, %v463
      %v465 = vsel %vm373, %v291, 0.0
      %v466 = vadd.f32 %v464, %v465
      %v467 = vsel %vm373, %v292, 0.0
      %v468 = vadd.f32 %v466, %v467
      %v469 = vsel %vm373, %v293, 0.0
      %v470 = vadd.f32 %v468, %v469
      %v471 = vsel %vm373, %v294, 0.0
      %v472 = vadd.f32 %v470, %v471
      %v473 = vsel %vm373, %v295, 0.0
      %v474 = vadd.f32 %v472, %v473
      %v475 = vsel %vm373, %v296, 0.0
      %v476 = vadd.f32 %v474, %v475
      %v477 = vsel %vm373, %v297, 0.0
      %v478 = vadd.f32 %v476, %v477
      %v479 = vsel %vm373, %v298, 0.0
      %v480 = vadd.f32 %v478, %v479
      %v481 = vsel %vm373, %v299, 0.0
      %v482 = vadd.f32 %v480, %v481
      %v483 = vsel %vm373, %v300, 0.0
      %v484 = vadd.f32 %v482, %v483
      %v485 = vsel %vm373, %v301, 0.0
      %v486 = vadd.f32 %v484, %v485
      %v487 = vsel %vm373, %v302, 0.0
      %v488 = vadd.f32 %v486, %v487
      %v489 = vsel %vm373, %v303, 0.0
      %v490 = vadd.f32 %v488, %v489
      %v491 = vsel %vm373, %v304, 0.0
      %v492 = vadd.f32 %v490, %v491
      %v493 = vsel %vm373, %v305, 0.0
      %v494 = vadd.f32 %v492, %v493
      %v495 = vsel %vm373, %v306, 0.0
      %v496 = vadd.f32 %v494, %v495
      %v497 = vsel %vm373, %v307, 0.0
      %v498 = vadd.f32 %v496, %v497
      %v499 = vsel %vm373, %v308, 0.0
      %v500 = vadd.f32 %v498, %v499
      %v501 = vsel %vm373, %v309, 0.0
      %v502 = vadd.f32 %v500, %v501
      %v503 = vsel %vm373, %v310, 0.0
      %v504 = vadd.f32 %v502, %v503
      %v505 = vsel %vm373, %v311, 0.0
      %v506 = vadd.f32 %v504, %v505
      %v507 = vsel %vm373, %v312, 0.0
      %v508 = vadd.f32 %v506, %v507
      %v509 = vsel %vm373, %v313, 0.0
      %v510 = vadd.f32 %v508, %v509
      %v511 = vsel %vm373, %v314, 0.0
      %v512 = vadd.f32 %v510, %v511
      %v513 = vsel %vm373, %v315, 0.0
      %v514 = vadd.f32 %v512, %v513
      %v515 = vsel %vm373, %v316, 0.0
      %v516 = vadd.f32 %v514, %v515
      %v517 = vsel %vm373, %v317, 0.0
      %v518 = vadd.f32 %v516, %v517
      %v519 = vsel %vm373, %v318, 0.0
      %v520 = vadd.f32 %v518, %v519
      %v521 = vsel %vm373, %v319, 0.0
      %v522 = vadd.f32 %v520, %v521
      %v523 = vsel %vm373, %v320, 0.0
      %v524 = vadd.f32 %v522, %v523
      %v525 = vsel %vm373, %v321, 0.0
      %v526 = vadd.f32 %v524, %v525
      %v527 = vsel %vm373, %v322, 0.0
      %v528 = vadd.f32 %v526, %v527
      %v529 = vsel %vm373, %v323, 0.0
      %v530 = vadd.f32 %v528, %v529
      %v531 = vsel %vm373, %v324, 0.0
      %v532 = vadd.f32 %v530, %v531
      %v533 = vsel %vm373, %v325, 0.0
      %v534 = vadd.f32 %v532, %v533
      %v535 = vsel %vm373, %v326, 0.0
      %v536 = vadd.f32 %v534, %v535
      %v537 = vsel %vm373, %v327, 0.0
      %v538 = vadd.f32 %v536, %v537
      %v539 = vsel %vm373, %v328, 0.0
      %v540 = vadd.f32 %v538, %v539
      %v541 = vsel %vm373, %v329, 0.0
      %v542 = vadd.f32 %v540, %v541
      %v543 = vsel %vm373, %v330, 0.0
      %v544 = vadd.f32 %v542, %v543
      %v545 = vsel %vm373, %v331, 0.0
      %v546 = vadd.f32 %v544, %v545
      %v547 = vsel %vm373, %v332, 0.0
      %v548 = vadd.f32 %v546, %v547
      %v549 = vsel %vm373, %v333, 0.0
      %v550 = vadd.f32 %v548, %v549
      %v551 = vsel %vm373, %v334, 0.0
      %v552 = vadd.f32 %v550, %v551
      %v553 = vsel %vm373, %v335, 0.0
      %v554 = vadd.f32 %v552, %v553
      %v555 = vsel %vm373, %v336, 0.0
      %v556 = vadd.f32 %v554, %v555
      %v557 = vsel %vm373, %v337, 0.0
      %v558 = vadd.f32 %v556, %v557
      %v559 = vsel %vm373, %v338, 0.0
      %v560 = vadd.f32 %v558, %v559
      %v561 = vsel %vm373, %v339, 0.0
      %v562 = vadd.f32 %v560, %v561
      %v563 = vsel %vm373, %v340, 0.0
      %v564 = vadd.f32 %v562, %v563
      %v565 = vsel %vm373, %v341, 0.0
      %v566 = vadd.f32 %v564, %v565
      %v567 = vsel %vm373, %v342, 0.0
      %v568 = vadd.f32 %v566, %v567
      %v569 = vsel %vm373, %v343, 0.0
      %v570 = vadd.f32 %v568, %v569
      %v571 = vsel %vm373, %v344, 0.0
      %v572 = vadd.f32 %v570, %v571
      %v573 = vsel %vm373, %v345, 0.0
      %v574 = vadd.f32 %v572, %v573
      %v575 = vsel %vm373, %v346, 0.0
      %v576 = vadd.f32 %v574, %v575
      %v577 = vsel %vm373, %v347, 0.0
      %v578 = vadd.f32 %v576, %v577
      %v579 = vsel %vm373, %v348, 0.0
      %v580 = vadd.f32 %v578, %v579
      %v581 = vsel %vm373, %v349, 0.0
      %v582 = vadd.f32 %v580, %v581
      %v583 = vsel %vm373, %v350, 0.0
      %v584 = vadd.f32 %v582, %v583
      %v585 = vsel %vm373, %v351, 0.0
      %v586 = vadd.f32 %v584, %v585
      %v587 = vsel %vm373, %v352, 0.0
      %v588 = vadd.f32 %v586, %v587
      %v589 = vsel %vm373, %v353, 0.0
      %v590 = vadd.f32 %v588, %v589
      %v591 = vsel %vm373, %v354, 0.0
      %v592 = vadd.f32 %v590, %v591
      %v593 = vsel %vm373, %v355, 0.0
      %v594 = vadd.f32 %v592, %v593
      %v595 = vsel %vm373, %v356, 0.0
      %v596 = vadd.f32 %v594, %v595
      %v597 = vsel %vm373, %v357, 0.0
      %v598 = vadd.f32 %v596, %v597
      %v599 = vsel %vm373, %v358, 0.0
      %v600 = vadd.f32 %v598, %v599
      %v601 = vsel %vm373, %v359, 0.0
      %v602 = vadd.f32 %v600, %v601
      %v603 = vsel %vm373, %v360, 0.0
      %v604 = vadd.f32 %v602, %v603
      %v605 = vsel %vm373, %v361, 0.0
      %v606 = vadd.f32 %v604, %v605
      %v607 = vsel %vm373, %v362, 0.0
      %v608 = vadd.f32 %v606, %v607
      %v609 = vsel %vm373, %v363, 0.0
      %v610 = vadd.f32 %v608, %v609
      %v611 = vsel %vm373, %v364, 0.0
      %v612 = vadd.f32 %v610, %v611
      %v613 = vsel %vm373, %v365, 0.0
      %v614 = vadd.f32 %v612, %v613
      %v615 = vsel %vm373, %v366, 0.0
      %v616 = vadd.f32 %v614, %v615
      %v617 = vsel %vm373, %v367, 0.0
      %v618 = vadd.f32 %v616, %v617
      %v619 = vsel %vm373, %v368, 0.0
      %v620 = vadd.f32 %v618, %v619
      %v621 = vsel %vm373, %v369, 0.0
      %v622 = vadd.f32 %v620, %v621
      %v623 = vsel %vm373, %v370, 0.0
      %v624 = vadd.f32 %v622, %v623
      %v625 = vsel %vm373, %v371, 0.0
      %v626 = vadd.f32 %v624, %v625
      %v627 = vsel %vm373, %v372, 0.0
      %v628 = vadd.f32 %v626, %v627
      %v629 = vrot.slane %v628, 4
      %v630 = vadd.f32 %v628, %v629
      %v631 = vrot.slane %v630, 2
      %v632 = vadd.f32 %v630, %v631
      %v633 = vrot.slane %v632, 1
      %v634 = vadd.f32 %v632, %v633
      %v635 = vmul.f32 %v245, %v245
      %v636 = vmul.f32 %v246, %v246
      %v637 = vmul.f32 %v247, %v247
      %v638 = vmul.f32 %v248, %v248
      %v639 = vmul.f32 %v249, %v249
      %v640 = vmul.f32 %v250, %v250
      %v641 = vmul.f32 %v251, %v251
      %v642 = vmul.f32 %v252, %v252
      %v643 = vmul.f32 %v253, %v253
      %v644 = vmul.f32 %v254, %v254
      %v645 = vmul.f32 %v255, %v255
      %v646 = vmul.f32 %v256, %v256
      %v647 = vmul.f32 %v257, %v257
      %v648 = vmul.f32 %v258, %v258
      %v649 = vmul.f32 %v259, %v259
      %v650 = vmul.f32 %v260, %v260
      %v651 = vmul.f32 %v261, %v261
      %v652 = vmul.f32 %v262, %v262
      %v653 = vmul.f32 %v263, %v263
      %v654 = vmul.f32 %v264, %v264
      %v655 = vmul.f32 %v265, %v265
      %v656 = vmul.f32 %v266, %v266
      %v657 = vmul.f32 %v267, %v267
      %v658 = vmul.f32 %v268, %v268
      %v659 = vmul.f32 %v269, %v269
      %v660 = vmul.f32 %v270, %v270
      %v661 = vmul.f32 %v271, %v271
      %v662 = vmul.f32 %v272, %v272
      %v663 = vmul.f32 %v273, %v273
      %v664 = vmul.f32 %v274, %v274
      %v665 = vmul.f32 %v275, %v275
      %v666 = vmul.f32 %v276, %v276
      %v667 = vmul.f32 %v277, %v277
      %v668 = vmul.f32 %v278, %v278
      %v669 = vmul.f32 %v279, %v279
      %v670 = vmul.f32 %v280, %v280
      %v671 = vmul.f32 %v281, %v281
      %v672 = vmul.f32 %v282, %v282
      %v673 = vmul.f32 %v283, %v283
      %v674 = vmul.f32 %v284, %v284
      %v675 = vmul.f32 %v285, %v285
      %v676 = vmul.f32 %v286, %v286
      %v677 = vmul.f32 %v287, %v287
      %v678 = vmul.f32 %v288, %v288
      %v679 = vmul.f32 %v289, %v289
      %v680 = vmul.f32 %v290, %v290
      %v681 = vmul.f32 %v291, %v291
      %v682 = vmul.f32 %v292, %v292
      %v683 = vmul.f32 %v293, %v293
      %v684 = vmul.f32 %v294, %v294
      %v685 = vmul.f32 %v295, %v295
      %v686 = vmul.f32 %v296, %v296
      %v687 = vmul.f32 %v297, %v297
      %v688 = vmul.f32 %v298, %v298
      %v689 = vmul.f32 %v299, %v299
      %v690 = vmul.f32 %v300, %v300
      %v691 = vmul.f32 %v301, %v301
      %v692 = vmul.f32 %v302, %v302
      %v693 = vmul.f32 %v303, %v303
      %v694 = vmul.f32 %v304, %v304
      %v695 = vmul.f32 %v305, %v305
      %v696 = vmul.f32 %v306, %v306
      %v697 = vmul.f32 %v307, %v307
      %v698 = vmul.f32 %v308, %v308
      %v699 = vmul.f32 %v309, %v309
      %v700 = vmul.f32 %v310, %v310
      %v701 = vmul.f32 %v311, %v311
      %v702 = vmul.f32 %v312, %v312
      %v703 = vmul.f32 %v313, %v313
      %v704 = vmul.f32 %v314, %v314
      %v705 = vmul.f32 %v315, %v315
      %v706 = vmul.f32 %v316, %v316
      %v707 = vmul.f32 %v317, %v317
      %v708 = vmul.f32 %v318, %v318
      %v709 = vmul.f32 %v319, %v319
      %v710 = vmul.f32 %v320, %v320
      %v711 = vmul.f32 %v321, %v321
      %v712 = vmul.f32 %v322, %v322
      %v713 = vmul.f32 %v323, %v323
      %v714 = vmul.f32 %v324, %v324
      %v715 = vmul.f32 %v325, %v325
      %v716 = vmul.f32 %v326, %v326
      %v717 = vmul.f32 %v327, %v327
      %v718 = vmul.f32 %v328, %v328
      %v719 = vmul.f32 %v329, %v329
      %v720 = vmul.f32 %v330, %v330
      %v721 = vmul.f32 %v331, %v331
      %v722 = vmul.f32 %v332, %v332
      %v723 = vmul.f32 %v333, %v333
      %v724 = vmul.f32 %v334, %v334
      %v725 = vmul.f32 %v335, %v335
      %v726 = vmul.f32 %v336, %v336
      %v727 = vmul.f32 %v337, %v337
      %v728 = vmul.f32 %v338, %v338
      %v729 = vmul.f32 %v339, %v339
      %v730 = vmul.f32 %v340, %v340
      %v731 = vmul.f32 %v341, %v341
      %v732 = vmul.f32 %v342, %v342
      %v733 = vmul.f32 %v343, %v343
      %v734 = vmul.f32 %v344, %v344
      %v735 = vmul.f32 %v345, %v345
      %v736 = vmul.f32 %v346, %v346
      %v737 = vmul.f32 %v347, %v347
      %v738 = vmul.f32 %v348, %v348
      %v739 = vmul.f32 %v349, %v349
      %v740 = vmul.f32 %v350, %v350
      %v741 = vmul.f32 %v351, %v351
      %v742 = vmul.f32 %v352, %v352
      %v743 = vmul.f32 %v353, %v353
      %v744 = vmul.f32 %v354, %v354
      %v745 = vmul.f32 %v355, %v355
      %v746 = vmul.f32 %v356, %v356
      %v747 = vmul.f32 %v357, %v357
      %v748 = vmul.f32 %v358, %v358
      %v749 = vmul.f32 %v359, %v359
      %v750 = vmul.f32 %v360, %v360
      %v751 = vmul.f32 %v361, %v361
      %v752 = vmul.f32 %v362, %v362
      %v753 = vmul.f32 %v363, %v363
      %v754 = vmul.f32 %v364, %v364
      %v755 = vmul.f32 %v365, %v365
      %v756 = vmul.f32 %v366, %v366
      %v757 = vmul.f32 %v367, %v367
      %v758 = vmul.f32 %v368, %v368
      %v759 = vmul.f32 %v369, %v369
      %v760 = vmul.f32 %v370, %v370
      %v761 = vmul.f32 %v371, %v371
      %v762 = vmul.f32 %v372, %v372
      %v763 = vsel %vm373, %v635, 0.0
      %v764 = vsel %vm373, %v636, 0.0
      %v765 = vadd.f32 %v763, %v764
      %v766 = vsel %vm373, %v637, 0.0
      %v767 = vadd.f32 %v765, %v766
      %v768 = vsel %vm373, %v638, 0.0
      %v769 = vadd.f32 %v767, %v768
      %v770 = vsel %vm373, %v639, 0.0
      %v771 = vadd.f32 %v769, %v770
      %v772 = vsel %vm373, %v640, 0.0
      %v773 = vadd.f32 %v771, %v772
      %v774 = vsel %vm373, %v641, 0.0
      %v775 = vadd.f32 %v773, %v774
      %v776 = vsel %vm373, %v642, 0.0
      %v777 = vadd.f32 %v775, %v776
      %v778 = vsel %vm373, %v643, 0.0
      %v779 = vadd.f32 %v777, %v778
      %v780 = vsel %vm373, %v644, 0.0
      %v781 = vadd.f32 %v779, %v780
      %v782 = vsel %vm373, %v645, 0.0
      %v783 = vadd.f32 %v781, %v782
      %v784 = vsel %vm373, %v646, 0.0
      %v785 = vadd.f32 %v783, %v784
      %v786 = vsel %vm373, %v647, 0.0
      %v787 = vadd.f32 %v785, %v786
      %v788 = vsel %vm373, %v648, 0.0
      %v789 = vadd.f32 %v787, %v788
      %v790 = vsel %vm373, %v649, 0.0
      %v791 = vadd.f32 %v789, %v790
      %v792 = vsel %vm373, %v650, 0.0
      %v793 = vadd.f32 %v791, %v792
      %v794 = vsel %vm373, %v651, 0.0
      %v795 = vadd.f32 %v793, %v794
      %v796 = vsel %vm373, %v652, 0.0
      %v797 = vadd.f32 %v795, %v796
      %v798 = vsel %vm373, %v653, 0.0
      %v799 = vadd.f32 %v797, %v798
      %v800 = vsel %vm373, %v654, 0.0
      %v801 = vadd.f32 %v799, %v800
      %v802 = vsel %vm373, %v655, 0.0
      %v803 = vadd.f32 %v801, %v802
      %v804 = vsel %vm373, %v656, 0.0
      %v805 = vadd.f32 %v803, %v804
      %v806 = vsel %vm373, %v657, 0.0
      %v807 = vadd.f32 %v805, %v806
      %v808 = vsel %vm373, %v658, 0.0
      %v809 = vadd.f32 %v807, %v808
      %v810 = vsel %vm373, %v659, 0.0
      %v811 = vadd.f32 %v809, %v810
      %v812 = vsel %vm373, %v660, 0.0
      %v813 = vadd.f32 %v811, %v812
      %v814 = vsel %vm373, %v661, 0.0
      %v815 = vadd.f32 %v813, %v814
      %v816 = vsel %vm373, %v662, 0.0
      %v817 = vadd.f32 %v815, %v816
      %v818 = vsel %vm373, %v663, 0.0
      %v819 = vadd.f32 %v817, %v818
      %v820 = vsel %vm373, %v664, 0.0
      %v821 = vadd.f32 %v819, %v820
      %v822 = vsel %vm373, %v665, 0.0
      %v823 = vadd.f32 %v821, %v822
      %v824 = vsel %vm373, %v666, 0.0
      %v825 = vadd.f32 %v823, %v824
      %v826 = vsel %vm373, %v667, 0.0
      %v827 = vadd.f32 %v825, %v826
      %v828 = vsel %vm373, %v668, 0.0
      %v829 = vadd.f32 %v827, %v828
      %v830 = vsel %vm373, %v669, 0.0
      %v831 = vadd.f32 %v829, %v830
      %v832 = vsel %vm373, %v670, 0.0
      %v833 = vadd.f32 %v831, %v832
      %v834 = vsel %vm373, %v671, 0.0
      %v835 = vadd.f32 %v833, %v834
      %v836 = vsel %vm373, %v672, 0.0
      %v837 = vadd.f32 %v835, %v836
      %v838 = vsel %vm373, %v673, 0.0
      %v839 = vadd.f32 %v837, %v838
      %v840 = vsel %vm373, %v674, 0.0
      %v841 = vadd.f32 %v839, %v840
      %v842 = vsel %vm373, %v675, 0.0
      %v843 = vadd.f32 %v841, %v842
      %v844 = vsel %vm373, %v676, 0.0
      %v845 = vadd.f32 %v843, %v844
      %v846 = vsel %vm373, %v677, 0.0
      %v847 = vadd.f32 %v845, %v846
      %v848 = vsel %vm373, %v678, 0.0
      %v849 = vadd.f32 %v847, %v848
      %v850 = vsel %vm373, %v679, 0.0
      %v851 = vadd.f32 %v849, %v850
      %v852 = vsel %vm373, %v680, 0.0
      %v853 = vadd.f32 %v851, %v852
      %v854 = vsel %vm373, %v681, 0.0
      %v855 = vadd.f32 %v853, %v854
      %v856 = vsel %vm373, %v682, 0.0
      %v857 = vadd.f32 %v855, %v856
      %v858 = vsel %vm373, %v683, 0.0
      %v859 = vadd.f32 %v857, %v858
      %v860 = vsel %vm373, %v684, 0.0
      %v861 = vadd.f32 %v859, %v860
      %v862 = vsel %vm373, %v685, 0.0
      %v863 = vadd.f32 %v861, %v862
      %v864 = vsel %vm373, %v686, 0.0
      %v865 = vadd.f32 %v863, %v864
      %v866 = vsel %vm373, %v687, 0.0
      %v867 = vadd.f32 %v865, %v866
      %v868 = vsel %vm373, %v688, 0.0
      %v869 = vadd.f32 %v867, %v868
      %v870 = vsel %vm373, %v689, 0.0
      %v871 = vadd.f32 %v869, %v870
      %v872 = vsel %vm373, %v690, 0.0
      %v873 = vadd.f32 %v871, %v872
      %v874 = vsel %vm373, %v691, 0.0
      %v875 = vadd.f32 %v873, %v874
      %v876 = vsel %vm373, %v692, 0.0
      %v877 = vadd.f32 %v875, %v876
      %v878 = vsel %vm373, %v693, 0.0
      %v879 = vadd.f32 %v877, %v878
      %v880 = vsel %vm373, %v694, 0.0
      %v881 = vadd.f32 %v879, %v880
      %v882 = vsel %vm373, %v695, 0.0
      %v883 = vadd.f32 %v881, %v882
      %v884 = vsel %vm373, %v696, 0.0
      %v885 = vadd.f32 %v883, %v884
      %v886 = vsel %vm373, %v697, 0.0
      %v887 = vadd.f32 %v885, %v886
      %v888 = vsel %vm373, %v698, 0.0
      %v889 = vadd.f32 %v887, %v888
      %v890 = vsel %vm373, %v699, 0.0
      %v891 = vadd.f32 %v889, %v890
      %v892 = vsel %vm373, %v700, 0.0
      %v893 = vadd.f32 %v891, %v892
      %v894 = vsel %vm373, %v701, 0.0
      %v895 = vadd.f32 %v893, %v894
      %v896 = vsel %vm373, %v702, 0.0
      %v897 = vadd.f32 %v895, %v896
      %v898 = vsel %vm373, %v703, 0.0
      %v899 = vadd.f32 %v897, %v898
      %v900 = vsel %vm373, %v704, 0.0
      %v901 = vadd.f32 %v899, %v900
      %v902 = vsel %vm373, %v705, 0.0
      %v903 = vadd.f32 %v901, %v902
      %v904 = vsel %vm373, %v706, 0.0
      %v905 = vadd.f32 %v903, %v904
      %v906 = vsel %vm373, %v707, 0.0
      %v907 = vadd.f32 %v905, %v906
      %v908 = vsel %vm373, %v708, 0.0
      %v909 = vadd.f32 %v907, %v908
      %v910 = vsel %vm373, %v709, 0.0
      %v911 = vadd.f32 %v909, %v910
      %v912 = vsel %vm373, %v710, 0.0
      %v913 = vadd.f32 %v911, %v912
      %v914 = vsel %vm373, %v711, 0.0
      %v915 = vadd.f32 %v913, %v914
      %v916 = vsel %vm373, %v712, 0.0
      %v917 = vadd.f32 %v915, %v916
      %v918 = vsel %vm373, %v713, 0.0
      %v919 = vadd.f32 %v917, %v918
      %v920 = vsel %vm373, %v714, 0.0
      %v921 = vadd.f32 %v919, %v920
      %v922 = vsel %vm373, %v715, 0.0
      %v923 = vadd.f32 %v921, %v922
      %v924 = vsel %vm373, %v716, 0.0
      %v925 = vadd.f32 %v923, %v924
      %v926 = vsel %vm373, %v717, 0.0
      %v927 = vadd.f32 %v925, %v926
      %v928 = vsel %vm373, %v718, 0.0
      %v929 = vadd.f32 %v927, %v928
      %v930 = vsel %vm373, %v719, 0.0
      %v931 = vadd.f32 %v929, %v930
      %v932 = vsel %vm373, %v720, 0.0
      %v933 = vadd.f32 %v931, %v932
      %v934 = vsel %vm373, %v721, 0.0
      %v935 = vadd.f32 %v933, %v934
      %v936 = vsel %vm373, %v722, 0.0
      %v937 = vadd.f32 %v935, %v936
      %v938 = vsel %vm373, %v723, 0.0
      %v939 = vadd.f32 %v937, %v938
      %v940 = vsel %vm373, %v724, 0.0
      %v941 = vadd.f32 %v939, %v940
      %v942 = vsel %vm373, %v725, 0.0
      %v943 = vadd.f32 %v941, %v942
      %v944 = vsel %vm373, %v726, 0.0
      %v945 = vadd.f32 %v943, %v944
      %v946 = vsel %vm373, %v727, 0.0
      %v947 = vadd.f32 %v945, %v946
      %v948 = vsel %vm373, %v728, 0.0
      %v949 = vadd.f32 %v947, %v948
      %v950 = vsel %vm373, %v729, 0.0
      %v951 = vadd.f32 %v949, %v950
      %v952 = vsel %vm373, %v730, 0.0
      %v953 = vadd.f32 %v951, %v952
      %v954 = vsel %vm373, %v731, 0.0
      %v955 = vadd.f32 %v953, %v954
      %v956 = vsel %vm373, %v732, 0.0
      %v957 = vadd.f32 %v955, %v956
      %v958 = vsel %vm373, %v733, 0.0
      %v959 = vadd.f32 %v957, %v958
      %v960 = vsel %vm373, %v734, 0.0
      %v961 = vadd.f32 %v959, %v960
      %v962 = vsel %vm373, %v735, 0.0
      %v963 = vadd.f32 %v961, %v962
      %v964 = vsel %vm373, %v736, 0.0
      %v965 = vadd.f32 %v963, %v964
      %v966 = vsel %vm373, %v737, 0.0
      %v967 = vadd.f32 %v965, %v966
      %v968 = vsel %vm373, %v738, 0.0
      %v969 = vadd.f32 %v967, %v968
      %v970 = vsel %vm373, %v739, 0.0
      %v971 = vadd.f32 %v969, %v970
      %v972 = vsel %vm373, %v740, 0.0
      %v973 = vadd.f32 %v971, %v972
      %v974 = vsel %vm373, %v741, 0.0
      %v975 = vadd.f32 %v973, %v974
      %v976 = vsel %vm373, %v742, 0.0
      %v977 = vadd.f32 %v975, %v976
      %v978 = vsel %vm373, %v743, 0.0
      %v979 = vadd.f32 %v977, %v978
      %v980 = vsel %vm373, %v744, 0.0
      %v981 = vadd.f32 %v979, %v980
      %v982 = vsel %vm373, %v745, 0.0
      %v983 = vadd.f32 %v981, %v982
      %v984 = vsel %vm373, %v746, 0.0
      %v985 = vadd.f32 %v983, %v984
      %v986 = vsel %vm373, %v747, 0.0
      %v987 = vadd.f32 %v985, %v986
      %v988 = vsel %vm373, %v748, 0.0
      %v989 = vadd.f32 %v987, %v988
      %v990 = vsel %vm373, %v749, 0.0
      %v991 = vadd.f32 %v989, %v990
      %v992 = vsel %vm373, %v750, 0.0
      %v993 = vadd.f32 %v991, %v992
      %v994 = vsel %vm373, %v751, 0.0
      %v995 = vadd.f32 %v993, %v994
      %v996 = vsel %vm373, %v752, 0.0
      %v997 = vadd.f32 %v995, %v996
      %v998 = vsel %vm373, %v753, 0.0
      %v999 = vadd.f32 %v997, %v998
      %v1000 = vsel %vm373, %v754, 0.0
      %v1001 = vadd.f32 %v999, %v1000
      %v1002 = vsel %vm373, %v755, 0.0
      %v1003 = vadd.f32 %v1001, %v1002
      %v1004 = vsel %vm373, %v756, 0.0
      %v1005 = vadd.f32 %v1003, %v1004
      %v1006 = vsel %vm373, %v757, 0.0
      %v1007 = vadd.f32 %v1005, %v1006
      %v1008 = vsel %vm373, %v758, 0.0
      %v1009 = vadd.f32 %v1007, %v1008
      %v1010 = vsel %vm373, %v759, 0.0
      %v1011 = vadd.f32 %v1009, %v1010
      %v1012 = vsel %vm373, %v760, 0.0
      %v1013 = vadd.f32 %v1011, %v1012
      %v1014 = vsel %vm373, %v761, 0.0
      %v1015 = vadd.f32 %v1013, %v1014
      %v1016 = vsel %vm373, %v762, 0.0
      %v1017 = vadd.f32 %v1015, %v1016
      %v1018 = vrot.slane %v1017, 4
      %v1019 = vadd.f32 %v1017, %v1018
      %v1020 = vrot.slane %v1019, 2
      %v1021 = vadd.f32 %v1019, %v1020
      %v1022 = vrot.slane %v1021, 1
      %v1023 = vadd.f32 %v1021, %v1022
      %vm1024 = vcmask 1040384
      %v1025 = vsel %vm1024, %v634, %v1023
      %vm1026 = vcmask 58368
      %1027 = vst.msk [vmem:[%s116] sm:$0x3] %vm1026, %v1025
      %p1028 = scmp.lt.s32.totalorder %s12, 1
      %s1029 = scalar_select %p1028, %s12, 1
      %s1030 = smul.addr %s1029, 2
      %s1031 = scalar_lea.vmem %s1, %s1030
      // Predicated region
      $region25: #{generator_forward.23} parent=23 // pred_check
        %p1032 = pneg %p56
      $region26: #{generator_forward.23} parent=23 // pred_check_branch
        %1034 = sbr.rel (%p1032) target = $region28
      $region27: #{generator_forward.23} parent=23 // pred_region
        _
      $region28: #{generator_forward.23} parent=23 // pred_fallthru
        _
    $region24: #{generator_forward.23} parent=5 // pred_fallthru
      _
    %p1035 = scmp.le.s32.totalorder 2, %s7
    // Predicated region
    $region29: #{generator_forward.23} parent=5 // pred_check
      %p1036 = pneg %p1035
    $region30: #{generator_forward.23} parent=5 // pred_check_branch
      %1038 = sbr.rel (%p1036) target = $region32
    $region31: #{generator_forward.23} parent=5 // pred_region
      %s1039 = ssub.s32 %s7, 2
      // Predicated region
      $region33: #{generator_forward.23} parent=31 // pred_check
        %p1040 = pneg %p62
      $region34: #{generator_forward.23} parent=31 // pred_check_branch
        %1042 = sbr.rel (%p1040) target = $region36
      $region35: #{generator_forward.23} parent=31 // pred_region
        %p1043 = scmp.lt.s32.totalorder %s13, 1
        %s1044 = scalar_select %p1043, %s13, 1
        %s1045 = smul.addr %s1044, 2
        %s1046 = scalar_lea.vmem %s1, %s1045
      $region36: #{generator_forward.23} parent=31 // pred_fallthru
        _
    $region32: #{generator_forward.23} parent=5 // pred_fallthru
      _
  $region6: #{generator_forward.23} parent=0 // loop_footer
    %s11 = sadd.s32 1, %s7
  $region7: #{generator_forward.23} parent=0 // loop_footer_branch
    %6 = sbr.rel target = $region3
  $region8: #{generator_forward.23} parent=0 // loop_exit
    _

// kernel: generator_forward.24
$region0: #{generator_forward.24}
  #allocation0 [shape = 'u32[]', space=smem, size = 0x4, offset = 0x4, fixed_abs, tag = 'smem constant byte address 0x4 - core index']
  #allocation1 [shape = 'u32[144,128]{1,0:T(1,128)}', space=vmem, size = 0x12000, scoped, tag = 'internal scratch']
  %s0 = inlined_call_operand.vmem [shape: bf16[2048,8], index: 0, kind: input, shape index: {}]
  %s1 = inlined_call_operand.vmem [shape: f32[1,8], index: 1, kind: input, shape index: {}]
  %s2 = inlined_call_operand.vmem [shape: f32[1,8], index: 2, kind: input, shape index: {}]
  %s3 = inlined_call_operand.vmem [shape: bf16[2048,8], index: 3, kind: output, shape index: {}]
  %s4 = sld [smem:[#allocation0]]
  $region45: #{generator_forward.24} parent=0
    _
  %s6 = ssub.s32 1, %s4
  %s7 = scalar_select 0, %s6, %s4
  loop: start=0, step=1, limit=4
  $region2: #{generator_forward.24} parent=0 // loop_pre_header
    _
  $region3: #{generator_forward.24} parent=0 // loop_header
    %s9 = sphi 0, %s13
    %p10 = scmp.ge.s32.totalorder %s9, 4
    %s19 = sphi 0, %s21
    %s22 = sphi 0, %s19
    %s23 = sphi 0, %s22
    %s39 = sphi 0, %s23
    %s43 = sphi 0, %s43
    %s45 = sphi 0, %s43
    %s46 = sphi 0, %s45
    %s60 = sphi 0, %s46
    %s64 = sphi 0, %s64
    %s66 = sphi 0, %s64
    %s67 = sphi 0, %s66
    %s81 = sphi 0, %s67
    %s87 = sphi 0, %s89
    %s90 = sphi 0, %s87
    %s91 = sphi 0, %s90
    %s107 = sphi 0, %s91
  $region4: #{generator_forward.24} parent=0 // loop_header_branch
    %12 = sbr.rel (%p10) target = $region8
  $region5: #{generator_forward.24} parent=0 // loop_body
    %s14 = ssub.s32 %s9, 1
    %s15 = ssub.s32 %s9, 2
    %s16 = sadd.s32 %s9, 1
    %s17 = ssub.s32 %s9, %s16
    %p18 = scmp.eq.s32.totalorder %s17, 0
    %s20 = sadd.s32 %s19, 1
    %s21 = scalar_select %p18, %s19, %s20
    %p24 = pneg %p18
    %p25 = scmp.eq.s32.totalorder %s9, 1
    %p26 = por %p24, %p25
    %p27 = scmp.ne.s32.totalorder %s19, %s22
    %p28 = scmp.eq.s32.totalorder %s9, 0
    %p29 = por %p27, %p28
    %p30 = scmp.ne.s32.totalorder %s19, %s22
    %p31 = scmp.eq.s32.totalorder %s14, 1
    %p32 = por %p30, %p31
    %p33 = scmp.ne.s32.totalorder %s22, %s23
    %p34 = scmp.eq.s32.totalorder %s14, 0
    %p35 = por %p33, %p34
    %p36 = scmp.ne.s32.totalorder %s22, %s23
    %p37 = scmp.eq.s32.totalorder %s15, 1
    %p38 = por %p36, %p37
    %p40 = scmp.ne.s32.totalorder %s23, %s39
    %p41 = scmp.eq.s32.totalorder %s15, 0
    %p42 = por %p40, %p41
    %s44 = sadd.s32 %s43, 1
    %p47 = scmp.eq.s32.totalorder %s9, 1
    %p48 = scmp.ne.s32.totalorder %s43, %s45
    %p49 = scmp.eq.s32.totalorder %s9, 0
    %p50 = por %p48, %p49
    %p51 = scmp.ne.s32.totalorder %s43, %s45
    %p52 = scmp.eq.s32.totalorder %s14, 1
    %p53 = por %p51, %p52
    %p54 = scmp.ne.s32.totalorder %s45, %s46
    %p55 = scmp.eq.s32.totalorder %s14, 0
    %p56 = por %p54, %p55
    %p57 = scmp.ne.s32.totalorder %s45, %s46
    %p58 = scmp.eq.s32.totalorder %s15, 1
    %p59 = por %p57, %p58
    %p61 = scmp.ne.s32.totalorder %s46, %s60
    %p62 = scmp.eq.s32.totalorder %s15, 0
    %p63 = por %p61, %p62
    %s65 = sadd.s32 %s64, 1
    %p68 = scmp.eq.s32.totalorder %s9, 1
    %p69 = scmp.ne.s32.totalorder %s64, %s66
    %p70 = scmp.eq.s32.totalorder %s9, 0
    %p71 = por %p69, %p70
    %p72 = scmp.ne.s32.totalorder %s64, %s66
    %p73 = scmp.eq.s32.totalorder %s14, 1
    %p74 = por %p72, %p73
    %p75 = scmp.ne.s32.totalorder %s66, %s67
    %p76 = scmp.eq.s32.totalorder %s14, 0
    %p77 = por %p75, %p76
    %p78 = scmp.ne.s32.totalorder %s66, %s67
    %p79 = scmp.eq.s32.totalorder %s15, 1
    %p80 = por %p78, %p79
    %p82 = scmp.ne.s32.totalorder %s67, %s81
    %p83 = scmp.eq.s32.totalorder %s15, 0
    %p84 = por %p82, %p83
    %s85 = ssub.s32 %s9, %s16
    %p86 = scmp.eq.s32.totalorder %s85, 0
    %s88 = sadd.s32 %s87, 1
    %s89 = scalar_select %p86, %s87, %s88
    %p92 = pneg %p86
    %p93 = scmp.eq.s32.totalorder %s9, 1
    %p94 = por %p92, %p93
    %p95 = scmp.ne.s32.totalorder %s87, %s90
    %p96 = scmp.eq.s32.totalorder %s9, 0
    %p97 = por %p95, %p96
    %p98 = scmp.ne.s32.totalorder %s87, %s90
    %p99 = scmp.eq.s32.totalorder %s14, 1
    %p100 = por %p98, %p99
    %p101 = scmp.ne.s32.totalorder %s90, %s91
    %p102 = scmp.eq.s32.totalorder %s14, 0
    %p103 = por %p101, %p102
    %p104 = scmp.ne.s32.totalorder %s90, %s91
    %p105 = scmp.eq.s32.totalorder %s15, 1
    %p106 = por %p104, %p105
    %p108 = scmp.ne.s32.totalorder %s91, %s107
    %p109 = scmp.eq.s32.totalorder %s15, 0
    %p110 = por %p108, %p109
    %p111 = scmp.le.s32.totalorder 1, %s9
    %p112 = scmp.lt.s32.totalorder %s9, 3
    %p113 = pnand %p111, %p112
    %p114 = pneg %p113
    // Predicated region
    $region9: #{generator_forward.24} parent=5 // pred_check
      _
    $region10: #{generator_forward.24} parent=5 // pred_check_branch
      %116 = sbr.rel (%p113) target = $region12
    $region11: #{generator_forward.24} parent=5 // pred_region
      %s117 = ssub.s32 %s9, 1
      // Predicated region
      $region13: #{generator_forward.24} parent=11 // pred_check
        %p118 = pneg %p56
      $region14: #{generator_forward.24} parent=11 // pred_check_branch
        %120 = sbr.rel (%p118) target = $region16
      $region15: #{generator_forward.24} parent=11 // pred_region
        _
      $region16: #{generator_forward.24} parent=11 // pred_fallthru
        _
      // Predicated region
      $region17: #{generator_forward.24} parent=11 // pred_check
        %p121 = pneg %p77
      $region18: #{generator_forward.24} parent=11 // pred_check_branch
        %123 = sbr.rel (%p121) target = $region20
      $region19: #{generator_forward.24} parent=11 // pred_region
        _
      $region20: #{generator_forward.24} parent=11 // pred_fallthru
        _
    $region12: #{generator_forward.24} parent=5 // pred_fallthru
      _
    %p124 = scmp.lt.s32.totalorder %s9, 2
    // Predicated region
    $region21: #{generator_forward.24} parent=5 // pred_check
      %p125 = pneg %p124
    $region22: #{generator_forward.24} parent=5 // pred_check_branch
      %127 = sbr.rel (%p125) target = $region24
    $region23: #{generator_forward.24} parent=5 // pred_region
      // Predicated region
      $region25: #{generator_forward.24} parent=23 // pred_check
        %p128 = pneg %p29
      $region26: #{generator_forward.24} parent=23 // pred_check_branch
        %130 = sbr.rel (%p128) target = $region28
      $region27: #{generator_forward.24} parent=23 // pred_region
        %s131 = smul.u32 128, %s9
        %p132 = scmp.lt.s32.totalorder %s131, 255
        %s133 = scalar_select %p132, %s131, 255
        %s134 = smul.addr %s133, 4
        %s135 = scalar_lea.vmem %s0, %s134
        %s136 = smul.u32 128, %s9
      $region28: #{generator_forward.24} parent=23 // pred_fallthru
        _
    $region24: #{generator_forward.24} parent=5 // pred_fallthru
      _
    %p137 = scmp.le.s32.totalorder 1, %s9
    %p138 = scmp.lt.s32.totalorder %s9, 3
    %p139 = pnand %p137, %p138
    %p140 = pneg %p139
    // Predicated region
    $region29: #{generator_forward.24} parent=5 // pred_check
      _
    $region30: #{generator_forward.24} parent=5 // pred_check_branch
      %142 = sbr.rel (%p139) target = $region32
    $region31: #{generator_forward.24} parent=5 // pred_region
      %s143 = ssub.s32 %s9, 1
      %s144 = smul.u32 128, %s14
      %p145 = scmp.lt.s32.totalorder %s144, 255
      %s146 = scalar_select %p145, %s144, 255
      %s147 = smul.addr %s146, 4
      %s148 = scalar_lea.vmem %s0, %s147
      %p149 = pneg %p35
      %p150 = pneg %p32
      %p151 = pneg %p56
      %p152 = pneg %p53
      %p153 = pneg %p77
      %p154 = pneg %p74
      %p155 = pneg %p103
      %p156 = pneg %p100
      %s157 = smul.u32 128, %s14
      %p158 = scmp.lt.s32.totalorder %s157, 255
      %s159 = scalar_select %p158, %s157, 255
      %s160 = smul.addr %s159, 4
      %s161 = scalar_lea.vmem %s3, %s160
      %s162 = smul.u32 128, %s14
      %p163 = scmp.lt.s32.totalorder %s162, 255
      %s164 = scalar_select %p163, %s162, 255
      %s165 = smul.addr %s164, 4
      %s166 = scalar_lea.vmem %s0, %s165
      %s167 = smul.u32 128, %s14
      %s168 = smul.u32 128, %s14
      %p169 = scmp.lt.s32.totalorder %s168, 255
      %s170 = scalar_select %p169, %s168, 255
      %s171 = smul.addr %s170, 4
      %s172 = scalar_lea.vmem %s3, %s171
      %s173 = smul.u32 128, %s14
      %v174 = vld [vmem:[%s166] sm:$0xf]
      %v175 = vld [vmem:[%s166 + $0x4] sm:$0xf]
      %v176 = vld [vmem:[%s166 + $0x8] sm:$0xf]
      %v177 = vld [vmem:[%s166 + $0xc] sm:$0xf]
      %v178 = vld [vmem:[%s166 + $0x10] sm:$0xf]
      %v179 = vld [vmem:[%s166 + $0x14] sm:$0xf]
      %v180 = vld [vmem:[%s166 + $0x18] sm:$0xf]
      %v181 = vld [vmem:[%s166 + $0x1c] sm:$0xf]
      %v182 = vld [vmem:[%s166 + $0x20] sm:$0xf]
      %v183 = vld [vmem:[%s166 + $0x24] sm:$0xf]
      %v184 = vld [vmem:[%s166 + $0x28] sm:$0xf]
      %v185 = vld [vmem:[%s166 + $0x2c] sm:$0xf]
      %v186 = vld [vmem:[%s166 + $0x30] sm:$0xf]
      %v187 = vld [vmem:[%s166 + $0x34] sm:$0xf]
      %v188 = vld [vmem:[%s166 + $0x38] sm:$0xf]
      %v189 = vld [vmem:[%s166 + $0x3c] sm:$0xf]
      %v190 = vld [vmem:[%s166 + $0x40] sm:$0xf]
      %v191 = vld [vmem:[%s166 + $0x44] sm:$0xf]
      %v192 = vld [vmem:[%s166 + $0x48] sm:$0xf]
      %v193 = vld [vmem:[%s166 + $0x4c] sm:$0xf]
      %v194 = vld [vmem:[%s166 + $0x50] sm:$0xf]
      %v195 = vld [vmem:[%s166 + $0x54] sm:$0xf]
      %v196 = vld [vmem:[%s166 + $0x58] sm:$0xf]
      %v197 = vld [vmem:[%s166 + $0x5c] sm:$0xf]
      %v198 = vld [vmem:[%s166 + $0x60] sm:$0xf]
      %v199 = vld [vmem:[%s166 + $0x64] sm:$0xf]
      %v200 = vld [vmem:[%s166 + $0x68] sm:$0xf]
      %v201 = vld [vmem:[%s166 + $0x6c] sm:$0xf]
      %v202 = vld [vmem:[%s166 + $0x70] sm:$0xf]
      %v203 = vld [vmem:[%s166 + $0x74] sm:$0xf]
      %v204 = vld [vmem:[%s166 + $0x78] sm:$0xf]
      %v205 = vld [vmem:[%s166 + $0x7c] sm:$0xf]
      %v206 = vld [vmem:[%s166 + $0x80] sm:$0xf]
      %v207 = vld [vmem:[%s166 + $0x84] sm:$0xf]
      %v208 = vld [vmem:[%s166 + $0x88] sm:$0xf]
      %v209 = vld [vmem:[%s166 + $0x8c] sm:$0xf]
      %v210 = vld [vmem:[%s166 + $0x90] sm:$0xf]
      %v211 = vld [vmem:[%s166 + $0x94] sm:$0xf]
      %v212 = vld [vmem:[%s166 + $0x98] sm:$0xf]
      %v213 = vld [vmem:[%s166 + $0x9c] sm:$0xf]
      %v214 = vld [vmem:[%s166 + $0xa0] sm:$0xf]
      %v215 = vld [vmem:[%s166 + $0xa4] sm:$0xf]
      %v216 = vld [vmem:[%s166 + $0xa8] sm:$0xf]
      %v217 = vld [vmem:[%s166 + $0xac] sm:$0xf]
      %v218 = vld [vmem:[%s166 + $0xb0] sm:$0xf]
      %v219 = vld [vmem:[%s166 + $0xb4] sm:$0xf]
      %v220 = vld [vmem:[%s166 + $0xb8] sm:$0xf]
      %v221 = vld [vmem:[%s166 + $0xbc] sm:$0xf]
      %v222 = vld [vmem:[%s166 + $0xc0] sm:$0xf]
      %v223 = vld [vmem:[%s166 + $0xc4] sm:$0xf]
      %v224 = vld [vmem:[%s166 + $0xc8] sm:$0xf]
      %v225 = vld [vmem:[%s166 + $0xcc] sm:$0xf]
      %v226 = vld [vmem:[%s166 + $0xd0] sm:$0xf]
      %v227 = vld [vmem:[%s166 + $0xd4] sm:$0xf]
      %v228 = vld [vmem:[%s166 + $0xd8] sm:$0xf]
      %v229 = vld [vmem:[%s166 + $0xdc] sm:$0xf]
      %v230 = vld [vmem:[%s166 + $0xe0] sm:$0xf]
      %v231 = vld [vmem:[%s166 + $0xe4] sm:$0xf]
      %v232 = vld [vmem:[%s166 + $0xe8] sm:$0xf]
      %v233 = vld [vmem:[%s166 + $0xec] sm:$0xf]
      %v234 = vld [vmem:[%s166 + $0xf0] sm:$0xf]
      %v235 = vld [vmem:[%s166 + $0xf4] sm:$0xf]
      %v236 = vld [vmem:[%s166 + $0xf8] sm:$0xf]
      %v237 = vld [vmem:[%s166 + $0xfc] sm:$0xf]
      %v238 = vld [vmem:[%s166 + $0x100] sm:$0xf]
      %v239 = vld [vmem:[%s166 + $0x104] sm:$0xf]
      %v240 = vld [vmem:[%s166 + $0x108] sm:$0xf]
      %v241 = vld [vmem:[%s166 + $0x10c] sm:$0xf]
      %v242 = vld [vmem:[%s166 + $0x110] sm:$0xf]
      %v243 = vld [vmem:[%s166 + $0x114] sm:$0xf]
      %v244 = vld [vmem:[%s166 + $0x118] sm:$0xf]
      %v245 = vld [vmem:[%s166 + $0x11c] sm:$0xf]
      %v246 = vld [vmem:[%s166 + $0x120] sm:$0xf]
      %v247 = vld [vmem:[%s166 + $0x124] sm:$0xf]
      %v248 = vld [vmem:[%s166 + $0x128] sm:$0xf]
      %v249 = vld [vmem:[%s166 + $0x12c] sm:$0xf]
      %v250 = vld [vmem:[%s166 + $0x130] sm:$0xf]
      %v251 = vld [vmem:[%s166 + $0x134] sm:$0xf]
      %v252 = vld [vmem:[%s166 + $0x138] sm:$0xf]
      %v253 = vld [vmem:[%s166 + $0x13c] sm:$0xf]
      %v254 = vld [vmem:[%s166 + $0x140] sm:$0xf]
      %v255 = vld [vmem:[%s166 + $0x144] sm:$0xf]
      %v256 = vld [vmem:[%s166 + $0x148] sm:$0xf]
      %v257 = vld [vmem:[%s166 + $0x14c] sm:$0xf]
      %v258 = vld [vmem:[%s166 + $0x150] sm:$0xf]
      %v259 = vld [vmem:[%s166 + $0x154] sm:$0xf]
      %v260 = vld [vmem:[%s166 + $0x158] sm:$0xf]
      %v261 = vld [vmem:[%s166 + $0x15c] sm:$0xf]
      %v262 = vld [vmem:[%s166 + $0x160] sm:$0xf]
      %v263 = vld [vmem:[%s166 + $0x164] sm:$0xf]
      %v264 = vld [vmem:[%s166 + $0x168] sm:$0xf]
      %v265 = vld [vmem:[%s166 + $0x16c] sm:$0xf]
      %v266 = vld [vmem:[%s166 + $0x170] sm:$0xf]
      %v267 = vld [vmem:[%s166 + $0x174] sm:$0xf]
      %v268 = vld [vmem:[%s166 + $0x178] sm:$0xf]
      %v269 = vld [vmem:[%s166 + $0x17c] sm:$0xf]
      %v270 = vld [vmem:[%s166 + $0x180] sm:$0xf]
      %v271 = vld [vmem:[%s166 + $0x184] sm:$0xf]
      %v272 = vld [vmem:[%s166 + $0x188] sm:$0xf]
      %v273 = vld [vmem:[%s166 + $0x18c] sm:$0xf]
      %v274 = vld [vmem:[%s166 + $0x190] sm:$0xf]
      %v275 = vld [vmem:[%s166 + $0x194] sm:$0xf]
      %v276 = vld [vmem:[%s166 + $0x198] sm:$0xf]
      %v277 = vld [vmem:[%s166 + $0x19c] sm:$0xf]
      %v278 = vld [vmem:[%s166 + $0x1a0] sm:$0xf]
      %v279 = vld [vmem:[%s166 + $0x1a4] sm:$0xf]
      %v280 = vld [vmem:[%s166 + $0x1a8] sm:$0xf]
      %v281 = vld [vmem:[%s166 + $0x1ac] sm:$0xf]
      %v282 = vld [vmem:[%s166 + $0x1b0] sm:$0xf]
      %v283 = vld [vmem:[%s166 + $0x1b4] sm:$0xf]
      %v284 = vld [vmem:[%s166 + $0x1b8] sm:$0xf]
      %v285 = vld [vmem:[%s166 + $0x1bc] sm:$0xf]
      %v286 = vld [vmem:[%s166 + $0x1c0] sm:$0xf]
      %v287 = vld [vmem:[%s166 + $0x1c4] sm:$0xf]
      %v288 = vld [vmem:[%s166 + $0x1c8] sm:$0xf]
      %v289 = vld [vmem:[%s166 + $0x1cc] sm:$0xf]
      %v290 = vld [vmem:[%s166 + $0x1d0] sm:$0xf]
      %v291 = vld [vmem:[%s166 + $0x1d4] sm:$0xf]
      %v292 = vld [vmem:[%s166 + $0x1d8] sm:$0xf]
      %v293 = vld [vmem:[%s166 + $0x1dc] sm:$0xf]
      %v294 = vld [vmem:[%s166 + $0x1e0] sm:$0xf]
      %v295 = vld [vmem:[%s166 + $0x1e4] sm:$0xf]
      %v296 = vld [vmem:[%s166 + $0x1e8] sm:$0xf]
      %v297 = vld [vmem:[%s166 + $0x1ec] sm:$0xf]
      %v298 = vld [vmem:[%s166 + $0x1f0] sm:$0xf]
      %v299 = vld [vmem:[%s166 + $0x1f4] sm:$0xf]
      %v300 = vld [vmem:[%s166 + $0x1f8] sm:$0xf]
      %v301 = vld [vmem:[%s166 + $0x1fc] sm:$0xf]
      %v302 = vunpack.c.l.bf16 %v174
      %v303 = vunpack.c.l.bf16 %v175
      %v304 = vunpack.c.l.bf16 %v176
      %v305 = vunpack.c.l.bf16 %v177
      %v306 = vunpack.c.l.bf16 %v178
      %v307 = vunpack.c.l.bf16 %v179
      %v308 = vunpack.c.l.bf16 %v180
      %v309 = vunpack.c.l.bf16 %v181
      %v310 = vunpack.c.l.bf16 %v182
      %v311 = vunpack.c.l.bf16 %v183
      %v312 = vunpack.c.l.bf16 %v184
      %v313 = vunpack.c.l.bf16 %v185
      %v314 = vunpack.c.l.bf16 %v186
      %v315 = vunpack.c.l.bf16 %v187
      %v316 = vunpack.c.l.bf16 %v188
      %v317 = vunpack.c.l.bf16 %v189
      %v318 = vunpack.c.l.bf16 %v190
      %v319 = vunpack.c.l.bf16 %v191
      %v320 = vunpack.c.l.bf16 %v192
      %v321 = vunpack.c.l.bf16 %v193
      %v322 = vunpack.c.l.bf16 %v194
      %v323 = vunpack.c.l.bf16 %v195
      %v324 = vunpack.c.l.bf16 %v196
      %v325 = vunpack.c.l.bf16 %v197
      %v326 = vunpack.c.l.bf16 %v198
      %v327 = vunpack.c.l.bf16 %v199
      %v328 = vunpack.c.l.bf16 %v200
      %v329 = vunpack.c.l.bf16 %v201
      %v330 = vunpack.c.l.bf16 %v202
      %v331 = vunpack.c.l.bf16 %v203
      %v332 = vunpack.c.l.bf16 %v204
      %v333 = vunpack.c.l.bf16 %v205
      %v334 = vunpack.c.l.bf16 %v206
      %v335 = vunpack.c.l.bf16 %v207
      %v336 = vunpack.c.l.bf16 %v208
      %v337 = vunpack.c.l.bf16 %v209
      %v338 = vunpack.c.l.bf16 %v210
      %v339 = vunpack.c.l.bf16 %v211
      %v340 = vunpack.c.l.bf16 %v212
      %v341 = vunpack.c.l.bf16 %v213
      %v342 = vunpack.c.l.bf16 %v214
      %v343 = vunpack.c.l.bf16 %v215
      %v344 = vunpack.c.l.bf16 %v216
      %v345 = vunpack.c.l.bf16 %v217
      %v346 = vunpack.c.l.bf16 %v218
      %v347 = vunpack.c.l.bf16 %v219
      %v348 = vunpack.c.l.bf16 %v220
      %v349 = vunpack.c.l.bf16 %v221
      %v350 = vunpack.c.l.bf16 %v222
      %v351 = vunpack.c.l.bf16 %v223
      %v352 = vunpack.c.l.bf16 %v224
      %v353 = vunpack.c.l.bf16 %v225
      %v354 = vunpack.c.l.bf16 %v226
      %v355 = vunpack.c.l.bf16 %v227
      %v356 = vunpack.c.l.bf16 %v228
      %v357 = vunpack.c.l.bf16 %v229
      %v358 = vunpack.c.l.bf16 %v230
      %v359 = vunpack.c.l.bf16 %v231
      %v360 = vunpack.c.l.bf16 %v232
      %v361 = vunpack.c.l.bf16 %v233
      %v362 = vunpack.c.l.bf16 %v234
      %v363 = vunpack.c.l.bf16 %v235
      %v364 = vunpack.c.l.bf16 %v236
      %v365 = vunpack.c.l.bf16 %v237
      %v366 = vunpack.c.l.bf16 %v238
      %v367 = vunpack.c.l.bf16 %v239
      %v368 = vunpack.c.l.bf16 %v240
      %v369 = vunpack.c.l.bf16 %v241
      %v370 = vunpack.c.l.bf16 %v242
      %v371 = vunpack.c.l.bf16 %v243
      %v372 = vunpack.c.l.bf16 %v244
      %v373 = vunpack.c.l.bf16 %v245
      %v374 = vunpack.c.l.bf16 %v246
      %v375 = vunpack.c.l.bf16 %v247
      %v376 = vunpack.c.l.bf16 %v248
      %v377 = vunpack.c.l.bf16 %v249
      %v378 = vunpack.c.l.bf16 %v250
      %v379 = vunpack.c.l.bf16 %v251
      %v380 = vunpack.c.l.bf16 %v252
      %v381 = vunpack.c.l.bf16 %v253
      %v382 = vunpack.c.l.bf16 %v254
      %v383 = vunpack.c.l.bf16 %v255
      %v384 = vunpack.c.l.bf16 %v256
      %v385 = vunpack.c.l.bf16 %v257
      %v386 = vunpack.c.l.bf16 %v258
      %v387 = vunpack.c.l.bf16 %v259
      %v388 = vunpack.c.l.bf16 %v260
      %v389 = vunpack.c.l.bf16 %v261
      %v390 = vunpack.c.l.bf16 %v262
      %v391 = vunpack.c.l.bf16 %v263
      %v392 = vunpack.c.l.bf16 %v264
      %v393 = vunpack.c.l.bf16 %v265
      %v394 = vunpack.c.l.bf16 %v266
      %v395 = vunpack.c.l.bf16 %v267
      %v396 = vunpack.c.l.bf16 %v268
      %v397 = vunpack.c.l.bf16 %v269
      %v398 = vunpack.c.l.bf16 %v270
      %v399 = vunpack.c.l.bf16 %v271
      %v400 = vunpack.c.l.bf16 %v272
      %v401 = vunpack.c.l.bf16 %v273
      %v402 = vunpack.c.l.bf16 %v274
      %v403 = vunpack.c.l.bf16 %v275
      %v404 = vunpack.c.l.bf16 %v276
      %v405 = vunpack.c.l.bf16 %v277
      %v406 = vunpack.c.l.bf16 %v278
      %v407 = vunpack.c.l.bf16 %v279
      %v408 = vunpack.c.l.bf16 %v280
      %v409 = vunpack.c.l.bf16 %v281
      %v410 = vunpack.c.l.bf16 %v282
      %v411 = vunpack.c.l.bf16 %v283
      %v412 = vunpack.c.l.bf16 %v284
      %v413 = vunpack.c.l.bf16 %v285
      %v414 = vunpack.c.l.bf16 %v286
      %v415 = vunpack.c.l.bf16 %v287
      %v416 = vunpack.c.l.bf16 %v288
      %v417 = vunpack.c.l.bf16 %v289
      %v418 = vunpack.c.l.bf16 %v290
      %v419 = vunpack.c.l.bf16 %v291
      %v420 = vunpack.c.l.bf16 %v292
      %v421 = vunpack.c.l.bf16 %v293
      %v422 = vunpack.c.l.bf16 %v294
      %v423 = vunpack.c.l.bf16 %v295
      %v424 = vunpack.c.l.bf16 %v296
      %v425 = vunpack.c.l.bf16 %v297
      %v426 = vunpack.c.l.bf16 %v298
      %v427 = vunpack.c.l.bf16 %v299
      %v428 = vunpack.c.l.bf16 %v300
      %v429 = vunpack.c.l.bf16 %v301
      %v430 = vld [vmem:[%s1] sm:$0x1]
      %v432 = vlaneseq
      %v433 = vshrl.u32 %v432, 7
      %v434 = vsub.s32 0, %v433
      %v435 = vrot.slane %v430, %v434
      %v437 = vmul.f32 %v302, %v435
      %v438 = vmul.f32 %v303, %v435
      %v439 = vmul.f32 %v304, %v435
      %v440 = vmul.f32 %v305, %v435
      %v441 = vmul.f32 %v306, %v435
      %v442 = vmul.f32 %v307, %v435
      %v443 = vmul.f32 %v308, %v435
      %v444 = vmul.f32 %v309, %v435
      %v445 = vmul.f32 %v310, %v435
      %v446 = vmul.f32 %v311, %v435
      %v447 = vmul.f32 %v312, %v435
      %v448 = vmul.f32 %v313, %v435
      %v449 = vmul.f32 %v314, %v435
      %v450 = vmul.f32 %v315, %v435
      %v451 = vmul.f32 %v316, %v435
      %v452 = vmul.f32 %v317, %v435
      %v453 = vmul.f32 %v318, %v435
      %v454 = vmul.f32 %v319, %v435
      %v455 = vmul.f32 %v320, %v435
      %v456 = vmul.f32 %v321, %v435
      %v457 = vmul.f32 %v322, %v435
      %v458 = vmul.f32 %v323, %v435
      %v459 = vmul.f32 %v324, %v435
      %v460 = vmul.f32 %v325, %v435
      %v461 = vmul.f32 %v326, %v435
      %v462 = vmul.f32 %v327, %v435
      %v463 = vmul.f32 %v328, %v435
      %v464 = vmul.f32 %v329, %v435
      %v465 = vmul.f32 %v330, %v435
      %v466 = vmul.f32 %v331, %v435
      %v467 = vmul.f32 %v332, %v435
      %v468 = vmul.f32 %v333, %v435
      %v469 = vmul.f32 %v334, %v435
      %v470 = vmul.f32 %v335, %v435
      %v471 = vmul.f32 %v336, %v435
      %v472 = vmul.f32 %v337, %v435
      %v473 = vmul.f32 %v338, %v435
      %v474 = vmul.f32 %v339, %v435
      %v475 = vmul.f32 %v340, %v435
      %v476 = vmul.f32 %v341, %v435
      %v477 = vmul.f32 %v342, %v435
      %v478 = vmul.f32 %v343, %v435
      %v479 = vmul.f32 %v344, %v435
      %v480 = vmul.f32 %v345, %v435
      %v481 = vmul.f32 %v346, %v435
      %v482 = vmul.f32 %v347, %v435
      %v483 = vmul.f32 %v348, %v435
      %v484 = vmul.f32 %v349, %v435
      %v485 = vmul.f32 %v350, %v435
      %v486 = vmul.f32 %v351, %v435
      %v487 = vmul.f32 %v352, %v435
      %v488 = vmul.f32 %v353, %v435
      %v489 = vmul.f32 %v354, %v435
      %v490 = vmul.f32 %v355, %v435
      %v491 = vmul.f32 %v356, %v435
      %v492 = vmul.f32 %v357, %v435
      %v493 = vmul.f32 %v358, %v435
      %v494 = vmul.f32 %v359, %v435
      %v495 = vmul.f32 %v360, %v435
      %v496 = vmul.f32 %v361, %v435
      %v497 = vmul.f32 %v362, %v435
      %v498 = vmul.f32 %v363, %v435
      %v499 = vmul.f32 %v364, %v435
      %v500 = vmul.f32 %v365, %v435
      %v501 = vmul.f32 %v366, %v435
      %v502 = vmul.f32 %v367, %v435
      %v503 = vmul.f32 %v368, %v435
      %v504 = vmul.f32 %v369, %v435
      %v505 = vmul.f32 %v370, %v435
      %v506 = vmul.f32 %v371, %v435
      %v507 = vmul.f32 %v372, %v435
      %v508 = vmul.f32 %v373, %v435
      %v509 = vmul.f32 %v374, %v435
      %v510 = vmul.f32 %v375, %v435
      %v511 = vmul.f32 %v376, %v435
      %v512 = vmul.f32 %v377, %v435
      %v513 = vmul.f32 %v378, %v435
      %v514 = vmul.f32 %v379, %v435
      %v515 = vmul.f32 %v380, %v435
      %v516 = vmul.f32 %v381, %v435
      %v517 = vmul.f32 %v382, %v435
      %v518 = vmul.f32 %v383, %v435
      %v519 = vmul.f32 %v384, %v435
      %v520 = vmul.f32 %v385, %v435
      %v521 = vmul.f32 %v386, %v435
      %v522 = vmul.f32 %v387, %v435
      %v523 = vmul.f32 %v388, %v435
      %v524 = vmul.f32 %v389, %v435
      %v525 = vmul.f32 %v390, %v435
      %v526 = vmul.f32 %v391, %v435
      %v527 = vmul.f32 %v392, %v435
      %v528 = vmul.f32 %v393, %v435
      %v529 = vmul.f32 %v394, %v435
      %v530 = vmul.f32 %v395, %v435
      %v531 = vmul.f32 %v396, %v435
      %v532 = vmul.f32 %v397, %v435
      %v533 = vmul.f32 %v398, %v435
      %v534 = vmul.f32 %v399, %v435
      %v535 = vmul.f32 %v400, %v435
      %v536 = vmul.f32 %v401, %v435
      %v537 = vmul.f32 %v402, %v435
      %v538 = vmul.f32 %v403, %v435
      %v539 = vmul.f32 %v404, %v435
      %v540 = vmul.f32 %v405, %v435
      %v541 = vmul.f32 %v406, %v435
      %v542 = vmul.f32 %v407, %v435
      %v543 = vmul.f32 %v408, %v435
      %v544 = vmul.f32 %v409, %v435
      %v545 = vmul.f32 %v410, %v435
      %v546 = vmul.f32 %v411, %v435
      %v547 = vmul.f32 %v412, %v435
      %v548 = vmul.f32 %v413, %v435
      %v549 = vmul.f32 %v414, %v435
      %v550 = vmul.f32 %v415, %v435
      %v551 = vmul.f32 %v416, %v435
      %v552 = vmul.f32 %v417, %v435
      %v553 = vmul.f32 %v418, %v435
      %v554 = vmul.f32 %v419, %v435
      %v555 = vmul.f32 %v420, %v435
      %v556 = vmul.f32 %v421, %v435
      %v557 = vmul.f32 %v422, %v435
      %v558 = vmul.f32 %v423, %v435
      %v559 = vmul.f32 %v424, %v435
      %v560 = vmul.f32 %v425, %v435
      %v561 = vmul.f32 %v426, %v435
      %v562 = vmul.f32 %v427, %v435
      %v563 = vmul.f32 %v428, %v435
      %v564 = vmul.f32 %v429, %v435
      %v565 = vld [vmem:[%s2] sm:$0x1]
      %v567 = vlaneseq
      %v568 = vshrl.u32 %v567, 7
      %v569 = vsub.s32 0, %v568
      %v570 = vrot.slane %v565, %v569
      %v572 = vadd.f32 %v437, %v570
      %v573 = vadd.f32 %v438, %v570
      %v574 = vadd.f32 %v439, %v570
      %v575 = vadd.f32 %v440, %v570
      %v576 = vadd.f32 %v441, %v570
      %v577 = vadd.f32 %v442, %v570
      %v578 = vadd.f32 %v443, %v570
      %v579 = vadd.f32 %v444, %v570
      %v580 = vadd.f32 %v445, %v570
      %v581 = vadd.f32 %v446, %v570
      %v582 = vadd.f32 %v447, %v570
      %v583 = vadd.f32 %v448, %v570
      %v584 = vadd.f32 %v449, %v570
      %v585 = vadd.f32 %v450, %v570
      %v586 = vadd.f32 %v451, %v570
      %v587 = vadd.f32 %v452, %v570
      %v588 = vadd.f32 %v453, %v570
      %v589 = vadd.f32 %v454, %v570
      %v590 = vadd.f32 %v455, %v570
      %v591 = vadd.f32 %v456, %v570
      %v592 = vadd.f32 %v457, %v570
      %v593 = vadd.f32 %v458, %v570
      %v594 = vadd.f32 %v459, %v570
      %v595 = vadd.f32 %v460, %v570
      %v596 = vadd.f32 %v461, %v570
      %v597 = vadd.f32 %v462, %v570
      %v598 = vadd.f32 %v463, %v570
      %v599 = vadd.f32 %v464, %v570
      %v600 = vadd.f32 %v465, %v570
      %v601 = vadd.f32 %v466, %v570
      %v602 = vadd.f32 %v467, %v570
      %v603 = vadd.f32 %v468, %v570
      %v604 = vadd.f32 %v469, %v570
      %v605 = vadd.f32 %v470, %v570
      %v606 = vadd.f32 %v471, %v570
      %v607 = vadd.f32 %v472, %v570
      %v608 = vadd.f32 %v473, %v570
      %v609 = vadd.f32 %v474, %v570
      %v610 = vadd.f32 %v475, %v570
      %v611 = vadd.f32 %v476, %v570
      %v612 = vadd.f32 %v477, %v570
      %v613 = vadd.f32 %v478, %v570
      %v614 = vadd.f32 %v479, %v570
      %v615 = vadd.f32 %v480, %v570
      %v616 = vadd.f32 %v481, %v570
      %v617 = vadd.f32 %v482, %v570
      %v618 = vadd.f32 %v483, %v570
      %v619 = vadd.f32 %v484, %v570
      %v620 = vadd.f32 %v485, %v570
      %v621 = vadd.f32 %v486, %v570
      %v622 = vadd.f32 %v487, %v570
      %v623 = vadd.f32 %v488, %v570
      %v624 = vadd.f32 %v489, %v570
      %v625 = vadd.f32 %v490, %v570
      %v626 = vadd.f32 %v491, %v570
      %v627 = vadd.f32 %v492, %v570
      %v628 = vadd.f32 %v493, %v570
      %v629 = vadd.f32 %v494, %v570
      %v630 = vadd.f32 %v495, %v570
      %v631 = vadd.f32 %v496, %v570
      %v632 = vadd.f32 %v497, %v570
      %v633 = vadd.f32 %v498, %v570
      %v634 = vadd.f32 %v499, %v570
      %v635 = vadd.f32 %v500, %v570
      %v636 = vadd.f32 %v501, %v570
      %v637 = vadd.f32 %v502, %v570
      %v638 = vadd.f32 %v503, %v570
      %v639 = vadd.f32 %v504, %v570
      %v640 = vadd.f32 %v505, %v570
      %v641 = vadd.f32 %v506, %v570
      %v642 = vadd.f32 %v507, %v570
      %v643 = vadd.f32 %v508, %v570
      %v644 = vadd.f32 %v509, %v570
      %v645 = vadd.f32 %v510, %v570
      %v646 = vadd.f32 %v511, %v570
      %v647 = vadd.f32 %v512, %v570
      %v648 = vadd.f32 %v513, %v570
      %v649 = vadd.f32 %v514, %v570
      %v650 = vadd.f32 %v515, %v570
      %v651 = vadd.f32 %v516, %v570
      %v652 = vadd.f32 %v517, %v570
      %v653 = vadd.f32 %v518, %v570
      %v654 = vadd.f32 %v519, %v570
      %v655 = vadd.f32 %v520, %v570
      %v656 = vadd.f32 %v521, %v570
      %v657 = vadd.f32 %v522, %v570
      %v658 = vadd.f32 %v523, %v570
      %v659 = vadd.f32 %v524, %v570
      %v660 = vadd.f32 %v525, %v570
      %v661 = vadd.f32 %v526, %v570
      %v662 = vadd.f32 %v527, %v570
      %v663 = vadd.f32 %v528, %v570
      %v664 = vadd.f32 %v529, %v570
      %v665 = vadd.f32 %v530, %v570
      %v666 = vadd.f32 %v531, %v570
      %v667 = vadd.f32 %v532, %v570
      %v668 = vadd.f32 %v533, %v570
      %v669 = vadd.f32 %v534, %v570
      %v670 = vadd.f32 %v535, %v570
      %v671 = vadd.f32 %v536, %v570
      %v672 = vadd.f32 %v537, %v570
      %v673 = vadd.f32 %v538, %v570
      %v674 = vadd.f32 %v539, %v570
      %v675 = vadd.f32 %v540, %v570
      %v676 = vadd.f32 %v541, %v570
      %v677 = vadd.f32 %v542, %v570
      %v678 = vadd.f32 %v543, %v570
      %v679 = vadd.f32 %v544, %v570
      %v680 = vadd.f32 %v545, %v570
      %v681 = vadd.f32 %v546, %v570
      %v682 = vadd.f32 %v547, %v570
      %v683 = vadd.f32 %v548, %v570
      %v684 = vadd.f32 %v549, %v570
      %v685 = vadd.f32 %v550, %v570
      %v686 = vadd.f32 %v551, %v570
      %v687 = vadd.f32 %v552, %v570
      %v688 = vadd.f32 %v553, %v570
      %v689 = vadd.f32 %v554, %v570
      %v690 = vadd.f32 %v555, %v570
      %v691 = vadd.f32 %v556, %v570
      %v692 = vadd.f32 %v557, %v570
      %v693 = vadd.f32 %v558, %v570
      %v694 = vadd.f32 %v559, %v570
      %v695 = vadd.f32 %v560, %v570
      %v696 = vadd.f32 %v561, %v570
      %v697 = vadd.f32 %v562, %v570
      %v698 = vadd.f32 %v563, %v570
      %v699 = vadd.f32 %v564, %v570
      %v700 = vmax.f32 %v572, 0.0
      %v701 = vmax.f32 %v573, 0.0
      %v702 = vmax.f32 %v574, 0.0
      %v703 = vmax.f32 %v575, 0.0
      %v704 = vmax.f32 %v576, 0.0
      %v705 = vmax.f32 %v577, 0.0
      %v706 = vmax.f32 %v578, 0.0
      %v707 = vmax.f32 %v579, 0.0
      %v708 = vmax.f32 %v580, 0.0
      %v709 = vmax.f32 %v581, 0.0
      %v710 = vmax.f32 %v582, 0.0
      %v711 = vmax.f32 %v583, 0.0
      %v712 = vmax.f32 %v584, 0.0
      %v713 = vmax.f32 %v585, 0.0
      %v714 = vmax.f32 %v586, 0.0
      %v715 = vmax.f32 %v587, 0.0
      %v716 = vmax.f32 %v588, 0.0
      %v717 = vmax.f32 %v589, 0.0
      %v718 = vmax.f32 %v590, 0.0
      %v719 = vmax.f32 %v591, 0.0
      %v720 = vmax.f32 %v592, 0.0
      %v721 = vmax.f32 %v593, 0.0
      %v722 = vmax.f32 %v594, 0.0
      %v723 = vmax.f32 %v595, 0.0
      %v724 = vmax.f32 %v596, 0.0
      %v725 = vmax.f32 %v597, 0.0
      %v726 = vmax.f32 %v598, 0.0
      %v727 = vmax.f32 %v599, 0.0
      %v728 = vmax.f32 %v600, 0.0
      %v729 = vmax.f32 %v601, 0.0
      %v730 = vmax.f32 %v602, 0.0
      %v731 = vmax.f32 %v603, 0.0
      %v732 = vmax.f32 %v604, 0.0
      %v733 = vmax.f32 %v605, 0.0
      %v734 = vmax.f32 %v606, 0.0
      %v735 = vmax.f32 %v607, 0.0
      %v736 = vmax.f32 %v608, 0.0
      %v737 = vmax.f32 %v609, 0.0
      %v738 = vmax.f32 %v610, 0.0
      %v739 = vmax.f32 %v611, 0.0
      %v740 = vmax.f32 %v612, 0.0
      %v741 = vmax.f32 %v613, 0.0
      %v742 = vmax.f32 %v614, 0.0
      %v743 = vmax.f32 %v615, 0.0
      %v744 = vmax.f32 %v616, 0.0
      %v745 = vmax.f32 %v617, 0.0
      %v746 = vmax.f32 %v618, 0.0
      %v747 = vmax.f32 %v619, 0.0
      %v748 = vmax.f32 %v620, 0.0
      %v749 = vmax.f32 %v621, 0.0
      %v750 = vmax.f32 %v622, 0.0
      %v751 = vmax.f32 %v623, 0.0
      %v752 = vmax.f32 %v624, 0.0
      %v753 = vmax.f32 %v625, 0.0
      %v754 = vmax.f32 %v626, 0.0
      %v755 = vmax.f32 %v627, 0.0
      %v756 = vmax.f32 %v628, 0.0
      %v757 = vmax.f32 %v629, 0.0
      %v758 = vmax.f32 %v630, 0.0
      %v759 = vmax.f32 %v631, 0.0
      %v760 = vmax.f32 %v632, 0.0
      %v761 = vmax.f32 %v633, 0.0
      %v762 = vmax.f32 %v634, 0.0
      %v763 = vmax.f32 %v635, 0.0
      %v764 = vmax.f32 %v636, 0.0
      %v765 = vmax.f32 %v637, 0.0
      %v766 = vmax.f32 %v638, 0.0
      %v767 = vmax.f32 %v639, 0.0
      %v768 = vmax.f32 %v640, 0.0
      %v769 = vmax.f32 %v641, 0.0
      %v770 = vmax.f32 %v642, 0.0
      %v771 = vmax.f32 %v643, 0.0
      %v772 = vmax.f32 %v644, 0.0
      %v773 = vmax.f32 %v645, 0.0
      %v774 = vmax.f32 %v646, 0.0
      %v775 = vmax.f32 %v647, 0.0
      %v776 = vmax.f32 %v648, 0.0
      %v777 = vmax.f32 %v649, 0.0
      %v778 = vmax.f32 %v650, 0.0
      %v779 = vmax.f32 %v651, 0.0
      %v780 = vmax.f32 %v652, 0.0
      %v781 = vmax.f32 %v653, 0.0
      %v782 = vmax.f32 %v654, 0.0
      %v783 = vmax.f32 %v655, 0.0
      %v784 = vmax.f32 %v656, 0.0
      %v785 = vmax.f32 %v657, 0.0
      %v786 = vmax.f32 %v658, 0.0
      %v787 = vmax.f32 %v659, 0.0
      %v788 = vmax.f32 %v660, 0.0
      %v789 = vmax.f32 %v661, 0.0
      %v790 = vmax.f32 %v662, 0.0
      %v791 = vmax.f32 %v663, 0.0
      %v792 = vmax.f32 %v664, 0.0
      %v793 = vmax.f32 %v665, 0.0
      %v794 = vmax.f32 %v666, 0.0
      %v795 = vmax.f32 %v667, 0.0
      %v796 = vmax.f32 %v668, 0.0
      %v797 = vmax.f32 %v669, 0.0
      %v798 = vmax.f32 %v670, 0.0
      %v799 = vmax.f32 %v671, 0.0
      %v800 = vmax.f32 %v672, 0.0
      %v801 = vmax.f32 %v673, 0.0
      %v802 = vmax.f32 %v674, 0.0
      %v803 = vmax.f32 %v675, 0.0
      %v804 = vmax.f32 %v676, 0.0
      %v805 = vmax.f32 %v677, 0.0
      %v806 = vmax.f32 %v678, 0.0
      %v807 = vmax.f32 %v679, 0.0
      %v808 = vmax.f32 %v680, 0.0
      %v809 = vmax.f32 %v681, 0.0
      %v810 = vmax.f32 %v682, 0.0
      %v811 = vmax.f32 %v683, 0.0
      %v812 = vmax.f32 %v684, 0.0
      %v813 = vmax.f32 %v685, 0.0
      %v814 = vmax.f32 %v686, 0.0
      %v815 = vmax.f32 %v687, 0.0
      %v816 = vmax.f32 %v688, 0.0
      %v817 = vmax.f32 %v689, 0.0
      %v818 = vmax.f32 %v690, 0.0
      %v819 = vmax.f32 %v691, 0.0
      %v820 = vmax.f32 %v692, 0.0
      %v821 = vmax.f32 %v693, 0.0
      %v822 = vmax.f32 %v694, 0.0
      %v823 = vmax.f32 %v695, 0.0
      %v824 = vmax.f32 %v696, 0.0
      %v825 = vmax.f32 %v697, 0.0
      %v826 = vmax.f32 %v698, 0.0
      %v827 = vmax.f32 %v699, 0.0
      %v828 = vpack.c.bf16 %v701, %v700
      %v829 = vpack.c.bf16 %v703, %v702
      %v830 = vpack.c.bf16 %v705, %v704
      %v831 = vpack.c.bf16 %v707, %v706
      %v832 = vpack.c.bf16 %v709, %v708
      %v833 = vpack.c.bf16 %v711, %v710
      %v834 = vpack.c.bf16 %v713, %v712
      %v835 = vpack.c.bf16 %v715, %v714
      %v836 = vpack.c.bf16 %v717, %v716
      %v837 = vpack.c.bf16 %v719, %v718
      %v838 = vpack.c.bf16 %v721, %v720
      %v839 = vpack.c.bf16 %v723, %v722
      %v840 = vpack.c.bf16 %v725, %v724
      %v841 = vpack.c.bf16 %v727, %v726
      %v842 = vpack.c.bf16 %v729, %v728
      %v843 = vpack.c.bf16 %v731, %v730
      %v844 = vpack.c.bf16 %v733, %v732
      %v845 = vpack.c.bf16 %v735, %v734
      %v846 = vpack.c.bf16 %v737, %v736
      %v847 = vpack.c.bf16 %v739, %v738
      %v848 = vpack.c.bf16 %v741, %v740
      %v849 = vpack.c.bf16 %v743, %v742
      %v850 = vpack.c.bf16 %v745, %v744
      %v851 = vpack.c.bf16 %v747, %v746
      %v852 = vpack.c.bf16 %v749, %v748
      %v853 = vpack.c.bf16 %v751, %v750
      %v854 = vpack.c.bf16 %v753, %v752
      %v855 = vpack.c.bf16 %v755, %v754
      %v856 = vpack.c.bf16 %v757, %v756
      %v857 = vpack.c.bf16 %v759, %v758
      %v858 = vpack.c.bf16 %v761, %v760
      %v859 = vpack.c.bf16 %v763, %v762
      %v860 = vpack.c.bf16 %v765, %v764
      %v861 = vpack.c.bf16 %v767, %v766
      %v862 = vpack.c.bf16 %v769, %v768
      %v863 = vpack.c.bf16 %v771, %v770
      %v864 = vpack.c.bf16 %v773, %v772
      %v865 = vpack.c.bf16 %v775, %v774
      %v866 = vpack.c.bf16 %v777, %v776
      %v867 = vpack.c.bf16 %v779, %v778
      %v868 = vpack.c.bf16 %v781, %v780
      %v869 = vpack.c.bf16 %v783, %v782
      %v870 = vpack.c.bf16 %v785, %v784
      %v871 = vpack.c.bf16 %v787, %v786
      %v872 = vpack.c.bf16 %v789, %v788
      %v873 = vpack.c.bf16 %v791, %v790
      %v874 = vpack.c.bf16 %v793, %v792
      %v875 = vpack.c.bf16 %v795, %v794
      %v876 = vpack.c.bf16 %v797, %v796
      %v877 = vpack.c.bf16 %v799, %v798
      %v878 = vpack.c.bf16 %v801, %v800
      %v879 = vpack.c.bf16 %v803, %v802
      %v880 = vpack.c.bf16 %v805, %v804
      %v881 = vpack.c.bf16 %v807, %v806
      %v882 = vpack.c.bf16 %v809, %v808
      %v883 = vpack.c.bf16 %v811, %v810
      %v884 = vpack.c.bf16 %v813, %v812
      %v885 = vpack.c.bf16 %v815, %v814
      %v886 = vpack.c.bf16 %v817, %v816
      %v887 = vpack.c.bf16 %v819, %v818
      %v888 = vpack.c.bf16 %v821, %v820
      %v889 = vpack.c.bf16 %v823, %v822
      %v890 = vpack.c.bf16 %v825, %v824
      %v891 = vpack.c.bf16 %v827, %v826
      %v956 = vunpack.c.l.b16 %v828
      %v957 = vunpack.c.h.b16 %v828
      %v958 = vunpack.c.l.b16 %v829
      %v959 = vunpack.c.h.b16 %v829
      %v960 = vunpack.c.l.b16 %v830
      %v961 = vunpack.c.h.b16 %v830
      %v962 = vunpack.c.l.b16 %v831
      %v963 = vunpack.c.h.b16 %v831
      %v964 = vunpack.c.l.b16 %v832
      %v965 = vunpack.c.h.b16 %v832
      %v966 = vunpack.c.l.b16 %v833
      %v967 = vunpack.c.h.b16 %v833
      %v968 = vunpack.c.l.b16 %v834
      %v969 = vunpack.c.h.b16 %v834
      %v970 = vunpack.c.l.b16 %v835
      %v971 = vunpack.c.h.b16 %v835
      %v972 = vunpack.c.l.b16 %v836
      %v973 = vunpack.c.h.b16 %v836
      %v974 = vunpack.c.l.b16 %v837
      %v975 = vunpack.c.h.b16 %v837
      %v976 = vunpack.c.l.b16 %v838
      %v977 = vunpack.c.h.b16 %v838
      %v978 = vunpack.c.l.b16 %v839
      %v979 = vunpack.c.h.b16 %v839
      %v980 = vunpack.c.l.b16 %v840
      %v981 = vunpack.c.h.b16 %v840
      %v982 = vunpack.c.l.b16 %v841
      %v983 = vunpack.c.h.b16 %v841
      %v984 = vunpack.c.l.b16 %v842
      %v985 = vunpack.c.h.b16 %v842
      %v986 = vunpack.c.l.b16 %v843
      %v987 = vunpack.c.h.b16 %v843
      %v988 = vunpack.c.l.b16 %v844
      %v989 = vunpack.c.h.b16 %v844
      %v990 = vunpack.c.l.b16 %v845
      %v991 = vunpack.c.h.b16 %v845
      %v992 = vunpack.c.l.b16 %v846
      %v993 = vunpack.c.h.b16 %v846
      %v994 = vunpack.c.l.b16 %v847
      %v995 = vunpack.c.h.b16 %v847
      %v996 = vunpack.c.l.b16 %v848
      %v997 = vunpack.c.h.b16 %v848
      %v998 = vunpack.c.l.b16 %v849
      %v999 = vunpack.c.h.b16 %v849
      %v1000 = vunpack.c.l.b16 %v850
      %v1001 = vunpack.c.h.b16 %v850
      %v1002 = vunpack.c.l.b16 %v851
      %v1003 = vunpack.c.h.b16 %v851
      %v1004 = vunpack.c.l.b16 %v852
      %v1005 = vunpack.c.h.b16 %v852
      %v1006 = vunpack.c.l.b16 %v853
      %v1007 = vunpack.c.h.b16 %v853
      %v1008 = vunpack.c.l.b16 %v854
      %v1009 = vunpack.c.h.b16 %v854
      %v1010 = vunpack.c.l.b16 %v855
      %v1011 = vunpack.c.h.b16 %v855
      %v1012 = vunpack.c.l.b16 %v856
      %v1013 = vunpack.c.h.b16 %v856
      %v1014 = vunpack.c.l.b16 %v857
      %v1015 = vunpack.c.h.b16 %v857
      %v1016 = vunpack.c.l.b16 %v858
      %v1017 = vunpack.c.h.b16 %v858
      %v1018 = vunpack.c.l.b16 %v859
      %v1019 = vunpack.c.h.b16 %v859
      %v1020 = vunpack.c.l.b16 %v860
      %v1021 = vunpack.c.h.b16 %v860
      %v1022 = vunpack.c.l.b16 %v861
      %v1023 = vunpack.c.h.b16 %v861
      %v1024 = vunpack.c.l.b16 %v862
      %v1025 = vunpack.c.h.b16 %v862
      %v1026 = vunpack.c.l.b16 %v863
      %v1027 = vunpack.c.h.b16 %v863
      %v1028 = vunpack.c.l.b16 %v864
      %v1029 = vunpack.c.h.b16 %v864
      %v1030 = vunpack.c.l.b16 %v865
      %v1031 = vunpack.c.h.b16 %v865
      %v1032 = vunpack.c.l.b16 %v866
      %v1033 = vunpack.c.h.b16 %v866
      %v1034 = vunpack.c.l.b16 %v867
      %v1035 = vunpack.c.h.b16 %v867
      %v1036 = vunpack.c.l.b16 %v868
      %v1037 = vunpack.c.h.b16 %v868
      %v1038 = vunpack.c.l.b16 %v869
      %v1039 = vunpack.c.h.b16 %v869
      %v1040 = vunpack.c.l.b16 %v870
      %v1041 = vunpack.c.h.b16 %v870
      %v1042 = vunpack.c.l.b16 %v871
      %v1043 = vunpack.c.h.b16 %v871
      %v1044 = vunpack.c.l.b16 %v872
      %v1045 = vunpack.c.h.b16 %v872
      %v1046 = vunpack.c.l.b16 %v873
      %v1047 = vunpack.c.h.b16 %v873
      %v1048 = vunpack.c.l.b16 %v874
      %v1049 = vunpack.c.h.b16 %v874
      %v1050 = vunpack.c.l.b16 %v875
      %v1051 = vunpack.c.h.b16 %v875
      %v1052 = vunpack.c.l.b16 %v876
      %v1053 = vunpack.c.h.b16 %v876
      %v1054 = vunpack.c.l.b16 %v877
      %v1055 = vunpack.c.h.b16 %v877
      %v1056 = vunpack.c.l.b16 %v878
      %v1057 = vunpack.c.h.b16 %v878
      %v1058 = vunpack.c.l.b16 %v879
      %v1059 = vunpack.c.h.b16 %v879
      %v1060 = vunpack.c.l.b16 %v880
      %v1061 = vunpack.c.h.b16 %v880
      %v1062 = vunpack.c.l.b16 %v881
      %v1063 = vunpack.c.h.b16 %v881
      %v1064 = vunpack.c.l.b16 %v882
      %v1065 = vunpack.c.h.b16 %v882
      %v1066 = vunpack.c.l.b16 %v883
      %v1067 = vunpack.c.h.b16 %v883
      %v1068 = vunpack.c.l.b16 %v884
      %v1069 = vunpack.c.h.b16 %v884
      %v1070 = vunpack.c.l.b16 %v885
      %v1071 = vunpack.c.h.b16 %v885
      %v1072 = vunpack.c.l.b16 %v886
      %v1073 = vunpack.c.h.b16 %v886
      %v1074 = vunpack.c.l.b16 %v887
      %v1075 = vunpack.c.h.b16 %v887
      %v1076 = vunpack.c.l.b16 %v888
      %v1077 = vunpack.c.h.b16 %v888
      %v1078 = vunpack.c.l.b16 %v889
      %v1079 = vunpack.c.h.b16 %v889
      %v1080 = vunpack.c.l.b16 %v890
      %v1081 = vunpack.c.h.b16 %v890
      %v1082 = vunpack.c.l.b16 %v891
      %v1083 = vunpack.c.h.b16 %v891
      %v1084 = vpack.c.b16 %v956, %v956
      %v1085 = vpack.c.b16 %v957, %v957
      %v1086 = vpack.c.b16 %v958, %v958
      %v1087 = vpack.c.b16 %v959, %v959
      %v1088 = vpack.c.b16 %v960, %v960
      %v1089 = vpack.c.b16 %v961, %v961
      %v1090 = vpack.c.b16 %v962, %v962
      %v1091 = vpack.c.b16 %v963, %v963
      %v1092 = vpack.c.b16 %v964, %v964
      %v1093 = vpack.c.b16 %v965, %v965
      %v1094 = vpack.c.b16 %v966, %v966
      %v1095 = vpack.c.b16 %v967, %v967
      %v1096 = vpack.c.b16 %v968, %v968
      %v1097 = vpack.c.b16 %v969, %v969
      %v1098 = vpack.c.b16 %v970, %v970
      %v1099 = vpack.c.b16 %v971, %v971
      %v1100 = vpack.c.b16 %v972, %v972
      %v1101 = vpack.c.b16 %v973, %v973
      %v1102 = vpack.c.b16 %v974, %v974
      %v1103 = vpack.c.b16 %v975, %v975
      %v1104 = vpack.c.b16 %v976, %v976
      %v1105 = vpack.c.b16 %v977, %v977
      %v1106 = vpack.c.b16 %v978, %v978
      %v1107 = vpack.c.b16 %v979, %v979
      %v1108 = vpack.c.b16 %v980, %v980
      %v1109 = vpack.c.b16 %v981, %v981
      %v1110 = vpack.c.b16 %v982, %v982
      %v1111 = vpack.c.b16 %v983, %v983
      %v1112 = vpack.c.b16 %v984, %v984
      %v1113 = vpack.c.b16 %v985, %v985
      %v1114 = vpack.c.b16 %v986, %v986
      %v1115 = vpack.c.b16 %v987, %v987
      %v1116 = vpack.c.b16 %v988, %v988
      %v1117 = vpack.c.b16 %v989, %v989
      %v1118 = vpack.c.b16 %v990, %v990
      %v1119 = vpack.c.b16 %v991, %v991
      %v1120 = vpack.c.b16 %v992, %v992
      %v1121 = vpack.c.b16 %v993, %v993
      %v1122 = vpack.c.b16 %v994, %v994
      %v1123 = vpack.c.b16 %v995, %v995
      %v1124 = vpack.c.b16 %v996, %v996
      %v1125 = vpack.c.b16 %v997, %v997
      %v1126 = vpack.c.b16 %v998, %v998
      %v1127 = vpack.c.b16 %v999, %v999
      %v1128 = vpack.c.b16 %v1000, %v1000
      %v1129 = vpack.c.b16 %v1001, %v1001
      %v1130 = vpack.c.b16 %v1002, %v1002
      %v1131 = vpack.c.b16 %v1003, %v1003
      %v1132 = vpack.c.b16 %v1004, %v1004
      %v1133 = vpack.c.b16 %v1005, %v1005
      %v1134 = vpack.c.b16 %v1006, %v1006
      %v1135 = vpack.c.b16 %v1007, %v1007
      %v1136 = vpack.c.b16 %v1008, %v1008
      %v1137 = vpack.c.b16 %v1009, %v1009
      %v1138 = vpack.c.b16 %v1010, %v1010
      %v1139 = vpack.c.b16 %v1011, %v1011
      %v1140 = vpack.c.b16 %v1012, %v1012
      %v1141 = vpack.c.b16 %v1013, %v1013
      %v1142 = vpack.c.b16 %v1014, %v1014
      %v1143 = vpack.c.b16 %v1015, %v1015
      %v1144 = vpack.c.b16 %v1016, %v1016
      %v1145 = vpack.c.b16 %v1017, %v1017
      %v1146 = vpack.c.b16 %v1018, %v1018
      %v1147 = vpack.c.b16 %v1019, %v1019
      %v1148 = vpack.c.b16 %v1020, %v1020
      %v1149 = vpack.c.b16 %v1021, %v1021
      %v1150 = vpack.c.b16 %v1022, %v1022
      %v1151 = vpack.c.b16 %v1023, %v1023
      %v1152 = vpack.c.b16 %v1024, %v1024
      %v1153 = vpack.c.b16 %v1025, %v1025
      %v1154 = vpack.c.b16 %v1026, %v1026
      %v1155 = vpack.c.b16 %v1027, %v1027
      %v1156 = vpack.c.b16 %v1028, %v1028
      %v1157 = vpack.c.b16 %v1029, %v1029
      %v1158 = vpack.c.b16 %v1030, %v1030
      %v1159 = vpack.c.b16 %v1031, %v1031
      %v1160 = vpack.c.b16 %v1032, %v1032
      %v1161 = vpack.c.b16 %v1033, %v1033
      %v1162 = vpack.c.b16 %v1034, %v1034
      %v1163 = vpack.c.b16 %v1035, %v1035
      %v1164 = vpack.c.b16 %v1036, %v1036
      %v1165 = vpack.c.b16 %v1037, %v1037
      %v1166 = vpack.c.b16 %v1038, %v1038
      %v1167 = vpack.c.b16 %v1039, %v1039
      %v1168 = vpack.c.b16 %v1040, %v1040
      %v1169 = vpack.c.b16 %v1041, %v1041
      %v1170 = vpack.c.b16 %v1042, %v1042
      %v1171 = vpack.c.b16 %v1043, %v1043
      %v1172 = vpack.c.b16 %v1044, %v1044
      %v1173 = vpack.c.b16 %v1045, %v1045
      %v1174 = vpack.c.b16 %v1046, %v1046
      %v1175 = vpack.c.b16 %v1047, %v1047
      %v1176 = vpack.c.b16 %v1048, %v1048
      %v1177 = vpack.c.b16 %v1049, %v1049
      %v1178 = vpack.c.b16 %v1050, %v1050
      %v1179 = vpack.c.b16 %v1051, %v1051
      %v1180 = vpack.c.b16 %v1052, %v1052
      %v1181 = vpack.c.b16 %v1053, %v1053
      %v1182 = vpack.c.b16 %v1054, %v1054
      %v1183 = vpack.c.b16 %v1055, %v1055
      %v1184 = vpack.c.b16 %v1056, %v1056
      %v1185 = vpack.c.b16 %v1057, %v1057
      %v1186 = vpack.c.b16 %v1058, %v1058
      %v1187 = vpack.c.b16 %v1059, %v1059
      %v1188 = vpack.c.b16 %v1060, %v1060
      %v1189 = vpack.c.b16 %v1061, %v1061
      %v1190 = vpack.c.b16 %v1062, %v1062
      %v1191 = vpack.c.b16 %v1063, %v1063
      %v1192 = vpack.c.b16 %v1064, %v1064
      %v1193 = vpack.c.b16 %v1065, %v1065
      %v1194 = vpack.c.b16 %v1066, %v1066
      %v1195 = vpack.c.b16 %v1067, %v1067
      %v1196 = vpack.c.b16 %v1068, %v1068
      %v1197 = vpack.c.b16 %v1069, %v1069
      %v1198 = vpack.c.b16 %v1070, %v1070
      %v1199 = vpack.c.b16 %v1071, %v1071
      %v1200 = vpack.c.b16 %v1072, %v1072
      %v1201 = vpack.c.b16 %v1073, %v1073
      %v1202 = vpack.c.b16 %v1074, %v1074
      %v1203 = vpack.c.b16 %v1075, %v1075
      %v1204 = vpack.c.b16 %v1076, %v1076
      %v1205 = vpack.c.b16 %v1077, %v1077
      %v1206 = vpack.c.b16 %v1078, %v1078
      %v1207 = vpack.c.b16 %v1079, %v1079
      %v1208 = vpack.c.b16 %v1080, %v1080
      %v1209 = vpack.c.b16 %v1081, %v1081
      %v1210 = vpack.c.b16 %v1082, %v1082
      %v1211 = vpack.c.b16 %v1083, %v1083
      %vm1340 = vcmask 60416
      %1341 = vst.msk [vmem:[%s172] sm:$0xf] %vm1340, %v1084
      %1342 = vst.msk [vmem:[%s172 + $0x4] sm:$0xf] %vm1340, %v1085
      %1343 = vst.msk [vmem:[%s172 + $0x8] sm:$0xf] %vm1340, %v1086
      %1344 = vst.msk [vmem:[%s172 + $0xc] sm:$0xf] %vm1340, %v1087
      %1345 = vst.msk [vmem:[%s172 + $0x10] sm:$0xf] %vm1340, %v1088
      %1346 = vst.msk [vmem:[%s172 + $0x14] sm:$0xf] %vm1340, %v1089
      %1347 = vst.msk [vmem:[%s172 + $0x18] sm:$0xf] %vm1340, %v1090
      %1348 = vst.msk [vmem:[%s172 + $0x1c] sm:$0xf] %vm1340, %v1091
      %1349 = vst.msk [vmem:[%s172 + $0x20] sm:$0xf] %vm1340, %v1092
      %1350 = vst.msk [vmem:[%s172 + $0x24] sm:$0xf] %vm1340, %v1093
      %1351 = vst.msk [vmem:[%s172 + $0x28] sm:$0xf] %vm1340, %v1094
      %1352 = vst.msk [vmem:[%s172 + $0x2c] sm:$0xf] %vm1340, %v1095
      %1353 = vst.msk [vmem:[%s172 + $0x30] sm:$0xf] %vm1340, %v1096
      %1354 = vst.msk [vmem:[%s172 + $0x34] sm:$0xf] %vm1340, %v1097
      %1355 = vst.msk [vmem:[%s172 + $0x38] sm:$0xf] %vm1340, %v1098
      %1356 = vst.msk [vmem:[%s172 + $0x3c] sm:$0xf] %vm1340, %v1099
      %1357 = vst.msk [vmem:[%s172 + $0x40] sm:$0xf] %vm1340, %v1100
      %1358 = vst.msk [vmem:[%s172 + $0x44] sm:$0xf] %vm1340, %v1101
      %1359 = vst.msk [vmem:[%s172 + $0x48] sm:$0xf] %vm1340, %v1102
      %1360 = vst.msk [vmem:[%s172 + $0x4c] sm:$0xf] %vm1340, %v1103
      %1361 = vst.msk [vmem:[%s172 + $0x50] sm:$0xf] %vm1340, %v1104
      %1362 = vst.msk [vmem:[%s172 + $0x54] sm:$0xf] %vm1340, %v1105
      %1363 = vst.msk [vmem:[%s172 + $0x58] sm:$0xf] %vm1340, %v1106
      %1364 = vst.msk [vmem:[%s172 + $0x5c] sm:$0xf] %vm1340, %v1107
      %1365 = vst.msk [vmem:[%s172 + $0x60] sm:$0xf] %vm1340, %v1108
      %1366 = vst.msk [vmem:[%s172 + $0x64] sm:$0xf] %vm1340, %v1109
      %1367 = vst.msk [vmem:[%s172 + $0x68] sm:$0xf] %vm1340, %v1110
      %1368 = vst.msk [vmem:[%s172 + $0x6c] sm:$0xf] %vm1340, %v1111
      %1369 = vst.msk [vmem:[%s172 + $0x70] sm:$0xf] %vm1340, %v1112
      %1370 = vst.msk [vmem:[%s172 + $0x74] sm:$0xf] %vm1340, %v1113
      %1371 = vst.msk [vmem:[%s172 + $0x78] sm:$0xf] %vm1340, %v1114
      %1372 = vst.msk [vmem:[%s172 + $0x7c] sm:$0xf] %vm1340, %v1115
      %1373 = vst.msk [vmem:[%s172 + $0x80] sm:$0xf] %vm1340, %v1116
      %1374 = vst.msk [vmem:[%s172 + $0x84] sm:$0xf] %vm1340, %v1117
      %1375 = vst.msk [vmem:[%s172 + $0x88] sm:$0xf] %vm1340, %v1118
      %1376 = vst.msk [vmem:[%s172 + $0x8c] sm:$0xf] %vm1340, %v1119
      %1377 = vst.msk [vmem:[%s172 + $0x90] sm:$0xf] %vm1340, %v1120
      %1378 = vst.msk [vmem:[%s172 + $0x94] sm:$0xf] %vm1340, %v1121
      %1379 = vst.msk [vmem:[%s172 + $0x98] sm:$0xf] %vm1340, %v1122
      %1380 = vst.msk [vmem:[%s172 + $0x9c] sm:$0xf] %vm1340, %v1123
      %1381 = vst.msk [vmem:[%s172 + $0xa0] sm:$0xf] %vm1340, %v1124
      %1382 = vst.msk [vmem:[%s172 + $0xa4] sm:$0xf] %vm1340, %v1125
      %1383 = vst.msk [vmem:[%s172 + $0xa8] sm:$0xf] %vm1340, %v1126
      %1384 = vst.msk [vmem:[%s172 + $0xac] sm:$0xf] %vm1340, %v1127
      %1385 = vst.msk [vmem:[%s172 + $0xb0] sm:$0xf] %vm1340, %v1128
      %1386 = vst.msk [vmem:[%s172 + $0xb4] sm:$0xf] %vm1340, %v1129
      %1387 = vst.msk [vmem:[%s172 + $0xb8] sm:$0xf] %vm1340, %v1130
      %1388 = vst.msk [vmem:[%s172 + $0xbc] sm:$0xf] %vm1340, %v1131
      %1389 = vst.msk [vmem:[%s172 + $0xc0] sm:$0xf] %vm1340, %v1132
      %1390 = vst.msk [vmem:[%s172 + $0xc4] sm:$0xf] %vm1340, %v1133
      %1391 = vst.msk [vmem:[%s172 + $0xc8] sm:$0xf] %vm1340, %v1134
      %1392 = vst.msk [vmem:[%s172 + $0xcc] sm:$0xf] %vm1340, %v1135
      %1393 = vst.msk [vmem:[%s172 + $0xd0] sm:$0xf] %vm1340, %v1136
      %1394 = vst.msk [vmem:[%s172 + $0xd4] sm:$0xf] %vm1340, %v1137
      %1395 = vst.msk [vmem:[%s172 + $0xd8] sm:$0xf] %vm1340, %v1138
      %1396 = vst.msk [vmem:[%s172 + $0xdc] sm:$0xf] %vm1340, %v1139
      %1397 = vst.msk [vmem:[%s172 + $0xe0] sm:$0xf] %vm1340, %v1140
      %1398 = vst.msk [vmem:[%s172 + $0xe4] sm:$0xf] %vm1340, %v1141
      %1399 = vst.msk [vmem:[%s172 + $0xe8] sm:$0xf] %vm1340, %v1142
      %1400 = vst.msk [vmem:[%s172 + $0xec] sm:$0xf] %vm1340, %v1143
      %1401 = vst.msk [vmem:[%s172 + $0xf0] sm:$0xf] %vm1340, %v1144
      %1402 = vst.msk [vmem:[%s172 + $0xf4] sm:$0xf] %vm1340, %v1145
      %1403 = vst.msk [vmem:[%s172 + $0xf8] sm:$0xf] %vm1340, %v1146
      %1404 = vst.msk [vmem:[%s172 + $0xfc] sm:$0xf] %vm1340, %v1147
      %1405 = vst.msk [vmem:[%s172 + $0x100] sm:$0xf] %vm1340, %v1148
      %1406 = vst.msk [vmem:[%s172 + $0x104] sm:$0xf] %vm1340, %v1149
      %1407 = vst.msk [vmem:[%s172 + $0x108] sm:$0xf] %vm1340, %v1150
      %1408 = vst.msk [vmem:[%s172 + $0x10c] sm:$0xf] %vm1340, %v1151
      %1409 = vst.msk [vmem:[%s172 + $0x110] sm:$0xf] %vm1340, %v1152
      %1410 = vst.msk [vmem:[%s172 + $0x114] sm:$0xf] %vm1340, %v1153
      %1411 = vst.msk [vmem:[%s172 + $0x118] sm:$0xf] %vm1340, %v1154
      %1412 = vst.msk [vmem:[%s172 + $0x11c] sm:$0xf] %vm1340, %v1155
      %1413 = vst.msk [vmem:[%s172 + $0x120] sm:$0xf] %vm1340, %v1156
      %1414 = vst.msk [vmem:[%s172 + $0x124] sm:$0xf] %vm1340, %v1157
      %1415 = vst.msk [vmem:[%s172 + $0x128] sm:$0xf] %vm1340, %v1158
      %1416 = vst.msk [vmem:[%s172 + $0x12c] sm:$0xf] %vm1340, %v1159
      %1417 = vst.msk [vmem:[%s172 + $0x130] sm:$0xf] %vm1340, %v1160
      %1418 = vst.msk [vmem:[%s172 + $0x134] sm:$0xf] %vm1340, %v1161
      %1419 = vst.msk [vmem:[%s172 + $0x138] sm:$0xf] %vm1340, %v1162
      %1420 = vst.msk [vmem:[%s172 + $0x13c] sm:$0xf] %vm1340, %v1163
      %1421 = vst.msk [vmem:[%s172 + $0x140] sm:$0xf] %vm1340, %v1164
      %1422 = vst.msk [vmem:[%s172 + $0x144] sm:$0xf] %vm1340, %v1165
      %1423 = vst.msk [vmem:[%s172 + $0x148] sm:$0xf] %vm1340, %v1166
      %1424 = vst.msk [vmem:[%s172 + $0x14c] sm:$0xf] %vm1340, %v1167
      %1425 = vst.msk [vmem:[%s172 + $0x150] sm:$0xf] %vm1340, %v1168
      %1426 = vst.msk [vmem:[%s172 + $0x154] sm:$0xf] %vm1340, %v1169
      %1427 = vst.msk [vmem:[%s172 + $0x158] sm:$0xf] %vm1340, %v1170
      %1428 = vst.msk [vmem:[%s172 + $0x15c] sm:$0xf] %vm1340, %v1171
      %1429 = vst.msk [vmem:[%s172 + $0x160] sm:$0xf] %vm1340, %v1172
      %1430 = vst.msk [vmem:[%s172 + $0x164] sm:$0xf] %vm1340, %v1173
      %1431 = vst.msk [vmem:[%s172 + $0x168] sm:$0xf] %vm1340, %v1174
      %1432 = vst.msk [vmem:[%s172 + $0x16c] sm:$0xf] %vm1340, %v1175
      %1433 = vst.msk [vmem:[%s172 + $0x170] sm:$0xf] %vm1340, %v1176
      %1434 = vst.msk [vmem:[%s172 + $0x174] sm:$0xf] %vm1340, %v1177
      %1435 = vst.msk [vmem:[%s172 + $0x178] sm:$0xf] %vm1340, %v1178
      %1436 = vst.msk [vmem:[%s172 + $0x17c] sm:$0xf] %vm1340, %v1179
      %1437 = vst.msk [vmem:[%s172 + $0x180] sm:$0xf] %vm1340, %v1180
      %1438 = vst.msk [vmem:[%s172 + $0x184] sm:$0xf] %vm1340, %v1181
      %1439 = vst.msk [vmem:[%s172 + $0x188] sm:$0xf] %vm1340, %v1182
      %1440 = vst.msk [vmem:[%s172 + $0x18c] sm:$0xf] %vm1340, %v1183
      %1441 = vst.msk [vmem:[%s172 + $0x190] sm:$0xf] %vm1340, %v1184
      %1442 = vst.msk [vmem:[%s172 + $0x194] sm:$0xf] %vm1340, %v1185
      %1443 = vst.msk [vmem:[%s172 + $0x198] sm:$0xf] %vm1340, %v1186
      %1444 = vst.msk [vmem:[%s172 + $0x19c] sm:$0xf] %vm1340, %v1187
      %1445 = vst.msk [vmem:[%s172 + $0x1a0] sm:$0xf] %vm1340, %v1188
      %1446 = vst.msk [vmem:[%s172 + $0x1a4] sm:$0xf] %vm1340, %v1189
      %1447 = vst.msk [vmem:[%s172 + $0x1a8] sm:$0xf] %vm1340, %v1190
      %1448 = vst.msk [vmem:[%s172 + $0x1ac] sm:$0xf] %vm1340, %v1191
      %1449 = vst.msk [vmem:[%s172 + $0x1b0] sm:$0xf] %vm1340, %v1192
      %1450 = vst.msk [vmem:[%s172 + $0x1b4] sm:$0xf] %vm1340, %v1193
      %1451 = vst.msk [vmem:[%s172 + $0x1b8] sm:$0xf] %vm1340, %v1194
      %1452 = vst.msk [vmem:[%s172 + $0x1bc] sm:$0xf] %vm1340, %v1195
      %1453 = vst.msk [vmem:[%s172 + $0x1c0] sm:$0xf] %vm1340, %v1196
      %1454 = vst.msk [vmem:[%s172 + $0x1c4] sm:$0xf] %vm1340, %v1197
      %1455 = vst.msk [vmem:[%s172 + $0x1c8] sm:$0xf] %vm1340, %v1198
      %1456 = vst.msk [vmem:[%s172 + $0x1cc] sm:$0xf] %vm1340, %v1199
      %1457 = vst.msk [vmem:[%s172 + $0x1d0] sm:$0xf] %vm1340, %v1200
      %1458 = vst.msk [vmem:[%s172 + $0x1d4] sm:$0xf] %vm1340, %v1201
      %1459 = vst.msk [vmem:[%s172 + $0x1d8] sm:$0xf] %vm1340, %v1202
      %1460 = vst.msk [vmem:[%s172 + $0x1dc] sm:$0xf] %vm1340, %v1203
      %1461 = vst.msk [vmem:[%s172 + $0x1e0] sm:$0xf] %vm1340, %v1204
      %1462 = vst.msk [vmem:[%s172 + $0x1e4] sm:$0xf] %vm1340, %v1205
      %1463 = vst.msk [vmem:[%s172 + $0x1e8] sm:$0xf] %vm1340, %v1206
      %1464 = vst.msk [vmem:[%s172 + $0x1ec] sm:$0xf] %vm1340, %v1207
      %1465 = vst.msk [vmem:[%s172 + $0x1f0] sm:$0xf] %vm1340, %v1208
      %1466 = vst.msk [vmem:[%s172 + $0x1f4] sm:$0xf] %vm1340, %v1209
      %1467 = vst.msk [vmem:[%s172 + $0x1f8] sm:$0xf] %vm1340, %v1210
      %1468 = vst.msk [vmem:[%s172 + $0x1fc] sm:$0xf] %vm1340, %v1211
      %s1469 = smul.u32 128, %s14
      %p1470 = scmp.lt.s32.totalorder %s1469, 255
      %s1471 = scalar_select %p1470, %s1469, 255
      %s1472 = smul.addr %s1471, 4
      %s1473 = scalar_lea.vmem %s3, %s1472
      // Predicated region
      $region33: #{generator_forward.24} parent=31 // pred_check
        %p1474 = pneg %p100
      $region34: #{generator_forward.24} parent=31 // pred_check_branch
        %1476 = sbr.rel (%p1474) target = $region36
      $region35: #{generator_forward.24} parent=31 // pred_region
        %s1477 = smul.u32 128, %s14
      $region36: #{generator_forward.24} parent=31 // pred_fallthru
        _
    $region32: #{generator_forward.24} parent=5 // pred_fallthru
      _
    %p1478 = scmp.le.s32.totalorder 2, %s9
    // Predicated region
    $region37: #{generator_forward.24} parent=5 // pred_check
      %p1479 = pneg %p1478
    $region38: #{generator_forward.24} parent=5 // pred_check_branch
      %1481 = sbr.rel (%p1479) target = $region40
    $region39: #{generator_forward.24} parent=5 // pred_region
      %s1482 = ssub.s32 %s9, 2
      // Predicated region
      $region41: #{generator_forward.24} parent=39 // pred_check
        %p1483 = pneg %p106
      $region42: #{generator_forward.24} parent=39 // pred_check_branch
        %1485 = sbr.rel (%p1483) target = $region44
      $region43: #{generator_forward.24} parent=39 // pred_region
        %s1486 = smul.u32 128, %s15
        %p1487 = scmp.lt.s32.totalorder %s1486, 255
        %s1488 = scalar_select %p1487, %s1486, 255
        %s1489 = smul.addr %s1488, 4
        %s1490 = scalar_lea.vmem %s3, %s1489
      $region44: #{generator_forward.24} parent=39 // pred_fallthru
        _
    $region40: #{generator_forward.24} parent=5 // pred_fallthru
      _
  $region6: #{generator_forward.24} parent=0 // loop_footer
    %s13 = sadd.s32 1, %s9
  $region7: #{generator_forward.24} parent=0 // loop_footer_branch
    %8 = sbr.rel target = $region3
  $region8: #{generator_forward.24} parent=0 // loop_exit
    _

// kernel: generator_forward.25
$region0: #{generator_forward.25}
  #allocation0 [shape = 'u32[]', space=smem, size = 0x4, offset = 0x4, fixed_abs, tag = 'smem constant byte address 0x4 - core index']
  #allocation1 [shape = 'u32[144,128]{1,0:T(1,128)}', space=vmem, size = 0x12000, scoped, tag = 'internal scratch']
  %s0 = inlined_call_operand.vmem [shape: bf16[12,32], index: 0, kind: input, shape index: {}]
  %s1 = inlined_call_operand.vmem [shape: bf16[32,2178], index: 1, kind: input, shape index: {}]
  %s2 = inlined_call_operand.vmem [shape: f32[12,1], index: 2, kind: input, shape index: {}]
  %s3 = inlined_call_operand.vmem [shape: f32[12,2178], index: 3, kind: output, shape index: {}]
  %s4 = sld [smem:[#allocation0]]
  $region22: #{generator_forward.25} parent=0
    _
  %s6 = ssub.s32 1, %s4
  %s7 = scalar_select 0, %s6, %s4
  // Predicated region
  $region2: #{generator_forward.25} parent=0 // pred_check
    _
  $region3: #{generator_forward.25} parent=0 // pred_check_branch
    %9 = sbr.rel (0) target = $region5
  $region4: #{generator_forward.25} parent=0 // pred_region
    _
  $region5: #{generator_forward.25} parent=0 // pred_fallthru
    _
  // Predicated region
  $region6: #{generator_forward.25} parent=0 // pred_check
    _
  $region7: #{generator_forward.25} parent=0 // pred_check_branch
    %11 = sbr.rel (0) target = $region9
  $region8: #{generator_forward.25} parent=0 // pred_region
    _
  $region9: #{generator_forward.25} parent=0 // pred_fallthru
    _
  // Predicated region
  $region10: #{generator_forward.25} parent=0 // pred_check
    _
  $region11: #{generator_forward.25} parent=0 // pred_check_branch
    %13 = sbr.rel (0) target = $region13
  $region12: #{generator_forward.25} parent=0 // pred_region
    _
  $region13: #{generator_forward.25} parent=0 // pred_fallthru
    _
  %v15 = vld [vmem:[%s0] sm:$0xf]
  %v16 = vld [vmem:[%s0 + $0x4] sm:$0x3]
  %v17 = vld [vmem:[%s1] sm:$0xff]
  %v18 = vld [vmem:[%s1 + $0x8] sm:$0xff]
  %v19 = vld [vmem:[%s1 + $0x10] sm:$0xff]
  %v20 = vld [vmem:[%s1 + $0x18] sm:$0xff]
  %v21 = vld [vmem:[%s1 + $0x20] sm:$0xff]
  %v22 = vld [vmem:[%s1 + $0x28] sm:$0xff]
  %v23 = vld [vmem:[%s1 + $0x30] sm:$0xff]
  %v24 = vld [vmem:[%s1 + $0x38] sm:$0xff]
  %v25 = vld [vmem:[%s1 + $0x40] sm:$0xff]
  %v26 = vld [vmem:[%s1 + $0x48] sm:$0xff]
  %v27 = vld [vmem:[%s1 + $0x50] sm:$0xff]
  %v28 = vld [vmem:[%s1 + $0x58] sm:$0xff]
  %v29 = vld [vmem:[%s1 + $0x60] sm:$0xff]
  %v30 = vld [vmem:[%s1 + $0x68] sm:$0xff]
  %v31 = vld [vmem:[%s1 + $0x70] sm:$0xff]
  %v32 = vld [vmem:[%s1 + $0x78] sm:$0xff]
  %v33 = vld [vmem:[%s1 + $0x80] sm:$0xff]
  %v34 = vld [vmem:[%s1 + $0x88] sm:$0xff]
  %v35 = vld [vmem:[%s1 + $0x90] sm:$0xff]
  %v36 = vld [vmem:[%s1 + $0x98] sm:$0xff]
  %v37 = vld [vmem:[%s1 + $0xa0] sm:$0xff]
  %v38 = vld [vmem:[%s1 + $0xa8] sm:$0xff]
  %v39 = vld [vmem:[%s1 + $0xb0] sm:$0xff]
  %v40 = vld [vmem:[%s1 + $0xb8] sm:$0xff]
  %v41 = vld [vmem:[%s1 + $0xc0] sm:$0xff]
  %v42 = vld [vmem:[%s1 + $0xc8] sm:$0xff]
  %v43 = vld [vmem:[%s1 + $0xd0] sm:$0xff]
  %v44 = vld [vmem:[%s1 + $0xd8] sm:$0xff]
  %v45 = vld [vmem:[%s1 + $0xe0] sm:$0xff]
  %v46 = vld [vmem:[%s1 + $0xe8] sm:$0xff]
  %v47 = vld [vmem:[%s1 + $0xf0] sm:$0xff]
  %v48 = vld [vmem:[%s1 + $0xf8] sm:$0xff]
  %v49 = vld [vmem:[%s1 + $0x100] sm:$0xff]
  %v50 = vld [vmem:[%s1 + $0x108] sm:$0xff]
  %v51 = vld [vmem:[%s1 + $0x110] sm:$0xff]
  %v52 = vld [vmem:[%s1 + $0x118] sm:$0xff]
  %v53 = vld [vmem:[%s2] sm:$0xff]
  %v54 = vld [vmem:[%s2 + $0x8] sm:$0xf]
  %56 = vset.pattern.permute.xlu0 0
  %57 = vperm.xlu0 %56, %v53
  %v58 = vpop.permute.xlu0 %57
  %61 = vset.pattern.permute.xlu0 0
  %62 = vperm.xlu0 %61, %v54
  %v63 = vpop.permute.xlu0 %62
  %v67 = vunpack.c.l.b16 %v15
  %v68 = vunpack.c.l.b16 %v16
  %v69 = vpack.c.b16 %v68, %v67
  %v106 = vunpack.c.l.b16 %v17
  %v107 = vunpack.c.h.b16 %v17
  %v108 = vunpack.c.l.b16 %v18
  %v109 = vunpack.c.h.b16 %v18
  %v110 = vunpack.c.l.b16 %v19
  %v111 = vunpack.c.h.b16 %v19
  %v112 = vunpack.c.l.b16 %v20
  %v113 = vunpack.c.h.b16 %v20
  %v114 = vunpack.c.l.b16 %v21
  %v115 = vunpack.c.h.b16 %v21
  %v116 = vunpack.c.l.b16 %v22
  %v117 = vunpack.c.h.b16 %v22
  %v118 = vunpack.c.l.b16 %v23
  %v119 = vunpack.c.h.b16 %v23
  %v120 = vunpack.c.l.b16 %v24
  %v121 = vunpack.c.h.b16 %v24
  %v122 = vunpack.c.l.b16 %v25
  %v123 = vunpack.c.h.b16 %v25
  %v124 = vunpack.c.l.b16 %v26
  %v125 = vunpack.c.h.b16 %v26
  %v126 = vunpack.c.l.b16 %v27
  %v127 = vunpack.c.h.b16 %v27
  %v128 = vunpack.c.l.b16 %v28
  %v129 = vunpack.c.h.b16 %v28
  %v130 = vunpack.c.l.b16 %v29
  %v131 = vunpack.c.h.b16 %v29
  %v132 = vunpack.c.l.b16 %v30
  %v133 = vunpack.c.h.b16 %v30
  %v134 = vunpack.c.l.b16 %v31
  %v135 = vunpack.c.h.b16 %v31
  %v136 = vunpack.c.l.b16 %v32
  %v137 = vunpack.c.h.b16 %v32
  %v138 = vunpack.c.l.b16 %v33
  %v139 = vunpack.c.h.b16 %v33
  %v140 = vunpack.c.l.b16 %v34
  %v141 = vunpack.c.h.b16 %v34
  %v142 = vunpack.c.l.b16 %v35
  %v143 = vunpack.c.h.b16 %v35
  %v144 = vunpack.c.l.b16 %v36
  %v145 = vunpack.c.h.b16 %v36
  %v146 = vunpack.c.l.b16 %v37
  %v147 = vunpack.c.h.b16 %v37
  %v148 = vunpack.c.l.b16 %v38
  %v149 = vunpack.c.h.b16 %v38
  %v150 = vunpack.c.l.b16 %v39
  %v151 = vunpack.c.h.b16 %v39
  %v152 = vunpack.c.l.b16 %v40
  %v153 = vunpack.c.h.b16 %v40
  %v154 = vunpack.c.l.b16 %v41
  %v155 = vunpack.c.h.b16 %v41
  %v156 = vunpack.c.l.b16 %v42
  %v157 = vunpack.c.h.b16 %v42
  %v158 = vunpack.c.l.b16 %v43
  %v159 = vunpack.c.h.b16 %v43
  %v160 = vunpack.c.l.b16 %v44
  %v161 = vunpack.c.h.b16 %v44
  %v162 = vunpack.c.l.b16 %v45
  %v163 = vunpack.c.h.b16 %v45
  %v164 = vunpack.c.l.b16 %v46
  %v165 = vunpack.c.h.b16 %v46
  %v166 = vunpack.c.l.b16 %v47
  %v167 = vunpack.c.h.b16 %v47
  %v168 = vunpack.c.l.b16 %v48
  %v169 = vunpack.c.h.b16 %v48
  %v170 = vunpack.c.l.b16 %v49
  %v171 = vunpack.c.h.b16 %v49
  %v172 = vunpack.c.l.b16 %v50
  %v173 = vunpack.c.h.b16 %v50
  %v174 = vunpack.c.l.b16 %v51
  %v175 = vunpack.c.h.b16 %v51
  %v176 = vunpack.c.l.b16 %v52
  %v177 = vunpack.c.h.b16 %v52
  %v178 = vpack.c.b16 %v124, %v106
  %v179 = vpack.c.b16 %v125, %v107
  %v180 = vpack.c.b16 %v126, %v108
  %v181 = vpack.c.b16 %v127, %v109
  %v182 = vpack.c.b16 %v128, %v110
  %v183 = vpack.c.b16 %v129, %v111
  %v184 = vpack.c.b16 %v130, %v112
  %v185 = vpack.c.b16 %v131, %v113
  %v186 = vpack.c.b16 %v132, %v114
  %v187 = vpack.c.b16 %v133, %v115
  %v188 = vpack.c.b16 %v134, %v116
  %v189 = vpack.c.b16 %v135, %v117
  %v190 = vpack.c.b16 %v136, %v118
  %v191 = vpack.c.b16 %v137, %v119
  %v192 = vpack.c.b16 %v138, %v120
  %v193 = vpack.c.b16 %v139, %v121
  %v194 = vpack.c.b16 %v140, %v122
  %v195 = vpack.c.b16 %v141, %v123
  %v196 = vpack.c.b16 %v160, %v142
  %v197 = vpack.c.b16 %v161, %v143
  %v198 = vpack.c.b16 %v162, %v144
  %v199 = vpack.c.b16 %v163, %v145
  %v200 = vpack.c.b16 %v164, %v146
  %v201 = vpack.c.b16 %v165, %v147
  %v202 = vpack.c.b16 %v166, %v148
  %v203 = vpack.c.b16 %v167, %v149
  %v204 = vpack.c.b16 %v168, %v150
  %v205 = vpack.c.b16 %v169, %v151
  %v206 = vpack.c.b16 %v170, %v152
  %v207 = vpack.c.b16 %v171, %v153
  %v208 = vpack.c.b16 %v172, %v154
  %v209 = vpack.c.b16 %v173, %v155
  %v210 = vpack.c.b16 %v174, %v156
  %v211 = vpack.c.b16 %v175, %v157
  %v212 = vpack.c.b16 %v176, %v158
  %v213 = vpack.c.b16 %v177, %v159
  %vm250 = vcmask 261120
  %v252 = vsel %vm250, %v69, 0
  %254 = vmatprep.subr.bf16.mxu0 %v179
  %255 = vmatpush1.bf16.msra.mxu0 %v178
  %256 = vmatprep.subr.bf16.mxu0 %v197
  %257 = vmatpush1.bf16.msra.mxu0 %v196
  %258 = vmatprep.subr.bf16.mxu0 0
  %259 = vmatpush1.bf16.msra.mxu0 0
  %260 = vmatprep.subr.bf16.mxu0 0
  %261 = vmatpush1.bf16.msra.mxu0 0
  %262 = vmatprep.subr.bf16.mxu0 0
  %263 = vmatpush1.bf16.msra.mxu0 0
  %264 = vmatprep.subr.bf16.mxu0 0
  %265 = vmatpush1.bf16.msra.mxu0 0
  %266 = vmatprep.subr.bf16.mxu0 0
  %267 = vmatpush1.bf16.msra.mxu0 0
  %268 = vmatprep.subr.bf16.mxu0 0
  %269 = vmatpush1.bf16.msra.mxu0 0
  %270 = vmatprep.subr.bf16.mxu0 0
  %271 = vmatpush1.bf16.msra.mxu0 0
  %272 = vmatprep.subr.bf16.mxu0 0
  %273 = vmatpush1.bf16.msra.mxu0 0
  %274 = vmatprep.subr.bf16.mxu0 0
  %275 = vmatpush1.bf16.msra.mxu0 0
  %276 = vmatprep.subr.bf16.mxu0 0
  %277 = vmatpush1.bf16.msra.mxu0 0
  %278 = vmatprep.subr.bf16.mxu0 0
  %279 = vmatpush1.bf16.msra.mxu0 0
  %280 = vmatprep.subr.bf16.mxu0 0
  %281 = vmatpush1.bf16.msra.mxu0 0
  %282 = vmatprep.subr.bf16.mxu0 0
  %283 = vmatpush1.bf16.msra.mxu0 0
  %284 = vmatprep.subr.bf16.mxu0 0
  %285 = vmatpush1.bf16.msra.mxu0 0
  %286 = vmatprep.mubr.bf16.mxu0 0
  %287 = vmatmul.mubr.bf16.gmra.mrb[0].mxu0 %v252
  %v288 = vpop.f32.mrb[0].mxu0
  %v289 = vadd.f32 %v58, %v288
  %v290 = vpop.f32.mrb[0].mxu0
  %v291 = vadd.f32 %v58, %v290
  %v292 = vpop.f32.mrb[0].mxu0
  %v293 = vadd.f32 %v63, %v292
  %v294 = vpop.f32.mrb[0].mxu0
  %v295 = vadd.f32 %v63, %v294
  %296 = vdwg.mxu0
  %297 = vmatprep.subr.bf16.mxu0 %v181
  %298 = vmatpush1.bf16.msra.mxu0 %v180
  %299 = vmatprep.subr.bf16.mxu0 %v199
  %300 = vmatpush1.bf16.msra.mxu0 %v198
  %301 = vmatprep.subr.bf16.mxu0 0
  %302 = vmatpush1.bf16.msra.mxu0 0
  %303 = vmatprep.subr.bf16.mxu0 0
  %304 = vmatpush1.bf16.msra.mxu0 0
  %305 = vmatprep.subr.bf16.mxu0 0
  %306 = vmatpush1.bf16.msra.mxu0 0
  %307 = vmatprep.subr.bf16.mxu0 0
  %308 = vmatpush1.bf16.msra.mxu0 0
  %309 = vmatprep.subr.bf16.mxu0 0
  %310 = vmatpush1.bf16.msra.mxu0 0
  %311 = vmatprep.subr.bf16.mxu0 0
  %312 = vmatpush1.bf16.msra.mxu0 0
  %313 = vmatprep.subr.bf16.mxu0 0
  %314 = vmatpush1.bf16.msra.mxu0 0
  %315 = vmatprep.subr.bf16.mxu0 0
  %316 = vmatpush1.bf16.msra.mxu0 0
  %317 = vmatprep.subr.bf16.mxu0 0
  %318 = vmatpush1.bf16.msra.mxu0 0
  %319 = vmatprep.subr.bf16.mxu0 0
  %320 = vmatpush1.bf16.msra.mxu0 0
  %321 = vmatprep.subr.bf16.mxu0 0
  %322 = vmatpush1.bf16.msra.mxu0 0
  %323 = vmatprep.subr.bf16.mxu0 0
  %324 = vmatpush1.bf16.msra.mxu0 0
  %325 = vmatprep.subr.bf16.mxu0 0
  %326 = vmatpush1.bf16.msra.mxu0 0
  %327 = vmatprep.subr.bf16.mxu0 0
  %328 = vmatpush1.bf16.msra.mxu0 0
  %329 = vmatprep.mubr.bf16.mxu0 0
  %330 = vmatmul.mubr.bf16.gmra.mrb[0].mxu0 %v252
  %v331 = vpop.f32.mrb[0].mxu0
  %v332 = vadd.f32 %v58, %v331
  %v333 = vpop.f32.mrb[0].mxu0
  %v334 = vadd.f32 %v58, %v333
  %v335 = vpop.f32.mrb[0].mxu0
  %v336 = vadd.f32 %v63, %v335
  %v337 = vpop.f32.mrb[0].mxu0
  %v338 = vadd.f32 %v63, %v337
  %339 = vdwg.mxu0
  %340 = vmatprep.subr.bf16.mxu0 %v183
  %341 = vmatpush1.bf16.msra.mxu0 %v182
  %342 = vmatprep.subr.bf16.mxu0 %v201
  %343 = vmatpush1.bf16.msra.mxu0 %v200
  %344 = vmatprep.subr.bf16.mxu0 0
  %345 = vmatpush1.bf16.msra.mxu0 0
  %346 = vmatprep.subr.bf16.mxu0 0
  %347 = vmatpush1.bf16.msra.mxu0 0
  %348 = vmatprep.subr.bf16.mxu0 0
  %349 = vmatpush1.bf16.msra.mxu0 0
  %350 = vmatprep.subr.bf16.mxu0 0
  %351 = vmatpush1.bf16.msra.mxu0 0
  %352 = vmatprep.subr.bf16.mxu0 0
  %353 = vmatpush1.bf16.msra.mxu0 0
  %354 = vmatprep.subr.bf16.mxu0 0
  %355 = vmatpush1.bf16.msra.mxu0 0
  %356 = vmatprep.subr.bf16.mxu0 0
  %357 = vmatpush1.bf16.msra.mxu0 0
  %358 = vmatprep.subr.bf16.mxu0 0
  %359 = vmatpush1.bf16.msra.mxu0 0
  %360 = vmatprep.subr.bf16.mxu0 0
  %361 = vmatpush1.bf16.msra.mxu0 0
  %362 = vmatprep.subr.bf16.mxu0 0
  %363 = vmatpush1.bf16.msra.mxu0 0
  %364 = vmatprep.subr.bf16.mxu0 0
  %365 = vmatpush1.bf16.msra.mxu0 0
  %366 = vmatprep.subr.bf16.mxu0 0
  %367 = vmatpush1.bf16.msra.mxu0 0
  %368 = vmatprep.subr.bf16.mxu0 0
  %369 = vmatpush1.bf16.msra.mxu0 0
  %370 = vmatprep.subr.bf16.mxu0 0
  %371 = vmatpush1.bf16.msra.mxu0 0
  %372 = vmatprep.mubr.bf16.mxu0 0
  %373 = vmatmul.mubr.bf16.gmra.mrb[0].mxu0 %v252
  %v374 = vpop.f32.mrb[0].mxu0
  %v375 = vadd.f32 %v58, %v374
  %v376 = vpop.f32.mrb[0].mxu0
  %v377 = vadd.f32 %v58, %v376
  %v378 = vpop.f32.mrb[0].mxu0
  %v379 = vadd.f32 %v63, %v378
  %v380 = vpop.f32.mrb[0].mxu0
  %v381 = vadd.f32 %v63, %v380
  %382 = vdwg.mxu0
  %383 = vmatprep.subr.bf16.mxu0 %v185
  %384 = vmatpush1.bf16.msra.mxu0 %v184
  %385 = vmatprep.subr.bf16.mxu0 %v203
  %386 = vmatpush1.bf16.msra.mxu0 %v202
  %387 = vmatprep.subr.bf16.mxu0 0
  %388 = vmatpush1.bf16.msra.mxu0 0
  %389 = vmatprep.subr.bf16.mxu0 0
  %390 = vmatpush1.bf16.msra.mxu0 0
  %391 = vmatprep.subr.bf16.mxu0 0
  %392 = vmatpush1.bf16.msra.mxu0 0
  %393 = vmatprep.subr.bf16.mxu0 0
  %394 = vmatpush1.bf16.msra.mxu0 0
  %395 = vmatprep.subr.bf16.mxu0 0
  %396 = vmatpush1.bf16.msra.mxu0 0
  %397 = vmatprep.subr.bf16.mxu0 0
  %398 = vmatpush1.bf16.msra.mxu0 0
  %399 = vmatprep.subr.bf16.mxu0 0
  %400 = vmatpush1.bf16.msra.mxu0 0
  %401 = vmatprep.subr.bf16.mxu0 0
  %402 = vmatpush1.bf16.msra.mxu0 0
  %403 = vmatprep.subr.bf16.mxu0 0
  %404 = vmatpush1.bf16.msra.mxu0 0
  %405 = vmatprep.subr.bf16.mxu0 0
  %406 = vmatpush1.bf16.msra.mxu0 0
  %407 = vmatprep.subr.bf16.mxu0 0
  %408 = vmatpush1.bf16.msra.mxu0 0
  %409 = vmatprep.subr.bf16.mxu0 0
  %410 = vmatpush1.bf16.msra.mxu0 0
  %411 = vmatprep.subr.bf16.mxu0 0
  %412 = vmatpush1.bf16.msra.mxu0 0
  %413 = vmatprep.subr.bf16.mxu0 0
  %414 = vmatpush1.bf16.msra.mxu0 0
  %415 = vmatprep.mubr.bf16.mxu0 0
  %416 = vmatmul.mubr.bf16.gmra.mrb[0].mxu0 %v252
  %v417 = vpop.f32.mrb[0].mxu0
  %v418 = vadd.f32 %v58, %v417
  %v419 = vpop.f32.mrb[0].mxu0
  %v420 = vadd.f32 %v58, %v419
  %v421 = vpop.f32.mrb[0].mxu0
  %v422 = vadd.f32 %v63, %v421
  %v423 = vpop.f32.mrb[0].mxu0
  %v424 = vadd.f32 %v63, %v423
  %425 = vdwg.mxu0
  %426 = vmatprep.subr.bf16.mxu0 %v187
  %427 = vmatpush1.bf16.msra.mxu0 %v186
  %428 = vmatprep.subr.bf16.mxu0 %v205
  %429 = vmatpush1.bf16.msra.mxu0 %v204
  %430 = vmatprep.subr.bf16.mxu0 0
  %431 = vmatpush1.bf16.msra.mxu0 0
  %432 = vmatprep.subr.bf16.mxu0 0
  %433 = vmatpush1.bf16.msra.mxu0 0
  %434 = vmatprep.subr.bf16.mxu0 0
  %435 = vmatpush1.bf16.msra.mxu0 0
  %436 = vmatprep.subr.bf16.mxu0 0
  %437 = vmatpush1.bf16.msra.mxu0 0
  %438 = vmatprep.subr.bf16.mxu0 0
  %439 = vmatpush1.bf16.msra.mxu0 0
  %440 = vmatprep.subr.bf16.mxu0 0
  %441 = vmatpush1.bf16.msra.mxu0 0
  %442 = vmatprep.subr.bf16.mxu0 0
  %443 = vmatpush1.bf16.msra.mxu0 0
  %444 = vmatprep.subr.bf16.mxu0 0
  %445 = vmatpush1.bf16.msra.mxu0 0
  %446 = vmatprep.subr.bf16.mxu0 0
  %447 = vmatpush1.bf16.msra.mxu0 0
  %448 = vmatprep.subr.bf16.mxu0 0
  %449 = vmatpush1.bf16.msra.mxu0 0
  %450 = vmatprep.subr.bf16.mxu0 0
  %451 = vmatpush1.bf16.msra.mxu0 0
  %452 = vmatprep.subr.bf16.mxu0 0
  %453 = vmatpush1.bf16.msra.mxu0 0
  %454 = vmatprep.subr.bf16.mxu0 0
  %455 = vmatpush1.bf16.msra.mxu0 0
  %456 = vmatprep.subr.bf16.mxu0 0
  %457 = vmatpush1.bf16.msra.mxu0 0
  %458 = vmatprep.mubr.bf16.mxu0 0
  %459 = vmatmul.mubr.bf16.gmra.mrb[0].mxu0 %v252
  %v460 = vpop.f32.mrb[0].mxu0
  %v461 = vadd.f32 %v58, %v460
  %v462 = vpop.f32.mrb[0].mxu0
  %v463 = vadd.f32 %v58, %v462
  %v464 = vpop.f32.mrb[0].mxu0
  %v465 = vadd.f32 %v63, %v464
  %v466 = vpop.f32.mrb[0].mxu0
  %v467 = vadd.f32 %v63, %v466
  %468 = vdwg.mxu0
  %469 = vmatprep.subr.bf16.mxu0 %v189
  %470 = vmatpush1.bf16.msra.mxu0 %v188
  %471 = vmatprep.subr.bf16.mxu0 %v207
  %472 = vmatpush1.bf16.msra.mxu0 %v206
  %473 = vmatprep.subr.bf16.mxu0 0
  %474 = vmatpush1.bf16.msra.mxu0 0
  %475 = vmatprep.subr.bf16.mxu0 0
  %476 = vmatpush1.bf16.msra.mxu0 0
  %477 = vmatprep.subr.bf16.mxu0 0
  %478 = vmatpush1.bf16.msra.mxu0 0
  %479 = vmatprep.subr.bf16.mxu0 0
  %480 = vmatpush1.bf16.msra.mxu0 0
  %481 = vmatprep.subr.bf16.mxu0 0
  %482 = vmatpush1.bf16.msra.mxu0 0
  %483 = vmatprep.subr.bf16.mxu0 0
  %484 = vmatpush1.bf16.msra.mxu0 0
  %485 = vmatprep.subr.bf16.mxu0 0
  %486 = vmatpush1.bf16.msra.mxu0 0
  %487 = vmatprep.subr.bf16.mxu0 0
  %488 = vmatpush1.bf16.msra.mxu0 0
  %489 = vmatprep.subr.bf16.mxu0 0
  %490 = vmatpush1.bf16.msra.mxu0 0
  %491 = vmatprep.subr.bf16.mxu0 0
  %492 = vmatpush1.bf16.msra.mxu0 0
  %493 = vmatprep.subr.bf16.mxu0 0
  %494 = vmatpush1.bf16.msra.mxu0 0
  %495 = vmatprep.subr.bf16.mxu0 0
  %496 = vmatpush1.bf16.msra.mxu0 0
  %497 = vmatprep.subr.bf16.mxu0 0
  %498 = vmatpush1.bf16.msra.mxu0 0
  %499 = vmatprep.subr.bf16.mxu0 0
  %500 = vmatpush1.bf16.msra.mxu0 0
  %501 = vmatprep.mubr.bf16.mxu0 0
  %502 = vmatmul.mubr.bf16.gmra.mrb[0].mxu0 %v252
  %v503 = vpop.f32.mrb[0].mxu0
  %v504 = vadd.f32 %v58, %v503
  %v505 = vpop.f32.mrb[0].mxu0
  %v506 = vadd.f32 %v58, %v505
  %v507 = vpop.f32.mrb[0].mxu0
  %v508 = vadd.f32 %v63, %v507
  %v509 = vpop.f32.mrb[0].mxu0
  %v510 = vadd.f32 %v63, %v509
  %511 = vdwg.mxu0
  %512 = vmatprep.subr.bf16.mxu0 %v191
  %513 = vmatpush1.bf16.msra.mxu0 %v190
  %514 = vmatprep.subr.bf16.mxu0 %v209
  %515 = vmatpush1.bf16.msra.mxu0 %v208
  %516 = vmatprep.subr.bf16.mxu0 0
  %517 = vmatpush1.bf16.msra.mxu0 0
  %518 = vmatprep.subr.bf16.mxu0 0
  %519 = vmatpush1.bf16.msra.mxu0 0
  %520 = vmatprep.subr.bf16.mxu0 0
  %521 = vmatpush1.bf16.msra.mxu0 0
  %522 = vmatprep.subr.bf16.mxu0 0
  %523 = vmatpush1.bf16.msra.mxu0 0
  %524 = vmatprep.subr.bf16.mxu0 0
  %525 = vmatpush1.bf16.msra.mxu0 0
  %526 = vmatprep.subr.bf16.mxu0 0
  %527 = vmatpush1.bf16.msra.mxu0 0
  %528 = vmatprep.subr.bf16.mxu0 0
  %529 = vmatpush1.bf16.msra.mxu0 0
  %530 = vmatprep.subr.bf16.mxu0 0
  %531 = vmatpush1.bf16.msra.mxu0 0
  %532 = vmatprep.subr.bf16.mxu0 0
  %533 = vmatpush1.bf16.msra.mxu0 0
  %534 = vmatprep.subr.bf16.mxu0 0
  %535 = vmatpush1.bf16.msra.mxu0 0
  %536 = vmatprep.subr.bf16.mxu0 0
  %537 = vmatpush1.bf16.msra.mxu0 0
  %538 = vmatprep.subr.bf16.mxu0 0
  %539 = vmatpush1.bf16.msra.mxu0 0
  %540 = vmatprep.subr.bf16.mxu0 0
  %541 = vmatpush1.bf16.msra.mxu0 0
  %542 = vmatprep.subr.bf16.mxu0 0
  %543 = vmatpush1.bf16.msra.mxu0 0
  %544 = vmatprep.mubr.bf16.mxu0 0
  %545 = vmatmul.mubr.bf16.gmra.mrb[0].mxu0 %v252
  %v546 = vpop.f32.mrb[0].mxu0
  %v547 = vadd.f32 %v58, %v546
  %v548 = vpop.f32.mrb[0].mxu0
  %v549 = vadd.f32 %v58, %v548
  %v550 = vpop.f32.mrb[0].mxu0
  %v551 = vadd.f32 %v63, %v550
  %v552 = vpop.f32.mrb[0].mxu0
  %v553 = vadd.f32 %v63, %v552
  %554 = vdwg.mxu0
  %555 = vmatprep.subr.bf16.mxu0 %v193
  %556 = vmatpush1.bf16.msra.mxu0 %v192
  %557 = vmatprep.subr.bf16.mxu0 %v211
  %558 = vmatpush1.bf16.msra.mxu0 %v210
  %559 = vmatprep.subr.bf16.mxu0 0
  %560 = vmatpush1.bf16.msra.mxu0 0
  %561 = vmatprep.subr.bf16.mxu0 0
  %562 = vmatpush1.bf16.msra.mxu0 0
  %563 = vmatprep.subr.bf16.mxu0 0
  %564 = vmatpush1.bf16.msra.mxu0 0
  %565 = vmatprep.subr.bf16.mxu0 0
  %566 = vmatpush1.bf16.msra.mxu0 0
  %567 = vmatprep.subr.bf16.mxu0 0
  %568 = vmatpush1.bf16.msra.mxu0 0
  %569 = vmatprep.subr.bf16.mxu0 0
  %570 = vmatpush1.bf16.msra.mxu0 0
  %571 = vmatprep.subr.bf16.mxu0 0
  %572 = vmatpush1.bf16.msra.mxu0 0
  %573 = vmatprep.subr.bf16.mxu0 0
  %574 = vmatpush1.bf16.msra.mxu0 0
  %575 = vmatprep.subr.bf16.mxu0 0
  %576 = vmatpush1.bf16.msra.mxu0 0
  %577 = vmatprep.subr.bf16.mxu0 0
  %578 = vmatpush1.bf16.msra.mxu0 0
  %579 = vmatprep.subr.bf16.mxu0 0
  %580 = vmatpush1.bf16.msra.mxu0 0
  %581 = vmatprep.subr.bf16.mxu0 0
  %582 = vmatpush1.bf16.msra.mxu0 0
  %583 = vmatprep.subr.bf16.mxu0 0
  %584 = vmatpush1.bf16.msra.mxu0 0
  %585 = vmatprep.subr.bf16.mxu0 0
  %586 = vmatpush1.bf16.msra.mxu0 0
  %587 = vmatprep.mubr.bf16.mxu0 0
  %588 = vmatmul.mubr.bf16.gmra.mrb[0].mxu0 %v252
  %v589 = vpop.f32.mrb[0].mxu0
  %v590 = vadd.f32 %v58, %v589
  %v591 = vpop.f32.mrb[0].mxu0
  %v592 = vadd.f32 %v58, %v591
  %v593 = vpop.f32.mrb[0].mxu0
  %v594 = vadd.f32 %v63, %v593
  %v595 = vpop.f32.mrb[0].mxu0
  %v596 = vadd.f32 %v63, %v595
  %597 = vdwg.mxu0
  %598 = vmatprep.subr.bf16.mxu0 %v195
  %599 = vmatpush1.bf16.msra.mxu0 %v194
  %600 = vmatprep.subr.bf16.mxu0 %v213
  %601 = vmatpush1.bf16.msra.mxu0 %v212
  %602 = vmatprep.subr.bf16.mxu0 0
  %603 = vmatpush1.bf16.msra.mxu0 0
  %604 = vmatprep.subr.bf16.mxu0 0
  %605 = vmatpush1.bf16.msra.mxu0 0
  %606 = vmatprep.subr.bf16.mxu0 0
  %607 = vmatpush1.bf16.msra.mxu0 0
  %608 = vmatprep.subr.bf16.mxu0 0
  %609 = vmatpush1.bf16.msra.mxu0 0
  %610 = vmatprep.subr.bf16.mxu0 0
  %611 = vmatpush1.bf16.msra.mxu0 0
  %612 = vmatprep.subr.bf16.mxu0 0
  %613 = vmatpush1.bf16.msra.mxu0 0
  %614 = vmatprep.subr.bf16.mxu0 0
  %615 = vmatpush1.bf16.msra.mxu0 0
  %616 = vmatprep.subr.bf16.mxu0 0
  %617 = vmatpush1.bf16.msra.mxu0 0
  %618 = vmatprep.subr.bf16.mxu0 0
  %619 = vmatpush1.bf16.msra.mxu0 0
  %620 = vmatprep.subr.bf16.mxu0 0
  %621 = vmatpush1.bf16.msra.mxu0 0
  %622 = vmatprep.subr.bf16.mxu0 0
  %623 = vmatpush1.bf16.msra.mxu0 0
  %624 = vmatprep.subr.bf16.mxu0 0
  %625 = vmatpush1.bf16.msra.mxu0 0
  %626 = vmatprep.subr.bf16.mxu0 0
  %627 = vmatpush1.bf16.msra.mxu0 0
  %628 = vmatprep.subr.bf16.mxu0 0
  %629 = vmatpush1.bf16.msra.mxu0 0
  %630 = vmatprep.mubr.bf16.mxu0 0
  %631 = vmatmul.mubr.bf16.gmra.mrb[0].mxu0 %v252
  %v632 = vpop.f32.mrb[0].mxu0
  %v633 = vadd.f32 %v58, %v632
  %v634 = vpop.f32.mrb[0].mxu0
  %v635 = vadd.f32 %v58, %v634
  %v636 = vpop.f32.mrb[0].mxu0
  %v637 = vadd.f32 %v63, %v636
  %v638 = vpop.f32.mrb[0].mxu0
  %v639 = vadd.f32 %v63, %v638
  %640 = vdwg.mxu0
  %v641 = vtanh.pop %v289
  %v642 = vtanh.pop %v291
  %v643 = vtanh.pop %v332
  %v644 = vtanh.pop %v334
  %v645 = vtanh.pop %v375
  %v646 = vtanh.pop %v377
  %v647 = vtanh.pop %v418
  %v648 = vtanh.pop %v420
  %v649 = vtanh.pop %v461
  %v650 = vtanh.pop %v463
  %v651 = vtanh.pop %v504
  %v652 = vtanh.pop %v506
  %v653 = vtanh.pop %v547
  %v654 = vtanh.pop %v549
  %v655 = vtanh.pop %v590
  %v656 = vtanh.pop %v592
  %v657 = vtanh.pop %v633
  %v658 = vtanh.pop %v635
  %v659 = vtanh.pop %v293
  %v660 = vtanh.pop %v295
  %v661 = vtanh.pop %v336
  %v662 = vtanh.pop %v338
  %v663 = vtanh.pop %v379
  %v664 = vtanh.pop %v381
  %v665 = vtanh.pop %v422
  %v666 = vtanh.pop %v424
  %v667 = vtanh.pop %v465
  %v668 = vtanh.pop %v467
  %v669 = vtanh.pop %v508
  %v670 = vtanh.pop %v510
  %v671 = vtanh.pop %v551
  %v672 = vtanh.pop %v553
  %v673 = vtanh.pop %v594
  %v674 = vtanh.pop %v596
  %v675 = vtanh.pop %v637
  %v676 = vtanh.pop %v639
  %677 = vst [vmem:[%s3] sm:$0xff] %v641
  %678 = vst [vmem:[%s3 + $0x8] sm:$0xff] %v642
  %679 = vst [vmem:[%s3 + $0x10] sm:$0xff] %v643
  %680 = vst [vmem:[%s3 + $0x18] sm:$0xff] %v644
  %681 = vst [vmem:[%s3 + $0x20] sm:$0xff] %v645
  %682 = vst [vmem:[%s3 + $0x28] sm:$0xff] %v646
  %683 = vst [vmem:[%s3 + $0x30] sm:$0xff] %v647
  %684 = vst [vmem:[%s3 + $0x38] sm:$0xff] %v648
  %685 = vst [vmem:[%s3 + $0x40] sm:$0xff] %v649
  %686 = vst [vmem:[%s3 + $0x48] sm:$0xff] %v650
  %687 = vst [vmem:[%s3 + $0x50] sm:$0xff] %v651
  %688 = vst [vmem:[%s3 + $0x58] sm:$0xff] %v652
  %689 = vst [vmem:[%s3 + $0x60] sm:$0xff] %v653
  %690 = vst [vmem:[%s3 + $0x68] sm:$0xff] %v654
  %691 = vst [vmem:[%s3 + $0x70] sm:$0xff] %v655
  %692 = vst [vmem:[%s3 + $0x78] sm:$0xff] %v656
  %693 = vst [vmem:[%s3 + $0x80] sm:$0xff] %v657
  %vm694 = vcmask 15360
  %695 = vst.msk [vmem:[%s3 + $0x88] sm:$0xff] %vm694, %v658
  %696 = vst [vmem:[%s3 + $0x90] sm:$0xf] %v659
  %697 = vst [vmem:[%s3 + $0x98] sm:$0xf] %v660
  %698 = vst [vmem:[%s3 + $0xa0] sm:$0xf] %v661
  %699 = vst [vmem:[%s3 + $0xa8] sm:$0xf] %v662
  %700 = vst [vmem:[%s3 + $0xb0] sm:$0xf] %v663
  %701 = vst [vmem:[%s3 + $0xb8] sm:$0xf] %v664
  %702 = vst [vmem:[%s3 + $0xc0] sm:$0xf] %v665
  %703 = vst [vmem:[%s3 + $0xc8] sm:$0xf] %v666
  %704 = vst [vmem:[%s3 + $0xd0] sm:$0xf] %v667
  %705 = vst [vmem:[%s3 + $0xd8] sm:$0xf] %v668
  %706 = vst [vmem:[%s3 + $0xe0] sm:$0xf] %v669
  %707 = vst [vmem:[%s3 + $0xe8] sm:$0xf] %v670
  %708 = vst [vmem:[%s3 + $0xf0] sm:$0xf] %v671
  %709 = vst [vmem:[%s3 + $0xf8] sm:$0xf] %v672
  %710 = vst [vmem:[%s3 + $0x100] sm:$0xf] %v673
  %711 = vst [vmem:[%s3 + $0x108] sm:$0xf] %v674
  %712 = vst [vmem:[%s3 + $0x110] sm:$0xf] %v675
  %vm713 = vcmask 11264
  %714 = vst.msk [vmem:[%s3 + $0x118] sm:$0xf] %vm713, %v676
  // Predicated region
  $region14: #{generator_forward.25} parent=0 // pred_check
    _
  $region15: #{generator_forward.25} parent=0 // pred_check_branch
    %716 = sbr.rel (0) target = $region17
  $region16: #{generator_forward.25} parent=0 // pred_region
    _
  $region17: #{generator_forward.25} parent=0 // pred_fallthru
    _
  // Predicated region
  $region18: #{generator_forward.25} parent=0 // pred_check
    _
  $region19: #{generator_forward.25} parent=0 // pred_check_branch
    %718 = sbr.rel (0) target = $region21
  $region20: #{generator_forward.25} parent=0 // pred_region
    _
  $region21: #{generator_forward.25} parent=0 // pred_fallthru
    _

</llo_original>
